<compile_context>
chip_gen: v7x
topology: tpu7x:2x2x1
jax: 0.10.0
libtpu: 0.0.40
codegen_flags: <defaults>
</compile_context>

<pallas_src>
import math
import numpy as np
import jax
import jax.numpy as jnp
from jax.experimental import pallas as pl
from jax.experimental.pallas import tpu as pltpu

# ----------------------------- mel constants --------------------------------

N_FFT = 1024
HOP = 256
WIN = 1024
N_MELS = 80
SR = 16000
FMIN = 0.0
FMAX = 8000.0
N_FREQ = N_FFT // 2 + 1          # 513
N_FREQ_PAD = 640                 # 513 padded to a multiple of 128 (zero columns)
N_MEL_PAD = 128                  # 80 padded to 128 (lane-dense stores)
PAD = (N_FFT - HOP) // 2         # 384, HiFi-GAN style centering (center=False)


def _hz_to_mel(f):
    f = np.asarray(f, dtype=np.float64)
    f_sp = 200.0 / 3.0
    mels = f / f_sp
    min_log_hz = 1000.0
    min_log_mel = min_log_hz / f_sp
    logstep = np.log(6.4) / 27.0
    return np.where(
        f >= min_log_hz,
        min_log_mel + np.log(np.maximum(f, 1e-10) / min_log_hz) / logstep,
        mels,
    )


def _mel_to_hz(m):
    m = np.asarray(m, dtype=np.float64)
    f_sp = 200.0 / 3.0
    freqs = f_sp * m
    min_log_hz = 1000.0
    min_log_mel = min_log_hz / f_sp
    logstep = np.log(6.4) / 27.0
    return np.where(m >= min_log_mel, min_log_hz * np.exp(logstep * (m - min_log_mel)), freqs)


def mel_filterbank():
    """librosa-style slaney mel filterbank (n_mels, n_freq)."""
    fftfreqs = np.linspace(0.0, SR / 2.0, N_FREQ)
    mels = np.linspace(_hz_to_mel(FMIN), _hz_to_mel(FMAX), N_MELS + 2)
    mel_f = _mel_to_hz(mels)
    fdiff = np.diff(mel_f)
    ramps = mel_f[:, None] - fftfreqs[None, :]
    lower = -ramps[:-2] / fdiff[:-1, None]
    upper = ramps[2:] / fdiff[1:, None]
    weights = np.maximum(0.0, np.minimum(lower, upper))
    enorm = 2.0 / (mel_f[2: N_MELS + 2] - mel_f[:N_MELS])
    weights *= enorm[:, None]
    return weights.astype(np.float64)  # (80, 513)


def make_mel_consts():
    """Fused bf16 DFT matrix (hann window folded in, cos|sin on lanes) + padded mel matrix."""
    n = np.arange(N_FFT)
    window = 0.5 - 0.5 * np.cos(2.0 * np.pi * n / N_FFT)          # periodic hann
    k = np.arange(N_FREQ)
    ang = 2.0 * np.pi * np.outer(n, k) / N_FFT
    cosm = np.cos(ang) * window[:, None]                          # (n_fft, n_freq)
    sinm = -np.sin(ang) * window[:, None]

    dft = np.zeros((N_FFT, 2 * N_FREQ_PAD), np.float32)           # [cos | sin], lane-aligned at 640
    dft[:, :N_FREQ] = cosm
    dft[:, N_FREQ_PAD:N_FREQ_PAD + N_FREQ] = sinm

    melp = np.zeros((N_FREQ_PAD, N_MEL_PAD), np.float32)
    melp[:N_FREQ, :N_MELS] = mel_filterbank().T                   # (513, 80) into padded slab

    return (jnp.asarray(dft, dtype=jnp.bfloat16),
            jnp.asarray(melp, dtype=jnp.bfloat16))


# ----------------------------- melspec kernel --------------------------------


def _melspec_kernel(sig_ref, dft_ref, melT_ref, out_ref):
    # sig_ref: (bct, F+3, 256) f32 reflect-padded signal in hop-sized rows.
    # out_ref: (bct, F, 128) f32 log-mel, frames on sublanes, padded mel bins on lanes.
    bct, fp3, _ = sig_ref.shape
    nf = fp3 - 3
    sig = sig_ref[...].astype(jnp.bfloat16)        # cast once, BEFORE framing

    # K-split STFT: frame f = hop-rows [f, f+1, f+2, f+3]; accumulate per 256-wide K chunk so
    # the (M, 1024) frames intermediate is never materialized.
    reim = None
    for q in range(4):
        chunk = sig[:, q:q + nf, :].reshape(bct * nf, HOP)
        part = jnp.dot(chunk, dft_ref[q * HOP:(q + 1) * HOP, :],
                       preferred_element_type=jnp.float32)         # (M, 1280)
        reim = part if reim is None else reim + part

    re = reim[:, :N_FREQ_PAD]
    im = reim[:, N_FREQ_PAD:]
    mag = jnp.sqrt(re * re + im * im + 1e-9)
    mel = jnp.dot(mag.astype(jnp.bfloat16), melT_ref[...],
                  preferred_element_type=jnp.float32)              # (M, 128)
    out_ref[...] = jnp.log(jnp.maximum(mel, 1e-5)).reshape(bct, nf, N_MEL_PAD)


def _choose_bct(bc, nf, m_cap=512):
    """Batch items per melspec step: fill MXU M (<= m_cap rows) but keep >=2 grid steps
    whenever possible so v7x's second TensorCore gets work."""
    divs = [d for d in range(1, bc + 1) if bc % d == 0 and d * nf <= m_cap]
    if not divs:
        divs = [1]
    multi = [d for d in divs if bc // d >= 2]
    return max(multi) if multi else max(divs)


def melspec_pallas(sig3, dft, melT):
    bc, fp3, _ = sig3.shape
    nf = fp3 - 3
    bct = _choose_bct(bc, nf)
    grid = (bc // bct,)
    return pl.pallas_call(
        _melspec_kernel,
        out_shape=jax.ShapeDtypeStruct((bc, nf, N_MEL_PAD), jnp.float32),
        grid=grid,
        in_specs=[
            pl.BlockSpec((bct, fp3, HOP), lambda i: (i, 0, 0)),
            pl.BlockSpec((N_FFT, 2 * N_FREQ_PAD), lambda i: (0, 0)),
            pl.BlockSpec((N_FREQ_PAD, N_MEL_PAD), lambda i: (0, 0)),
        ],
        out_specs=pl.BlockSpec((bct, nf, N_MEL_PAD), lambda i: (i, 0, 0)),
        compiler_params=pltpu.CompilerParams(
            dimension_semantics=("parallel",),
            vmem_limit_bytes=32 * 1024 * 1024),
    )(sig3, dft, melT)


# -------------------- fused hifi + upsample + conv_post + mask ---------------


def _fused_post_kernel(mel_ref, mix_ref, whifi_ref, bhifi_ref, wstack_ref,
                       bpost_ref, out_ref, h3_scr):
    # mel_ref : (1, F, 128) log-mel (padded lanes), resident across the tile axis.
    # mix_ref : (1, 1, nF, 256) mixture tile, out_ref: (1, 2, nF, 256) separated tile.
    F = mel_ref.shape[1]
    nF = out_ref.shape[2]
    j = pl.program_id(1)

    @pl.when(j == 0)
    def _():
        # Synthetic HiFi generator (1x1 conv 80->8 + tanh) at frame rate: ONCE per batch item.
        mel = mel_ref[0].astype(jnp.bfloat16)                                   # (F, 128)
        h = jnp.tanh(jnp.dot(mel, whifi_ref[...],
                             preferred_element_type=jnp.float32) + bhifi_ref[...])  # (F, 8)
        zero = jnp.zeros((1, 8), jnp.float32)
        hp = jnp.concatenate([zero, h, zero], axis=0)                           # (F+2, 8)
        # Frame-context stack [h[f-1] | h[f] | h[f+1]] so every tile is one aligned slice.
        h3_scr[...] = jnp.concatenate([hp[0:F], hp[1:F + 1], hp[2:F + 2]], axis=-1)  # (F, 24)

    f0 = j * nF
    if nF % 8 == 0:
        f0 = pl.multiple_of(f0, 8)
    hcat = h3_scr[pl.ds(f0, nF), :].astype(jnp.bfloat16)                        # (nF, 24)

    # conv_post (k=7, pad=3) on the x256 nearest-upsampled h, done implicitly at frame rate:
    # per within-frame offset r the 7 taps collapse onto (f-1, f, f+1) weight sums, stacked
    # host-side into one (24, 512) matrix -> a single MXU pass per tile.
    lg = (jnp.dot(hcat, wstack_ref[...], preferred_element_type=jnp.float32)
          + bpost_ref[...])                                                     # (nF, 512)
    l0 = lg[:, :HOP]
    l1 = lg[:, HOP:]

    # exact softmax over the 2 channels == sigmoid of the logit difference.
    m0 = 1.0 / (1.0 + jnp.exp(l1 - l0))
    m1 = 1.0 - m0

    mix = mix_ref[0, 0]                                                         # (nF, 256)
    out_ref[0, 0] = mix * m0
    out_ref[0, 1] = mix * m1


def _choose_tile_frames(F, cap=256):
    if F <= cap:
        return F
    for d in range(cap, 7, -1):
        if F % d == 0 and d % 8 == 0:
            return d
    return F  # single tile fallback


def fused_post_pallas(mel_in, mix4, whifi_t, bhifi, wstack, bpost):
    B, F, _ = mel_in.shape
    nF = _choose_tile_frames(F)
    n_tiles = F // nF
    return pl.pallas_call(
        _fused_post_kernel,
        out_shape=jax.ShapeDtypeStruct((B, 2, F, HOP), jnp.float32),
        grid=(B, n_tiles),
        in_specs=[
            pl.BlockSpec((1, F, N_MEL_PAD), lambda b, j: (b, 0, 0)),
            pl.BlockSpec((1, 1, nF, HOP), lambda b, j: (b, 0, j, 0)),
            pl.BlockSpec((N_MEL_PAD, 8), lambda b, j: (0, 0)),
            pl.BlockSpec((1, 8), lambda b, j: (0, 0)),
            pl.BlockSpec((24, 2 * HOP), lambda b, j: (0, 0)),
            pl.BlockSpec((1, 2 * HOP), lambda b, j: (0, 0)),
        ],
        out_specs=pl.BlockSpec((1, 2, nF, HOP), lambda b, j: (b, 0, j, 0)),
        scratch_shapes=[pltpu.VMEM((F, 24), jnp.float32)],
        compiler_params=pltpu.CompilerParams(
            dimension_semantics=("parallel", "arbitrary"),
            vmem_limit_bytes=32 * 1024 * 1024),
    )(mel_in, mix4, whifi_t, bhifi, wstack, bpost)


# ----------------------------- forward (glue) --------------------------------


def get_melspec_fm(x, mel_consts):
    """x: (B, C, T) -> (B*C, F, 128) log-mel with frames on sublanes, padded mel on lanes."""
    B, C, T = x.shape
    assert T % HOP == 0 and T > 2 * PAD
    sig = x.reshape(B * C, T)
    padded = jnp.pad(sig, ((0, 0), (PAD, PAD)), mode="reflect")   # (B*C, T + 768)
    F = T // HOP
    sig3 = padded.reshape(B * C, F + 3, HOP)                       # contiguous, free
    return melspec_pallas(sig3, *mel_consts)


def forward(mix_audio, fused_weights, mel_consts):
    B, C, T = mix_audio.shape
    assert C == 1
    F = T // HOP

    mel_in = get_melspec_fm(mix_audio, mel_consts)                 # (B, F, 128)
    mix4 = mix_audio.reshape(B, 1, F, HOP)                         # free reshape

    sep4 = fused_post_pallas(mel_in, mix4, *fused_weights)         # (B, 2, F, 256)
    sep = sep4.reshape(B, 2, T)                                    # free reshape

    fake_fm = get_melspec_fm(sep, mel_consts)                      # (2B, F, 128)
    # small layout fixup to the PyTorch (B, 2, n_mels, F) convention
    fake_mel = jnp.transpose(fake_fm[:, :, :N_MELS], (0, 2, 1)).reshape(B, 2, N_MELS, F)
    return {"separated_audios": sep, "fake_melspec": fake_mel}


# ----------------------------- params ----------------------------------------


def make_params(key):
    k_hw, k_v, k_b = jax.random.split(key, 3)
    # synthetic HiFi generator params (80 -> 8), init_weights style normal(0, 0.01)
    hifi_w = (jax.random.normal(k_hw, (8, N_MELS)) * 0.01).astype(jnp.float32)
    hifi_b = jnp.zeros((8,), jnp.float32)

    # conv_post with weight_norm: w = g * v / ||v||_(ci,k), g initialized to ||v||
    v = (jax.random.normal(k_v, (2, 8, 7)) * 0.01).astype(jnp.float32)
    vnorm = jnp.sqrt(jnp.sum(v * v, axis=(1, 2), keepdims=True))
    w_eff = vnorm * v / vnorm                                      # (2, 8, 7)
    bound = 1.0 / math.sqrt(8 * 7)
    post_b = jax.random.uniform(k_b, (2,), minval=-bound, maxval=bound).astype(jnp.float32)

    return {"hifi_w": hifi_w, "hifi_b": hifi_b, "post_w": w_eff, "post_b": post_b}


def prepare_fused_weights(params):
    """One-time host-side refactoring of the weights for the fused kernel."""
    whifi = params["hifi_w"]                                        # (8, 80)
    whifi_t = jnp.zeros((N_MEL_PAD, 8), jnp.float32).at[:N_MELS, :].set(whifi.T)
    whifi_t = whifi_t.astype(jnp.bfloat16)                          # padded mel lanes hit zero rows
    bhifi = params["hifi_b"].reshape(1, 8).astype(jnp.float32)

    W = params["post_w"]                                            # (2, 8, 7)
    Wsum = W.sum(-1)                                                # (2, 8)
    # per within-frame offset r (0..255), the 7 taps of the conv on the x256 upsampled h
    # collapse onto weight sums applied to frames f-1 / f / f+1.
    A = jnp.zeros((2, 8, HOP), jnp.float32)                         # -> frame f-1 (r < 3)
    Cm = jnp.zeros((2, 8, HOP), jnp.float32)                        # -> frame f+1 (r > 252)
    for r in range(3):
        A = A.at[:, :, r].set(W[:, :, :3 - r].sum(-1))
    for r in range(HOP - 3, HOP):
        Cm = Cm.at[:, :, r].set(W[:, :, HOP + 3 - r:].sum(-1))
    Bm = Wsum[:, :, None] - A - Cm                                  # -> frame f

    wl = jnp.transpose(A, (1, 0, 2)).reshape(8, 2 * HOP)            # [ci, c*256 + r]
    wm = jnp.transpose(Bm, (1, 0, 2)).reshape(8, 2 * HOP)
    wr = jnp.transpose(Cm, (1, 0, 2)).reshape(8, 2 * HOP)
    wstack = jnp.concatenate([wl, wm, wr], axis=0).astype(jnp.bfloat16)   # (24, 512)

    b = params["post_b"]
    bpost = jnp.concatenate([jnp.full((HOP,), b[0]), jnp.full((HOP,), b[1])]
                            ).reshape(1, 2 * HOP).astype(jnp.float32)
    return (whifi_t, bhifi, wstack, bpost)


# ----------------------------- main -------------------------------------------


if __name__ == "__main__":
    key = jax.random.PRNGKey(0)
    k_in, k_par = jax.random.split(key)

    B, T = 2, 2048  # T multiple of hop=256 and > 2*384 for reflect pad
    mix_audio = (jax.random.normal(k_in, (B, 1, T)) * 0.1).astype(jnp.float32)

    params = make_params(k_par)
    fused_weights = prepare_fused_weights(params)
    mel_consts = make_mel_consts()

    fwd = jax.jit(lambda x: forward(x, fused_weights, mel_consts))
    out = fwd(mix_audio)
    out = jax.tree_util.tree_map(jax.block_until_ready, out)

    assert out["separated_audios"].shape == (B, 2, T)
    assert out["fake_melspec"].shape == (B, 2, N_MELS, T // HOP)
    assert bool(jnp.all(jnp.isfinite(out["separated_audios"])))
    assert bool(jnp.all(jnp.isfinite(out["fake_melspec"])))
    print("KERNEL_OK")
</pallas_src>

<mosaic_0001>
module attributes {stable_mosaic.version = 11 : i64} {
  func.func @_melspec_kernel(%arg0: i32, %arg1: memref<1x11x256xf32, #tpu.memory_space<vmem>>, %arg2: memref<1024x1280xbf16, #tpu.memory_space<vmem>>, %arg3: memref<640x128xbf16, #tpu.memory_space<vmem>>, %arg4: memref<1x8x128xf32, #tpu.memory_space<vmem>>) attributes {dimension_semantics = [#tpu.dimension_semantics<parallel>], iteration_bounds = array<i64: 2>, scalar_prefetch = 0 : i64, scratch_operands = 0 : i64, tpu.core_type = #tpu.core_type<tc>, window_params = [{transform_indices = @transform_0, window_bounds = array<i64: 1, 11, 256>}, {pipeline_mode = #tpu.pipeline_mode<synchronous>, transform_indices = @transform_1, window_bounds = array<i64: 1024, 1280>}, {pipeline_mode = #tpu.pipeline_mode<synchronous>, transform_indices = @transform_2, window_bounds = array<i64: 640, 128>}, {transform_indices = @transform_3, window_bounds = array<i64: 1, 8, 128>}]} {
    %c0 = arith.constant 0 : index
    %c0_0 = arith.constant 0 : index
    %c0_1 = arith.constant 0 : index
    %0 = vector.load %arg1[%c0, %c0_0, %c0_1] : memref<1x11x256xf32, #tpu.memory_space<vmem>>, vector<1x11x256xf32>
    %1 = arith.truncf %0 : vector<1x11x256xf32> to vector<1x11x256xbf16>
    %2 = vector.extract_strided_slice %1 {offsets = [0, 0, 0], sizes = [1, 8, 256], strides = [1, 1, 1]} : vector<1x11x256xbf16> to vector<1x8x256xbf16>
    %3 = vector.shape_cast %2 : vector<1x8x256xbf16> to vector<8x256xbf16>
    %c0_2 = arith.constant 0 : index
    %c0_3 = arith.constant 0 : index
    %4 = vector.load %arg2[%c0_2, %c0_3] : memref<1024x1280xbf16, #tpu.memory_space<vmem>>, vector<256x1280xbf16>
    %cst = arith.constant dense<0.000000e+00> : vector<8x1280xf32>
    %5 = tpu.matmul %3, %4, %cst {dimension_numbers = #tpu.dot_dimension_numbers<[1], [0], [0], [1], [0, 0, 1, 1], [], []>} : vector<8x256xbf16>, vector<256x1280xbf16>, vector<8x1280xf32> -> vector<8x1280xf32>
    %6 = vector.extract_strided_slice %1 {offsets = [0, 1, 0], sizes = [1, 8, 256], strides = [1, 1, 1]} : vector<1x11x256xbf16> to vector<1x8x256xbf16>
    %7 = vector.shape_cast %6 : vector<1x8x256xbf16> to vector<8x256xbf16>
    %c256 = arith.constant 256 : index
    %c0_4 = arith.constant 0 : index
    %8 = vector.load %arg2[%c256, %c0_4] : memref<1024x1280xbf16, #tpu.memory_space<vmem>>, vector<256x1280xbf16>
    %cst_5 = arith.constant dense<0.000000e+00> : vector<8x1280xf32>
    %9 = tpu.matmul %7, %8, %cst_5 {dimension_numbers = #tpu.dot_dimension_numbers<[1], [0], [0], [1], [0, 0, 1, 1], [], []>} : vector<8x256xbf16>, vector<256x1280xbf16>, vector<8x1280xf32> -> vector<8x1280xf32>
    %10 = arith.addf %5, %9 : vector<8x1280xf32>
    %11 = vector.extract_strided_slice %1 {offsets = [0, 2, 0], sizes = [1, 8, 256], strides = [1, 1, 1]} : vector<1x11x256xbf16> to vector<1x8x256xbf16>
    %12 = vector.shape_cast %11 : vector<1x8x256xbf16> to vector<8x256xbf16>
    %c512 = arith.constant 512 : index
    %c0_6 = arith.constant 0 : index
    %13 = vector.load %arg2[%c512, %c0_6] : memref<1024x1280xbf16, #tpu.memory_space<vmem>>, vector<256x1280xbf16>
    %cst_7 = arith.constant dense<0.000000e+00> : vector<8x1280xf32>
    %14 = tpu.matmul %12, %13, %cst_7 {dimension_numbers = #tpu.dot_dimension_numbers<[1], [0], [0], [1], [0, 0, 1, 1], [], []>} : vector<8x256xbf16>, vector<256x1280xbf16>, vector<8x1280xf32> -> vector<8x1280xf32>
    %15 = arith.addf %10, %14 : vector<8x1280xf32>
    %16 = vector.extract_strided_slice %1 {offsets = [0, 3, 0], sizes = [1, 8, 256], strides = [1, 1, 1]} : vector<1x11x256xbf16> to vector<1x8x256xbf16>
    %17 = vector.shape_cast %16 : vector<1x8x256xbf16> to vector<8x256xbf16>
    %c768 = arith.constant 768 : index
    %c0_8 = arith.constant 0 : index
    %18 = vector.load %arg2[%c768, %c0_8] : memref<1024x1280xbf16, #tpu.memory_space<vmem>>, vector<256x1280xbf16>
    %cst_9 = arith.constant dense<0.000000e+00> : vector<8x1280xf32>
    %19 = tpu.matmul %17, %18, %cst_9 {dimension_numbers = #tpu.dot_dimension_numbers<[1], [0], [0], [1], [0, 0, 1, 1], [], []>} : vector<8x256xbf16>, vector<256x1280xbf16>, vector<8x1280xf32> -> vector<8x1280xf32>
    %20 = arith.addf %15, %19 : vector<8x1280xf32>
    %21 = vector.extract_strided_slice %20 {offsets = [0, 0], sizes = [8, 640], strides = [1, 1]} : vector<8x1280xf32> to vector<8x640xf32>
    %22 = vector.extract_strided_slice %20 {offsets = [0, 640], sizes = [8, 640], strides = [1, 1]} : vector<8x1280xf32> to vector<8x640xf32>
    %23 = arith.mulf %21, %21 : vector<8x640xf32>
    %24 = arith.mulf %22, %22 : vector<8x640xf32>
    %25 = arith.addf %23, %24 : vector<8x640xf32>
    %cst_10 = arith.constant 9.99999971E-10 : f32
    %26 = vector.broadcast %cst_10 : f32 to vector<8x640xf32>
    %27 = arith.addf %25, %26 : vector<8x640xf32>
    %28 = math.sqrt %27 : vector<8x640xf32>
    %29 = arith.truncf %28 : vector<8x640xf32> to vector<8x640xbf16>
    %c0_11 = arith.constant 0 : index
    %c0_12 = arith.constant 0 : index
    %30 = vector.load %arg3[%c0_11, %c0_12] : memref<640x128xbf16, #tpu.memory_space<vmem>>, vector<640x128xbf16>
    %cst_13 = arith.constant dense<0.000000e+00> : vector<8x128xf32>
    %31 = tpu.matmul %29, %30, %cst_13 {dimension_numbers = #tpu.dot_dimension_numbers<[1], [0], [0], [1], [0, 0, 1, 1], [], []>} : vector<8x640xbf16>, vector<640x128xbf16>, vector<8x128xf32> -> vector<8x128xf32>
    %cst_14 = arith.constant 9.99999974E-6 : f32
    %32 = vector.broadcast %cst_14 : f32 to vector<8x128xf32>
    %33 = arith.maximumf %31, %32 : vector<8x128xf32>
    %34 = math.log %33 : vector<8x128xf32>
    %35 = vector.shape_cast %34 : vector<8x128xf32> to vector<1x8x128xf32>
    %c0_15 = arith.constant 0 : index
    %c0_16 = arith.constant 0 : index
    %c0_17 = arith.constant 0 : index
    %36 = vector.load %arg4[%c0_15, %c0_16, %c0_17] : memref<1x8x128xf32, #tpu.memory_space<vmem>>, vector<1x8x128xf32>
    tpu.vector_store %arg4[%c0_15, %c0_16, %c0_17], %35 {strides = array<i32>} : memref<1x8x128xf32, #tpu.memory_space<vmem>>, vector<1x8x128xf32>,
    return
  }
  func.func @transform_0(%arg0: i32) -> (i32, i32, i32) {
    %c0_i32 = arith.constant 0 : i32
    %c0_i32_0 = arith.constant 0 : i32
    %c0_i32_1 = arith.constant 0 : i32
    return %arg0, %c0_i32, %c0_i32_0 : i32, i32, i32
  }
  func.func @transform_1(%arg0: i32) -> (i32, i32) {
    %c0_i32 = arith.constant 0 : i32
    %c0_i32_0 = arith.constant 0 : i32
    %c0_i32_1 = arith.constant 0 : i32
    return %c0_i32, %c0_i32_0 : i32, i32
  }
  func.func @transform_2(%arg0: i32) -> (i32, i32) {
    %c0_i32 = arith.constant 0 : i32
    %c0_i32_0 = arith.constant 0 : i32
    %c0_i32_1 = arith.constant 0 : i32
    return %c0_i32, %c0_i32_0 : i32, i32
  }
  func.func @transform_3(%arg0: i32) -> (i32, i32, i32) {
    %c0_i32 = arith.constant 0 : i32
    %c0_i32_0 = arith.constant 0 : i32
    %c0_i32_1 = arith.constant 0 : i32
    return %arg0, %c0_i32, %c0_i32_0 : i32, i32, i32
  }
}

module attributes {stable_mosaic.version = 11 : i64} {
  func.func @_fused_post_kernel(%arg0: i32, %arg1: i32, %arg2: memref<1x8x128xf32, #tpu.memory_space<vmem>>, %arg3: memref<1x1x8x256xf32, #tpu.memory_space<vmem>>, %arg4: memref<128x8xbf16, #tpu.memory_space<vmem>>, %arg5: memref<1x8xf32, #tpu.memory_space<vmem>>, %arg6: memref<24x512xbf16, #tpu.memory_space<vmem>>, %arg7: memref<1x512xf32, #tpu.memory_space<vmem>>, %arg8: memref<1x2x8x256xf32, #tpu.memory_space<vmem>>, %arg9: memref<8x24xf32, #tpu.memory_space<vmem>>) attributes {dimension_semantics = [#tpu.dimension_semantics<parallel>, #tpu.dimension_semantics<arbitrary>], iteration_bounds = array<i64: 2, 1>, scalar_prefetch = 0 : i64, scratch_operands = 1 : i64, tpu.core_type = #tpu.core_type<tc>, window_params = [{transform_indices = @transform_0, window_bounds = array<i64: 1, 8, 128>}, {transform_indices = @transform_1, window_bounds = array<i64: 1, 1, 8, 256>}, {pipeline_mode = #tpu.pipeline_mode<synchronous>, transform_indices = @transform_2, window_bounds = array<i64: 128, 8>}, {pipeline_mode = #tpu.pipeline_mode<synchronous>, transform_indices = @transform_3, window_bounds = array<i64: 1, 8>}, {pipeline_mode = #tpu.pipeline_mode<synchronous>, transform_indices = @transform_4, window_bounds = array<i64: 24, 512>}, {pipeline_mode = #tpu.pipeline_mode<synchronous>, transform_indices = @transform_5, window_bounds = array<i64: 1, 512>}, {transform_indices = @transform_6, window_bounds = array<i64: 1, 2, 8, 256>}]} {
    %c0_i32 = arith.constant 0 : i32
    %0 = arith.cmpi eq, %arg1, %c0_i32 : i32
    %1 = arith.extui %0 : i1 to i32
    %c0_i32_0 = arith.constant 0 : i32
    %2 = arith.cmpi ne, %1, %c0_i32_0 : i32
    scf.if %2 {
      %c0_19 = arith.constant 0 : index
      %c0_20 = arith.constant 0 : index
      %c0_21 = arith.constant 0 : index
      %33 = vector.load %arg2[%c0_19, %c0_20, %c0_21] : memref<1x8x128xf32, #tpu.memory_space<vmem>>, vector<1x8x128xf32>
      %34 = vector.shape_cast %33 : vector<1x8x128xf32> to vector<8x128xf32>
      %35 = arith.truncf %34 : vector<8x128xf32> to vector<8x128xbf16>
      %c0_22 = arith.constant 0 : index
      %c0_23 = arith.constant 0 : index
      %36 = vector.load %arg4[%c0_22, %c0_23] : memref<128x8xbf16, #tpu.memory_space<vmem>>, vector<128x8xbf16>
      %cst_24 = arith.constant dense<0.000000e+00> : vector<8x8xf32>
      %37 = tpu.matmul %35, %36, %cst_24 {dimension_numbers = #tpu.dot_dimension_numbers<[1], [0], [0], [1], [0, 0, 1, 1], [], []>} : vector<8x128xbf16>, vector<128x8xbf16>, vector<8x8xf32> -> vector<8x8xf32>
      %c0_25 = arith.constant 0 : index
      %c0_26 = arith.constant 0 : index
      %38 = vector.load %arg5[%c0_25, %c0_26] : memref<1x8xf32, #tpu.memory_space<vmem>>, vector<1x8xf32>
      %39 = vector.broadcast %38 : vector<1x8xf32> to vector<8x8xf32>
      %40 = arith.addf %37, %39 : vector<8x8xf32>
      %41 = math.tanh %40 : vector<8x8xf32>
      %cst_27 = arith.constant 0.000000e+00 : f32
      %42 = vector.broadcast %cst_27 : f32 to vector<1x8xf32>
      %43 = tpu.concatenate %42, %41, %42 in 0 : vector<1x8xf32>, vector<8x8xf32>, vector<1x8xf32> -> vector<10x8xf32>
      %44 = vector.extract_strided_slice %43 {offsets = [0, 0], sizes = [8, 8], strides = [1, 1]} : vector<10x8xf32> to vector<8x8xf32>
      %45 = vector.extract_strided_slice %43 {offsets = [1, 0], sizes = [8, 8], strides = [1, 1]} : vector<10x8xf32> to vector<8x8xf32>
      %46 = vector.extract_strided_slice %43 {offsets = [2, 0], sizes = [8, 8], strides = [1, 1]} : vector<10x8xf32> to vector<8x8xf32>
      %47 = tpu.concatenate %44, %45, %46 in 1 : vector<8x8xf32>, vector<8x8xf32>, vector<8x8xf32> -> vector<8x24xf32>
      %c0_28 = arith.constant 0 : index
      %c0_29 = arith.constant 0 : index
      %48 = vector.load %arg9[%c0_28, %c0_29] : memref<8x24xf32, #tpu.memory_space<vmem>>, vector<8x24xf32>
      tpu.vector_store %arg9[%c0_28, %c0_29], %47 {strides = array<i32>} : memref<8x24xf32, #tpu.memory_space<vmem>>, vector<8x24xf32>,
    } else {
    }
    %c8_i32 = arith.constant 8 : i32
    %3 = arith.muli %arg1, %c8_i32 : i32
    %4 = tpu.assume_multiple %3, 8 : i32
    %5 = arith.index_cast %4 : i32 to index
    %c0 = arith.constant 0 : index
    %6 = vector.load %arg9[%5, %c0] : memref<8x24xf32, #tpu.memory_space<vmem>>, vector<8x24xf32>
    %7 = arith.truncf %6 : vector<8x24xf32> to vector<8x24xbf16>
    %c0_1 = arith.constant 0 : index
    %c0_2 = arith.constant 0 : index
    %8 = vector.load %arg6[%c0_1, %c0_2] : memref<24x512xbf16, #tpu.memory_space<vmem>>, vector<24x512xbf16>
    %cst = arith.constant dense<0.000000e+00> : vector<8x512xf32>
    %9 = tpu.matmul %7, %8, %cst {dimension_numbers = #tpu.dot_dimension_numbers<[1], [0], [0], [1], [0, 0, 1, 1], [], []>} : vector<8x24xbf16>, vector<24x512xbf16>, vector<8x512xf32> -> vector<8x512xf32>
    %c0_3 = arith.constant 0 : index
    %c0_4 = arith.constant 0 : index
    %10 = vector.load %arg7[%c0_3, %c0_4] : memref<1x512xf32, #tpu.memory_space<vmem>>, vector<1x512xf32>
    %11 = vector.broadcast %10 : vector<1x512xf32> to vector<8x512xf32>
    %12 = arith.addf %9, %11 : vector<8x512xf32>
    %13 = vector.extract_strided_slice %12 {offsets = [0, 0], sizes = [8, 256], strides = [1, 1]} : vector<8x512xf32> to vector<8x256xf32>
    %14 = vector.extract_strided_slice %12 {offsets = [0, 256], sizes = [8, 256], strides = [1, 1]} : vector<8x512xf32> to vector<8x256xf32>
    %15 = arith.subf %14, %13 : vector<8x256xf32>
    %16 = math.exp %15 : vector<8x256xf32>
    %cst_5 = arith.constant 1.000000e+00 : f32
    %17 = vector.broadcast %cst_5 : f32 to vector<8x256xf32>
    %18 = arith.addf %17, %16 : vector<8x256xf32>
    %cst_6 = arith.constant 1.000000e+00 : f32
    %19 = vector.broadcast %cst_6 : f32 to vector<8x256xf32>
    %20 = arith.divf %19, %18 : vector<8x256xf32>
    %cst_7 = arith.constant 1.000000e+00 : f32
    %21 = vector.broadcast %cst_7 : f32 to vector<8x256xf32>
    %22 = arith.subf %21, %20 : vector<8x256xf32>
    %c0_8 = arith.constant 0 : index
    %c0_9 = arith.constant 0 : index
    %c0_10 = arith.constant 0 : index
    %c0_11 = arith.constant 0 : index
    %23 = vector.load %arg3[%c0_8, %c0_9, %c0_10, %c0_11] : memref<1x1x8x256xf32, #tpu.memory_space<vmem>>, vector<1x1x8x256xf32>
    %24 = vector.shape_cast %23 : vector<1x1x8x256xf32> to vector<8x256xf32>
    %25 = arith.mulf %24, %20 : vector<8x256xf32>
    %c0_12 = arith.constant 0 : index
    %c0_13 = arith.constant 0 : index
    %c0_14 = arith.constant 0 : index
    %c0_15 = arith.constant 0 : index
    %26 = vector.load %arg8[%c0_12, %c0_13, %c0_14, %c0_15] : memref<1x2x8x256xf32, #tpu.memory_space<vmem>>, vector<1x1x8x256xf32>
    %27 = vector.shape_cast %26 : vector<1x1x8x256xf32> to vector<8x256xf32>
    %28 = vector.shape_cast %25 : vector<8x256xf32> to vector<1x1x8x256xf32>
    tpu.vector_store %arg8[%c0_12, %c0_13, %c0_14, %c0_15], %28 {strides = array<i32>} : memref<1x2x8x256xf32, #tpu.memory_space<vmem>>, vector<1x1x8x256xf32>,
    %29 = arith.mulf %24, %22 : vector<8x256xf32>
    %c0_16 = arith.constant 0 : index
    %c1 = arith.constant 1 : index
    %c0_17 = arith.constant 0 : index
    %c0_18 = arith.constant 0 : index
    %30 = vector.load %arg8[%c0_16, %c1, %c0_17, %c0_18] : memref<1x2x8x256xf32, #tpu.memory_space<vmem>>, vector<1x1x8x256xf32>
    %31 = vector.shape_cast %30 : vector<1x1x8x256xf32> to vector<8x256xf32>
    %32 = vector.shape_cast %29 : vector<8x256xf32> to vector<1x1x8x256xf32>
    tpu.vector_store %arg8[%c0_16, %c1, %c0_17, %c0_18], %32 {strides = array<i32>} : memref<1x2x8x256xf32, #tpu.memory_space<vmem>>, vector<1x1x8x256xf32>,
    return
  }
  func.func @transform_0(%arg0: i32, %arg1: i32) -> (i32, i32, i32) {
    %c0_i32 = arith.constant 0 : i32
    %c0_i32_0 = arith.constant 0 : i32
    %c0_i32_1 = arith.constant 0 : i32
    return %arg0, %c0_i32, %c0_i32_0 : i32, i32, i32
  }
  func.func @transform_1(%arg0: i32, %arg1: i32) -> (i32, i32, i32, i32) {
    %c0_i32 = arith.constant 0 : i32
    %c0_i32_0 = arith.constant 0 : i32
    %c0_i32_1 = arith.constant 0 : i32
    return %arg0, %c0_i32, %arg1, %c0_i32_0 : i32, i32, i32, i32
  }
  func.func @transform_2(%arg0: i32, %arg1: i32) -> (i32, i32) {
    %c0_i32 = arith.constant 0 : i32
    %c0_i32_0 = arith.constant 0 : i32
    %c0_i32_1 = arith.constant 0 : i32
    return %c0_i32, %c0_i32_0 : i32, i32
  }
  func.func @transform_3(%arg0: i32, %arg1: i32) -> (i32, i32) {
    %c0_i32 = arith.constant 0 : i32
    %c0_i32_0 = arith.constant 0 : i32
    %c0_i32_1 = arith.constant 0 : i32
    return %c0_i32, %c0_i32_0 : i32, i32
  }
  func.func @transform_4(%arg0: i32, %arg1: i32) -> (i32, i32) {
    %c0_i32 = arith.constant 0 : i32
    %c0_i32_0 = arith.constant 0 : i32
    %c0_i32_1 = arith.constant 0 : i32
    return %c0_i32, %c0_i32_0 : i32, i32
  }
  func.func @transform_5(%arg0: i32, %arg1: i32) -> (i32, i32) {
    %c0_i32 = arith.constant 0 : i32
    %c0_i32_0 = arith.constant 0 : i32
    %c0_i32_1 = arith.constant 0 : i32
    return %c0_i32, %c0_i32_0 : i32, i32
  }
  func.func @transform_6(%arg0: i32, %arg1: i32) -> (i32, i32, i32, i32) {
    %c0_i32 = arith.constant 0 : i32
    %c0_i32_0 = arith.constant 0 : i32
    %c0_i32_1 = arith.constant 0 : i32
    return %arg0, %c0_i32, %arg1, %c0_i32_0 : i32, i32, i32, i32
  }
}

module attributes {stable_mosaic.version = 11 : i64} {
  func.func @_melspec_kernel(%arg0: i32, %arg1: memref<2x11x256xf32, #tpu.memory_space<vmem>>, %arg2: memref<1024x1280xbf16, #tpu.memory_space<vmem>>, %arg3: memref<640x128xbf16, #tpu.memory_space<vmem>>, %arg4: memref<2x8x128xf32, #tpu.memory_space<vmem>>) attributes {dimension_semantics = [#tpu.dimension_semantics<parallel>], iteration_bounds = array<i64: 2>, scalar_prefetch = 0 : i64, scratch_operands = 0 : i64, tpu.core_type = #tpu.core_type<tc>, window_params = [{transform_indices = @transform_0, window_bounds = array<i64: 2, 11, 256>}, {pipeline_mode = #tpu.pipeline_mode<synchronous>, transform_indices = @transform_1, window_bounds = array<i64: 1024, 1280>}, {pipeline_mode = #tpu.pipeline_mode<synchronous>, transform_indices = @transform_2, window_bounds = array<i64: 640, 128>}, {transform_indices = @transform_3, window_bounds = array<i64: 2, 8, 128>}]} {
    %c0 = arith.constant 0 : index
    %c0_0 = arith.constant 0 : index
    %c0_1 = arith.constant 0 : index
    %0 = vector.load %arg1[%c0, %c0_0, %c0_1] : memref<2x11x256xf32, #tpu.memory_space<vmem>>, vector<2x11x256xf32>
    %1 = arith.truncf %0 : vector<2x11x256xf32> to vector<2x11x256xbf16>
    %2 = vector.extract_strided_slice %1 {offsets = [0, 0, 0], sizes = [2, 8, 256], strides = [1, 1, 1]} : vector<2x11x256xbf16> to vector<2x8x256xbf16>
    %3 = vector.shape_cast %2 : vector<2x8x256xbf16> to vector<16x256xbf16>
    %c0_2 = arith.constant 0 : index
    %c0_3 = arith.constant 0 : index
    %4 = vector.load %arg2[%c0_2, %c0_3] : memref<1024x1280xbf16, #tpu.memory_space<vmem>>, vector<256x1280xbf16>
    %cst = arith.constant dense<0.000000e+00> : vector<16x1280xf32>
    %5 = tpu.matmul %3, %4, %cst {dimension_numbers = #tpu.dot_dimension_numbers<[1], [0], [0], [1], [0, 0, 1, 1], [], []>} : vector<16x256xbf16>, vector<256x1280xbf16>, vector<16x1280xf32> -> vector<16x1280xf32>
    %6 = vector.extract_strided_slice %1 {offsets = [0, 1, 0], sizes = [2, 8, 256], strides = [1, 1, 1]} : vector<2x11x256xbf16> to vector<2x8x256xbf16>
    %7 = vector.shape_cast %6 : vector<2x8x256xbf16> to vector<16x256xbf16>
    %c256 = arith.constant 256 : index
    %c0_4 = arith.constant 0 : index
    %8 = vector.load %arg2[%c256, %c0_4] : memref<1024x1280xbf16, #tpu.memory_space<vmem>>, vector<256x1280xbf16>
    %cst_5 = arith.constant dense<0.000000e+00> : vector<16x1280xf32>
    %9 = tpu.matmul %7, %8, %cst_5 {dimension_numbers = #tpu.dot_dimension_numbers<[1], [0], [0], [1], [0, 0, 1, 1], [], []>} : vector<16x256xbf16>, vector<256x1280xbf16>, vector<16x1280xf32> -> vector<16x1280xf32>
    %10 = arith.addf %5, %9 : vector<16x1280xf32>
    %11 = vector.extract_strided_slice %1 {offsets = [0, 2, 0], sizes = [2, 8, 256], strides = [1, 1, 1]} : vector<2x11x256xbf16> to vector<2x8x256xbf16>
    %12 = vector.shape_cast %11 : vector<2x8x256xbf16> to vector<16x256xbf16>
    %c512 = arith.constant 512 : index
    %c0_6 = arith.constant 0 : index
    %13 = vector.load %arg2[%c512, %c0_6] : memref<1024x1280xbf16, #tpu.memory_space<vmem>>, vector<256x1280xbf16>
    %cst_7 = arith.constant dense<0.000000e+00> : vector<16x1280xf32>
    %14 = tpu.matmul %12, %13, %cst_7 {dimension_numbers = #tpu.dot_dimension_numbers<[1], [0], [0], [1], [0, 0, 1, 1], [], []>} : vector<16x256xbf16>, vector<256x1280xbf16>, vector<16x1280xf32> -> vector<16x1280xf32>
    %15 = arith.addf %10, %14 : vector<16x1280xf32>
    %16 = vector.extract_strided_slice %1 {offsets = [0, 3, 0], sizes = [2, 8, 256], strides = [1, 1, 1]} : vector<2x11x256xbf16> to vector<2x8x256xbf16>
    %17 = vector.shape_cast %16 : vector<2x8x256xbf16> to vector<16x256xbf16>
    %c768 = arith.constant 768 : index
    %c0_8 = arith.constant 0 : index
    %18 = vector.load %arg2[%c768, %c0_8] : memref<1024x1280xbf16, #tpu.memory_space<vmem>>, vector<256x1280xbf16>
    %cst_9 = arith.constant dense<0.000000e+00> : vector<16x1280xf32>
    %19 = tpu.matmul %17, %18, %cst_9 {dimension_numbers = #tpu.dot_dimension_numbers<[1], [0], [0], [1], [0, 0, 1, 1], [], []>} : vector<16x256xbf16>, vector<256x1280xbf16>, vector<16x1280xf32> -> vector<16x1280xf32>
    %20 = arith.addf %15, %19 : vector<16x1280xf32>
    %21 = vector.extract_strided_slice %20 {offsets = [0, 0], sizes = [16, 640], strides = [1, 1]} : vector<16x1280xf32> to vector<16x640xf32>
    %22 = vector.extract_strided_slice %20 {offsets = [0, 640], sizes = [16, 640], strides = [1, 1]} : vector<16x1280xf32> to vector<16x640xf32>
    %23 = arith.mulf %21, %21 : vector<16x640xf32>
    %24 = arith.mulf %22, %22 : vector<16x640xf32>
    %25 = arith.addf %23, %24 : vector<16x640xf32>
    %cst_10 = arith.constant 9.99999971E-10 : f32
    %26 = vector.broadcast %cst_10 : f32 to vector<16x640xf32>
    %27 = arith.addf %25, %26 : vector<16x640xf32>
    %28 = math.sqrt %27 : vector<16x640xf32>
    %29 = arith.truncf %28 : vector<16x640xf32> to vector<16x640xbf16>
    %c0_11 = arith.constant 0 : index
    %c0_12 = arith.constant 0 : index
    %30 = vector.load %arg3[%c0_11, %c0_12] : memref<640x128xbf16, #tpu.memory_space<vmem>>, vector<640x128xbf16>
    %cst_13 = arith.constant dense<0.000000e+00> : vector<16x128xf32>
    %31 = tpu.matmul %29, %30, %cst_13 {dimension_numbers = #tpu.dot_dimension_numbers<[1], [0], [0], [1], [0, 0, 1, 1], [], []>} : vector<16x640xbf16>, vector<640x128xbf16>, vector<16x128xf32> -> vector<16x128xf32>
    %cst_14 = arith.constant 9.99999974E-6 : f32
    %32 = vector.broadcast %cst_14 : f32 to vector<16x128xf32>
    %33 = arith.maximumf %31, %32 : vector<16x128xf32>
    %34 = math.log %33 : vector<16x128xf32>
    %35 = vector.shape_cast %34 : vector<16x128xf32> to vector<2x8x128xf32>
    %c0_15 = arith.constant 0 : index
    %c0_16 = arith.constant 0 : index
    %c0_17 = arith.constant 0 : index
    %36 = vector.load %arg4[%c0_15, %c0_16, %c0_17] : memref<2x8x128xf32, #tpu.memory_space<vmem>>, vector<2x8x128xf32>
    tpu.vector_store %arg4[%c0_15, %c0_16, %c0_17], %35 {strides = array<i32>} : memref<2x8x128xf32, #tpu.memory_space<vmem>>, vector<2x8x128xf32>,
    return
  }
  func.func @transform_0(%arg0: i32) -> (i32, i32, i32) {
    %c0_i32 = arith.constant 0 : i32
    %c0_i32_0 = arith.constant 0 : i32
    %c0_i32_1 = arith.constant 0 : i32
    return %arg0, %c0_i32, %c0_i32_0 : i32, i32, i32
  }
  func.func @transform_1(%arg0: i32) -> (i32, i32) {
    %c0_i32 = arith.constant 0 : i32
    %c0_i32_0 = arith.constant 0 : i32
    %c0_i32_1 = arith.constant 0 : i32
    return %c0_i32, %c0_i32_0 : i32, i32
  }
  func.func @transform_2(%arg0: i32) -> (i32, i32) {
    %c0_i32 = arith.constant 0 : i32
    %c0_i32_0 = arith.constant 0 : i32
    %c0_i32_1 = arith.constant 0 : i32
    return %c0_i32, %c0_i32_0 : i32, i32
  }
  func.func @transform_3(%arg0: i32) -> (i32, i32, i32) {
    %c0_i32 = arith.constant 0 : i32
    %c0_i32_0 = arith.constant 0 : i32
    %c0_i32_1 = arith.constant 0 : i32
    return %arg0, %c0_i32, %c0_i32_0 : i32, i32, i32
  }
}

</mosaic_0001>

<llo_original>
// kernel: _lambda_.4
$region0: #{_lambda_.4}
  #allocation0 [shape = 'u32[]', space=smem, size = 0x4, offset = 0x4, fixed_abs, tag = 'smem constant byte address 0x4 - core index']
  #allocation1 [shape = 'u32[144,128]{1,0:T(1,128)}', space=vmem, size = 0x12000, scoped, tag = 'internal scratch']
  #allocation2 [shape = 'f32[8,24]{1,0:T(8,128)}', space=vmem, size = 0x1000, scoped, tag = 'scratch operand']
  %s0 = inlined_call_operand.vmem [shape: f32[2,8,128], index: 0, kind: input, shape index: {}]
  %s1 = inlined_call_operand.vmem [shape: f32[2,1,8,256], index: 1, kind: input, shape index: {}]
  %s2 = inlined_call_operand.vmem [shape: bf16[128,8], index: 2, kind: input, shape index: {}]
  %s3 = inlined_call_operand.vmem [shape: f32[1,8], index: 3, kind: input, shape index: {}]
  %s4 = inlined_call_operand.vmem [shape: bf16[24,512], index: 4, kind: input, shape index: {}]
  %s5 = inlined_call_operand.vmem [shape: f32[1,512], index: 5, kind: input, shape index: {}]
  %s6 = inlined_call_operand.vmem [shape: f32[2,2,8,256], index: 6, kind: output, shape index: {}]
  %s7 = sld [smem:[#allocation0]]
  $region61: #{_lambda_.4} parent=0
    _
  %s9 = ssub.s32 1, %s7
  %s10 = scalar_select 0, %s9, %s7
  loop: start=0, step=1, limit=4
  $region2: #{_lambda_.4} parent=0 // loop_pre_header
    _
  $region3: #{_lambda_.4} parent=0 // loop_header
    %s12 = sphi 0, %s16
    %p13 = scmp.ge.s32.totalorder %s12, 4
    %s19 = sphi 0, %s31
    %s20 = sphi 0, %s27
    %s21 = sphi 0, %s19
    %s22 = sphi 0, %s20
    %s23 = sphi 0, %s21
    %s24 = sphi 0, %s22
    %s34 = sphi 0, %s36
    %s37 = sphi 0, %s34
    %s38 = sphi 0, %s37
    %s54 = sphi 0, %s38
    %s62 = sphi 0, %s64
    %s65 = sphi 0, %s62
    %s66 = sphi 0, %s65
    %s82 = sphi 0, %s66
    %s86 = sphi 0, %s86
    %s88 = sphi 0, %s86
    %s89 = sphi 0, %s88
    %s103 = sphi 0, %s89
    %s107 = sphi 0, %s107
    %s109 = sphi 0, %s107
    %s110 = sphi 0, %s109
    %s124 = sphi 0, %s110
    %s128 = sphi 0, %s128
    %s130 = sphi 0, %s128
    %s131 = sphi 0, %s130
    %s145 = sphi 0, %s131
    %s149 = sphi 0, %s149
    %s151 = sphi 0, %s149
    %s152 = sphi 0, %s151
    %s166 = sphi 0, %s152
    %s174 = sphi 0, %s176
    %s177 = sphi 0, %s174
    %s178 = sphi 0, %s177
    %s194 = sphi 0, %s178
  $region4: #{_lambda_.4} parent=0 // loop_header_branch
    %15 = sbr.rel (%p13) target = $region8
  $region5: #{_lambda_.4} parent=0 // loop_body
    %s17 = ssub.s32 %s12, 1
    %s18 = ssub.s32 %s12, 2
    %s25 = sadd.s32 1, %s20
    %p26 = scmp.ge.s32.totalorder %s25, 1
    %s27 = scalar_select %p26, 0, %s25
    %s28 = sadd.s32 1, %s19
    %s29 = scalar_select %p26, %s28, %s19
    %p30 = scmp.ge.s32.totalorder %s29, 2
    %s31 = scalar_select %p30, 0, %s29
    %s32 = ssub.s32 %s19, %s31
    %p33 = scmp.eq.s32.totalorder %s32, 0
    %s35 = sadd.s32 %s34, 1
    %s36 = scalar_select %p33, %s34, %s35
    %p39 = pneg %p33
    %p40 = scmp.eq.s32.totalorder %s12, 1
    %p41 = por %p39, %p40
    %p42 = scmp.ne.s32.totalorder %s34, %s37
    %p43 = scmp.eq.s32.totalorder %s12, 0
    %p44 = por %p42, %p43
    %p45 = scmp.ne.s32.totalorder %s34, %s37
    %p46 = scmp.eq.s32.totalorder %s17, 1
    %p47 = por %p45, %p46
    %p48 = scmp.ne.s32.totalorder %s37, %s38
    %p49 = scmp.eq.s32.totalorder %s17, 0
    %p50 = por %p48, %p49
    %p51 = scmp.ne.s32.totalorder %s37, %s38
    %p52 = scmp.eq.s32.totalorder %s18, 1
    %p53 = por %p51, %p52
    %p55 = scmp.ne.s32.totalorder %s38, %s54
    %p56 = scmp.eq.s32.totalorder %s18, 0
    %p57 = por %p55, %p56
    %s58 = ssub.s32 %s19, %s31
    %s59 = ssub.s32 %s20, %s27
    %s60 = sor.u32 %s58, %s59
    %p61 = scmp.eq.s32.totalorder %s60, 0
    %s63 = sadd.s32 %s62, 1
    %s64 = scalar_select %p61, %s62, %s63
    %p67 = pneg %p61
    %p68 = scmp.eq.s32.totalorder %s12, 1
    %p69 = por %p67, %p68
    %p70 = scmp.ne.s32.totalorder %s62, %s65
    %p71 = scmp.eq.s32.totalorder %s12, 0
    %p72 = por %p70, %p71
    %p73 = scmp.ne.s32.totalorder %s62, %s65
    %p74 = scmp.eq.s32.totalorder %s17, 1
    %p75 = por %p73, %p74
    %p76 = scmp.ne.s32.totalorder %s65, %s66
    %p77 = scmp.eq.s32.totalorder %s17, 0
    %p78 = por %p76, %p77
    %p79 = scmp.ne.s32.totalorder %s65, %s66
    %p80 = scmp.eq.s32.totalorder %s18, 1
    %p81 = por %p79, %p80
    %p83 = scmp.ne.s32.totalorder %s66, %s82
    %p84 = scmp.eq.s32.totalorder %s18, 0
    %p85 = por %p83, %p84
    %s87 = sadd.s32 %s86, 1
    %p90 = scmp.eq.s32.totalorder %s12, 1
    %p91 = scmp.ne.s32.totalorder %s86, %s88
    %p92 = scmp.eq.s32.totalorder %s12, 0
    %p93 = por %p91, %p92
    %p94 = scmp.ne.s32.totalorder %s86, %s88
    %p95 = scmp.eq.s32.totalorder %s17, 1
    %p96 = por %p94, %p95
    %p97 = scmp.ne.s32.totalorder %s88, %s89
    %p98 = scmp.eq.s32.totalorder %s17, 0
    %p99 = por %p97, %p98
    %p100 = scmp.ne.s32.totalorder %s88, %s89
    %p101 = scmp.eq.s32.totalorder %s18, 1
    %p102 = por %p100, %p101
    %p104 = scmp.ne.s32.totalorder %s89, %s103
    %p105 = scmp.eq.s32.totalorder %s18, 0
    %p106 = por %p104, %p105
    %s108 = sadd.s32 %s107, 1
    %p111 = scmp.eq.s32.totalorder %s12, 1
    %p112 = scmp.ne.s32.totalorder %s107, %s109
    %p113 = scmp.eq.s32.totalorder %s12, 0
    %p114 = por %p112, %p113
    %p115 = scmp.ne.s32.totalorder %s107, %s109
    %p116 = scmp.eq.s32.totalorder %s17, 1
    %p117 = por %p115, %p116
    %p118 = scmp.ne.s32.totalorder %s109, %s110
    %p119 = scmp.eq.s32.totalorder %s17, 0
    %p120 = por %p118, %p119
    %p121 = scmp.ne.s32.totalorder %s109, %s110
    %p122 = scmp.eq.s32.totalorder %s18, 1
    %p123 = por %p121, %p122
    %p125 = scmp.ne.s32.totalorder %s110, %s124
    %p126 = scmp.eq.s32.totalorder %s18, 0
    %p127 = por %p125, %p126
    %s129 = sadd.s32 %s128, 1
    %p132 = scmp.eq.s32.totalorder %s12, 1
    %p133 = scmp.ne.s32.totalorder %s128, %s130
    %p134 = scmp.eq.s32.totalorder %s12, 0
    %p135 = por %p133, %p134
    %p136 = scmp.ne.s32.totalorder %s128, %s130
    %p137 = scmp.eq.s32.totalorder %s17, 1
    %p138 = por %p136, %p137
    %p139 = scmp.ne.s32.totalorder %s130, %s131
    %p140 = scmp.eq.s32.totalorder %s17, 0
    %p141 = por %p139, %p140
    %p142 = scmp.ne.s32.totalorder %s130, %s131
    %p143 = scmp.eq.s32.totalorder %s18, 1
    %p144 = por %p142, %p143
    %p146 = scmp.ne.s32.totalorder %s131, %s145
    %p147 = scmp.eq.s32.totalorder %s18, 0
    %p148 = por %p146, %p147
    %s150 = sadd.s32 %s149, 1
    %p153 = scmp.eq.s32.totalorder %s12, 1
    %p154 = scmp.ne.s32.totalorder %s149, %s151
    %p155 = scmp.eq.s32.totalorder %s12, 0
    %p156 = por %p154, %p155
    %p157 = scmp.ne.s32.totalorder %s149, %s151
    %p158 = scmp.eq.s32.totalorder %s17, 1
    %p159 = por %p157, %p158
    %p160 = scmp.ne.s32.totalorder %s151, %s152
    %p161 = scmp.eq.s32.totalorder %s17, 0
    %p162 = por %p160, %p161
    %p163 = scmp.ne.s32.totalorder %s151, %s152
    %p164 = scmp.eq.s32.totalorder %s18, 1
    %p165 = por %p163, %p164
    %p167 = scmp.ne.s32.totalorder %s152, %s166
    %p168 = scmp.eq.s32.totalorder %s18, 0
    %p169 = por %p167, %p168
    %s170 = ssub.s32 %s19, %s31
    %s171 = ssub.s32 %s20, %s27
    %s172 = sor.u32 %s170, %s171
    %p173 = scmp.eq.s32.totalorder %s172, 0
    %s175 = sadd.s32 %s174, 1
    %s176 = scalar_select %p173, %s174, %s175
    %p179 = pneg %p173
    %p180 = scmp.eq.s32.totalorder %s12, 1
    %p181 = por %p179, %p180
    %p182 = scmp.ne.s32.totalorder %s174, %s177
    %p183 = scmp.eq.s32.totalorder %s12, 0
    %p184 = por %p182, %p183
    %p185 = scmp.ne.s32.totalorder %s174, %s177
    %p186 = scmp.eq.s32.totalorder %s17, 1
    %p187 = por %p185, %p186
    %p188 = scmp.ne.s32.totalorder %s177, %s178
    %p189 = scmp.eq.s32.totalorder %s17, 0
    %p190 = por %p188, %p189
    %p191 = scmp.ne.s32.totalorder %s177, %s178
    %p192 = scmp.eq.s32.totalorder %s18, 1
    %p193 = por %p191, %p192
    %p195 = scmp.ne.s32.totalorder %s178, %s194
    %p196 = scmp.eq.s32.totalorder %s18, 0
    %p197 = por %p195, %p196
    %p198 = scmp.le.s32.totalorder 1, %s12
    %p199 = scmp.lt.s32.totalorder %s12, 3
    %p200 = pnand %p198, %p199
    %p201 = pneg %p200
    // Predicated region
    $region9: #{_lambda_.4} parent=5 // pred_check
      _
    $region10: #{_lambda_.4} parent=5 // pred_check_branch
      %203 = sbr.rel (%p200) target = $region12
    $region11: #{_lambda_.4} parent=5 // pred_region
      %s204 = ssub.s32 %s12, 1
      // Predicated region
      $region13: #{_lambda_.4} parent=11 // pred_check
        %p205 = pneg %p99
      $region14: #{_lambda_.4} parent=11 // pred_check_branch
        %207 = sbr.rel (%p205) target = $region16
      $region15: #{_lambda_.4} parent=11 // pred_region
        _
      $region16: #{_lambda_.4} parent=11 // pred_fallthru
        _
      // Predicated region
      $region17: #{_lambda_.4} parent=11 // pred_check
        %p208 = pneg %p120
      $region18: #{_lambda_.4} parent=11 // pred_check_branch
        %210 = sbr.rel (%p208) target = $region20
      $region19: #{_lambda_.4} parent=11 // pred_region
        _
      $region20: #{_lambda_.4} parent=11 // pred_fallthru
        _
      // Predicated region
      $region21: #{_lambda_.4} parent=11 // pred_check
        %p211 = pneg %p141
      $region22: #{_lambda_.4} parent=11 // pred_check_branch
        %213 = sbr.rel (%p211) target = $region24
      $region23: #{_lambda_.4} parent=11 // pred_region
        _
      $region24: #{_lambda_.4} parent=11 // pred_fallthru
        _
      // Predicated region
      $region25: #{_lambda_.4} parent=11 // pred_check
        %p214 = pneg %p162
      $region26: #{_lambda_.4} parent=11 // pred_check_branch
        %216 = sbr.rel (%p214) target = $region28
      $region27: #{_lambda_.4} parent=11 // pred_region
        _
      $region28: #{_lambda_.4} parent=11 // pred_fallthru
        _
    $region12: #{_lambda_.4} parent=5 // pred_fallthru
      _
    %p217 = scmp.lt.s32.totalorder %s12, 2
    // Predicated region
    $region29: #{_lambda_.4} parent=5 // pred_check
      %p218 = pneg %p217
    $region30: #{_lambda_.4} parent=5 // pred_check_branch
      %220 = sbr.rel (%p218) target = $region32
    $region31: #{_lambda_.4} parent=5 // pred_region
      // Predicated region
      $region33: #{_lambda_.4} parent=31 // pred_check
        %p221 = pneg %p44
      $region34: #{_lambda_.4} parent=31 // pred_check_branch
        %223 = sbr.rel (%p221) target = $region36
      $region35: #{_lambda_.4} parent=31 // pred_region
        %p224 = scmp.lt.s32.totalorder %s19, 1
        %s225 = scalar_select %p224, %s19, 1
        %s226 = smul.addr %s225, 8
        %s227 = scalar_lea.vmem %s0, %s226
      $region36: #{_lambda_.4} parent=31 // pred_fallthru
        _
      // Predicated region
      $region37: #{_lambda_.4} parent=31 // pred_check
        %p228 = pneg %p72
      $region38: #{_lambda_.4} parent=31 // pred_check_branch
        %230 = sbr.rel (%p228) target = $region40
      $region39: #{_lambda_.4} parent=31 // pred_region
        %p231 = scmp.lt.s32.totalorder %s19, 1
        %s232 = scalar_select %p231, %s19, 1
        %p233 = scmp.lt.s32.totalorder %s20, 0
        %s234 = scalar_select %p233, %s20, 0
        %s235 = smul.addr %s234, 2
        %s236 = smul.addr %s232, 2
        %s237 = sadd.s32 %s235, %s236
        %s238 = smul.addr %s237, 8
        %s239 = scalar_lea.vmem %s1, %s238
      $region40: #{_lambda_.4} parent=31 // pred_fallthru
        _
    $region32: #{_lambda_.4} parent=5 // pred_fallthru
      _
    %p240 = scmp.le.s32.totalorder 1, %s12
    %p241 = scmp.lt.s32.totalorder %s12, 3
    %p242 = pnand %p240, %p241
    %p243 = pneg %p242
    // Predicated region
    $region41: #{_lambda_.4} parent=5 // pred_check
      _
    $region42: #{_lambda_.4} parent=5 // pred_check_branch
      %245 = sbr.rel (%p242) target = $region44
    $region43: #{_lambda_.4} parent=5 // pred_region
      %s246 = ssub.s32 %s12, 1
      %p247 = scmp.lt.s32.totalorder %s21, 1
      %s248 = scalar_select %p247, %s21, 1
      %s249 = smul.addr %s248, 8
      %s250 = scalar_lea.vmem %s0, %s249
      %p251 = pneg %p50
      %p252 = pneg %p47
      %p253 = scmp.lt.s32.totalorder %s21, 1
      %s254 = scalar_select %p253, %s21, 1
      %p255 = scmp.lt.s32.totalorder %s22, 0
      %s256 = scalar_select %p255, %s22, 0
      %s257 = smul.addr %s256, 2
      %s258 = smul.addr %s254, 2
      %s259 = sadd.s32 %s257, %s258
      %s260 = smul.addr %s259, 8
      %s261 = scalar_lea.vmem %s1, %s260
      %p262 = pneg %p78
      %p263 = pneg %p75
      %p264 = pneg %p99
      %p265 = pneg %p96
      %p266 = pneg %p120
      %p267 = pneg %p117
      %p268 = pneg %p141
      %p269 = pneg %p138
      %p270 = pneg %p162
      %p271 = pneg %p159
      %p272 = pneg %p190
      %p273 = pneg %p187
      %p274 = scmp.lt.s32.totalorder %s21, 1
      %s275 = scalar_select %p274, %s21, 1
      %p276 = scmp.lt.s32.totalorder %s22, 0
      %s277 = scalar_select %p276, %s22, 0
      %s278 = smul.addr %s277, 2
      %s279 = smul.addr %s275, 4
      %s280 = sadd.s32 %s278, %s279
      %s281 = smul.addr %s280, 8
      %s282 = scalar_lea.vmem %s6, %s281
      %p283 = scmp.lt.s32.totalorder %s21, 1
      %s284 = scalar_select %p283, %s21, 1
      %s285 = smul.addr %s284, 8
      %s286 = scalar_lea.vmem %s0, %s285
      %p287 = scmp.lt.s32.totalorder %s21, 1
      %s288 = scalar_select %p287, %s21, 1
      %p289 = scmp.lt.s32.totalorder %s22, 0
      %s290 = scalar_select %p289, %s22, 0
      %s291 = smul.addr %s290, 2
      %s292 = smul.addr %s288, 2
      %s293 = sadd.s32 %s291, %s292
      %s294 = smul.addr %s293, 8
      %s295 = scalar_lea.vmem %s1, %s294
      %p296 = scmp.lt.s32.totalorder %s21, 1
      %s297 = scalar_select %p296, %s21, 1
      %p298 = scmp.lt.s32.totalorder %s22, 0
      %s299 = scalar_select %p298, %s22, 0
      %s300 = smul.addr %s299, 2
      %s301 = smul.addr %s297, 4
      %s302 = sadd.s32 %s300, %s301
      %s303 = smul.addr %s302, 8
      %s304 = scalar_lea.vmem %s6, %s303
      %p306 = scmp.eq.s32.totalorder %s22, 0
      // Predicated region
      $region45: #{_lambda_.4} parent=43 // pred_check
        %p307 = pneg %p306
      $region46: #{_lambda_.4} parent=43 // pred_check_branch
        %309 = sbr.rel (%p307) target = $region48
      $region47: #{_lambda_.4} parent=43 // pred_region
        %v310 = vld [vmem:[%s286] sm:$0xff]
        %v311 = vpack.c.bf16 %v310, %v310
        %v312 = vld [vmem:[%s2] sm:$0xf]
        %v313 = vld [vmem:[%s2 + $0x4] sm:$0xf]
        %v314 = vld [vmem:[%s2 + $0x8] sm:$0xf]
        %v315 = vld [vmem:[%s2 + $0xc] sm:$0xf]
        %v316 = vld [vmem:[%s2 + $0x10] sm:$0xf]
        %v317 = vld [vmem:[%s2 + $0x14] sm:$0xf]
        %v318 = vld [vmem:[%s2 + $0x18] sm:$0xf]
        %v319 = vld [vmem:[%s2 + $0x1c] sm:$0xf]
        %v320 = vld [vmem:[%s2 + $0x20] sm:$0xf]
        %v321 = vld [vmem:[%s2 + $0x24] sm:$0xf]
        %v322 = vld [vmem:[%s2 + $0x28] sm:$0xf]
        %v323 = vld [vmem:[%s2 + $0x2c] sm:$0xf]
        %v324 = vld [vmem:[%s2 + $0x30] sm:$0xf]
        %v325 = vld [vmem:[%s2 + $0x34] sm:$0xf]
        %v326 = vld [vmem:[%s2 + $0x38] sm:$0xf]
        %v327 = vld [vmem:[%s2 + $0x3c] sm:$0xf]
        %v328 = vld [vmem:[%s3] sm:$0x1]
        %v330 = vlaneseq
        %v331 = vshrl.u32 %v330, 7
        %v332 = vsub.s32 0, %v331
        %v333 = vrot.slane %v328, %v332
        %v351 = vunpack.c.l.b16 %v312
        %v352 = vunpack.c.l.b16 %v313
        %v353 = vunpack.c.l.b16 %v314
        %v354 = vunpack.c.l.b16 %v315
        %v355 = vunpack.c.l.b16 %v316
        %v356 = vunpack.c.l.b16 %v317
        %v357 = vunpack.c.l.b16 %v318
        %v358 = vunpack.c.l.b16 %v319
        %v359 = vunpack.c.l.b16 %v320
        %v360 = vunpack.c.l.b16 %v321
        %v361 = vunpack.c.l.b16 %v322
        %v362 = vunpack.c.l.b16 %v323
        %v363 = vunpack.c.l.b16 %v324
        %v364 = vunpack.c.l.b16 %v325
        %v365 = vunpack.c.l.b16 %v326
        %v366 = vunpack.c.l.b16 %v327
        %v367 = vpack.c.b16 %v352, %v351
        %v368 = vpack.c.b16 %v354, %v353
        %v369 = vpack.c.b16 %v356, %v355
        %v370 = vpack.c.b16 %v358, %v357
        %v371 = vpack.c.b16 %v360, %v359
        %v372 = vpack.c.b16 %v362, %v361
        %v373 = vpack.c.b16 %v364, %v363
        %v374 = vpack.c.b16 %v366, %v365
        %383 = vmatprep.subr.bf16.mxu0 0
        %384 = vmatpush1.bf16.msra.mxu0 %v367
        %385 = vmatprep.subr.bf16.mxu0 0
        %386 = vmatpush1.bf16.msra.mxu0 %v368
        %387 = vmatprep.subr.bf16.mxu0 0
        %388 = vmatpush1.bf16.msra.mxu0 %v369
        %389 = vmatprep.subr.bf16.mxu0 0
        %390 = vmatpush1.bf16.msra.mxu0 %v370
        %391 = vmatprep.subr.bf16.mxu0 0
        %392 = vmatpush1.bf16.msra.mxu0 %v371
        %393 = vmatprep.subr.bf16.mxu0 0
        %394 = vmatpush1.bf16.msra.mxu0 %v372
        %395 = vmatprep.subr.bf16.mxu0 0
        %396 = vmatpush1.bf16.msra.mxu0 %v373
        %397 = vmatprep.subr.bf16.mxu0 0
        %398 = vmatpush1.bf16.msra.mxu0 %v374
        %399 = vmatprep.subr.bf16.mxu0 0
        %400 = vmatpush1.bf16.msra.mxu0 0
        %401 = vmatprep.subr.bf16.mxu0 0
        %402 = vmatpush1.bf16.msra.mxu0 0
        %403 = vmatprep.subr.bf16.mxu0 0
        %404 = vmatpush1.bf16.msra.mxu0 0
        %405 = vmatprep.subr.bf16.mxu0 0
        %406 = vmatpush1.bf16.msra.mxu0 0
        %407 = vmatprep.subr.bf16.mxu0 0
        %408 = vmatpush1.bf16.msra.mxu0 0
        %409 = vmatprep.subr.bf16.mxu0 0
        %410 = vmatpush1.bf16.msra.mxu0 0
        %411 = vmatprep.subr.bf16.mxu0 0
        %412 = vmatpush1.bf16.msra.mxu0 0
        %413 = vmatprep.subr.bf16.mxu0 0
        %414 = vmatpush1.bf16.msra.mxu0 0
        %415 = vmatprep.mubr.bf16.mxu0 0
        %416 = vmatmul.mubr.bf16.gmra.mrb[0].mxu0 %v311
        %v417 = vpop.f32.mrb[0].mxu0
        %v418 = vadd.f32 %v333, %v417
        %v419 = vpop.f32.mrb[0].mxu0
        %v420 = vpop.f32.mrb[0].mxu0
        %v421 = vpop.f32.mrb[0].mxu0
        %422 = vdwg.mxu0
        %v423 = vtanh.pop %v418
        %v425 = vrot.slane %v423, 7
        %vm427 = vcmask 1040384
        %v428 = vsel %vm427, 0.0, %v425
        %v429 = vsel %vm427, %v425, 0.0
        %vm432 = vcmask 1046528
        %v433 = vrot.slane %v428, 1
        %v434 = vrot.slane %v429, 1
        %v435 = vsel %vm432, %v433, %v434
        %436 = vrot.lane.b32.xlu0 %v435, 8
        %v437 = vpop.permute.xlu0 %436
        %vm439 = vcmask 1045504
        %v440 = vrot.slane %v428, 2
        %v441 = vrot.slane %v429, 2
        %v442 = vsel %vm439, %v440, %v441
        %443 = vrot.lane.b32.xlu0 %v442, 16
        %v444 = vpop.permute.xlu0 %443
        %vm446 = vcmask 64512
        %v447 = vsel %vm446, %v428, %v437
        %vm448 = vcmask 130048
        %v449 = vsel %vm448, %v447, %v444
        %vm450 = vcmask 195584
        %451 = vst.msk [vmem:[#allocation2] sm:$0xff] %vm450, %v449
      $region48: #{_lambda_.4} parent=43 // pred_fallthru
        _
      %s452 = smul.u32 %s22, 8
      %s453 = scalar_lea.vmem [#allocation2], %s452
      %v454 = vld [vmem:[%s453] sm:$0xff]
      %v455 = vpack.c.bf16 %v454, %v454
      %v456 = vld [vmem:[%s4] sm:$0xff]
      %v457 = vld [vmem:[%s4 + $0x8] sm:$0xff]
      %v458 = vld [vmem:[%s4 + $0x10] sm:$0xff]
      %v459 = vld [vmem:[%s4 + $0x18] sm:$0xff]
      %v460 = vld [vmem:[%s4 + $0x20] sm:$0xff]
      %v461 = vld [vmem:[%s4 + $0x28] sm:$0xff]
      %v462 = vld [vmem:[%s5] sm:$0xf]
      %v464 = vlaneseq
      %v465 = vshrl.u32 %v464, 7
      %v466 = vsub.s32 0, %v465
      %v467 = vrot.slane %v462, %v466
      %v468 = vlaneseq
      %v469 = vshrl.u32 %v468, 7
      %v470 = vsub.s32 1, %v469
      %v471 = vrot.slane %v462, %v470
      %v472 = vlaneseq
      %v473 = vshrl.u32 %v472, 7
      %v474 = vsub.s32 2, %v473
      %v475 = vrot.slane %v462, %v474
      %v476 = vlaneseq
      %v477 = vshrl.u32 %v476, 7
      %v478 = vsub.s32 3, %v477
      %v479 = vrot.slane %v462, %v478
      %v490 = vunpack.c.l.b16 %v456
      %v491 = vunpack.c.h.b16 %v456
      %v492 = vunpack.c.l.b16 %v457
      %v493 = vunpack.c.h.b16 %v457
      %v494 = vunpack.c.l.b16 %v458
      %v495 = vunpack.c.h.b16 %v458
      %v496 = vunpack.c.l.b16 %v459
      %v497 = vunpack.c.h.b16 %v459
      %v498 = vunpack.c.l.b16 %v460
      %v499 = vunpack.c.h.b16 %v460
      %v500 = vunpack.c.l.b16 %v461
      %v501 = vunpack.c.h.b16 %v461
      %v502 = vpack.c.b16 %v494, %v490
      %v503 = vpack.c.b16 %v495, %v491
      %v504 = vpack.c.b16 %v496, %v492
      %v505 = vpack.c.b16 %v497, %v493
      %v506 = vpack.c.b16 %v498, %v498
      %v507 = vpack.c.b16 %v499, %v499
      %v508 = vpack.c.b16 %v500, %v500
      %v509 = vpack.c.b16 %v501, %v501
      %vm514 = vcmask 195584
      %v516 = vsel %vm514, %v455, 0
      %vm518 = vcmask 1043456
      %v520 = vsel %vm518, %v506, 0
      %v523 = vsel %vm518, %v507, 0
      %v526 = vsel %vm518, %v508, 0
      %v529 = vsel %vm518, %v509, 0
      %531 = vmatprep.subr.bf16.mxu0 %v503
      %532 = vmatpush1.bf16.msra.mxu0 %v502
      %533 = vmatprep.subr.bf16.mxu0 %v523
      %534 = vmatpush1.bf16.msra.mxu0 %v520
      %535 = vmatprep.subr.bf16.mxu0 0
      %536 = vmatpush1.bf16.msra.mxu0 0
      %537 = vmatprep.subr.bf16.mxu0 0
      %538 = vmatpush1.bf16.msra.mxu0 0
      %539 = vmatprep.subr.bf16.mxu0 0
      %540 = vmatpush1.bf16.msra.mxu0 0
      %541 = vmatprep.subr.bf16.mxu0 0
      %542 = vmatpush1.bf16.msra.mxu0 0
      %543 = vmatprep.subr.bf16.mxu0 0
      %544 = vmatpush1.bf16.msra.mxu0 0
      %545 = vmatprep.subr.bf16.mxu0 0
      %546 = vmatpush1.bf16.msra.mxu0 0
      %547 = vmatprep.subr.bf16.mxu0 0
      %548 = vmatpush1.bf16.msra.mxu0 0
      %549 = vmatprep.subr.bf16.mxu0 0
      %550 = vmatpush1.bf16.msra.mxu0 0
      %551 = vmatprep.subr.bf16.mxu0 0
      %552 = vmatpush1.bf16.msra.mxu0 0
      %553 = vmatprep.subr.bf16.mxu0 0
      %554 = vmatpush1.bf16.msra.mxu0 0
      %555 = vmatprep.subr.bf16.mxu0 0
      %556 = vmatpush1.bf16.msra.mxu0 0
      %557 = vmatprep.subr.bf16.mxu0 0
      %558 = vmatpush1.bf16.msra.mxu0 0
      %559 = vmatprep.subr.bf16.mxu0 0
      %560 = vmatpush1.bf16.msra.mxu0 0
      %561 = vmatprep.subr.bf16.mxu0 0
      %562 = vmatpush1.bf16.msra.mxu0 0
      %563 = vmatprep.mubr.bf16.mxu0 0
      %564 = vmatmul.mubr.bf16.gmra.mrb[0].mxu0 %v516
      %v565 = vpop.f32.mrb[0].mxu0
      %v566 = vadd.f32 %v467, %v565
      %v567 = vpop.f32.mrb[0].mxu0
      %v568 = vadd.f32 %v471, %v567
      %v569 = vpop.f32.mrb[0].mxu0
      %v570 = vpop.f32.mrb[0].mxu0
      %571 = vdwg.mxu0
      %572 = vmatprep.subr.bf16.mxu0 %v505
      %573 = vmatpush1.bf16.msra.mxu0 %v504
      %574 = vmatprep.subr.bf16.mxu0 %v529
      %575 = vmatpush1.bf16.msra.mxu0 %v526
      %576 = vmatprep.subr.bf16.mxu0 0
      %577 = vmatpush1.bf16.msra.mxu0 0
      %578 = vmatprep.subr.bf16.mxu0 0
      %579 = vmatpush1.bf16.msra.mxu0 0
      %580 = vmatprep.subr.bf16.mxu0 0
      %581 = vmatpush1.bf16.msra.mxu0 0
      %582 = vmatprep.subr.bf16.mxu0 0
      %583 = vmatpush1.bf16.msra.mxu0 0
      %584 = vmatprep.subr.bf16.mxu0 0
      %585 = vmatpush1.bf16.msra.mxu0 0
      %586 = vmatprep.subr.bf16.mxu0 0
      %587 = vmatpush1.bf16.msra.mxu0 0
      %588 = vmatprep.subr.bf16.mxu0 0
      %589 = vmatpush1.bf16.msra.mxu0 0
      %590 = vmatprep.subr.bf16.mxu0 0
      %591 = vmatpush1.bf16.msra.mxu0 0
      %592 = vmatprep.subr.bf16.mxu0 0
      %593 = vmatpush1.bf16.msra.mxu0 0
      %594 = vmatprep.subr.bf16.mxu0 0
      %595 = vmatpush1.bf16.msra.mxu0 0
      %596 = vmatprep.subr.bf16.mxu0 0
      %597 = vmatpush1.bf16.msra.mxu0 0
      %598 = vmatprep.subr.bf16.mxu0 0
      %599 = vmatpush1.bf16.msra.mxu0 0
      %600 = vmatprep.subr.bf16.mxu0 0
      %601 = vmatpush1.bf16.msra.mxu0 0
      %602 = vmatprep.subr.bf16.mxu0 0
      %603 = vmatpush1.bf16.msra.mxu0 0
      %604 = vmatprep.mubr.bf16.mxu0 0
      %605 = vmatmul.mubr.bf16.gmra.mrb[0].mxu0 %v516
      %v606 = vpop.f32.mrb[0].mxu0
      %v607 = vadd.f32 %v475, %v606
      %v608 = vpop.f32.mrb[0].mxu0
      %v609 = vadd.f32 %v479, %v608
      %v610 = vpop.f32.mrb[0].mxu0
      %v611 = vpop.f32.mrb[0].mxu0
      %612 = vdwg.mxu0
      %v613 = vsub.f32 %v607, %v566
      %v614 = vsub.f32 %v609, %v568
      %v615 = vmul.f32 %v613, 1.442695
      %v616 = vpow.pop %v615
      %v617 = vmul.f32 %v614, 1.442695
      %v618 = vpow.pop %v617
      %v619 = vadd.f32 %v616, 1.0
      %v620 = vadd.f32 %v618, 1.0
      %v621 = vrcp.pop %v619
      %v622 = vmul.f32 1.0, %v621
      %v623 = vrcp.pop %v620
      %v624 = vmul.f32 1.0, %v623
      %v625 = vsub.f32 1.0, %v622
      %v626 = vsub.f32 1.0, %v624
      %v627 = vld [vmem:[%s295] sm:$0xff]
      %v628 = vld [vmem:[%s295 + $0x8] sm:$0xff]
      %v629 = vmul.f32 %v627, %v622
      %v630 = vmul.f32 %v628, %v624
      %631 = vst [vmem:[%s304] sm:$0xff] %v629
      %632 = vst [vmem:[%s304 + $0x8] sm:$0xff] %v630
      %v633 = vmul.f32 %v627, %v625
      %v634 = vmul.f32 %v628, %v626
      %s635 = scalar_lea.vmem %s304, 16
      %636 = vst [vmem:[%s635] sm:$0xff] %v633
      %637 = vst [vmem:[%s635 + $0x8] sm:$0xff] %v634
      %p638 = scmp.lt.s32.totalorder %s21, 1
      %s639 = scalar_select %p638, %s21, 1
      %p640 = scmp.lt.s32.totalorder %s22, 0
      %s641 = scalar_select %p640, %s22, 0
      %s642 = smul.addr %s641, 2
      %s643 = smul.addr %s639, 4
      %s644 = sadd.s32 %s642, %s643
      %s645 = smul.addr %s644, 8
      %s646 = scalar_lea.vmem %s6, %s645
      // Predicated region
      $region49: #{_lambda_.4} parent=43 // pred_check
        %p647 = pneg %p187
      $region50: #{_lambda_.4} parent=43 // pred_check_branch
        %649 = sbr.rel (%p647) target = $region52
      $region51: #{_lambda_.4} parent=43 // pred_region
        _
      $region52: #{_lambda_.4} parent=43 // pred_fallthru
        _
    $region44: #{_lambda_.4} parent=5 // pred_fallthru
      _
    %p650 = scmp.le.s32.totalorder 2, %s12
    // Predicated region
    $region53: #{_lambda_.4} parent=5 // pred_check
      %p651 = pneg %p650
    $region54: #{_lambda_.4} parent=5 // pred_check_branch
      %653 = sbr.rel (%p651) target = $region56
    $region55: #{_lambda_.4} parent=5 // pred_region
      %s654 = ssub.s32 %s12, 2
      // Predicated region
      $region57: #{_lambda_.4} parent=55 // pred_check
        %p655 = pneg %p193
      $region58: #{_lambda_.4} parent=55 // pred_check_branch
        %657 = sbr.rel (%p655) target = $region60
      $region59: #{_lambda_.4} parent=55 // pred_region
        %p658 = scmp.lt.s32.totalorder %s23, 1
        %s659 = scalar_select %p658, %s23, 1
        %p660 = scmp.lt.s32.totalorder %s24, 0
        %s661 = scalar_select %p660, %s24, 0
        %s662 = smul.addr %s661, 2
        %s663 = smul.addr %s659, 4
        %s664 = sadd.s32 %s662, %s663
        %s665 = smul.addr %s664, 8
        %s666 = scalar_lea.vmem %s6, %s665
      $region60: #{_lambda_.4} parent=55 // pred_fallthru
        _
    $region56: #{_lambda_.4} parent=5 // pred_fallthru
      _
  $region6: #{_lambda_.4} parent=0 // loop_footer
    %s16 = sadd.s32 1, %s12
  $region7: #{_lambda_.4} parent=0 // loop_footer_branch
    %11 = sbr.rel target = $region3
  $region8: #{_lambda_.4} parent=0 // loop_exit
    _

// kernel: _lambda_.3
$region0: #{_lambda_.3}
  #allocation0 [shape = 'u32[]', space=smem, size = 0x4, offset = 0x4, fixed_abs, tag = 'smem constant byte address 0x4 - core index']
  #allocation1 [shape = 'u32[144,128]{1,0:T(1,128)}', space=vmem, size = 0x12000, scoped, tag = 'internal scratch']
  %s0 = inlined_call_operand.vmem [shape: f32[2,11,256], index: 0, kind: input, shape index: {}]
  %s1 = inlined_call_operand.vmem [shape: bf16[1024,1280], index: 1, kind: input, shape index: {}]
  %s2 = inlined_call_operand.vmem [shape: bf16[640,128], index: 2, kind: input, shape index: {}]
  %s3 = inlined_call_operand.vmem [shape: f32[2,8,128], index: 3, kind: output, shape index: {}]
  %s4 = sld [smem:[#allocation0]]
  $region45: #{_lambda_.3} parent=0
    _
  %s6 = ssub.s32 1, %s4
  %s7 = scalar_select 0, %s6, %s4
  loop: start=0, step=1, limit=4
  $region2: #{_lambda_.3} parent=0 // loop_pre_header
    _
  $region3: #{_lambda_.3} parent=0 // loop_header
    %s9 = sphi 0, %s13
    %p10 = scmp.ge.s32.totalorder %s9, 4
    %s19 = sphi 0, %s21
    %s22 = sphi 0, %s19
    %s23 = sphi 0, %s22
    %s39 = sphi 0, %s23
    %s43 = sphi 0, %s43
    %s45 = sphi 0, %s43
    %s46 = sphi 0, %s45
    %s60 = sphi 0, %s46
    %s64 = sphi 0, %s64
    %s66 = sphi 0, %s64
    %s67 = sphi 0, %s66
    %s81 = sphi 0, %s67
    %s87 = sphi 0, %s89
    %s90 = sphi 0, %s87
    %s91 = sphi 0, %s90
    %s107 = sphi 0, %s91
  $region4: #{_lambda_.3} parent=0 // loop_header_branch
    %12 = sbr.rel (%p10) target = $region8
  $region5: #{_lambda_.3} parent=0 // loop_body
    %s14 = ssub.s32 %s9, 1
    %s15 = ssub.s32 %s9, 2
    %s16 = sadd.s32 %s9, 1
    %s17 = ssub.s32 %s9, %s16
    %p18 = scmp.eq.s32.totalorder %s17, 0
    %s20 = sadd.s32 %s19, 1
    %s21 = scalar_select %p18, %s19, %s20
    %p24 = pneg %p18
    %p25 = scmp.eq.s32.totalorder %s9, 1
    %p26 = por %p24, %p25
    %p27 = scmp.ne.s32.totalorder %s19, %s22
    %p28 = scmp.eq.s32.totalorder %s9, 0
    %p29 = por %p27, %p28
    %p30 = scmp.ne.s32.totalorder %s19, %s22
    %p31 = scmp.eq.s32.totalorder %s14, 1
    %p32 = por %p30, %p31
    %p33 = scmp.ne.s32.totalorder %s22, %s23
    %p34 = scmp.eq.s32.totalorder %s14, 0
    %p35 = por %p33, %p34
    %p36 = scmp.ne.s32.totalorder %s22, %s23
    %p37 = scmp.eq.s32.totalorder %s15, 1
    %p38 = por %p36, %p37
    %p40 = scmp.ne.s32.totalorder %s23, %s39
    %p41 = scmp.eq.s32.totalorder %s15, 0
    %p42 = por %p40, %p41
    %s44 = sadd.s32 %s43, 1
    %p47 = scmp.eq.s32.totalorder %s9, 1
    %p48 = scmp.ne.s32.totalorder %s43, %s45
    %p49 = scmp.eq.s32.totalorder %s9, 0
    %p50 = por %p48, %p49
    %p51 = scmp.ne.s32.totalorder %s43, %s45
    %p52 = scmp.eq.s32.totalorder %s14, 1
    %p53 = por %p51, %p52
    %p54 = scmp.ne.s32.totalorder %s45, %s46
    %p55 = scmp.eq.s32.totalorder %s14, 0
    %p56 = por %p54, %p55
    %p57 = scmp.ne.s32.totalorder %s45, %s46
    %p58 = scmp.eq.s32.totalorder %s15, 1
    %p59 = por %p57, %p58
    %p61 = scmp.ne.s32.totalorder %s46, %s60
    %p62 = scmp.eq.s32.totalorder %s15, 0
    %p63 = por %p61, %p62
    %s65 = sadd.s32 %s64, 1
    %p68 = scmp.eq.s32.totalorder %s9, 1
    %p69 = scmp.ne.s32.totalorder %s64, %s66
    %p70 = scmp.eq.s32.totalorder %s9, 0
    %p71 = por %p69, %p70
    %p72 = scmp.ne.s32.totalorder %s64, %s66
    %p73 = scmp.eq.s32.totalorder %s14, 1
    %p74 = por %p72, %p73
    %p75 = scmp.ne.s32.totalorder %s66, %s67
    %p76 = scmp.eq.s32.totalorder %s14, 0
    %p77 = por %p75, %p76
    %p78 = scmp.ne.s32.totalorder %s66, %s67
    %p79 = scmp.eq.s32.totalorder %s15, 1
    %p80 = por %p78, %p79
    %p82 = scmp.ne.s32.totalorder %s67, %s81
    %p83 = scmp.eq.s32.totalorder %s15, 0
    %p84 = por %p82, %p83
    %s85 = ssub.s32 %s9, %s16
    %p86 = scmp.eq.s32.totalorder %s85, 0
    %s88 = sadd.s32 %s87, 1
    %s89 = scalar_select %p86, %s87, %s88
    %p92 = pneg %p86
    %p93 = scmp.eq.s32.totalorder %s9, 1
    %p94 = por %p92, %p93
    %p95 = scmp.ne.s32.totalorder %s87, %s90
    %p96 = scmp.eq.s32.totalorder %s9, 0
    %p97 = por %p95, %p96
    %p98 = scmp.ne.s32.totalorder %s87, %s90
    %p99 = scmp.eq.s32.totalorder %s14, 1
    %p100 = por %p98, %p99
    %p101 = scmp.ne.s32.totalorder %s90, %s91
    %p102 = scmp.eq.s32.totalorder %s14, 0
    %p103 = por %p101, %p102
    %p104 = scmp.ne.s32.totalorder %s90, %s91
    %p105 = scmp.eq.s32.totalorder %s15, 1
    %p106 = por %p104, %p105
    %p108 = scmp.ne.s32.totalorder %s91, %s107
    %p109 = scmp.eq.s32.totalorder %s15, 0
    %p110 = por %p108, %p109
    %p111 = scmp.le.s32.totalorder 1, %s9
    %p112 = scmp.lt.s32.totalorder %s9, 3
    %p113 = pnand %p111, %p112
    %p114 = pneg %p113
    // Predicated region
    $region9: #{_lambda_.3} parent=5 // pred_check
      _
    $region10: #{_lambda_.3} parent=5 // pred_check_branch
      %116 = sbr.rel (%p113) target = $region12
    $region11: #{_lambda_.3} parent=5 // pred_region
      %s117 = ssub.s32 %s9, 1
      // Predicated region
      $region13: #{_lambda_.3} parent=11 // pred_check
        %p118 = pneg %p56
      $region14: #{_lambda_.3} parent=11 // pred_check_branch
        %120 = sbr.rel (%p118) target = $region16
      $region15: #{_lambda_.3} parent=11 // pred_region
        _
      $region16: #{_lambda_.3} parent=11 // pred_fallthru
        _
      // Predicated region
      $region17: #{_lambda_.3} parent=11 // pred_check
        %p121 = pneg %p77
      $region18: #{_lambda_.3} parent=11 // pred_check_branch
        %123 = sbr.rel (%p121) target = $region20
      $region19: #{_lambda_.3} parent=11 // pred_region
        _
      $region20: #{_lambda_.3} parent=11 // pred_fallthru
        _
    $region12: #{_lambda_.3} parent=5 // pred_fallthru
      _
    %p124 = scmp.lt.s32.totalorder %s9, 2
    // Predicated region
    $region21: #{_lambda_.3} parent=5 // pred_check
      %p125 = pneg %p124
    $region22: #{_lambda_.3} parent=5 // pred_check_branch
      %127 = sbr.rel (%p125) target = $region24
    $region23: #{_lambda_.3} parent=5 // pred_region
      // Predicated region
      $region25: #{_lambda_.3} parent=23 // pred_check
        %p128 = pneg %p29
      $region26: #{_lambda_.3} parent=23 // pred_check_branch
        %130 = sbr.rel (%p128) target = $region28
      $region27: #{_lambda_.3} parent=23 // pred_region
        %p131 = scmp.lt.s32.totalorder %s9, 1
        %s132 = scalar_select %p131, %s9, 1
        %s133 = smul.addr %s132, 4
        %s134 = smul.addr %s133, 8
        %s135 = scalar_lea.vmem %s0, %s134
      $region28: #{_lambda_.3} parent=23 // pred_fallthru
        _
    $region24: #{_lambda_.3} parent=5 // pred_fallthru
      _
    %p136 = scmp.le.s32.totalorder 1, %s9
    %p137 = scmp.lt.s32.totalorder %s9, 3
    %p138 = pnand %p136, %p137
    %p139 = pneg %p138
    // Predicated region
    $region29: #{_lambda_.3} parent=5 // pred_check
      _
    $region30: #{_lambda_.3} parent=5 // pred_check_branch
      %141 = sbr.rel (%p138) target = $region32
    $region31: #{_lambda_.3} parent=5 // pred_region
      %s142 = ssub.s32 %s9, 1
      %p143 = scmp.lt.s32.totalorder %s14, 1
      %s144 = scalar_select %p143, %s14, 1
      %s145 = smul.addr %s144, 4
      %s146 = smul.addr %s145, 8
      %s147 = scalar_lea.vmem %s0, %s146
      %p148 = pneg %p35
      %p149 = pneg %p32
      %p150 = pneg %p56
      %p151 = pneg %p53
      %p152 = pneg %p77
      %p153 = pneg %p74
      %p154 = pneg %p103
      %p155 = pneg %p100
      %p156 = scmp.lt.s32.totalorder %s14, 1
      %s157 = scalar_select %p156, %s14, 1
      %s158 = smul.addr %s157, 8
      %s159 = scalar_lea.vmem %s3, %s158
      %p160 = scmp.lt.s32.totalorder %s14, 1
      %s161 = scalar_select %p160, %s14, 1
      %s162 = smul.addr %s161, 4
      %s163 = smul.addr %s162, 8
      %s164 = scalar_lea.vmem %s0, %s163
      %p165 = scmp.lt.s32.totalorder %s14, 1
      %s166 = scalar_select %p165, %s14, 1
      %s167 = smul.addr %s166, 8
      %s168 = scalar_lea.vmem %s3, %s167
      %v170 = vld [vmem:[%s164] sm:$0xff]
      %v171 = vld [vmem:[%s164 + $0x8] sm:$0xff]
      %v172 = vld [vmem:[%s164 + $0x10] sm:$0x7]
      %v173 = vld [vmem:[%s164 + $0x18] sm:$0x7]
      %v174 = vpack.c.bf16 %v172, %v170
      %v175 = vpack.c.bf16 %v173, %v171
      %v176 = vld [vmem:[%s1] sm:$0xff]
      %v177 = vld [vmem:[%s1 + $0x8] sm:$0xff]
      %v178 = vld [vmem:[%s1 + $0x10] sm:$0xff]
      %v179 = vld [vmem:[%s1 + $0x18] sm:$0xff]
      %v180 = vld [vmem:[%s1 + $0x20] sm:$0xff]
      %v181 = vld [vmem:[%s1 + $0x28] sm:$0xff]
      %v182 = vld [vmem:[%s1 + $0x30] sm:$0xff]
      %v183 = vld [vmem:[%s1 + $0x38] sm:$0xff]
      %v184 = vld [vmem:[%s1 + $0x40] sm:$0xff]
      %v185 = vld [vmem:[%s1 + $0x48] sm:$0xff]
      %v186 = vld [vmem:[%s1 + $0x50] sm:$0xff]
      %v187 = vld [vmem:[%s1 + $0x58] sm:$0xff]
      %v188 = vld [vmem:[%s1 + $0x60] sm:$0xff]
      %v189 = vld [vmem:[%s1 + $0x68] sm:$0xff]
      %v190 = vld [vmem:[%s1 + $0x70] sm:$0xff]
      %v191 = vld [vmem:[%s1 + $0x78] sm:$0xff]
      %v192 = vld [vmem:[%s1 + $0x80] sm:$0xff]
      %v193 = vld [vmem:[%s1 + $0x88] sm:$0xff]
      %v194 = vld [vmem:[%s1 + $0x90] sm:$0xff]
      %v195 = vld [vmem:[%s1 + $0x98] sm:$0xff]
      %v196 = vld [vmem:[%s1 + $0xa0] sm:$0xff]
      %v197 = vld [vmem:[%s1 + $0xa8] sm:$0xff]
      %v198 = vld [vmem:[%s1 + $0xb0] sm:$0xff]
      %v199 = vld [vmem:[%s1 + $0xb8] sm:$0xff]
      %v200 = vld [vmem:[%s1 + $0xc0] sm:$0xff]
      %v201 = vld [vmem:[%s1 + $0xc8] sm:$0xff]
      %v202 = vld [vmem:[%s1 + $0xd0] sm:$0xff]
      %v203 = vld [vmem:[%s1 + $0xd8] sm:$0xff]
      %v204 = vld [vmem:[%s1 + $0xe0] sm:$0xff]
      %v205 = vld [vmem:[%s1 + $0xe8] sm:$0xff]
      %v206 = vld [vmem:[%s1 + $0xf0] sm:$0xff]
      %v207 = vld [vmem:[%s1 + $0xf8] sm:$0xff]
      %v208 = vld [vmem:[%s1 + $0x100] sm:$0xff]
      %v209 = vld [vmem:[%s1 + $0x108] sm:$0xff]
      %v210 = vld [vmem:[%s1 + $0x110] sm:$0xff]
      %v211 = vld [vmem:[%s1 + $0x118] sm:$0xff]
      %v212 = vld [vmem:[%s1 + $0x120] sm:$0xff]
      %v213 = vld [vmem:[%s1 + $0x128] sm:$0xff]
      %v214 = vld [vmem:[%s1 + $0x130] sm:$0xff]
      %v215 = vld [vmem:[%s1 + $0x138] sm:$0xff]
      %v216 = vld [vmem:[%s1 + $0x140] sm:$0xff]
      %v217 = vld [vmem:[%s1 + $0x148] sm:$0xff]
      %v218 = vld [vmem:[%s1 + $0x150] sm:$0xff]
      %v219 = vld [vmem:[%s1 + $0x158] sm:$0xff]
      %v220 = vld [vmem:[%s1 + $0x160] sm:$0xff]
      %v221 = vld [vmem:[%s1 + $0x168] sm:$0xff]
      %v222 = vld [vmem:[%s1 + $0x170] sm:$0xff]
      %v223 = vld [vmem:[%s1 + $0x178] sm:$0xff]
      %v224 = vld [vmem:[%s1 + $0x180] sm:$0xff]
      %v225 = vld [vmem:[%s1 + $0x188] sm:$0xff]
      %v226 = vld [vmem:[%s1 + $0x190] sm:$0xff]
      %v227 = vld [vmem:[%s1 + $0x198] sm:$0xff]
      %v228 = vld [vmem:[%s1 + $0x1a0] sm:$0xff]
      %v229 = vld [vmem:[%s1 + $0x1a8] sm:$0xff]
      %v230 = vld [vmem:[%s1 + $0x1b0] sm:$0xff]
      %v231 = vld [vmem:[%s1 + $0x1b8] sm:$0xff]
      %v232 = vld [vmem:[%s1 + $0x1c0] sm:$0xff]
      %v233 = vld [vmem:[%s1 + $0x1c8] sm:$0xff]
      %v234 = vld [vmem:[%s1 + $0x1d0] sm:$0xff]
      %v235 = vld [vmem:[%s1 + $0x1d8] sm:$0xff]
      %v236 = vld [vmem:[%s1 + $0x1e0] sm:$0xff]
      %v237 = vld [vmem:[%s1 + $0x1e8] sm:$0xff]
      %v238 = vld [vmem:[%s1 + $0x1f0] sm:$0xff]
      %v239 = vld [vmem:[%s1 + $0x1f8] sm:$0xff]
      %v240 = vld [vmem:[%s1 + $0x200] sm:$0xff]
      %v241 = vld [vmem:[%s1 + $0x208] sm:$0xff]
      %v242 = vld [vmem:[%s1 + $0x210] sm:$0xff]
      %v243 = vld [vmem:[%s1 + $0x218] sm:$0xff]
      %v244 = vld [vmem:[%s1 + $0x220] sm:$0xff]
      %v245 = vld [vmem:[%s1 + $0x228] sm:$0xff]
      %v246 = vld [vmem:[%s1 + $0x230] sm:$0xff]
      %v247 = vld [vmem:[%s1 + $0x238] sm:$0xff]
      %v248 = vld [vmem:[%s1 + $0x240] sm:$0xff]
      %v249 = vld [vmem:[%s1 + $0x248] sm:$0xff]
      %v250 = vld [vmem:[%s1 + $0x250] sm:$0xff]
      %v251 = vld [vmem:[%s1 + $0x258] sm:$0xff]
      %v252 = vld [vmem:[%s1 + $0x260] sm:$0xff]
      %v253 = vld [vmem:[%s1 + $0x268] sm:$0xff]
      %v254 = vld [vmem:[%s1 + $0x270] sm:$0xff]
      %v255 = vld [vmem:[%s1 + $0x278] sm:$0xff]
      %v256 = vld [vmem:[%s1 + $0x280] sm:$0xff]
      %v257 = vld [vmem:[%s1 + $0x288] sm:$0xff]
      %v258 = vld [vmem:[%s1 + $0x290] sm:$0xff]
      %v259 = vld [vmem:[%s1 + $0x298] sm:$0xff]
      %v260 = vld [vmem:[%s1 + $0x2a0] sm:$0xff]
      %v261 = vld [vmem:[%s1 + $0x2a8] sm:$0xff]
      %v262 = vld [vmem:[%s1 + $0x2b0] sm:$0xff]
      %v263 = vld [vmem:[%s1 + $0x2b8] sm:$0xff]
      %v264 = vld [vmem:[%s1 + $0x2c0] sm:$0xff]
      %v265 = vld [vmem:[%s1 + $0x2c8] sm:$0xff]
      %v266 = vld [vmem:[%s1 + $0x2d0] sm:$0xff]
      %v267 = vld [vmem:[%s1 + $0x2d8] sm:$0xff]
      %v268 = vld [vmem:[%s1 + $0x2e0] sm:$0xff]
      %v269 = vld [vmem:[%s1 + $0x2e8] sm:$0xff]
      %v270 = vld [vmem:[%s1 + $0x2f0] sm:$0xff]
      %v271 = vld [vmem:[%s1 + $0x2f8] sm:$0xff]
      %v272 = vld [vmem:[%s1 + $0x300] sm:$0xff]
      %v273 = vld [vmem:[%s1 + $0x308] sm:$0xff]
      %v274 = vld [vmem:[%s1 + $0x310] sm:$0xff]
      %v275 = vld [vmem:[%s1 + $0x318] sm:$0xff]
      %v276 = vld [vmem:[%s1 + $0x320] sm:$0xff]
      %v277 = vld [vmem:[%s1 + $0x328] sm:$0xff]
      %v278 = vld [vmem:[%s1 + $0x330] sm:$0xff]
      %v279 = vld [vmem:[%s1 + $0x338] sm:$0xff]
      %v280 = vld [vmem:[%s1 + $0x340] sm:$0xff]
      %v281 = vld [vmem:[%s1 + $0x348] sm:$0xff]
      %v282 = vld [vmem:[%s1 + $0x350] sm:$0xff]
      %v283 = vld [vmem:[%s1 + $0x358] sm:$0xff]
      %v284 = vld [vmem:[%s1 + $0x360] sm:$0xff]
      %v285 = vld [vmem:[%s1 + $0x368] sm:$0xff]
      %v286 = vld [vmem:[%s1 + $0x370] sm:$0xff]
      %v287 = vld [vmem:[%s1 + $0x378] sm:$0xff]
      %v288 = vld [vmem:[%s1 + $0x380] sm:$0xff]
      %v289 = vld [vmem:[%s1 + $0x388] sm:$0xff]
      %v290 = vld [vmem:[%s1 + $0x390] sm:$0xff]
      %v291 = vld [vmem:[%s1 + $0x398] sm:$0xff]
      %v292 = vld [vmem:[%s1 + $0x3a0] sm:$0xff]
      %v293 = vld [vmem:[%s1 + $0x3a8] sm:$0xff]
      %v294 = vld [vmem:[%s1 + $0x3b0] sm:$0xff]
      %v295 = vld [vmem:[%s1 + $0x3b8] sm:$0xff]
      %v296 = vld [vmem:[%s1 + $0x3c0] sm:$0xff]
      %v297 = vld [vmem:[%s1 + $0x3c8] sm:$0xff]
      %v298 = vld [vmem:[%s1 + $0x3d0] sm:$0xff]
      %v299 = vld [vmem:[%s1 + $0x3d8] sm:$0xff]
      %v300 = vld [vmem:[%s1 + $0x3e0] sm:$0xff]
      %v301 = vld [vmem:[%s1 + $0x3e8] sm:$0xff]
      %v302 = vld [vmem:[%s1 + $0x3f0] sm:$0xff]
      %v303 = vld [vmem:[%s1 + $0x3f8] sm:$0xff]
      %v304 = vld [vmem:[%s1 + $0x400] sm:$0xff]
      %v305 = vld [vmem:[%s1 + $0x408] sm:$0xff]
      %v306 = vld [vmem:[%s1 + $0x410] sm:$0xff]
      %v307 = vld [vmem:[%s1 + $0x418] sm:$0xff]
      %v308 = vld [vmem:[%s1 + $0x420] sm:$0xff]
      %v309 = vld [vmem:[%s1 + $0x428] sm:$0xff]
      %v310 = vld [vmem:[%s1 + $0x430] sm:$0xff]
      %v311 = vld [vmem:[%s1 + $0x438] sm:$0xff]
      %v312 = vld [vmem:[%s1 + $0x440] sm:$0xff]
      %v313 = vld [vmem:[%s1 + $0x448] sm:$0xff]
      %v314 = vld [vmem:[%s1 + $0x450] sm:$0xff]
      %v315 = vld [vmem:[%s1 + $0x458] sm:$0xff]
      %v316 = vld [vmem:[%s1 + $0x460] sm:$0xff]
      %v317 = vld [vmem:[%s1 + $0x468] sm:$0xff]
      %v318 = vld [vmem:[%s1 + $0x470] sm:$0xff]
      %v319 = vld [vmem:[%s1 + $0x478] sm:$0xff]
      %v320 = vld [vmem:[%s1 + $0x480] sm:$0xff]
      %v321 = vld [vmem:[%s1 + $0x488] sm:$0xff]
      %v322 = vld [vmem:[%s1 + $0x490] sm:$0xff]
      %v323 = vld [vmem:[%s1 + $0x498] sm:$0xff]
      %v324 = vld [vmem:[%s1 + $0x4a0] sm:$0xff]
      %v325 = vld [vmem:[%s1 + $0x4a8] sm:$0xff]
      %v326 = vld [vmem:[%s1 + $0x4b0] sm:$0xff]
      %v327 = vld [vmem:[%s1 + $0x4b8] sm:$0xff]
      %v328 = vld [vmem:[%s1 + $0x4c0] sm:$0xff]
      %v329 = vld [vmem:[%s1 + $0x4c8] sm:$0xff]
      %v330 = vld [vmem:[%s1 + $0x4d0] sm:$0xff]
      %v331 = vld [vmem:[%s1 + $0x4d8] sm:$0xff]
      %v332 = vld [vmem:[%s1 + $0x4e0] sm:$0xff]
      %v333 = vld [vmem:[%s1 + $0x4e8] sm:$0xff]
      %v334 = vld [vmem:[%s1 + $0x4f0] sm:$0xff]
      %v335 = vld [vmem:[%s1 + $0x4f8] sm:$0xff]
      %v336 = vld [vmem:[%s1 + $0x500] sm:$0xff]
      %v337 = vld [vmem:[%s1 + $0x508] sm:$0xff]
      %v338 = vld [vmem:[%s1 + $0x510] sm:$0xff]
      %v339 = vld [vmem:[%s1 + $0x518] sm:$0xff]
      %v340 = vld [vmem:[%s1 + $0x520] sm:$0xff]
      %v341 = vld [vmem:[%s1 + $0x528] sm:$0xff]
      %v342 = vld [vmem:[%s1 + $0x530] sm:$0xff]
      %v343 = vld [vmem:[%s1 + $0x538] sm:$0xff]
      %v344 = vld [vmem:[%s1 + $0x540] sm:$0xff]
      %v345 = vld [vmem:[%s1 + $0x548] sm:$0xff]
      %v346 = vld [vmem:[%s1 + $0x550] sm:$0xff]
      %v347 = vld [vmem:[%s1 + $0x558] sm:$0xff]
      %v348 = vld [vmem:[%s1 + $0x560] sm:$0xff]
      %v349 = vld [vmem:[%s1 + $0x568] sm:$0xff]
      %v350 = vld [vmem:[%s1 + $0x570] sm:$0xff]
      %v351 = vld [vmem:[%s1 + $0x578] sm:$0xff]
      %v352 = vld [vmem:[%s1 + $0x580] sm:$0xff]
      %v353 = vld [vmem:[%s1 + $0x588] sm:$0xff]
      %v354 = vld [vmem:[%s1 + $0x590] sm:$0xff]
      %v355 = vld [vmem:[%s1 + $0x598] sm:$0xff]
      %v356 = vld [vmem:[%s1 + $0x5a0] sm:$0xff]
      %v357 = vld [vmem:[%s1 + $0x5a8] sm:$0xff]
      %v358 = vld [vmem:[%s1 + $0x5b0] sm:$0xff]
      %v359 = vld [vmem:[%s1 + $0x5b8] sm:$0xff]
      %v360 = vld [vmem:[%s1 + $0x5c0] sm:$0xff]
      %v361 = vld [vmem:[%s1 + $0x5c8] sm:$0xff]
      %v362 = vld [vmem:[%s1 + $0x5d0] sm:$0xff]
      %v363 = vld [vmem:[%s1 + $0x5d8] sm:$0xff]
      %v364 = vld [vmem:[%s1 + $0x5e0] sm:$0xff]
      %v365 = vld [vmem:[%s1 + $0x5e8] sm:$0xff]
      %v366 = vld [vmem:[%s1 + $0x5f0] sm:$0xff]
      %v367 = vld [vmem:[%s1 + $0x5f8] sm:$0xff]
      %v368 = vld [vmem:[%s1 + $0x600] sm:$0xff]
      %v369 = vld [vmem:[%s1 + $0x608] sm:$0xff]
      %v370 = vld [vmem:[%s1 + $0x610] sm:$0xff]
      %v371 = vld [vmem:[%s1 + $0x618] sm:$0xff]
      %v372 = vld [vmem:[%s1 + $0x620] sm:$0xff]
      %v373 = vld [vmem:[%s1 + $0x628] sm:$0xff]
      %v374 = vld [vmem:[%s1 + $0x630] sm:$0xff]
      %v375 = vld [vmem:[%s1 + $0x638] sm:$0xff]
      %v376 = vld [vmem:[%s1 + $0x640] sm:$0xff]
      %v377 = vld [vmem:[%s1 + $0x648] sm:$0xff]
      %v378 = vld [vmem:[%s1 + $0x650] sm:$0xff]
      %v379 = vld [vmem:[%s1 + $0x658] sm:$0xff]
      %v380 = vld [vmem:[%s1 + $0x660] sm:$0xff]
      %v381 = vld [vmem:[%s1 + $0x668] sm:$0xff]
      %v382 = vld [vmem:[%s1 + $0x670] sm:$0xff]
      %v383 = vld [vmem:[%s1 + $0x678] sm:$0xff]
      %v384 = vld [vmem:[%s1 + $0x680] sm:$0xff]
      %v385 = vld [vmem:[%s1 + $0x688] sm:$0xff]
      %v386 = vld [vmem:[%s1 + $0x690] sm:$0xff]
      %v387 = vld [vmem:[%s1 + $0x698] sm:$0xff]
      %v388 = vld [vmem:[%s1 + $0x6a0] sm:$0xff]
      %v389 = vld [vmem:[%s1 + $0x6a8] sm:$0xff]
      %v390 = vld [vmem:[%s1 + $0x6b0] sm:$0xff]
      %v391 = vld [vmem:[%s1 + $0x6b8] sm:$0xff]
      %v392 = vld [vmem:[%s1 + $0x6c0] sm:$0xff]
      %v393 = vld [vmem:[%s1 + $0x6c8] sm:$0xff]
      %v394 = vld [vmem:[%s1 + $0x6d0] sm:$0xff]
      %v395 = vld [vmem:[%s1 + $0x6d8] sm:$0xff]
      %v396 = vld [vmem:[%s1 + $0x6e0] sm:$0xff]
      %v397 = vld [vmem:[%s1 + $0x6e8] sm:$0xff]
      %v398 = vld [vmem:[%s1 + $0x6f0] sm:$0xff]
      %v399 = vld [vmem:[%s1 + $0x6f8] sm:$0xff]
      %v400 = vld [vmem:[%s1 + $0x700] sm:$0xff]
      %v401 = vld [vmem:[%s1 + $0x708] sm:$0xff]
      %v402 = vld [vmem:[%s1 + $0x710] sm:$0xff]
      %v403 = vld [vmem:[%s1 + $0x718] sm:$0xff]
      %v404 = vld [vmem:[%s1 + $0x720] sm:$0xff]
      %v405 = vld [vmem:[%s1 + $0x728] sm:$0xff]
      %v406 = vld [vmem:[%s1 + $0x730] sm:$0xff]
      %v407 = vld [vmem:[%s1 + $0x738] sm:$0xff]
      %v408 = vld [vmem:[%s1 + $0x740] sm:$0xff]
      %v409 = vld [vmem:[%s1 + $0x748] sm:$0xff]
      %v410 = vld [vmem:[%s1 + $0x750] sm:$0xff]
      %v411 = vld [vmem:[%s1 + $0x758] sm:$0xff]
      %v412 = vld [vmem:[%s1 + $0x760] sm:$0xff]
      %v413 = vld [vmem:[%s1 + $0x768] sm:$0xff]
      %v414 = vld [vmem:[%s1 + $0x770] sm:$0xff]
      %v415 = vld [vmem:[%s1 + $0x778] sm:$0xff]
      %v416 = vld [vmem:[%s1 + $0x780] sm:$0xff]
      %v417 = vld [vmem:[%s1 + $0x788] sm:$0xff]
      %v418 = vld [vmem:[%s1 + $0x790] sm:$0xff]
      %v419 = vld [vmem:[%s1 + $0x798] sm:$0xff]
      %v420 = vld [vmem:[%s1 + $0x7a0] sm:$0xff]
      %v421 = vld [vmem:[%s1 + $0x7a8] sm:$0xff]
      %v422 = vld [vmem:[%s1 + $0x7b0] sm:$0xff]
      %v423 = vld [vmem:[%s1 + $0x7b8] sm:$0xff]
      %v424 = vld [vmem:[%s1 + $0x7c0] sm:$0xff]
      %v425 = vld [vmem:[%s1 + $0x7c8] sm:$0xff]
      %v426 = vld [vmem:[%s1 + $0x7d0] sm:$0xff]
      %v427 = vld [vmem:[%s1 + $0x7d8] sm:$0xff]
      %v428 = vld [vmem:[%s1 + $0x7e0] sm:$0xff]
      %v429 = vld [vmem:[%s1 + $0x7e8] sm:$0xff]
      %v430 = vld [vmem:[%s1 + $0x7f0] sm:$0xff]
      %v431 = vld [vmem:[%s1 + $0x7f8] sm:$0xff]
      %v432 = vld [vmem:[%s1 + $0x800] sm:$0xff]
      %v433 = vld [vmem:[%s1 + $0x808] sm:$0xff]
      %v434 = vld [vmem:[%s1 + $0x810] sm:$0xff]
      %v435 = vld [vmem:[%s1 + $0x818] sm:$0xff]
      %v436 = vld [vmem:[%s1 + $0x820] sm:$0xff]
      %v437 = vld [vmem:[%s1 + $0x828] sm:$0xff]
      %v438 = vld [vmem:[%s1 + $0x830] sm:$0xff]
      %v439 = vld [vmem:[%s1 + $0x838] sm:$0xff]
      %v440 = vld [vmem:[%s1 + $0x840] sm:$0xff]
      %v441 = vld [vmem:[%s1 + $0x848] sm:$0xff]
      %v442 = vld [vmem:[%s1 + $0x850] sm:$0xff]
      %v443 = vld [vmem:[%s1 + $0x858] sm:$0xff]
      %v444 = vld [vmem:[%s1 + $0x860] sm:$0xff]
      %v445 = vld [vmem:[%s1 + $0x868] sm:$0xff]
      %v446 = vld [vmem:[%s1 + $0x870] sm:$0xff]
      %v447 = vld [vmem:[%s1 + $0x878] sm:$0xff]
      %v448 = vld [vmem:[%s1 + $0x880] sm:$0xff]
      %v449 = vld [vmem:[%s1 + $0x888] sm:$0xff]
      %v450 = vld [vmem:[%s1 + $0x890] sm:$0xff]
      %v451 = vld [vmem:[%s1 + $0x898] sm:$0xff]
      %v452 = vld [vmem:[%s1 + $0x8a0] sm:$0xff]
      %v453 = vld [vmem:[%s1 + $0x8a8] sm:$0xff]
      %v454 = vld [vmem:[%s1 + $0x8b0] sm:$0xff]
      %v455 = vld [vmem:[%s1 + $0x8b8] sm:$0xff]
      %v456 = vld [vmem:[%s1 + $0x8c0] sm:$0xff]
      %v457 = vld [vmem:[%s1 + $0x8c8] sm:$0xff]
      %v458 = vld [vmem:[%s1 + $0x8d0] sm:$0xff]
      %v459 = vld [vmem:[%s1 + $0x8d8] sm:$0xff]
      %v460 = vld [vmem:[%s1 + $0x8e0] sm:$0xff]
      %v461 = vld [vmem:[%s1 + $0x8e8] sm:$0xff]
      %v462 = vld [vmem:[%s1 + $0x8f0] sm:$0xff]
      %v463 = vld [vmem:[%s1 + $0x8f8] sm:$0xff]
      %v464 = vld [vmem:[%s1 + $0x900] sm:$0xff]
      %v465 = vld [vmem:[%s1 + $0x908] sm:$0xff]
      %v466 = vld [vmem:[%s1 + $0x910] sm:$0xff]
      %v467 = vld [vmem:[%s1 + $0x918] sm:$0xff]
      %v468 = vld [vmem:[%s1 + $0x920] sm:$0xff]
      %v469 = vld [vmem:[%s1 + $0x928] sm:$0xff]
      %v470 = vld [vmem:[%s1 + $0x930] sm:$0xff]
      %v471 = vld [vmem:[%s1 + $0x938] sm:$0xff]
      %v472 = vld [vmem:[%s1 + $0x940] sm:$0xff]
      %v473 = vld [vmem:[%s1 + $0x948] sm:$0xff]
      %v474 = vld [vmem:[%s1 + $0x950] sm:$0xff]
      %v475 = vld [vmem:[%s1 + $0x958] sm:$0xff]
      %v476 = vld [vmem:[%s1 + $0x960] sm:$0xff]
      %v477 = vld [vmem:[%s1 + $0x968] sm:$0xff]
      %v478 = vld [vmem:[%s1 + $0x970] sm:$0xff]
      %v479 = vld [vmem:[%s1 + $0x978] sm:$0xff]
      %v480 = vld [vmem:[%s1 + $0x980] sm:$0xff]
      %v481 = vld [vmem:[%s1 + $0x988] sm:$0xff]
      %v482 = vld [vmem:[%s1 + $0x990] sm:$0xff]
      %v483 = vld [vmem:[%s1 + $0x998] sm:$0xff]
      %v484 = vld [vmem:[%s1 + $0x9a0] sm:$0xff]
      %v485 = vld [vmem:[%s1 + $0x9a8] sm:$0xff]
      %v486 = vld [vmem:[%s1 + $0x9b0] sm:$0xff]
      %v487 = vld [vmem:[%s1 + $0x9b8] sm:$0xff]
      %v488 = vld [vmem:[%s1 + $0x9c0] sm:$0xff]
      %v489 = vld [vmem:[%s1 + $0x9c8] sm:$0xff]
      %v490 = vld [vmem:[%s1 + $0x9d0] sm:$0xff]
      %v491 = vld [vmem:[%s1 + $0x9d8] sm:$0xff]
      %v492 = vld [vmem:[%s1 + $0x9e0] sm:$0xff]
      %v493 = vld [vmem:[%s1 + $0x9e8] sm:$0xff]
      %v494 = vld [vmem:[%s1 + $0x9f0] sm:$0xff]
      %v495 = vld [vmem:[%s1 + $0x9f8] sm:$0xff]
      %v497 = vshrl.u32 %v174, 16
      %v499 = vshll.u32 %v174, 16
      %v501 = vrot.slane %v499, 1
      %v502 = vor.u32 %v497, %v501
      %v504 = vshrl.u32 %v175, 16
      %v506 = vshll.u32 %v175, 16
      %v508 = vrot.slane %v506, 1
      %v509 = vor.u32 %v504, %v508
      %v672 = vunpack.c.l.b16 %v336
      %v673 = vunpack.c.h.b16 %v336
      %v674 = vunpack.c.l.b16 %v337
      %v675 = vunpack.c.h.b16 %v337
      %v676 = vunpack.c.l.b16 %v338
      %v677 = vunpack.c.h.b16 %v338
      %v678 = vunpack.c.l.b16 %v339
      %v679 = vunpack.c.h.b16 %v339
      %v680 = vunpack.c.l.b16 %v340
      %v681 = vunpack.c.h.b16 %v340
      %v682 = vunpack.c.l.b16 %v341
      %v683 = vunpack.c.h.b16 %v341
      %v684 = vunpack.c.l.b16 %v342
      %v685 = vunpack.c.h.b16 %v342
      %v686 = vunpack.c.l.b16 %v343
      %v687 = vunpack.c.h.b16 %v343
      %v688 = vunpack.c.l.b16 %v344
      %v689 = vunpack.c.h.b16 %v344
      %v690 = vunpack.c.l.b16 %v345
      %v691 = vunpack.c.h.b16 %v345
      %v692 = vunpack.c.l.b16 %v346
      %v693 = vunpack.c.h.b16 %v346
      %v694 = vunpack.c.l.b16 %v347
      %v695 = vunpack.c.h.b16 %v347
      %v696 = vunpack.c.l.b16 %v348
      %v697 = vunpack.c.h.b16 %v348
      %v698 = vunpack.c.l.b16 %v349
      %v699 = vunpack.c.h.b16 %v349
      %v700 = vunpack.c.l.b16 %v350
      %v701 = vunpack.c.h.b16 %v350
      %v702 = vunpack.c.l.b16 %v351
      %v703 = vunpack.c.h.b16 %v351
      %v704 = vunpack.c.l.b16 %v352
      %v705 = vunpack.c.h.b16 %v352
      %v706 = vunpack.c.l.b16 %v353
      %v707 = vunpack.c.h.b16 %v353
      %v708 = vunpack.c.l.b16 %v354
      %v709 = vunpack.c.h.b16 %v354
      %v710 = vunpack.c.l.b16 %v355
      %v711 = vunpack.c.h.b16 %v355
      %v712 = vunpack.c.l.b16 %v356
      %v713 = vunpack.c.h.b16 %v356
      %v714 = vunpack.c.l.b16 %v357
      %v715 = vunpack.c.h.b16 %v357
      %v716 = vunpack.c.l.b16 %v358
      %v717 = vunpack.c.h.b16 %v358
      %v718 = vunpack.c.l.b16 %v359
      %v719 = vunpack.c.h.b16 %v359
      %v720 = vunpack.c.l.b16 %v360
      %v721 = vunpack.c.h.b16 %v360
      %v722 = vunpack.c.l.b16 %v361
      %v723 = vunpack.c.h.b16 %v361
      %v724 = vunpack.c.l.b16 %v362
      %v725 = vunpack.c.h.b16 %v362
      %v726 = vunpack.c.l.b16 %v363
      %v727 = vunpack.c.h.b16 %v363
      %v728 = vunpack.c.l.b16 %v364
      %v729 = vunpack.c.h.b16 %v364
      %v730 = vunpack.c.l.b16 %v365
      %v731 = vunpack.c.h.b16 %v365
      %v732 = vunpack.c.l.b16 %v366
      %v733 = vunpack.c.h.b16 %v366
      %v734 = vunpack.c.l.b16 %v367
      %v735 = vunpack.c.h.b16 %v367
      %v736 = vunpack.c.l.b16 %v368
      %v737 = vunpack.c.h.b16 %v368
      %v738 = vunpack.c.l.b16 %v369
      %v739 = vunpack.c.h.b16 %v369
      %v740 = vunpack.c.l.b16 %v370
      %v741 = vunpack.c.h.b16 %v370
      %v742 = vunpack.c.l.b16 %v371
      %v743 = vunpack.c.h.b16 %v371
      %v744 = vunpack.c.l.b16 %v372
      %v745 = vunpack.c.h.b16 %v372
      %v746 = vunpack.c.l.b16 %v373
      %v747 = vunpack.c.h.b16 %v373
      %v748 = vunpack.c.l.b16 %v374
      %v749 = vunpack.c.h.b16 %v374
      %v750 = vunpack.c.l.b16 %v375
      %v751 = vunpack.c.h.b16 %v375
      %v752 = vunpack.c.l.b16 %v376
      %v753 = vunpack.c.h.b16 %v376
      %v754 = vunpack.c.l.b16 %v377
      %v755 = vunpack.c.h.b16 %v377
      %v756 = vunpack.c.l.b16 %v378
      %v757 = vunpack.c.h.b16 %v378
      %v758 = vunpack.c.l.b16 %v379
      %v759 = vunpack.c.h.b16 %v379
      %v760 = vunpack.c.l.b16 %v380
      %v761 = vunpack.c.h.b16 %v380
      %v762 = vunpack.c.l.b16 %v381
      %v763 = vunpack.c.h.b16 %v381
      %v764 = vunpack.c.l.b16 %v382
      %v765 = vunpack.c.h.b16 %v382
      %v766 = vunpack.c.l.b16 %v383
      %v767 = vunpack.c.h.b16 %v383
      %v768 = vunpack.c.l.b16 %v384
      %v769 = vunpack.c.h.b16 %v384
      %v770 = vunpack.c.l.b16 %v385
      %v771 = vunpack.c.h.b16 %v385
      %v772 = vunpack.c.l.b16 %v386
      %v773 = vunpack.c.h.b16 %v386
      %v774 = vunpack.c.l.b16 %v387
      %v775 = vunpack.c.h.b16 %v387
      %v776 = vunpack.c.l.b16 %v388
      %v777 = vunpack.c.h.b16 %v388
      %v778 = vunpack.c.l.b16 %v389
      %v779 = vunpack.c.h.b16 %v389
      %v780 = vunpack.c.l.b16 %v390
      %v781 = vunpack.c.h.b16 %v390
      %v782 = vunpack.c.l.b16 %v391
      %v783 = vunpack.c.h.b16 %v391
      %v784 = vunpack.c.l.b16 %v392
      %v785 = vunpack.c.h.b16 %v392
      %v786 = vunpack.c.l.b16 %v393
      %v787 = vunpack.c.h.b16 %v393
      %v788 = vunpack.c.l.b16 %v394
      %v789 = vunpack.c.h.b16 %v394
      %v790 = vunpack.c.l.b16 %v395
      %v791 = vunpack.c.h.b16 %v395
      %v792 = vunpack.c.l.b16 %v396
      %v793 = vunpack.c.h.b16 %v396
      %v794 = vunpack.c.l.b16 %v397
      %v795 = vunpack.c.h.b16 %v397
      %v796 = vunpack.c.l.b16 %v398
      %v797 = vunpack.c.h.b16 %v398
      %v798 = vunpack.c.l.b16 %v399
      %v799 = vunpack.c.h.b16 %v399
      %v800 = vunpack.c.l.b16 %v400
      %v801 = vunpack.c.h.b16 %v400
      %v802 = vunpack.c.l.b16 %v401
      %v803 = vunpack.c.h.b16 %v401
      %v804 = vunpack.c.l.b16 %v402
      %v805 = vunpack.c.h.b16 %v402
      %v806 = vunpack.c.l.b16 %v403
      %v807 = vunpack.c.h.b16 %v403
      %v808 = vunpack.c.l.b16 %v404
      %v809 = vunpack.c.h.b16 %v404
      %v810 = vunpack.c.l.b16 %v405
      %v811 = vunpack.c.h.b16 %v405
      %v812 = vunpack.c.l.b16 %v406
      %v813 = vunpack.c.h.b16 %v406
      %v814 = vunpack.c.l.b16 %v407
      %v815 = vunpack.c.h.b16 %v407
      %v816 = vunpack.c.l.b16 %v408
      %v817 = vunpack.c.h.b16 %v408
      %v818 = vunpack.c.l.b16 %v409
      %v819 = vunpack.c.h.b16 %v409
      %v820 = vunpack.c.l.b16 %v410
      %v821 = vunpack.c.h.b16 %v410
      %v822 = vunpack.c.l.b16 %v411
      %v823 = vunpack.c.h.b16 %v411
      %v824 = vunpack.c.l.b16 %v412
      %v825 = vunpack.c.h.b16 %v412
      %v826 = vunpack.c.l.b16 %v413
      %v827 = vunpack.c.h.b16 %v413
      %v828 = vunpack.c.l.b16 %v414
      %v829 = vunpack.c.h.b16 %v414
      %v830 = vunpack.c.l.b16 %v415
      %v831 = vunpack.c.h.b16 %v415
      %v832 = vunpack.c.l.b16 %v416
      %v833 = vunpack.c.h.b16 %v416
      %v834 = vunpack.c.l.b16 %v417
      %v835 = vunpack.c.h.b16 %v417
      %v836 = vunpack.c.l.b16 %v418
      %v837 = vunpack.c.h.b16 %v418
      %v838 = vunpack.c.l.b16 %v419
      %v839 = vunpack.c.h.b16 %v419
      %v840 = vunpack.c.l.b16 %v420
      %v841 = vunpack.c.h.b16 %v420
      %v842 = vunpack.c.l.b16 %v421
      %v843 = vunpack.c.h.b16 %v421
      %v844 = vunpack.c.l.b16 %v422
      %v845 = vunpack.c.h.b16 %v422
      %v846 = vunpack.c.l.b16 %v423
      %v847 = vunpack.c.h.b16 %v423
      %v848 = vunpack.c.l.b16 %v424
      %v849 = vunpack.c.h.b16 %v424
      %v850 = vunpack.c.l.b16 %v425
      %v851 = vunpack.c.h.b16 %v425
      %v852 = vunpack.c.l.b16 %v426
      %v853 = vunpack.c.h.b16 %v426
      %v854 = vunpack.c.l.b16 %v427
      %v855 = vunpack.c.h.b16 %v427
      %v856 = vunpack.c.l.b16 %v428
      %v857 = vunpack.c.h.b16 %v428
      %v858 = vunpack.c.l.b16 %v429
      %v859 = vunpack.c.h.b16 %v429
      %v860 = vunpack.c.l.b16 %v430
      %v861 = vunpack.c.h.b16 %v430
      %v862 = vunpack.c.l.b16 %v431
      %v863 = vunpack.c.h.b16 %v431
      %v864 = vunpack.c.l.b16 %v432
      %v865 = vunpack.c.h.b16 %v432
      %v866 = vunpack.c.l.b16 %v433
      %v867 = vunpack.c.h.b16 %v433
      %v868 = vunpack.c.l.b16 %v434
      %v869 = vunpack.c.h.b16 %v434
      %v870 = vunpack.c.l.b16 %v435
      %v871 = vunpack.c.h.b16 %v435
      %v872 = vunpack.c.l.b16 %v436
      %v873 = vunpack.c.h.b16 %v436
      %v874 = vunpack.c.l.b16 %v437
      %v875 = vunpack.c.h.b16 %v437
      %v876 = vunpack.c.l.b16 %v438
      %v877 = vunpack.c.h.b16 %v438
      %v878 = vunpack.c.l.b16 %v439
      %v879 = vunpack.c.h.b16 %v439
      %v880 = vunpack.c.l.b16 %v440
      %v881 = vunpack.c.h.b16 %v440
      %v882 = vunpack.c.l.b16 %v441
      %v883 = vunpack.c.h.b16 %v441
      %v884 = vunpack.c.l.b16 %v442
      %v885 = vunpack.c.h.b16 %v442
      %v886 = vunpack.c.l.b16 %v443
      %v887 = vunpack.c.h.b16 %v443
      %v888 = vunpack.c.l.b16 %v444
      %v889 = vunpack.c.h.b16 %v444
      %v890 = vunpack.c.l.b16 %v445
      %v891 = vunpack.c.h.b16 %v445
      %v892 = vunpack.c.l.b16 %v446
      %v893 = vunpack.c.h.b16 %v446
      %v894 = vunpack.c.l.b16 %v447
      %v895 = vunpack.c.h.b16 %v447
      %v896 = vunpack.c.l.b16 %v448
      %v897 = vunpack.c.h.b16 %v448
      %v898 = vunpack.c.l.b16 %v449
      %v899 = vunpack.c.h.b16 %v449
      %v900 = vunpack.c.l.b16 %v450
      %v901 = vunpack.c.h.b16 %v450
      %v902 = vunpack.c.l.b16 %v451
      %v903 = vunpack.c.h.b16 %v451
      %v904 = vunpack.c.l.b16 %v452
      %v905 = vunpack.c.h.b16 %v452
      %v906 = vunpack.c.l.b16 %v453
      %v907 = vunpack.c.h.b16 %v453
      %v908 = vunpack.c.l.b16 %v454
      %v909 = vunpack.c.h.b16 %v454
      %v910 = vunpack.c.l.b16 %v455
      %v911 = vunpack.c.h.b16 %v455
      %v912 = vunpack.c.l.b16 %v456
      %v913 = vunpack.c.h.b16 %v456
      %v914 = vunpack.c.l.b16 %v457
      %v915 = vunpack.c.h.b16 %v457
      %v916 = vunpack.c.l.b16 %v458
      %v917 = vunpack.c.h.b16 %v458
      %v918 = vunpack.c.l.b16 %v459
      %v919 = vunpack.c.h.b16 %v459
      %v920 = vunpack.c.l.b16 %v460
      %v921 = vunpack.c.h.b16 %v460
      %v922 = vunpack.c.l.b16 %v461
      %v923 = vunpack.c.h.b16 %v461
      %v924 = vunpack.c.l.b16 %v462
      %v925 = vunpack.c.h.b16 %v462
      %v926 = vunpack.c.l.b16 %v463
      %v927 = vunpack.c.h.b16 %v463
      %v928 = vunpack.c.l.b16 %v464
      %v929 = vunpack.c.h.b16 %v464
      %v930 = vunpack.c.l.b16 %v465
      %v931 = vunpack.c.h.b16 %v465
      %v932 = vunpack.c.l.b16 %v466
      %v933 = vunpack.c.h.b16 %v466
      %v934 = vunpack.c.l.b16 %v467
      %v935 = vunpack.c.h.b16 %v467
      %v936 = vunpack.c.l.b16 %v468
      %v937 = vunpack.c.h.b16 %v468
      %v938 = vunpack.c.l.b16 %v469
      %v939 = vunpack.c.h.b16 %v469
      %v940 = vunpack.c.l.b16 %v470
      %v941 = vunpack.c.h.b16 %v470
      %v942 = vunpack.c.l.b16 %v471
      %v943 = vunpack.c.h.b16 %v471
      %v944 = vunpack.c.l.b16 %v472
      %v945 = vunpack.c.h.b16 %v472
      %v946 = vunpack.c.l.b16 %v473
      %v947 = vunpack.c.h.b16 %v473
      %v948 = vunpack.c.l.b16 %v474
      %v949 = vunpack.c.h.b16 %v474
      %v950 = vunpack.c.l.b16 %v475
      %v951 = vunpack.c.h.b16 %v475
      %v952 = vunpack.c.l.b16 %v476
      %v953 = vunpack.c.h.b16 %v476
      %v954 = vunpack.c.l.b16 %v477
      %v955 = vunpack.c.h.b16 %v477
      %v956 = vunpack.c.l.b16 %v478
      %v957 = vunpack.c.h.b16 %v478
      %v958 = vunpack.c.l.b16 %v479
      %v959 = vunpack.c.h.b16 %v479
      %v960 = vunpack.c.l.b16 %v480
      %v961 = vunpack.c.h.b16 %v480
      %v962 = vunpack.c.l.b16 %v481
      %v963 = vunpack.c.h.b16 %v481
      %v964 = vunpack.c.l.b16 %v482
      %v965 = vunpack.c.h.b16 %v482
      %v966 = vunpack.c.l.b16 %v483
      %v967 = vunpack.c.h.b16 %v483
      %v968 = vunpack.c.l.b16 %v484
      %v969 = vunpack.c.h.b16 %v484
      %v970 = vunpack.c.l.b16 %v485
      %v971 = vunpack.c.h.b16 %v485
      %v972 = vunpack.c.l.b16 %v486
      %v973 = vunpack.c.h.b16 %v486
      %v974 = vunpack.c.l.b16 %v487
      %v975 = vunpack.c.h.b16 %v487
      %v976 = vunpack.c.l.b16 %v488
      %v977 = vunpack.c.h.b16 %v488
      %v978 = vunpack.c.l.b16 %v489
      %v979 = vunpack.c.h.b16 %v489
      %v980 = vunpack.c.l.b16 %v490
      %v981 = vunpack.c.h.b16 %v490
      %v982 = vunpack.c.l.b16 %v491
      %v983 = vunpack.c.h.b16 %v491
      %v984 = vunpack.c.l.b16 %v492
      %v985 = vunpack.c.h.b16 %v492
      %v986 = vunpack.c.l.b16 %v493
      %v987 = vunpack.c.h.b16 %v493
      %v988 = vunpack.c.l.b16 %v494
      %v989 = vunpack.c.h.b16 %v494
      %v990 = vunpack.c.l.b16 %v495
      %v991 = vunpack.c.h.b16 %v495
      %v992 = vpack.c.b16 %v682, %v672
      %v993 = vpack.c.b16 %v683, %v673
      %v994 = vpack.c.b16 %v684, %v674
      %v995 = vpack.c.b16 %v685, %v675
      %v996 = vpack.c.b16 %v686, %v676
      %v997 = vpack.c.b16 %v687, %v677
      %v998 = vpack.c.b16 %v688, %v678
      %v999 = vpack.c.b16 %v689, %v679
      %v1000 = vpack.c.b16 %v690, %v680
      %v1001 = vpack.c.b16 %v691, %v681
      %v1002 = vpack.c.b16 %v702, %v692
      %v1003 = vpack.c.b16 %v703, %v693
      %v1004 = vpack.c.b16 %v704, %v694
      %v1005 = vpack.c.b16 %v705, %v695
      %v1006 = vpack.c.b16 %v706, %v696
      %v1007 = vpack.c.b16 %v707, %v697
      %v1008 = vpack.c.b16 %v708, %v698
      %v1009 = vpack.c.b16 %v709, %v699
      %v1010 = vpack.c.b16 %v710, %v700
      %v1011 = vpack.c.b16 %v711, %v701
      %v1012 = vpack.c.b16 %v722, %v712
      %v1013 = vpack.c.b16 %v723, %v713
      %v1014 = vpack.c.b16 %v724, %v714
      %v1015 = vpack.c.b16 %v725, %v715
      %v1016 = vpack.c.b16 %v726, %v716
      %v1017 = vpack.c.b16 %v727, %v717
      %v1018 = vpack.c.b16 %v728, %v718
      %v1019 = vpack.c.b16 %v729, %v719
      %v1020 = vpack.c.b16 %v730, %v720
      %v1021 = vpack.c.b16 %v731, %v721
      %v1022 = vpack.c.b16 %v742, %v732
      %v1023 = vpack.c.b16 %v743, %v733
      %v1024 = vpack.c.b16 %v744, %v734
      %v1025 = vpack.c.b16 %v745, %v735
      %v1026 = vpack.c.b16 %v746, %v736
      %v1027 = vpack.c.b16 %v747, %v737
      %v1028 = vpack.c.b16 %v748, %v738
      %v1029 = vpack.c.b16 %v749, %v739
      %v1030 = vpack.c.b16 %v750, %v740
      %v1031 = vpack.c.b16 %v751, %v741
      %v1032 = vpack.c.b16 %v762, %v752
      %v1033 = vpack.c.b16 %v763, %v753
      %v1034 = vpack.c.b16 %v764, %v754
      %v1035 = vpack.c.b16 %v765, %v755
      %v1036 = vpack.c.b16 %v766, %v756
      %v1037 = vpack.c.b16 %v767, %v757
      %v1038 = vpack.c.b16 %v768, %v758
      %v1039 = vpack.c.b16 %v769, %v759
      %v1040 = vpack.c.b16 %v770, %v760
      %v1041 = vpack.c.b16 %v771, %v761
      %v1042 = vpack.c.b16 %v782, %v772
      %v1043 = vpack.c.b16 %v783, %v773
      %v1044 = vpack.c.b16 %v784, %v774
      %v1045 = vpack.c.b16 %v785, %v775
      %v1046 = vpack.c.b16 %v786, %v776
      %v1047 = vpack.c.b16 %v787, %v777
      %v1048 = vpack.c.b16 %v788, %v778
      %v1049 = vpack.c.b16 %v789, %v779
      %v1050 = vpack.c.b16 %v790, %v780
      %v1051 = vpack.c.b16 %v791, %v781
      %v1052 = vpack.c.b16 %v802, %v792
      %v1053 = vpack.c.b16 %v803, %v793
      %v1054 = vpack.c.b16 %v804, %v794
      %v1055 = vpack.c.b16 %v805, %v795
      %v1056 = vpack.c.b16 %v806, %v796
      %v1057 = vpack.c.b16 %v807, %v797
      %v1058 = vpack.c.b16 %v808, %v798
      %v1059 = vpack.c.b16 %v809, %v799
      %v1060 = vpack.c.b16 %v810, %v800
      %v1061 = vpack.c.b16 %v811, %v801
      %v1062 = vpack.c.b16 %v822, %v812
      %v1063 = vpack.c.b16 %v823, %v813
      %v1064 = vpack.c.b16 %v824, %v814
      %v1065 = vpack.c.b16 %v825, %v815
      %v1066 = vpack.c.b16 %v826, %v816
      %v1067 = vpack.c.b16 %v827, %v817
      %v1068 = vpack.c.b16 %v828, %v818
      %v1069 = vpack.c.b16 %v829, %v819
      %v1070 = vpack.c.b16 %v830, %v820
      %v1071 = vpack.c.b16 %v831, %v821
      %v1072 = vpack.c.b16 %v842, %v832
      %v1073 = vpack.c.b16 %v843, %v833
      %v1074 = vpack.c.b16 %v844, %v834
      %v1075 = vpack.c.b16 %v845, %v835
      %v1076 = vpack.c.b16 %v846, %v836
      %v1077 = vpack.c.b16 %v847, %v837
      %v1078 = vpack.c.b16 %v848, %v838
      %v1079 = vpack.c.b16 %v849, %v839
      %v1080 = vpack.c.b16 %v850, %v840
      %v1081 = vpack.c.b16 %v851, %v841
      %v1082 = vpack.c.b16 %v862, %v852
      %v1083 = vpack.c.b16 %v863, %v853
      %v1084 = vpack.c.b16 %v864, %v854
      %v1085 = vpack.c.b16 %v865, %v855
      %v1086 = vpack.c.b16 %v866, %v856
      %v1087 = vpack.c.b16 %v867, %v857
      %v1088 = vpack.c.b16 %v868, %v858
      %v1089 = vpack.c.b16 %v869, %v859
      %v1090 = vpack.c.b16 %v870, %v860
      %v1091 = vpack.c.b16 %v871, %v861
      %v1092 = vpack.c.b16 %v882, %v872
      %v1093 = vpack.c.b16 %v883, %v873
      %v1094 = vpack.c.b16 %v884, %v874
      %v1095 = vpack.c.b16 %v885, %v875
      %v1096 = vpack.c.b16 %v886, %v876
      %v1097 = vpack.c.b16 %v887, %v877
      %v1098 = vpack.c.b16 %v888, %v878
      %v1099 = vpack.c.b16 %v889, %v879
      %v1100 = vpack.c.b16 %v890, %v880
      %v1101 = vpack.c.b16 %v891, %v881
      %v1102 = vpack.c.b16 %v902, %v892
      %v1103 = vpack.c.b16 %v903, %v893
      %v1104 = vpack.c.b16 %v904, %v894
      %v1105 = vpack.c.b16 %v905, %v895
      %v1106 = vpack.c.b16 %v906, %v896
      %v1107 = vpack.c.b16 %v907, %v897
      %v1108 = vpack.c.b16 %v908, %v898
      %v1109 = vpack.c.b16 %v909, %v899
      %v1110 = vpack.c.b16 %v910, %v900
      %v1111 = vpack.c.b16 %v911, %v901
      %v1112 = vpack.c.b16 %v922, %v912
      %v1113 = vpack.c.b16 %v923, %v913
      %v1114 = vpack.c.b16 %v924, %v914
      %v1115 = vpack.c.b16 %v925, %v915
      %v1116 = vpack.c.b16 %v926, %v916
      %v1117 = vpack.c.b16 %v927, %v917
      %v1118 = vpack.c.b16 %v928, %v918
      %v1119 = vpack.c.b16 %v929, %v919
      %v1120 = vpack.c.b16 %v930, %v920
      %v1121 = vpack.c.b16 %v931, %v921
      %v1122 = vpack.c.b16 %v942, %v932
      %v1123 = vpack.c.b16 %v943, %v933
      %v1124 = vpack.c.b16 %v944, %v934
      %v1125 = vpack.c.b16 %v945, %v935
      %v1126 = vpack.c.b16 %v946, %v936
      %v1127 = vpack.c.b16 %v947, %v937
      %v1128 = vpack.c.b16 %v948, %v938
      %v1129 = vpack.c.b16 %v949, %v939
      %v1130 = vpack.c.b16 %v950, %v940
      %v1131 = vpack.c.b16 %v951, %v941
      %v1132 = vpack.c.b16 %v962, %v952
      %v1133 = vpack.c.b16 %v963, %v953
      %v1134 = vpack.c.b16 %v964, %v954
      %v1135 = vpack.c.b16 %v965, %v955
      %v1136 = vpack.c.b16 %v966, %v956
      %v1137 = vpack.c.b16 %v967, %v957
      %v1138 = vpack.c.b16 %v968, %v958
      %v1139 = vpack.c.b16 %v969, %v959
      %v1140 = vpack.c.b16 %v970, %v960
      %v1141 = vpack.c.b16 %v971, %v961
      %v1142 = vpack.c.b16 %v982, %v972
      %v1143 = vpack.c.b16 %v983, %v973
      %v1144 = vpack.c.b16 %v984, %v974
      %v1145 = vpack.c.b16 %v985, %v975
      %v1146 = vpack.c.b16 %v986, %v976
      %v1147 = vpack.c.b16 %v987, %v977
      %v1148 = vpack.c.b16 %v988, %v978
      %v1149 = vpack.c.b16 %v989, %v979
      %v1150 = vpack.c.b16 %v990, %v980
      %v1151 = vpack.c.b16 %v991, %v981
      %1312 = vmatprep.subr.bf16.mxu0 %v993
      %1313 = vmatpush1.bf16.msra.mxu0 %v992
      %1314 = vmatprep.subr.bf16.mxu0 %v1003
      %1315 = vmatpush1.bf16.msra.mxu0 %v1002
      %1316 = vmatprep.subr.bf16.mxu0 %v1013
      %1317 = vmatpush1.bf16.msra.mxu0 %v1012
      %1318 = vmatprep.subr.bf16.mxu0 %v1023
      %1319 = vmatpush1.bf16.msra.mxu0 %v1022
      %1320 = vmatprep.subr.bf16.mxu0 %v1033
      %1321 = vmatpush1.bf16.msra.mxu0 %v1032
      %1322 = vmatprep.subr.bf16.mxu0 %v1043
      %1323 = vmatpush1.bf16.msra.mxu0 %v1042
      %1324 = vmatprep.subr.bf16.mxu0 %v1053
      %1325 = vmatpush1.bf16.msra.mxu0 %v1052
      %1326 = vmatprep.subr.bf16.mxu0 %v1063
      %1327 = vmatpush1.bf16.msra.mxu0 %v1062
      %1328 = vmatprep.subr.bf16.mxu0 %v1073
      %1329 = vmatpush1.bf16.msra.mxu0 %v1072
      %1330 = vmatprep.subr.bf16.mxu0 %v1083
      %1331 = vmatpush1.bf16.msra.mxu0 %v1082
      %1332 = vmatprep.subr.bf16.mxu0 %v1093
      %1333 = vmatpush1.bf16.msra.mxu0 %v1092
      %1334 = vmatprep.subr.bf16.mxu0 %v1103
      %1335 = vmatpush1.bf16.msra.mxu0 %v1102
      %1336 = vmatprep.subr.bf16.mxu0 %v1113
      %1337 = vmatpush1.bf16.msra.mxu0 %v1112
      %1338 = vmatprep.subr.bf16.mxu0 %v1123
      %1339 = vmatpush1.bf16.msra.mxu0 %v1122
      %1340 = vmatprep.subr.bf16.mxu0 %v1133
      %1341 = vmatpush1.bf16.msra.mxu0 %v1132
      %1342 = vmatprep.subr.bf16.mxu0 %v1143
      %1343 = vmatpush1.bf16.msra.mxu0 %v1142
      %1344 = vmatprep.mubr.bf16.mxu0 %v509
      %1345 = vmatmul.mubr.bf16.gmra.mrb[0].mxu0 %v502
      %v1346 = vpop.f32.mrb[0].mxu0
      %v1347 = vadd.f32 0.0, %v1346
      %v1348 = vpop.f32.mrb[0].mxu0
      %v1349 = vadd.f32 0.0, %v1348
      %v1350 = vpop.f32.mrb[0].mxu0
      %v1351 = vpop.f32.mrb[0].mxu0
      %1352 = vdwg.mxu0
      %1353 = vmatprep.subr.bf16.mxu0 %v995
      %1354 = vmatpush1.bf16.msra.mxu0 %v994
      %1355 = vmatprep.subr.bf16.mxu0 %v1005
      %1356 = vmatpush1.bf16.msra.mxu0 %v1004
      %1357 = vmatprep.subr.bf16.mxu0 %v1015
      %1358 = vmatpush1.bf16.msra.mxu0 %v1014
      %1359 = vmatprep.subr.bf16.mxu0 %v1025
      %1360 = vmatpush1.bf16.msra.mxu0 %v1024
      %1361 = vmatprep.subr.bf16.mxu0 %v1035
      %1362 = vmatpush1.bf16.msra.mxu0 %v1034
      %1363 = vmatprep.subr.bf16.mxu0 %v1045
      %1364 = vmatpush1.bf16.msra.mxu0 %v1044
      %1365 = vmatprep.subr.bf16.mxu0 %v1055
      %1366 = vmatpush1.bf16.msra.mxu0 %v1054
      %1367 = vmatprep.subr.bf16.mxu0 %v1065
      %1368 = vmatpush1.bf16.msra.mxu0 %v1064
      %1369 = vmatprep.subr.bf16.mxu0 %v1075
      %1370 = vmatpush1.bf16.msra.mxu0 %v1074
      %1371 = vmatprep.subr.bf16.mxu0 %v1085
      %1372 = vmatpush1.bf16.msra.mxu0 %v1084
      %1373 = vmatprep.subr.bf16.mxu0 %v1095
      %1374 = vmatpush1.bf16.msra.mxu0 %v1094
      %1375 = vmatprep.subr.bf16.mxu0 %v1105
      %1376 = vmatpush1.bf16.msra.mxu0 %v1104
      %1377 = vmatprep.subr.bf16.mxu0 %v1115
      %1378 = vmatpush1.bf16.msra.mxu0 %v1114
      %1379 = vmatprep.subr.bf16.mxu0 %v1125
      %1380 = vmatpush1.bf16.msra.mxu0 %v1124
      %1381 = vmatprep.subr.bf16.mxu0 %v1135
      %1382 = vmatpush1.bf16.msra.mxu0 %v1134
      %1383 = vmatprep.subr.bf16.mxu0 %v1145
      %1384 = vmatpush1.bf16.msra.mxu0 %v1144
      %1385 = vmatprep.mubr.bf16.mxu0 %v509
      %1386 = vmatmul.mubr.bf16.gmra.mrb[0].mxu0 %v502
      %v1387 = vpop.f32.mrb[0].mxu0
      %v1388 = vadd.f32 0.0, %v1387
      %v1389 = vpop.f32.mrb[0].mxu0
      %v1390 = vadd.f32 0.0, %v1389
      %v1391 = vpop.f32.mrb[0].mxu0
      %v1392 = vpop.f32.mrb[0].mxu0
      %1393 = vdwg.mxu0
      %1394 = vmatprep.subr.bf16.mxu0 %v997
      %1395 = vmatpush1.bf16.msra.mxu0 %v996
      %1396 = vmatprep.subr.bf16.mxu0 %v1007
      %1397 = vmatpush1.bf16.msra.mxu0 %v1006
      %1398 = vmatprep.subr.bf16.mxu0 %v1017
      %1399 = vmatpush1.bf16.msra.mxu0 %v1016
      %1400 = vmatprep.subr.bf16.mxu0 %v1027
      %1401 = vmatpush1.bf16.msra.mxu0 %v1026
      %1402 = vmatprep.subr.bf16.mxu0 %v1037
      %1403 = vmatpush1.bf16.msra.mxu0 %v1036
      %1404 = vmatprep.subr.bf16.mxu0 %v1047
      %1405 = vmatpush1.bf16.msra.mxu0 %v1046
      %1406 = vmatprep.subr.bf16.mxu0 %v1057
      %1407 = vmatpush1.bf16.msra.mxu0 %v1056
      %1408 = vmatprep.subr.bf16.mxu0 %v1067
      %1409 = vmatpush1.bf16.msra.mxu0 %v1066
      %1410 = vmatprep.subr.bf16.mxu0 %v1077
      %1411 = vmatpush1.bf16.msra.mxu0 %v1076
      %1412 = vmatprep.subr.bf16.mxu0 %v1087
      %1413 = vmatpush1.bf16.msra.mxu0 %v1086
      %1414 = vmatprep.subr.bf16.mxu0 %v1097
      %1415 = vmatpush1.bf16.msra.mxu0 %v1096
      %1416 = vmatprep.subr.bf16.mxu0 %v1107
      %1417 = vmatpush1.bf16.msra.mxu0 %v1106
      %1418 = vmatprep.subr.bf16.mxu0 %v1117
      %1419 = vmatpush1.bf16.msra.mxu0 %v1116
      %1420 = vmatprep.subr.bf16.mxu0 %v1127
      %1421 = vmatpush1.bf16.msra.mxu0 %v1126
      %1422 = vmatprep.subr.bf16.mxu0 %v1137
      %1423 = vmatpush1.bf16.msra.mxu0 %v1136
      %1424 = vmatprep.subr.bf16.mxu0 %v1147
      %1425 = vmatpush1.bf16.msra.mxu0 %v1146
      %1426 = vmatprep.mubr.bf16.mxu0 %v509
      %1427 = vmatmul.mubr.bf16.gmra.mrb[0].mxu0 %v502
      %v1428 = vpop.f32.mrb[0].mxu0
      %v1429 = vadd.f32 0.0, %v1428
      %v1430 = vpop.f32.mrb[0].mxu0
      %v1431 = vadd.f32 0.0, %v1430
      %v1432 = vpop.f32.mrb[0].mxu0
      %v1433 = vpop.f32.mrb[0].mxu0
      %1434 = vdwg.mxu0
      %1435 = vmatprep.subr.bf16.mxu0 %v999
      %1436 = vmatpush1.bf16.msra.mxu0 %v998
      %1437 = vmatprep.subr.bf16.mxu0 %v1009
      %1438 = vmatpush1.bf16.msra.mxu0 %v1008
      %1439 = vmatprep.subr.bf16.mxu0 %v1019
      %1440 = vmatpush1.bf16.msra.mxu0 %v1018
      %1441 = vmatprep.subr.bf16.mxu0 %v1029
      %1442 = vmatpush1.bf16.msra.mxu0 %v1028
      %1443 = vmatprep.subr.bf16.mxu0 %v1039
      %1444 = vmatpush1.bf16.msra.mxu0 %v1038
      %1445 = vmatprep.subr.bf16.mxu0 %v1049
      %1446 = vmatpush1.bf16.msra.mxu0 %v1048
      %1447 = vmatprep.subr.bf16.mxu0 %v1059
      %1448 = vmatpush1.bf16.msra.mxu0 %v1058
      %1449 = vmatprep.subr.bf16.mxu0 %v1069
      %1450 = vmatpush1.bf16.msra.mxu0 %v1068
      %1451 = vmatprep.subr.bf16.mxu0 %v1079
      %1452 = vmatpush1.bf16.msra.mxu0 %v1078
      %1453 = vmatprep.subr.bf16.mxu0 %v1089
      %1454 = vmatpush1.bf16.msra.mxu0 %v1088
      %1455 = vmatprep.subr.bf16.mxu0 %v1099
      %1456 = vmatpush1.bf16.msra.mxu0 %v1098
      %1457 = vmatprep.subr.bf16.mxu0 %v1109
      %1458 = vmatpush1.bf16.msra.mxu0 %v1108
      %1459 = vmatprep.subr.bf16.mxu0 %v1119
      %1460 = vmatpush1.bf16.msra.mxu0 %v1118
      %1461 = vmatprep.subr.bf16.mxu0 %v1129
      %1462 = vmatpush1.bf16.msra.mxu0 %v1128
      %1463 = vmatprep.subr.bf16.mxu0 %v1139
      %1464 = vmatpush1.bf16.msra.mxu0 %v1138
      %1465 = vmatprep.subr.bf16.mxu0 %v1149
      %1466 = vmatpush1.bf16.msra.mxu0 %v1148
      %1467 = vmatprep.mubr.bf16.mxu0 %v509
      %1468 = vmatmul.mubr.bf16.gmra.mrb[0].mxu0 %v502
      %v1469 = vpop.f32.mrb[0].mxu0
      %v1470 = vadd.f32 0.0, %v1469
      %v1471 = vpop.f32.mrb[0].mxu0
      %v1472 = vadd.f32 0.0, %v1471
      %v1473 = vpop.f32.mrb[0].mxu0
      %v1474 = vpop.f32.mrb[0].mxu0
      %1475 = vdwg.mxu0
      %1476 = vmatprep.subr.bf16.mxu0 %v1001
      %1477 = vmatpush1.bf16.msra.mxu0 %v1000
      %1478 = vmatprep.subr.bf16.mxu0 %v1011
      %1479 = vmatpush1.bf16.msra.mxu0 %v1010
      %1480 = vmatprep.subr.bf16.mxu0 %v1021
      %1481 = vmatpush1.bf16.msra.mxu0 %v1020
      %1482 = vmatprep.subr.bf16.mxu0 %v1031
      %1483 = vmatpush1.bf16.msra.mxu0 %v1030
      %1484 = vmatprep.subr.bf16.mxu0 %v1041
      %1485 = vmatpush1.bf16.msra.mxu0 %v1040
      %1486 = vmatprep.subr.bf16.mxu0 %v1051
      %1487 = vmatpush1.bf16.msra.mxu0 %v1050
      %1488 = vmatprep.subr.bf16.mxu0 %v1061
      %1489 = vmatpush1.bf16.msra.mxu0 %v1060
      %1490 = vmatprep.subr.bf16.mxu0 %v1071
      %1491 = vmatpush1.bf16.msra.mxu0 %v1070
      %1492 = vmatprep.subr.bf16.mxu0 %v1081
      %1493 = vmatpush1.bf16.msra.mxu0 %v1080
      %1494 = vmatprep.subr.bf16.mxu0 %v1091
      %1495 = vmatpush1.bf16.msra.mxu0 %v1090
      %1496 = vmatprep.subr.bf16.mxu0 %v1101
      %1497 = vmatpush1.bf16.msra.mxu0 %v1100
      %1498 = vmatprep.subr.bf16.mxu0 %v1111
      %1499 = vmatpush1.bf16.msra.mxu0 %v1110
      %1500 = vmatprep.subr.bf16.mxu0 %v1121
      %1501 = vmatpush1.bf16.msra.mxu0 %v1120
      %1502 = vmatprep.subr.bf16.mxu0 %v1131
      %1503 = vmatpush1.bf16.msra.mxu0 %v1130
      %1504 = vmatprep.subr.bf16.mxu0 %v1141
      %1505 = vmatpush1.bf16.msra.mxu0 %v1140
      %1506 = vmatprep.subr.bf16.mxu0 %v1151
      %1507 = vmatpush1.bf16.msra.mxu0 %v1150
      %1508 = vmatprep.mubr.bf16.mxu0 %v509
      %1509 = vmatmul.mubr.bf16.gmra.mrb[0].mxu0 %v502
      %v1510 = vpop.f32.mrb[0].mxu0
      %v1511 = vadd.f32 0.0, %v1510
      %v1512 = vpop.f32.mrb[0].mxu0
      %v1513 = vadd.f32 0.0, %v1512
      %v1514 = vpop.f32.mrb[0].mxu0
      %v1515 = vpop.f32.mrb[0].mxu0
      %1516 = vdwg.mxu0
      %v1677 = vunpack.c.l.b16 %v176
      %v1678 = vunpack.c.h.b16 %v176
      %v1679 = vunpack.c.l.b16 %v177
      %v1680 = vunpack.c.h.b16 %v177
      %v1681 = vunpack.c.l.b16 %v178
      %v1682 = vunpack.c.h.b16 %v178
      %v1683 = vunpack.c.l.b16 %v179
      %v1684 = vunpack.c.h.b16 %v179
      %v1685 = vunpack.c.l.b16 %v180
      %v1686 = vunpack.c.h.b16 %v180
      %v1687 = vunpack.c.l.b16 %v181
      %v1688 = vunpack.c.h.b16 %v181
      %v1689 = vunpack.c.l.b16 %v182
      %v1690 = vunpack.c.h.b16 %v182
      %v1691 = vunpack.c.l.b16 %v183
      %v1692 = vunpack.c.h.b16 %v183
      %v1693 = vunpack.c.l.b16 %v184
      %v1694 = vunpack.c.h.b16 %v184
      %v1695 = vunpack.c.l.b16 %v185
      %v1696 = vunpack.c.h.b16 %v185
      %v1697 = vunpack.c.l.b16 %v186
      %v1698 = vunpack.c.h.b16 %v186
      %v1699 = vunpack.c.l.b16 %v187
      %v1700 = vunpack.c.h.b16 %v187
      %v1701 = vunpack.c.l.b16 %v188
      %v1702 = vunpack.c.h.b16 %v188
      %v1703 = vunpack.c.l.b16 %v189
      %v1704 = vunpack.c.h.b16 %v189
      %v1705 = vunpack.c.l.b16 %v190
      %v1706 = vunpack.c.h.b16 %v190
      %v1707 = vunpack.c.l.b16 %v191
      %v1708 = vunpack.c.h.b16 %v191
      %v1709 = vunpack.c.l.b16 %v192
      %v1710 = vunpack.c.h.b16 %v192
      %v1711 = vunpack.c.l.b16 %v193
      %v1712 = vunpack.c.h.b16 %v193
      %v1713 = vunpack.c.l.b16 %v194
      %v1714 = vunpack.c.h.b16 %v194
      %v1715 = vunpack.c.l.b16 %v195
      %v1716 = vunpack.c.h.b16 %v195
      %v1717 = vunpack.c.l.b16 %v196
      %v1718 = vunpack.c.h.b16 %v196
      %v1719 = vunpack.c.l.b16 %v197
      %v1720 = vunpack.c.h.b16 %v197
      %v1721 = vunpack.c.l.b16 %v198
      %v1722 = vunpack.c.h.b16 %v198
      %v1723 = vunpack.c.l.b16 %v199
      %v1724 = vunpack.c.h.b16 %v199
      %v1725 = vunpack.c.l.b16 %v200
      %v1726 = vunpack.c.h.b16 %v200
      %v1727 = vunpack.c.l.b16 %v201
      %v1728 = vunpack.c.h.b16 %v201
      %v1729 = vunpack.c.l.b16 %v202
      %v1730 = vunpack.c.h.b16 %v202
      %v1731 = vunpack.c.l.b16 %v203
      %v1732 = vunpack.c.h.b16 %v203
      %v1733 = vunpack.c.l.b16 %v204
      %v1734 = vunpack.c.h.b16 %v204
      %v1735 = vunpack.c.l.b16 %v205
      %v1736 = vunpack.c.h.b16 %v205
      %v1737 = vunpack.c.l.b16 %v206
      %v1738 = vunpack.c.h.b16 %v206
      %v1739 = vunpack.c.l.b16 %v207
      %v1740 = vunpack.c.h.b16 %v207
      %v1741 = vunpack.c.l.b16 %v208
      %v1742 = vunpack.c.h.b16 %v208
      %v1743 = vunpack.c.l.b16 %v209
      %v1744 = vunpack.c.h.b16 %v209
      %v1745 = vunpack.c.l.b16 %v210
      %v1746 = vunpack.c.h.b16 %v210
      %v1747 = vunpack.c.l.b16 %v211
      %v1748 = vunpack.c.h.b16 %v211
      %v1749 = vunpack.c.l.b16 %v212
      %v1750 = vunpack.c.h.b16 %v212
      %v1751 = vunpack.c.l.b16 %v213
      %v1752 = vunpack.c.h.b16 %v213
      %v1753 = vunpack.c.l.b16 %v214
      %v1754 = vunpack.c.h.b16 %v214
      %v1755 = vunpack.c.l.b16 %v215
      %v1756 = vunpack.c.h.b16 %v215
      %v1757 = vunpack.c.l.b16 %v216
      %v1758 = vunpack.c.h.b16 %v216
      %v1759 = vunpack.c.l.b16 %v217
      %v1760 = vunpack.c.h.b16 %v217
      %v1761 = vunpack.c.l.b16 %v218
      %v1762 = vunpack.c.h.b16 %v218
      %v1763 = vunpack.c.l.b16 %v219
      %v1764 = vunpack.c.h.b16 %v219
      %v1765 = vunpack.c.l.b16 %v220
      %v1766 = vunpack.c.h.b16 %v220
      %v1767 = vunpack.c.l.b16 %v221
      %v1768 = vunpack.c.h.b16 %v221
      %v1769 = vunpack.c.l.b16 %v222
      %v1770 = vunpack.c.h.b16 %v222
      %v1771 = vunpack.c.l.b16 %v223
      %v1772 = vunpack.c.h.b16 %v223
      %v1773 = vunpack.c.l.b16 %v224
      %v1774 = vunpack.c.h.b16 %v224
      %v1775 = vunpack.c.l.b16 %v225
      %v1776 = vunpack.c.h.b16 %v225
      %v1777 = vunpack.c.l.b16 %v226
      %v1778 = vunpack.c.h.b16 %v226
      %v1779 = vunpack.c.l.b16 %v227
      %v1780 = vunpack.c.h.b16 %v227
      %v1781 = vunpack.c.l.b16 %v228
      %v1782 = vunpack.c.h.b16 %v228
      %v1783 = vunpack.c.l.b16 %v229
      %v1784 = vunpack.c.h.b16 %v229
      %v1785 = vunpack.c.l.b16 %v230
      %v1786 = vunpack.c.h.b16 %v230
      %v1787 = vunpack.c.l.b16 %v231
      %v1788 = vunpack.c.h.b16 %v231
      %v1789 = vunpack.c.l.b16 %v232
      %v1790 = vunpack.c.h.b16 %v232
      %v1791 = vunpack.c.l.b16 %v233
      %v1792 = vunpack.c.h.b16 %v233
      %v1793 = vunpack.c.l.b16 %v234
      %v1794 = vunpack.c.h.b16 %v234
      %v1795 = vunpack.c.l.b16 %v235
      %v1796 = vunpack.c.h.b16 %v235
      %v1797 = vunpack.c.l.b16 %v236
      %v1798 = vunpack.c.h.b16 %v236
      %v1799 = vunpack.c.l.b16 %v237
      %v1800 = vunpack.c.h.b16 %v237
      %v1801 = vunpack.c.l.b16 %v238
      %v1802 = vunpack.c.h.b16 %v238
      %v1803 = vunpack.c.l.b16 %v239
      %v1804 = vunpack.c.h.b16 %v239
      %v1805 = vunpack.c.l.b16 %v240
      %v1806 = vunpack.c.h.b16 %v240
      %v1807 = vunpack.c.l.b16 %v241
      %v1808 = vunpack.c.h.b16 %v241
      %v1809 = vunpack.c.l.b16 %v242
      %v1810 = vunpack.c.h.b16 %v242
      %v1811 = vunpack.c.l.b16 %v243
      %v1812 = vunpack.c.h.b16 %v243
      %v1813 = vunpack.c.l.b16 %v244
      %v1814 = vunpack.c.h.b16 %v244
      %v1815 = vunpack.c.l.b16 %v245
      %v1816 = vunpack.c.h.b16 %v245
      %v1817 = vunpack.c.l.b16 %v246
      %v1818 = vunpack.c.h.b16 %v246
      %v1819 = vunpack.c.l.b16 %v247
      %v1820 = vunpack.c.h.b16 %v247
      %v1821 = vunpack.c.l.b16 %v248
      %v1822 = vunpack.c.h.b16 %v248
      %v1823 = vunpack.c.l.b16 %v249
      %v1824 = vunpack.c.h.b16 %v249
      %v1825 = vunpack.c.l.b16 %v250
      %v1826 = vunpack.c.h.b16 %v250
      %v1827 = vunpack.c.l.b16 %v251
      %v1828 = vunpack.c.h.b16 %v251
      %v1829 = vunpack.c.l.b16 %v252
      %v1830 = vunpack.c.h.b16 %v252
      %v1831 = vunpack.c.l.b16 %v253
      %v1832 = vunpack.c.h.b16 %v253
      %v1833 = vunpack.c.l.b16 %v254
      %v1834 = vunpack.c.h.b16 %v254
      %v1835 = vunpack.c.l.b16 %v255
      %v1836 = vunpack.c.h.b16 %v255
      %v1837 = vunpack.c.l.b16 %v256
      %v1838 = vunpack.c.h.b16 %v256
      %v1839 = vunpack.c.l.b16 %v257
      %v1840 = vunpack.c.h.b16 %v257
      %v1841 = vunpack.c.l.b16 %v258
      %v1842 = vunpack.c.h.b16 %v258
      %v1843 = vunpack.c.l.b16 %v259
      %v1844 = vunpack.c.h.b16 %v259
      %v1845 = vunpack.c.l.b16 %v260
      %v1846 = vunpack.c.h.b16 %v260
      %v1847 = vunpack.c.l.b16 %v261
      %v1848 = vunpack.c.h.b16 %v261
      %v1849 = vunpack.c.l.b16 %v262
      %v1850 = vunpack.c.h.b16 %v262
      %v1851 = vunpack.c.l.b16 %v263
      %v1852 = vunpack.c.h.b16 %v263
      %v1853 = vunpack.c.l.b16 %v264
      %v1854 = vunpack.c.h.b16 %v264
      %v1855 = vunpack.c.l.b16 %v265
      %v1856 = vunpack.c.h.b16 %v265
      %v1857 = vunpack.c.l.b16 %v266
      %v1858 = vunpack.c.h.b16 %v266
      %v1859 = vunpack.c.l.b16 %v267
      %v1860 = vunpack.c.h.b16 %v267
      %v1861 = vunpack.c.l.b16 %v268
      %v1862 = vunpack.c.h.b16 %v268
      %v1863 = vunpack.c.l.b16 %v269
      %v1864 = vunpack.c.h.b16 %v269
      %v1865 = vunpack.c.l.b16 %v270
      %v1866 = vunpack.c.h.b16 %v270
      %v1867 = vunpack.c.l.b16 %v271
      %v1868 = vunpack.c.h.b16 %v271
      %v1869 = vunpack.c.l.b16 %v272
      %v1870 = vunpack.c.h.b16 %v272
      %v1871 = vunpack.c.l.b16 %v273
      %v1872 = vunpack.c.h.b16 %v273
      %v1873 = vunpack.c.l.b16 %v274
      %v1874 = vunpack.c.h.b16 %v274
      %v1875 = vunpack.c.l.b16 %v275
      %v1876 = vunpack.c.h.b16 %v275
      %v1877 = vunpack.c.l.b16 %v276
      %v1878 = vunpack.c.h.b16 %v276
      %v1879 = vunpack.c.l.b16 %v277
      %v1880 = vunpack.c.h.b16 %v277
      %v1881 = vunpack.c.l.b16 %v278
      %v1882 = vunpack.c.h.b16 %v278
      %v1883 = vunpack.c.l.b16 %v279
      %v1884 = vunpack.c.h.b16 %v279
      %v1885 = vunpack.c.l.b16 %v280
      %v1886 = vunpack.c.h.b16 %v280
      %v1887 = vunpack.c.l.b16 %v281
      %v1888 = vunpack.c.h.b16 %v281
      %v1889 = vunpack.c.l.b16 %v282
      %v1890 = vunpack.c.h.b16 %v282
      %v1891 = vunpack.c.l.b16 %v283
      %v1892 = vunpack.c.h.b16 %v283
      %v1893 = vunpack.c.l.b16 %v284
      %v1894 = vunpack.c.h.b16 %v284
      %v1895 = vunpack.c.l.b16 %v285
      %v1896 = vunpack.c.h.b16 %v285
      %v1897 = vunpack.c.l.b16 %v286
      %v1898 = vunpack.c.h.b16 %v286
      %v1899 = vunpack.c.l.b16 %v287
      %v1900 = vunpack.c.h.b16 %v287
      %v1901 = vunpack.c.l.b16 %v288
      %v1902 = vunpack.c.h.b16 %v288
      %v1903 = vunpack.c.l.b16 %v289
      %v1904 = vunpack.c.h.b16 %v289
      %v1905 = vunpack.c.l.b16 %v290
      %v1906 = vunpack.c.h.b16 %v290
      %v1907 = vunpack.c.l.b16 %v291
      %v1908 = vunpack.c.h.b16 %v291
      %v1909 = vunpack.c.l.b16 %v292
      %v1910 = vunpack.c.h.b16 %v292
      %v1911 = vunpack.c.l.b16 %v293
      %v1912 = vunpack.c.h.b16 %v293
      %v1913 = vunpack.c.l.b16 %v294
      %v1914 = vunpack.c.h.b16 %v294
      %v1915 = vunpack.c.l.b16 %v295
      %v1916 = vunpack.c.h.b16 %v295
      %v1917 = vunpack.c.l.b16 %v296
      %v1918 = vunpack.c.h.b16 %v296
      %v1919 = vunpack.c.l.b16 %v297
      %v1920 = vunpack.c.h.b16 %v297
      %v1921 = vunpack.c.l.b16 %v298
      %v1922 = vunpack.c.h.b16 %v298
      %v1923 = vunpack.c.l.b16 %v299
      %v1924 = vunpack.c.h.b16 %v299
      %v1925 = vunpack.c.l.b16 %v300
      %v1926 = vunpack.c.h.b16 %v300
      %v1927 = vunpack.c.l.b16 %v301
      %v1928 = vunpack.c.h.b16 %v301
      %v1929 = vunpack.c.l.b16 %v302
      %v1930 = vunpack.c.h.b16 %v302
      %v1931 = vunpack.c.l.b16 %v303
      %v1932 = vunpack.c.h.b16 %v303
      %v1933 = vunpack.c.l.b16 %v304
      %v1934 = vunpack.c.h.b16 %v304
      %v1935 = vunpack.c.l.b16 %v305
      %v1936 = vunpack.c.h.b16 %v305
      %v1937 = vunpack.c.l.b16 %v306
      %v1938 = vunpack.c.h.b16 %v306
      %v1939 = vunpack.c.l.b16 %v307
      %v1940 = vunpack.c.h.b16 %v307
      %v1941 = vunpack.c.l.b16 %v308
      %v1942 = vunpack.c.h.b16 %v308
      %v1943 = vunpack.c.l.b16 %v309
      %v1944 = vunpack.c.h.b16 %v309
      %v1945 = vunpack.c.l.b16 %v310
      %v1946 = vunpack.c.h.b16 %v310
      %v1947 = vunpack.c.l.b16 %v311
      %v1948 = vunpack.c.h.b16 %v311
      %v1949 = vunpack.c.l.b16 %v312
      %v1950 = vunpack.c.h.b16 %v312
      %v1951 = vunpack.c.l.b16 %v313
      %v1952 = vunpack.c.h.b16 %v313
      %v1953 = vunpack.c.l.b16 %v314
      %v1954 = vunpack.c.h.b16 %v314
      %v1955 = vunpack.c.l.b16 %v315
      %v1956 = vunpack.c.h.b16 %v315
      %v1957 = vunpack.c.l.b16 %v316
      %v1958 = vunpack.c.h.b16 %v316
      %v1959 = vunpack.c.l.b16 %v317
      %v1960 = vunpack.c.h.b16 %v317
      %v1961 = vunpack.c.l.b16 %v318
      %v1962 = vunpack.c.h.b16 %v318
      %v1963 = vunpack.c.l.b16 %v319
      %v1964 = vunpack.c.h.b16 %v319
      %v1965 = vunpack.c.l.b16 %v320
      %v1966 = vunpack.c.h.b16 %v320
      %v1967 = vunpack.c.l.b16 %v321
      %v1968 = vunpack.c.h.b16 %v321
      %v1969 = vunpack.c.l.b16 %v322
      %v1970 = vunpack.c.h.b16 %v322
      %v1971 = vunpack.c.l.b16 %v323
      %v1972 = vunpack.c.h.b16 %v323
      %v1973 = vunpack.c.l.b16 %v324
      %v1974 = vunpack.c.h.b16 %v324
      %v1975 = vunpack.c.l.b16 %v325
      %v1976 = vunpack.c.h.b16 %v325
      %v1977 = vunpack.c.l.b16 %v326
      %v1978 = vunpack.c.h.b16 %v326
      %v1979 = vunpack.c.l.b16 %v327
      %v1980 = vunpack.c.h.b16 %v327
      %v1981 = vunpack.c.l.b16 %v328
      %v1982 = vunpack.c.h.b16 %v328
      %v1983 = vunpack.c.l.b16 %v329
      %v1984 = vunpack.c.h.b16 %v329
      %v1985 = vunpack.c.l.b16 %v330
      %v1986 = vunpack.c.h.b16 %v330
      %v1987 = vunpack.c.l.b16 %v331
      %v1988 = vunpack.c.h.b16 %v331
      %v1989 = vunpack.c.l.b16 %v332
      %v1990 = vunpack.c.h.b16 %v332
      %v1991 = vunpack.c.l.b16 %v333
      %v1992 = vunpack.c.h.b16 %v333
      %v1993 = vunpack.c.l.b16 %v334
      %v1994 = vunpack.c.h.b16 %v334
      %v1995 = vunpack.c.l.b16 %v335
      %v1996 = vunpack.c.h.b16 %v335
      %v1997 = vpack.c.b16 %v1687, %v1677
      %v1998 = vpack.c.b16 %v1688, %v1678
      %v1999 = vpack.c.b16 %v1689, %v1679
      %v2000 = vpack.c.b16 %v1690, %v1680
      %v2001 = vpack.c.b16 %v1691, %v1681
      %v2002 = vpack.c.b16 %v1692, %v1682
      %v2003 = vpack.c.b16 %v1693, %v1683
      %v2004 = vpack.c.b16 %v1694, %v1684
      %v2005 = vpack.c.b16 %v1695, %v1685
      %v2006 = vpack.c.b16 %v1696, %v1686
      %v2007 = vpack.c.b16 %v1707, %v1697
      %v2008 = vpack.c.b16 %v1708, %v1698
      %v2009 = vpack.c.b16 %v1709, %v1699
      %v2010 = vpack.c.b16 %v1710, %v1700
      %v2011 = vpack.c.b16 %v1711, %v1701
      %v2012 = vpack.c.b16 %v1712, %v1702
      %v2013 = vpack.c.b16 %v1713, %v1703
      %v2014 = vpack.c.b16 %v1714, %v1704
      %v2015 = vpack.c.b16 %v1715, %v1705
      %v2016 = vpack.c.b16 %v1716, %v1706
      %v2017 = vpack.c.b16 %v1727, %v1717
      %v2018 = vpack.c.b16 %v1728, %v1718
      %v2019 = vpack.c.b16 %v1729, %v1719
      %v2020 = vpack.c.b16 %v1730, %v1720
      %v2021 = vpack.c.b16 %v1731, %v1721
      %v2022 = vpack.c.b16 %v1732, %v1722
      %v2023 = vpack.c.b16 %v1733, %v1723
      %v2024 = vpack.c.b16 %v1734, %v1724
      %v2025 = vpack.c.b16 %v1735, %v1725
      %v2026 = vpack.c.b16 %v1736, %v1726
      %v2027 = vpack.c.b16 %v1747, %v1737
      %v2028 = vpack.c.b16 %v1748, %v1738
      %v2029 = vpack.c.b16 %v1749, %v1739
      %v2030 = vpack.c.b16 %v1750, %v1740
      %v2031 = vpack.c.b16 %v1751, %v1741
      %v2032 = vpack.c.b16 %v1752, %v1742
      %v2033 = vpack.c.b16 %v1753, %v1743
      %v2034 = vpack.c.b16 %v1754, %v1744
      %v2035 = vpack.c.b16 %v1755, %v1745
      %v2036 = vpack.c.b16 %v1756, %v1746
      %v2037 = vpack.c.b16 %v1767, %v1757
      %v2038 = vpack.c.b16 %v1768, %v1758
      %v2039 = vpack.c.b16 %v1769, %v1759
      %v2040 = vpack.c.b16 %v1770, %v1760
      %v2041 = vpack.c.b16 %v1771, %v1761
      %v2042 = vpack.c.b16 %v1772, %v1762
      %v2043 = vpack.c.b16 %v1773, %v1763
      %v2044 = vpack.c.b16 %v1774, %v1764
      %v2045 = vpack.c.b16 %v1775, %v1765
      %v2046 = vpack.c.b16 %v1776, %v1766
      %v2047 = vpack.c.b16 %v1787, %v1777
      %v2048 = vpack.c.b16 %v1788, %v1778
      %v2049 = vpack.c.b16 %v1789, %v1779
      %v2050 = vpack.c.b16 %v1790, %v1780
      %v2051 = vpack.c.b16 %v1791, %v1781
      %v2052 = vpack.c.b16 %v1792, %v1782
      %v2053 = vpack.c.b16 %v1793, %v1783
      %v2054 = vpack.c.b16 %v1794, %v1784
      %v2055 = vpack.c.b16 %v1795, %v1785
      %v2056 = vpack.c.b16 %v1796, %v1786
      %v2057 = vpack.c.b16 %v1807, %v1797
      %v2058 = vpack.c.b16 %v1808, %v1798
      %v2059 = vpack.c.b16 %v1809, %v1799
      %v2060 = vpack.c.b16 %v1810, %v1800
      %v2061 = vpack.c.b16 %v1811, %v1801
      %v2062 = vpack.c.b16 %v1812, %v1802
      %v2063 = vpack.c.b16 %v1813, %v1803
      %v2064 = vpack.c.b16 %v1814, %v1804
      %v2065 = vpack.c.b16 %v1815, %v1805
      %v2066 = vpack.c.b16 %v1816, %v1806
      %v2067 = vpack.c.b16 %v1827, %v1817
      %v2068 = vpack.c.b16 %v1828, %v1818
      %v2069 = vpack.c.b16 %v1829, %v1819
      %v2070 = vpack.c.b16 %v1830, %v1820
      %v2071 = vpack.c.b16 %v1831, %v1821
      %v2072 = vpack.c.b16 %v1832, %v1822
      %v2073 = vpack.c.b16 %v1833, %v1823
      %v2074 = vpack.c.b16 %v1834, %v1824
      %v2075 = vpack.c.b16 %v1835, %v1825
      %v2076 = vpack.c.b16 %v1836, %v1826
      %v2077 = vpack.c.b16 %v1847, %v1837
      %v2078 = vpack.c.b16 %v1848, %v1838
      %v2079 = vpack.c.b16 %v1849, %v1839
      %v2080 = vpack.c.b16 %v1850, %v1840
      %v2081 = vpack.c.b16 %v1851, %v1841
      %v2082 = vpack.c.b16 %v1852, %v1842
      %v2083 = vpack.c.b16 %v1853, %v1843
      %v2084 = vpack.c.b16 %v1854, %v1844
      %v2085 = vpack.c.b16 %v1855, %v1845
      %v2086 = vpack.c.b16 %v1856, %v1846
      %v2087 = vpack.c.b16 %v1867, %v1857
      %v2088 = vpack.c.b16 %v1868, %v1858
      %v2089 = vpack.c.b16 %v1869, %v1859
      %v2090 = vpack.c.b16 %v1870, %v1860
      %v2091 = vpack.c.b16 %v1871, %v1861
      %v2092 = vpack.c.b16 %v1872, %v1862
      %v2093 = vpack.c.b16 %v1873, %v1863
      %v2094 = vpack.c.b16 %v1874, %v1864
      %v2095 = vpack.c.b16 %v1875, %v1865
      %v2096 = vpack.c.b16 %v1876, %v1866
      %v2097 = vpack.c.b16 %v1887, %v1877
      %v2098 = vpack.c.b16 %v1888, %v1878
      %v2099 = vpack.c.b16 %v1889, %v1879
      %v2100 = vpack.c.b16 %v1890, %v1880
      %v2101 = vpack.c.b16 %v1891, %v1881
      %v2102 = vpack.c.b16 %v1892, %v1882
      %v2103 = vpack.c.b16 %v1893, %v1883
      %v2104 = vpack.c.b16 %v1894, %v1884
      %v2105 = vpack.c.b16 %v1895, %v1885
      %v2106 = vpack.c.b16 %v1896, %v1886
      %v2107 = vpack.c.b16 %v1907, %v1897
      %v2108 = vpack.c.b16 %v1908, %v1898
      %v2109 = vpack.c.b16 %v1909, %v1899
      %v2110 = vpack.c.b16 %v1910, %v1900
      %v2111 = vpack.c.b16 %v1911, %v1901
      %v2112 = vpack.c.b16 %v1912, %v1902
      %v2113 = vpack.c.b16 %v1913, %v1903
      %v2114 = vpack.c.b16 %v1914, %v1904
      %v2115 = vpack.c.b16 %v1915, %v1905
      %v2116 = vpack.c.b16 %v1916, %v1906
      %v2117 = vpack.c.b16 %v1927, %v1917
      %v2118 = vpack.c.b16 %v1928, %v1918
      %v2119 = vpack.c.b16 %v1929, %v1919
      %v2120 = vpack.c.b16 %v1930, %v1920
      %v2121 = vpack.c.b16 %v1931, %v1921
      %v2122 = vpack.c.b16 %v1932, %v1922
      %v2123 = vpack.c.b16 %v1933, %v1923
      %v2124 = vpack.c.b16 %v1934, %v1924
      %v2125 = vpack.c.b16 %v1935, %v1925
      %v2126 = vpack.c.b16 %v1936, %v1926
      %v2127 = vpack.c.b16 %v1947, %v1937
      %v2128 = vpack.c.b16 %v1948, %v1938
      %v2129 = vpack.c.b16 %v1949, %v1939
      %v2130 = vpack.c.b16 %v1950, %v1940
      %v2131 = vpack.c.b16 %v1951, %v1941
      %v2132 = vpack.c.b16 %v1952, %v1942
      %v2133 = vpack.c.b16 %v1953, %v1943
      %v2134 = vpack.c.b16 %v1954, %v1944
      %v2135 = vpack.c.b16 %v1955, %v1945
      %v2136 = vpack.c.b16 %v1956, %v1946
      %v2137 = vpack.c.b16 %v1967, %v1957
      %v2138 = vpack.c.b16 %v1968, %v1958
      %v2139 = vpack.c.b16 %v1969, %v1959
      %v2140 = vpack.c.b16 %v1970, %v1960
      %v2141 = vpack.c.b16 %v1971, %v1961
      %v2142 = vpack.c.b16 %v1972, %v1962
      %v2143 = vpack.c.b16 %v1973, %v1963
      %v2144 = vpack.c.b16 %v1974, %v1964
      %v2145 = vpack.c.b16 %v1975, %v1965
      %v2146 = vpack.c.b16 %v1976, %v1966
      %v2147 = vpack.c.b16 %v1987, %v1977
      %v2148 = vpack.c.b16 %v1988, %v1978
      %v2149 = vpack.c.b16 %v1989, %v1979
      %v2150 = vpack.c.b16 %v1990, %v1980
      %v2151 = vpack.c.b16 %v1991, %v1981
      %v2152 = vpack.c.b16 %v1992, %v1982
      %v2153 = vpack.c.b16 %v1993, %v1983
      %v2154 = vpack.c.b16 %v1994, %v1984
      %v2155 = vpack.c.b16 %v1995, %v1985
      %v2156 = vpack.c.b16 %v1996, %v1986
      %2317 = vmatprep.subr.bf16.mxu0 %v1998
      %2318 = vmatpush1.bf16.msra.mxu0 %v1997
      %2319 = vmatprep.subr.bf16.mxu0 %v2008
      %2320 = vmatpush1.bf16.msra.mxu0 %v2007
      %2321 = vmatprep.subr.bf16.mxu0 %v2018
      %2322 = vmatpush1.bf16.msra.mxu0 %v2017
      %2323 = vmatprep.subr.bf16.mxu0 %v2028
      %2324 = vmatpush1.bf16.msra.mxu0 %v2027
      %2325 = vmatprep.subr.bf16.mxu0 %v2038
      %2326 = vmatpush1.bf16.msra.mxu0 %v2037
      %2327 = vmatprep.subr.bf16.mxu0 %v2048
      %2328 = vmatpush1.bf16.msra.mxu0 %v2047
      %2329 = vmatprep.subr.bf16.mxu0 %v2058
      %2330 = vmatpush1.bf16.msra.mxu0 %v2057
      %2331 = vmatprep.subr.bf16.mxu0 %v2068
      %2332 = vmatpush1.bf16.msra.mxu0 %v2067
      %2333 = vmatprep.subr.bf16.mxu0 %v2078
      %2334 = vmatpush1.bf16.msra.mxu0 %v2077
      %2335 = vmatprep.subr.bf16.mxu0 %v2088
      %2336 = vmatpush1.bf16.msra.mxu0 %v2087
      %2337 = vmatprep.subr.bf16.mxu0 %v2098
      %2338 = vmatpush1.bf16.msra.mxu0 %v2097
      %2339 = vmatprep.subr.bf16.mxu0 %v2108
      %2340 = vmatpush1.bf16.msra.mxu0 %v2107
      %2341 = vmatprep.subr.bf16.mxu0 %v2118
      %2342 = vmatpush1.bf16.msra.mxu0 %v2117
      %2343 = vmatprep.subr.bf16.mxu0 %v2128
      %2344 = vmatpush1.bf16.msra.mxu0 %v2127
      %2345 = vmatprep.subr.bf16.mxu0 %v2138
      %2346 = vmatpush1.bf16.msra.mxu0 %v2137
      %2347 = vmatprep.subr.bf16.mxu0 %v2148
      %2348 = vmatpush1.bf16.msra.mxu0 %v2147
      %2349 = vmatprep.mubr.bf16.mxu0 %v175
      %2350 = vmatmul.mubr.bf16.gmra.mrb[0].mxu0 %v174
      %v2351 = vpop.f32.mrb[0].mxu0
      %v2352 = vadd.f32 %v1347, %v2351
      %v2353 = vpop.f32.mrb[0].mxu0
      %v2354 = vadd.f32 %v1349, %v2353
      %v2355 = vpop.f32.mrb[0].mxu0
      %v2356 = vpop.f32.mrb[0].mxu0
      %2357 = vdwg.mxu0
      %2358 = vmatprep.subr.bf16.mxu0 %v2000
      %2359 = vmatpush1.bf16.msra.mxu0 %v1999
      %2360 = vmatprep.subr.bf16.mxu0 %v2010
      %2361 = vmatpush1.bf16.msra.mxu0 %v2009
      %2362 = vmatprep.subr.bf16.mxu0 %v2020
      %2363 = vmatpush1.bf16.msra.mxu0 %v2019
      %2364 = vmatprep.subr.bf16.mxu0 %v2030
      %2365 = vmatpush1.bf16.msra.mxu0 %v2029
      %2366 = vmatprep.subr.bf16.mxu0 %v2040
      %2367 = vmatpush1.bf16.msra.mxu0 %v2039
      %2368 = vmatprep.subr.bf16.mxu0 %v2050
      %2369 = vmatpush1.bf16.msra.mxu0 %v2049
      %2370 = vmatprep.subr.bf16.mxu0 %v2060
      %2371 = vmatpush1.bf16.msra.mxu0 %v2059
      %2372 = vmatprep.subr.bf16.mxu0 %v2070
      %2373 = vmatpush1.bf16.msra.mxu0 %v2069
      %2374 = vmatprep.subr.bf16.mxu0 %v2080
      %2375 = vmatpush1.bf16.msra.mxu0 %v2079
      %2376 = vmatprep.subr.bf16.mxu0 %v2090
      %2377 = vmatpush1.bf16.msra.mxu0 %v2089
      %2378 = vmatprep.subr.bf16.mxu0 %v2100
      %2379 = vmatpush1.bf16.msra.mxu0 %v2099
      %2380 = vmatprep.subr.bf16.mxu0 %v2110
      %2381 = vmatpush1.bf16.msra.mxu0 %v2109
      %2382 = vmatprep.subr.bf16.mxu0 %v2120
      %2383 = vmatpush1.bf16.msra.mxu0 %v2119
      %2384 = vmatprep.subr.bf16.mxu0 %v2130
      %2385 = vmatpush1.bf16.msra.mxu0 %v2129
      %2386 = vmatprep.subr.bf16.mxu0 %v2140
      %2387 = vmatpush1.bf16.msra.mxu0 %v2139
      %2388 = vmatprep.subr.bf16.mxu0 %v2150
      %2389 = vmatpush1.bf16.msra.mxu0 %v2149
      %2390 = vmatprep.mubr.bf16.mxu0 %v175
      %2391 = vmatmul.mubr.bf16.gmra.mrb[0].mxu0 %v174
      %v2392 = vpop.f32.mrb[0].mxu0
      %v2393 = vadd.f32 %v1388, %v2392
      %v2394 = vpop.f32.mrb[0].mxu0
      %v2395 = vadd.f32 %v1390, %v2394
      %v2396 = vpop.f32.mrb[0].mxu0
      %v2397 = vpop.f32.mrb[0].mxu0
      %2398 = vdwg.mxu0
      %2399 = vmatprep.subr.bf16.mxu0 %v2002
      %2400 = vmatpush1.bf16.msra.mxu0 %v2001
      %2401 = vmatprep.subr.bf16.mxu0 %v2012
      %2402 = vmatpush1.bf16.msra.mxu0 %v2011
      %2403 = vmatprep.subr.bf16.mxu0 %v2022
      %2404 = vmatpush1.bf16.msra.mxu0 %v2021
      %2405 = vmatprep.subr.bf16.mxu0 %v2032
      %2406 = vmatpush1.bf16.msra.mxu0 %v2031
      %2407 = vmatprep.subr.bf16.mxu0 %v2042
      %2408 = vmatpush1.bf16.msra.mxu0 %v2041
      %2409 = vmatprep.subr.bf16.mxu0 %v2052
      %2410 = vmatpush1.bf16.msra.mxu0 %v2051
      %2411 = vmatprep.subr.bf16.mxu0 %v2062
      %2412 = vmatpush1.bf16.msra.mxu0 %v2061
      %2413 = vmatprep.subr.bf16.mxu0 %v2072
      %2414 = vmatpush1.bf16.msra.mxu0 %v2071
      %2415 = vmatprep.subr.bf16.mxu0 %v2082
      %2416 = vmatpush1.bf16.msra.mxu0 %v2081
      %2417 = vmatprep.subr.bf16.mxu0 %v2092
      %2418 = vmatpush1.bf16.msra.mxu0 %v2091
      %2419 = vmatprep.subr.bf16.mxu0 %v2102
      %2420 = vmatpush1.bf16.msra.mxu0 %v2101
      %2421 = vmatprep.subr.bf16.mxu0 %v2112
      %2422 = vmatpush1.bf16.msra.mxu0 %v2111
      %2423 = vmatprep.subr.bf16.mxu0 %v2122
      %2424 = vmatpush1.bf16.msra.mxu0 %v2121
      %2425 = vmatprep.subr.bf16.mxu0 %v2132
      %2426 = vmatpush1.bf16.msra.mxu0 %v2131
      %2427 = vmatprep.subr.bf16.mxu0 %v2142
      %2428 = vmatpush1.bf16.msra.mxu0 %v2141
      %2429 = vmatprep.subr.bf16.mxu0 %v2152
      %2430 = vmatpush1.bf16.msra.mxu0 %v2151
      %2431 = vmatprep.mubr.bf16.mxu0 %v175
      %2432 = vmatmul.mubr.bf16.gmra.mrb[0].mxu0 %v174
      %v2433 = vpop.f32.mrb[0].mxu0
      %v2434 = vadd.f32 %v1429, %v2433
      %v2435 = vpop.f32.mrb[0].mxu0
      %v2436 = vadd.f32 %v1431, %v2435
      %v2437 = vpop.f32.mrb[0].mxu0
      %v2438 = vpop.f32.mrb[0].mxu0
      %2439 = vdwg.mxu0
      %2440 = vmatprep.subr.bf16.mxu0 %v2004
      %2441 = vmatpush1.bf16.msra.mxu0 %v2003
      %2442 = vmatprep.subr.bf16.mxu0 %v2014
      %2443 = vmatpush1.bf16.msra.mxu0 %v2013
      %2444 = vmatprep.subr.bf16.mxu0 %v2024
      %2445 = vmatpush1.bf16.msra.mxu0 %v2023
      %2446 = vmatprep.subr.bf16.mxu0 %v2034
      %2447 = vmatpush1.bf16.msra.mxu0 %v2033
      %2448 = vmatprep.subr.bf16.mxu0 %v2044
      %2449 = vmatpush1.bf16.msra.mxu0 %v2043
      %2450 = vmatprep.subr.bf16.mxu0 %v2054
      %2451 = vmatpush1.bf16.msra.mxu0 %v2053
      %2452 = vmatprep.subr.bf16.mxu0 %v2064
      %2453 = vmatpush1.bf16.msra.mxu0 %v2063
      %2454 = vmatprep.subr.bf16.mxu0 %v2074
      %2455 = vmatpush1.bf16.msra.mxu0 %v2073
      %2456 = vmatprep.subr.bf16.mxu0 %v2084
      %2457 = vmatpush1.bf16.msra.mxu0 %v2083
      %2458 = vmatprep.subr.bf16.mxu0 %v2094
      %2459 = vmatpush1.bf16.msra.mxu0 %v2093
      %2460 = vmatprep.subr.bf16.mxu0 %v2104
      %2461 = vmatpush1.bf16.msra.mxu0 %v2103
      %2462 = vmatprep.subr.bf16.mxu0 %v2114
      %2463 = vmatpush1.bf16.msra.mxu0 %v2113
      %2464 = vmatprep.subr.bf16.mxu0 %v2124
      %2465 = vmatpush1.bf16.msra.mxu0 %v2123
      %2466 = vmatprep.subr.bf16.mxu0 %v2134
      %2467 = vmatpush1.bf16.msra.mxu0 %v2133
      %2468 = vmatprep.subr.bf16.mxu0 %v2144
      %2469 = vmatpush1.bf16.msra.mxu0 %v2143
      %2470 = vmatprep.subr.bf16.mxu0 %v2154
      %2471 = vmatpush1.bf16.msra.mxu0 %v2153
      %2472 = vmatprep.mubr.bf16.mxu0 %v175
      %2473 = vmatmul.mubr.bf16.gmra.mrb[0].mxu0 %v174
      %v2474 = vpop.f32.mrb[0].mxu0
      %v2475 = vadd.f32 %v1470, %v2474
      %v2476 = vpop.f32.mrb[0].mxu0
      %v2477 = vadd.f32 %v1472, %v2476
      %v2478 = vpop.f32.mrb[0].mxu0
      %v2479 = vpop.f32.mrb[0].mxu0
      %2480 = vdwg.mxu0
      %2481 = vmatprep.subr.bf16.mxu0 %v2006
      %2482 = vmatpush1.bf16.msra.mxu0 %v2005
      %2483 = vmatprep.subr.bf16.mxu0 %v2016
      %2484 = vmatpush1.bf16.msra.mxu0 %v2015
      %2485 = vmatprep.subr.bf16.mxu0 %v2026
      %2486 = vmatpush1.bf16.msra.mxu0 %v2025
      %2487 = vmatprep.subr.bf16.mxu0 %v2036
      %2488 = vmatpush1.bf16.msra.mxu0 %v2035
      %2489 = vmatprep.subr.bf16.mxu0 %v2046
      %2490 = vmatpush1.bf16.msra.mxu0 %v2045
      %2491 = vmatprep.subr.bf16.mxu0 %v2056
      %2492 = vmatpush1.bf16.msra.mxu0 %v2055
      %2493 = vmatprep.subr.bf16.mxu0 %v2066
      %2494 = vmatpush1.bf16.msra.mxu0 %v2065
      %2495 = vmatprep.subr.bf16.mxu0 %v2076
      %2496 = vmatpush1.bf16.msra.mxu0 %v2075
      %2497 = vmatprep.subr.bf16.mxu0 %v2086
      %2498 = vmatpush1.bf16.msra.mxu0 %v2085
      %2499 = vmatprep.subr.bf16.mxu0 %v2096
      %2500 = vmatpush1.bf16.msra.mxu0 %v2095
      %2501 = vmatprep.subr.bf16.mxu0 %v2106
      %2502 = vmatpush1.bf16.msra.mxu0 %v2105
      %2503 = vmatprep.subr.bf16.mxu0 %v2116
      %2504 = vmatpush1.bf16.msra.mxu0 %v2115
      %2505 = vmatprep.subr.bf16.mxu0 %v2126
      %2506 = vmatpush1.bf16.msra.mxu0 %v2125
      %2507 = vmatprep.subr.bf16.mxu0 %v2136
      %2508 = vmatpush1.bf16.msra.mxu0 %v2135
      %2509 = vmatprep.subr.bf16.mxu0 %v2146
      %2510 = vmatpush1.bf16.msra.mxu0 %v2145
      %2511 = vmatprep.subr.bf16.mxu0 %v2156
      %2512 = vmatpush1.bf16.msra.mxu0 %v2155
      %2513 = vmatprep.mubr.bf16.mxu0 %v175
      %2514 = vmatmul.mubr.bf16.gmra.mrb[0].mxu0 %v174
      %v2515 = vpop.f32.mrb[0].mxu0
      %v2516 = vadd.f32 %v1511, %v2515
      %v2517 = vpop.f32.mrb[0].mxu0
      %v2518 = vadd.f32 %v1513, %v2517
      %v2519 = vpop.f32.mrb[0].mxu0
      %v2520 = vpop.f32.mrb[0].mxu0
      %2521 = vdwg.mxu0
      %v2522 = vld [vmem:[%s1 + $0xa00] sm:$0xff]
      %v2523 = vld [vmem:[%s1 + $0xa08] sm:$0xff]
      %v2524 = vld [vmem:[%s1 + $0xa10] sm:$0xff]
      %v2525 = vld [vmem:[%s1 + $0xa18] sm:$0xff]
      %v2526 = vld [vmem:[%s1 + $0xa20] sm:$0xff]
      %v2527 = vld [vmem:[%s1 + $0xa28] sm:$0xff]
      %v2528 = vld [vmem:[%s1 + $0xa30] sm:$0xff]
      %v2529 = vld [vmem:[%s1 + $0xa38] sm:$0xff]
      %v2530 = vld [vmem:[%s1 + $0xa40] sm:$0xff]
      %v2531 = vld [vmem:[%s1 + $0xa48] sm:$0xff]
      %v2532 = vld [vmem:[%s1 + $0xa50] sm:$0xff]
      %v2533 = vld [vmem:[%s1 + $0xa58] sm:$0xff]
      %v2534 = vld [vmem:[%s1 + $0xa60] sm:$0xff]
      %v2535 = vld [vmem:[%s1 + $0xa68] sm:$0xff]
      %v2536 = vld [vmem:[%s1 + $0xa70] sm:$0xff]
      %v2537 = vld [vmem:[%s1 + $0xa78] sm:$0xff]
      %v2538 = vld [vmem:[%s1 + $0xa80] sm:$0xff]
      %v2539 = vld [vmem:[%s1 + $0xa88] sm:$0xff]
      %v2540 = vld [vmem:[%s1 + $0xa90] sm:$0xff]
      %v2541 = vld [vmem:[%s1 + $0xa98] sm:$0xff]
      %v2542 = vld [vmem:[%s1 + $0xaa0] sm:$0xff]
      %v2543 = vld [vmem:[%s1 + $0xaa8] sm:$0xff]
      %v2544 = vld [vmem:[%s1 + $0xab0] sm:$0xff]
      %v2545 = vld [vmem:[%s1 + $0xab8] sm:$0xff]
      %v2546 = vld [vmem:[%s1 + $0xac0] sm:$0xff]
      %v2547 = vld [vmem:[%s1 + $0xac8] sm:$0xff]
      %v2548 = vld [vmem:[%s1 + $0xad0] sm:$0xff]
      %v2549 = vld [vmem:[%s1 + $0xad8] sm:$0xff]
      %v2550 = vld [vmem:[%s1 + $0xae0] sm:$0xff]
      %v2551 = vld [vmem:[%s1 + $0xae8] sm:$0xff]
      %v2552 = vld [vmem:[%s1 + $0xaf0] sm:$0xff]
      %v2553 = vld [vmem:[%s1 + $0xaf8] sm:$0xff]
      %v2554 = vld [vmem:[%s1 + $0xb00] sm:$0xff]
      %v2555 = vld [vmem:[%s1 + $0xb08] sm:$0xff]
      %v2556 = vld [vmem:[%s1 + $0xb10] sm:$0xff]
      %v2557 = vld [vmem:[%s1 + $0xb18] sm:$0xff]
      %v2558 = vld [vmem:[%s1 + $0xb20] sm:$0xff]
      %v2559 = vld [vmem:[%s1 + $0xb28] sm:$0xff]
      %v2560 = vld [vmem:[%s1 + $0xb30] sm:$0xff]
      %v2561 = vld [vmem:[%s1 + $0xb38] sm:$0xff]
      %v2562 = vld [vmem:[%s1 + $0xb40] sm:$0xff]
      %v2563 = vld [vmem:[%s1 + $0xb48] sm:$0xff]
      %v2564 = vld [vmem:[%s1 + $0xb50] sm:$0xff]
      %v2565 = vld [vmem:[%s1 + $0xb58] sm:$0xff]
      %v2566 = vld [vmem:[%s1 + $0xb60] sm:$0xff]
      %v2567 = vld [vmem:[%s1 + $0xb68] sm:$0xff]
      %v2568 = vld [vmem:[%s1 + $0xb70] sm:$0xff]
      %v2569 = vld [vmem:[%s1 + $0xb78] sm:$0xff]
      %v2570 = vld [vmem:[%s1 + $0xb80] sm:$0xff]
      %v2571 = vld [vmem:[%s1 + $0xb88] sm:$0xff]
      %v2572 = vld [vmem:[%s1 + $0xb90] sm:$0xff]
      %v2573 = vld [vmem:[%s1 + $0xb98] sm:$0xff]
      %v2574 = vld [vmem:[%s1 + $0xba0] sm:$0xff]
      %v2575 = vld [vmem:[%s1 + $0xba8] sm:$0xff]
      %v2576 = vld [vmem:[%s1 + $0xbb0] sm:$0xff]
      %v2577 = vld [vmem:[%s1 + $0xbb8] sm:$0xff]
      %v2578 = vld [vmem:[%s1 + $0xbc0] sm:$0xff]
      %v2579 = vld [vmem:[%s1 + $0xbc8] sm:$0xff]
      %v2580 = vld [vmem:[%s1 + $0xbd0] sm:$0xff]
      %v2581 = vld [vmem:[%s1 + $0xbd8] sm:$0xff]
      %v2582 = vld [vmem:[%s1 + $0xbe0] sm:$0xff]
      %v2583 = vld [vmem:[%s1 + $0xbe8] sm:$0xff]
      %v2584 = vld [vmem:[%s1 + $0xbf0] sm:$0xff]
      %v2585 = vld [vmem:[%s1 + $0xbf8] sm:$0xff]
      %v2586 = vld [vmem:[%s1 + $0xc00] sm:$0xff]
      %v2587 = vld [vmem:[%s1 + $0xc08] sm:$0xff]
      %v2588 = vld [vmem:[%s1 + $0xc10] sm:$0xff]
      %v2589 = vld [vmem:[%s1 + $0xc18] sm:$0xff]
      %v2590 = vld [vmem:[%s1 + $0xc20] sm:$0xff]
      %v2591 = vld [vmem:[%s1 + $0xc28] sm:$0xff]
      %v2592 = vld [vmem:[%s1 + $0xc30] sm:$0xff]
      %v2593 = vld [vmem:[%s1 + $0xc38] sm:$0xff]
      %v2594 = vld [vmem:[%s1 + $0xc40] sm:$0xff]
      %v2595 = vld [vmem:[%s1 + $0xc48] sm:$0xff]
      %v2596 = vld [vmem:[%s1 + $0xc50] sm:$0xff]
      %v2597 = vld [vmem:[%s1 + $0xc58] sm:$0xff]
      %v2598 = vld [vmem:[%s1 + $0xc60] sm:$0xff]
      %v2599 = vld [vmem:[%s1 + $0xc68] sm:$0xff]
      %v2600 = vld [vmem:[%s1 + $0xc70] sm:$0xff]
      %v2601 = vld [vmem:[%s1 + $0xc78] sm:$0xff]
      %v2602 = vld [vmem:[%s1 + $0xc80] sm:$0xff]
      %v2603 = vld [vmem:[%s1 + $0xc88] sm:$0xff]
      %v2604 = vld [vmem:[%s1 + $0xc90] sm:$0xff]
      %v2605 = vld [vmem:[%s1 + $0xc98] sm:$0xff]
      %v2606 = vld [vmem:[%s1 + $0xca0] sm:$0xff]
      %v2607 = vld [vmem:[%s1 + $0xca8] sm:$0xff]
      %v2608 = vld [vmem:[%s1 + $0xcb0] sm:$0xff]
      %v2609 = vld [vmem:[%s1 + $0xcb8] sm:$0xff]
      %v2610 = vld [vmem:[%s1 + $0xcc0] sm:$0xff]
      %v2611 = vld [vmem:[%s1 + $0xcc8] sm:$0xff]
      %v2612 = vld [vmem:[%s1 + $0xcd0] sm:$0xff]
      %v2613 = vld [vmem:[%s1 + $0xcd8] sm:$0xff]
      %v2614 = vld [vmem:[%s1 + $0xce0] sm:$0xff]
      %v2615 = vld [vmem:[%s1 + $0xce8] sm:$0xff]
      %v2616 = vld [vmem:[%s1 + $0xcf0] sm:$0xff]
      %v2617 = vld [vmem:[%s1 + $0xcf8] sm:$0xff]
      %v2618 = vld [vmem:[%s1 + $0xd00] sm:$0xff]
      %v2619 = vld [vmem:[%s1 + $0xd08] sm:$0xff]
      %v2620 = vld [vmem:[%s1 + $0xd10] sm:$0xff]
      %v2621 = vld [vmem:[%s1 + $0xd18] sm:$0xff]
      %v2622 = vld [vmem:[%s1 + $0xd20] sm:$0xff]
      %v2623 = vld [vmem:[%s1 + $0xd28] sm:$0xff]
      %v2624 = vld [vmem:[%s1 + $0xd30] sm:$0xff]
      %v2625 = vld [vmem:[%s1 + $0xd38] sm:$0xff]
      %v2626 = vld [vmem:[%s1 + $0xd40] sm:$0xff]
      %v2627 = vld [vmem:[%s1 + $0xd48] sm:$0xff]
      %v2628 = vld [vmem:[%s1 + $0xd50] sm:$0xff]
      %v2629 = vld [vmem:[%s1 + $0xd58] sm:$0xff]
      %v2630 = vld [vmem:[%s1 + $0xd60] sm:$0xff]
      %v2631 = vld [vmem:[%s1 + $0xd68] sm:$0xff]
      %v2632 = vld [vmem:[%s1 + $0xd70] sm:$0xff]
      %v2633 = vld [vmem:[%s1 + $0xd78] sm:$0xff]
      %v2634 = vld [vmem:[%s1 + $0xd80] sm:$0xff]
      %v2635 = vld [vmem:[%s1 + $0xd88] sm:$0xff]
      %v2636 = vld [vmem:[%s1 + $0xd90] sm:$0xff]
      %v2637 = vld [vmem:[%s1 + $0xd98] sm:$0xff]
      %v2638 = vld [vmem:[%s1 + $0xda0] sm:$0xff]
      %v2639 = vld [vmem:[%s1 + $0xda8] sm:$0xff]
      %v2640 = vld [vmem:[%s1 + $0xdb0] sm:$0xff]
      %v2641 = vld [vmem:[%s1 + $0xdb8] sm:$0xff]
      %v2642 = vld [vmem:[%s1 + $0xdc0] sm:$0xff]
      %v2643 = vld [vmem:[%s1 + $0xdc8] sm:$0xff]
      %v2644 = vld [vmem:[%s1 + $0xdd0] sm:$0xff]
      %v2645 = vld [vmem:[%s1 + $0xdd8] sm:$0xff]
      %v2646 = vld [vmem:[%s1 + $0xde0] sm:$0xff]
      %v2647 = vld [vmem:[%s1 + $0xde8] sm:$0xff]
      %v2648 = vld [vmem:[%s1 + $0xdf0] sm:$0xff]
      %v2649 = vld [vmem:[%s1 + $0xdf8] sm:$0xff]
      %v2650 = vld [vmem:[%s1 + $0xe00] sm:$0xff]
      %v2651 = vld [vmem:[%s1 + $0xe08] sm:$0xff]
      %v2652 = vld [vmem:[%s1 + $0xe10] sm:$0xff]
      %v2653 = vld [vmem:[%s1 + $0xe18] sm:$0xff]
      %v2654 = vld [vmem:[%s1 + $0xe20] sm:$0xff]
      %v2655 = vld [vmem:[%s1 + $0xe28] sm:$0xff]
      %v2656 = vld [vmem:[%s1 + $0xe30] sm:$0xff]
      %v2657 = vld [vmem:[%s1 + $0xe38] sm:$0xff]
      %v2658 = vld [vmem:[%s1 + $0xe40] sm:$0xff]
      %v2659 = vld [vmem:[%s1 + $0xe48] sm:$0xff]
      %v2660 = vld [vmem:[%s1 + $0xe50] sm:$0xff]
      %v2661 = vld [vmem:[%s1 + $0xe58] sm:$0xff]
      %v2662 = vld [vmem:[%s1 + $0xe60] sm:$0xff]
      %v2663 = vld [vmem:[%s1 + $0xe68] sm:$0xff]
      %v2664 = vld [vmem:[%s1 + $0xe70] sm:$0xff]
      %v2665 = vld [vmem:[%s1 + $0xe78] sm:$0xff]
      %v2666 = vld [vmem:[%s1 + $0xe80] sm:$0xff]
      %v2667 = vld [vmem:[%s1 + $0xe88] sm:$0xff]
      %v2668 = vld [vmem:[%s1 + $0xe90] sm:$0xff]
      %v2669 = vld [vmem:[%s1 + $0xe98] sm:$0xff]
      %v2670 = vld [vmem:[%s1 + $0xea0] sm:$0xff]
      %v2671 = vld [vmem:[%s1 + $0xea8] sm:$0xff]
      %v2672 = vld [vmem:[%s1 + $0xeb0] sm:$0xff]
      %v2673 = vld [vmem:[%s1 + $0xeb8] sm:$0xff]
      %v2674 = vld [vmem:[%s1 + $0xec0] sm:$0xff]
      %v2675 = vld [vmem:[%s1 + $0xec8] sm:$0xff]
      %v2676 = vld [vmem:[%s1 + $0xed0] sm:$0xff]
      %v2677 = vld [vmem:[%s1 + $0xed8] sm:$0xff]
      %v2678 = vld [vmem:[%s1 + $0xee0] sm:$0xff]
      %v2679 = vld [vmem:[%s1 + $0xee8] sm:$0xff]
      %v2680 = vld [vmem:[%s1 + $0xef0] sm:$0xff]
      %v2681 = vld [vmem:[%s1 + $0xef8] sm:$0xff]
      %v2684 = vrot.slane %v174, 1
      %v2685 = vrot.slane %v175, 1
      %v2848 = vunpack.c.l.b16 %v2522
      %v2849 = vunpack.c.h.b16 %v2522
      %v2850 = vunpack.c.l.b16 %v2523
      %v2851 = vunpack.c.h.b16 %v2523
      %v2852 = vunpack.c.l.b16 %v2524
      %v2853 = vunpack.c.h.b16 %v2524
      %v2854 = vunpack.c.l.b16 %v2525
      %v2855 = vunpack.c.h.b16 %v2525
      %v2856 = vunpack.c.l.b16 %v2526
      %v2857 = vunpack.c.h.b16 %v2526
      %v2858 = vunpack.c.l.b16 %v2527
      %v2859 = vunpack.c.h.b16 %v2527
      %v2860 = vunpack.c.l.b16 %v2528
      %v2861 = vunpack.c.h.b16 %v2528
      %v2862 = vunpack.c.l.b16 %v2529
      %v2863 = vunpack.c.h.b16 %v2529
      %v2864 = vunpack.c.l.b16 %v2530
      %v2865 = vunpack.c.h.b16 %v2530
      %v2866 = vunpack.c.l.b16 %v2531
      %v2867 = vunpack.c.h.b16 %v2531
      %v2868 = vunpack.c.l.b16 %v2532
      %v2869 = vunpack.c.h.b16 %v2532
      %v2870 = vunpack.c.l.b16 %v2533
      %v2871 = vunpack.c.h.b16 %v2533
      %v2872 = vunpack.c.l.b16 %v2534
      %v2873 = vunpack.c.h.b16 %v2534
      %v2874 = vunpack.c.l.b16 %v2535
      %v2875 = vunpack.c.h.b16 %v2535
      %v2876 = vunpack.c.l.b16 %v2536
      %v2877 = vunpack.c.h.b16 %v2536
      %v2878 = vunpack.c.l.b16 %v2537
      %v2879 = vunpack.c.h.b16 %v2537
      %v2880 = vunpack.c.l.b16 %v2538
      %v2881 = vunpack.c.h.b16 %v2538
      %v2882 = vunpack.c.l.b16 %v2539
      %v2883 = vunpack.c.h.b16 %v2539
      %v2884 = vunpack.c.l.b16 %v2540
      %v2885 = vunpack.c.h.b16 %v2540
      %v2886 = vunpack.c.l.b16 %v2541
      %v2887 = vunpack.c.h.b16 %v2541
      %v2888 = vunpack.c.l.b16 %v2542
      %v2889 = vunpack.c.h.b16 %v2542
      %v2890 = vunpack.c.l.b16 %v2543
      %v2891 = vunpack.c.h.b16 %v2543
      %v2892 = vunpack.c.l.b16 %v2544
      %v2893 = vunpack.c.h.b16 %v2544
      %v2894 = vunpack.c.l.b16 %v2545
      %v2895 = vunpack.c.h.b16 %v2545
      %v2896 = vunpack.c.l.b16 %v2546
      %v2897 = vunpack.c.h.b16 %v2546
      %v2898 = vunpack.c.l.b16 %v2547
      %v2899 = vunpack.c.h.b16 %v2547
      %v2900 = vunpack.c.l.b16 %v2548
      %v2901 = vunpack.c.h.b16 %v2548
      %v2902 = vunpack.c.l.b16 %v2549
      %v2903 = vunpack.c.h.b16 %v2549
      %v2904 = vunpack.c.l.b16 %v2550
      %v2905 = vunpack.c.h.b16 %v2550
      %v2906 = vunpack.c.l.b16 %v2551
      %v2907 = vunpack.c.h.b16 %v2551
      %v2908 = vunpack.c.l.b16 %v2552
      %v2909 = vunpack.c.h.b16 %v2552
      %v2910 = vunpack.c.l.b16 %v2553
      %v2911 = vunpack.c.h.b16 %v2553
      %v2912 = vunpack.c.l.b16 %v2554
      %v2913 = vunpack.c.h.b16 %v2554
      %v2914 = vunpack.c.l.b16 %v2555
      %v2915 = vunpack.c.h.b16 %v2555
      %v2916 = vunpack.c.l.b16 %v2556
      %v2917 = vunpack.c.h.b16 %v2556
      %v2918 = vunpack.c.l.b16 %v2557
      %v2919 = vunpack.c.h.b16 %v2557
      %v2920 = vunpack.c.l.b16 %v2558
      %v2921 = vunpack.c.h.b16 %v2558
      %v2922 = vunpack.c.l.b16 %v2559
      %v2923 = vunpack.c.h.b16 %v2559
      %v2924 = vunpack.c.l.b16 %v2560
      %v2925 = vunpack.c.h.b16 %v2560
      %v2926 = vunpack.c.l.b16 %v2561
      %v2927 = vunpack.c.h.b16 %v2561
      %v2928 = vunpack.c.l.b16 %v2562
      %v2929 = vunpack.c.h.b16 %v2562
      %v2930 = vunpack.c.l.b16 %v2563
      %v2931 = vunpack.c.h.b16 %v2563
      %v2932 = vunpack.c.l.b16 %v2564
      %v2933 = vunpack.c.h.b16 %v2564
      %v2934 = vunpack.c.l.b16 %v2565
      %v2935 = vunpack.c.h.b16 %v2565
      %v2936 = vunpack.c.l.b16 %v2566
      %v2937 = vunpack.c.h.b16 %v2566
      %v2938 = vunpack.c.l.b16 %v2567
      %v2939 = vunpack.c.h.b16 %v2567
      %v2940 = vunpack.c.l.b16 %v2568
      %v2941 = vunpack.c.h.b16 %v2568
      %v2942 = vunpack.c.l.b16 %v2569
      %v2943 = vunpack.c.h.b16 %v2569
      %v2944 = vunpack.c.l.b16 %v2570
      %v2945 = vunpack.c.h.b16 %v2570
      %v2946 = vunpack.c.l.b16 %v2571
      %v2947 = vunpack.c.h.b16 %v2571
      %v2948 = vunpack.c.l.b16 %v2572
      %v2949 = vunpack.c.h.b16 %v2572
      %v2950 = vunpack.c.l.b16 %v2573
      %v2951 = vunpack.c.h.b16 %v2573
      %v2952 = vunpack.c.l.b16 %v2574
      %v2953 = vunpack.c.h.b16 %v2574
      %v2954 = vunpack.c.l.b16 %v2575
      %v2955 = vunpack.c.h.b16 %v2575
      %v2956 = vunpack.c.l.b16 %v2576
      %v2957 = vunpack.c.h.b16 %v2576
      %v2958 = vunpack.c.l.b16 %v2577
      %v2959 = vunpack.c.h.b16 %v2577
      %v2960 = vunpack.c.l.b16 %v2578
      %v2961 = vunpack.c.h.b16 %v2578
      %v2962 = vunpack.c.l.b16 %v2579
      %v2963 = vunpack.c.h.b16 %v2579
      %v2964 = vunpack.c.l.b16 %v2580
      %v2965 = vunpack.c.h.b16 %v2580
      %v2966 = vunpack.c.l.b16 %v2581
      %v2967 = vunpack.c.h.b16 %v2581
      %v2968 = vunpack.c.l.b16 %v2582
      %v2969 = vunpack.c.h.b16 %v2582
      %v2970 = vunpack.c.l.b16 %v2583
      %v2971 = vunpack.c.h.b16 %v2583
      %v2972 = vunpack.c.l.b16 %v2584
      %v2973 = vunpack.c.h.b16 %v2584
      %v2974 = vunpack.c.l.b16 %v2585
      %v2975 = vunpack.c.h.b16 %v2585
      %v2976 = vunpack.c.l.b16 %v2586
      %v2977 = vunpack.c.h.b16 %v2586
      %v2978 = vunpack.c.l.b16 %v2587
      %v2979 = vunpack.c.h.b16 %v2587
      %v2980 = vunpack.c.l.b16 %v2588
      %v2981 = vunpack.c.h.b16 %v2588
      %v2982 = vunpack.c.l.b16 %v2589
      %v2983 = vunpack.c.h.b16 %v2589
      %v2984 = vunpack.c.l.b16 %v2590
      %v2985 = vunpack.c.h.b16 %v2590
      %v2986 = vunpack.c.l.b16 %v2591
      %v2987 = vunpack.c.h.b16 %v2591
      %v2988 = vunpack.c.l.b16 %v2592
      %v2989 = vunpack.c.h.b16 %v2592
      %v2990 = vunpack.c.l.b16 %v2593
      %v2991 = vunpack.c.h.b16 %v2593
      %v2992 = vunpack.c.l.b16 %v2594
      %v2993 = vunpack.c.h.b16 %v2594
      %v2994 = vunpack.c.l.b16 %v2595
      %v2995 = vunpack.c.h.b16 %v2595
      %v2996 = vunpack.c.l.b16 %v2596
      %v2997 = vunpack.c.h.b16 %v2596
      %v2998 = vunpack.c.l.b16 %v2597
      %v2999 = vunpack.c.h.b16 %v2597
      %v3000 = vunpack.c.l.b16 %v2598
      %v3001 = vunpack.c.h.b16 %v2598
      %v3002 = vunpack.c.l.b16 %v2599
      %v3003 = vunpack.c.h.b16 %v2599
      %v3004 = vunpack.c.l.b16 %v2600
      %v3005 = vunpack.c.h.b16 %v2600
      %v3006 = vunpack.c.l.b16 %v2601
      %v3007 = vunpack.c.h.b16 %v2601
      %v3008 = vunpack.c.l.b16 %v2602
      %v3009 = vunpack.c.h.b16 %v2602
      %v3010 = vunpack.c.l.b16 %v2603
      %v3011 = vunpack.c.h.b16 %v2603
      %v3012 = vunpack.c.l.b16 %v2604
      %v3013 = vunpack.c.h.b16 %v2604
      %v3014 = vunpack.c.l.b16 %v2605
      %v3015 = vunpack.c.h.b16 %v2605
      %v3016 = vunpack.c.l.b16 %v2606
      %v3017 = vunpack.c.h.b16 %v2606
      %v3018 = vunpack.c.l.b16 %v2607
      %v3019 = vunpack.c.h.b16 %v2607
      %v3020 = vunpack.c.l.b16 %v2608
      %v3021 = vunpack.c.h.b16 %v2608
      %v3022 = vunpack.c.l.b16 %v2609
      %v3023 = vunpack.c.h.b16 %v2609
      %v3024 = vunpack.c.l.b16 %v2610
      %v3025 = vunpack.c.h.b16 %v2610
      %v3026 = vunpack.c.l.b16 %v2611
      %v3027 = vunpack.c.h.b16 %v2611
      %v3028 = vunpack.c.l.b16 %v2612
      %v3029 = vunpack.c.h.b16 %v2612
      %v3030 = vunpack.c.l.b16 %v2613
      %v3031 = vunpack.c.h.b16 %v2613
      %v3032 = vunpack.c.l.b16 %v2614
      %v3033 = vunpack.c.h.b16 %v2614
      %v3034 = vunpack.c.l.b16 %v2615
      %v3035 = vunpack.c.h.b16 %v2615
      %v3036 = vunpack.c.l.b16 %v2616
      %v3037 = vunpack.c.h.b16 %v2616
      %v3038 = vunpack.c.l.b16 %v2617
      %v3039 = vunpack.c.h.b16 %v2617
      %v3040 = vunpack.c.l.b16 %v2618
      %v3041 = vunpack.c.h.b16 %v2618
      %v3042 = vunpack.c.l.b16 %v2619
      %v3043 = vunpack.c.h.b16 %v2619
      %v3044 = vunpack.c.l.b16 %v2620
      %v3045 = vunpack.c.h.b16 %v2620
      %v3046 = vunpack.c.l.b16 %v2621
      %v3047 = vunpack.c.h.b16 %v2621
      %v3048 = vunpack.c.l.b16 %v2622
      %v3049 = vunpack.c.h.b16 %v2622
      %v3050 = vunpack.c.l.b16 %v2623
      %v3051 = vunpack.c.h.b16 %v2623
      %v3052 = vunpack.c.l.b16 %v2624
      %v3053 = vunpack.c.h.b16 %v2624
      %v3054 = vunpack.c.l.b16 %v2625
      %v3055 = vunpack.c.h.b16 %v2625
      %v3056 = vunpack.c.l.b16 %v2626
      %v3057 = vunpack.c.h.b16 %v2626
      %v3058 = vunpack.c.l.b16 %v2627
      %v3059 = vunpack.c.h.b16 %v2627
      %v3060 = vunpack.c.l.b16 %v2628
      %v3061 = vunpack.c.h.b16 %v2628
      %v3062 = vunpack.c.l.b16 %v2629
      %v3063 = vunpack.c.h.b16 %v2629
      %v3064 = vunpack.c.l.b16 %v2630
      %v3065 = vunpack.c.h.b16 %v2630
      %v3066 = vunpack.c.l.b16 %v2631
      %v3067 = vunpack.c.h.b16 %v2631
      %v3068 = vunpack.c.l.b16 %v2632
      %v3069 = vunpack.c.h.b16 %v2632
      %v3070 = vunpack.c.l.b16 %v2633
      %v3071 = vunpack.c.h.b16 %v2633
      %v3072 = vunpack.c.l.b16 %v2634
      %v3073 = vunpack.c.h.b16 %v2634
      %v3074 = vunpack.c.l.b16 %v2635
      %v3075 = vunpack.c.h.b16 %v2635
      %v3076 = vunpack.c.l.b16 %v2636
      %v3077 = vunpack.c.h.b16 %v2636
      %v3078 = vunpack.c.l.b16 %v2637
      %v3079 = vunpack.c.h.b16 %v2637
      %v3080 = vunpack.c.l.b16 %v2638
      %v3081 = vunpack.c.h.b16 %v2638
      %v3082 = vunpack.c.l.b16 %v2639
      %v3083 = vunpack.c.h.b16 %v2639
      %v3084 = vunpack.c.l.b16 %v2640
      %v3085 = vunpack.c.h.b16 %v2640
      %v3086 = vunpack.c.l.b16 %v2641
      %v3087 = vunpack.c.h.b16 %v2641
      %v3088 = vunpack.c.l.b16 %v2642
      %v3089 = vunpack.c.h.b16 %v2642
      %v3090 = vunpack.c.l.b16 %v2643
      %v3091 = vunpack.c.h.b16 %v2643
      %v3092 = vunpack.c.l.b16 %v2644
      %v3093 = vunpack.c.h.b16 %v2644
      %v3094 = vunpack.c.l.b16 %v2645
      %v3095 = vunpack.c.h.b16 %v2645
      %v3096 = vunpack.c.l.b16 %v2646
      %v3097 = vunpack.c.h.b16 %v2646
      %v3098 = vunpack.c.l.b16 %v2647
      %v3099 = vunpack.c.h.b16 %v2647
      %v3100 = vunpack.c.l.b16 %v2648
      %v3101 = vunpack.c.h.b16 %v2648
      %v3102 = vunpack.c.l.b16 %v2649
      %v3103 = vunpack.c.h.b16 %v2649
      %v3104 = vunpack.c.l.b16 %v2650
      %v3105 = vunpack.c.h.b16 %v2650
      %v3106 = vunpack.c.l.b16 %v2651
      %v3107 = vunpack.c.h.b16 %v2651
      %v3108 = vunpack.c.l.b16 %v2652
      %v3109 = vunpack.c.h.b16 %v2652
      %v3110 = vunpack.c.l.b16 %v2653
      %v3111 = vunpack.c.h.b16 %v2653
      %v3112 = vunpack.c.l.b16 %v2654
      %v3113 = vunpack.c.h.b16 %v2654
      %v3114 = vunpack.c.l.b16 %v2655
      %v3115 = vunpack.c.h.b16 %v2655
      %v3116 = vunpack.c.l.b16 %v2656
      %v3117 = vunpack.c.h.b16 %v2656
      %v3118 = vunpack.c.l.b16 %v2657
      %v3119 = vunpack.c.h.b16 %v2657
      %v3120 = vunpack.c.l.b16 %v2658
      %v3121 = vunpack.c.h.b16 %v2658
      %v3122 = vunpack.c.l.b16 %v2659
      %v3123 = vunpack.c.h.b16 %v2659
      %v3124 = vunpack.c.l.b16 %v2660
      %v3125 = vunpack.c.h.b16 %v2660
      %v3126 = vunpack.c.l.b16 %v2661
      %v3127 = vunpack.c.h.b16 %v2661
      %v3128 = vunpack.c.l.b16 %v2662
      %v3129 = vunpack.c.h.b16 %v2662
      %v3130 = vunpack.c.l.b16 %v2663
      %v3131 = vunpack.c.h.b16 %v2663
      %v3132 = vunpack.c.l.b16 %v2664
      %v3133 = vunpack.c.h.b16 %v2664
      %v3134 = vunpack.c.l.b16 %v2665
      %v3135 = vunpack.c.h.b16 %v2665
      %v3136 = vunpack.c.l.b16 %v2666
      %v3137 = vunpack.c.h.b16 %v2666
      %v3138 = vunpack.c.l.b16 %v2667
      %v3139 = vunpack.c.h.b16 %v2667
      %v3140 = vunpack.c.l.b16 %v2668
      %v3141 = vunpack.c.h.b16 %v2668
      %v3142 = vunpack.c.l.b16 %v2669
      %v3143 = vunpack.c.h.b16 %v2669
      %v3144 = vunpack.c.l.b16 %v2670
      %v3145 = vunpack.c.h.b16 %v2670
      %v3146 = vunpack.c.l.b16 %v2671
      %v3147 = vunpack.c.h.b16 %v2671
      %v3148 = vunpack.c.l.b16 %v2672
      %v3149 = vunpack.c.h.b16 %v2672
      %v3150 = vunpack.c.l.b16 %v2673
      %v3151 = vunpack.c.h.b16 %v2673
      %v3152 = vunpack.c.l.b16 %v2674
      %v3153 = vunpack.c.h.b16 %v2674
      %v3154 = vunpack.c.l.b16 %v2675
      %v3155 = vunpack.c.h.b16 %v2675
      %v3156 = vunpack.c.l.b16 %v2676
      %v3157 = vunpack.c.h.b16 %v2676
      %v3158 = vunpack.c.l.b16 %v2677
      %v3159 = vunpack.c.h.b16 %v2677
      %v3160 = vunpack.c.l.b16 %v2678
      %v3161 = vunpack.c.h.b16 %v2678
      %v3162 = vunpack.c.l.b16 %v2679
      %v3163 = vunpack.c.h.b16 %v2679
      %v3164 = vunpack.c.l.b16 %v2680
      %v3165 = vunpack.c.h.b16 %v2680
      %v3166 = vunpack.c.l.b16 %v2681
      %v3167 = vunpack.c.h.b16 %v2681
      %v3168 = vpack.c.b16 %v2858, %v2848
      %v3169 = vpack.c.b16 %v2859, %v2849
      %v3170 = vpack.c.b16 %v2860, %v2850
      %v3171 = vpack.c.b16 %v2861, %v2851
      %v3172 = vpack.c.b16 %v2862, %v2852
      %v3173 = vpack.c.b16 %v2863, %v2853
      %v3174 = vpack.c.b16 %v2864, %v2854
      %v3175 = vpack.c.b16 %v2865, %v2855
      %v3176 = vpack.c.b16 %v2866, %v2856
      %v3177 = vpack.c.b16 %v2867, %v2857
      %v3178 = vpack.c.b16 %v2878, %v2868
      %v3179 = vpack.c.b16 %v2879, %v2869
      %v3180 = vpack.c.b16 %v2880, %v2870
      %v3181 = vpack.c.b16 %v2881, %v2871
      %v3182 = vpack.c.b16 %v2882, %v2872
      %v3183 = vpack.c.b16 %v2883, %v2873
      %v3184 = vpack.c.b16 %v2884, %v2874
      %v3185 = vpack.c.b16 %v2885, %v2875
      %v3186 = vpack.c.b16 %v2886, %v2876
      %v3187 = vpack.c.b16 %v2887, %v2877
      %v3188 = vpack.c.b16 %v2898, %v2888
      %v3189 = vpack.c.b16 %v2899, %v2889
      %v3190 = vpack.c.b16 %v2900, %v2890
      %v3191 = vpack.c.b16 %v2901, %v2891
      %v3192 = vpack.c.b16 %v2902, %v2892
      %v3193 = vpack.c.b16 %v2903, %v2893
      %v3194 = vpack.c.b16 %v2904, %v2894
      %v3195 = vpack.c.b16 %v2905, %v2895
      %v3196 = vpack.c.b16 %v2906, %v2896
      %v3197 = vpack.c.b16 %v2907, %v2897
      %v3198 = vpack.c.b16 %v2918, %v2908
      %v3199 = vpack.c.b16 %v2919, %v2909
      %v3200 = vpack.c.b16 %v2920, %v2910
      %v3201 = vpack.c.b16 %v2921, %v2911
      %v3202 = vpack.c.b16 %v2922, %v2912
      %v3203 = vpack.c.b16 %v2923, %v2913
      %v3204 = vpack.c.b16 %v2924, %v2914
      %v3205 = vpack.c.b16 %v2925, %v2915
      %v3206 = vpack.c.b16 %v2926, %v2916
      %v3207 = vpack.c.b16 %v2927, %v2917
      %v3208 = vpack.c.b16 %v2938, %v2928
      %v3209 = vpack.c.b16 %v2939, %v2929
      %v3210 = vpack.c.b16 %v2940, %v2930
      %v3211 = vpack.c.b16 %v2941, %v2931
      %v3212 = vpack.c.b16 %v2942, %v2932
      %v3213 = vpack.c.b16 %v2943, %v2933
      %v3214 = vpack.c.b16 %v2944, %v2934
      %v3215 = vpack.c.b16 %v2945, %v2935
      %v3216 = vpack.c.b16 %v2946, %v2936
      %v3217 = vpack.c.b16 %v2947, %v2937
      %v3218 = vpack.c.b16 %v2958, %v2948
      %v3219 = vpack.c.b16 %v2959, %v2949
      %v3220 = vpack.c.b16 %v2960, %v2950
      %v3221 = vpack.c.b16 %v2961, %v2951
      %v3222 = vpack.c.b16 %v2962, %v2952
      %v3223 = vpack.c.b16 %v2963, %v2953
      %v3224 = vpack.c.b16 %v2964, %v2954
      %v3225 = vpack.c.b16 %v2965, %v2955
      %v3226 = vpack.c.b16 %v2966, %v2956
      %v3227 = vpack.c.b16 %v2967, %v2957
      %v3228 = vpack.c.b16 %v2978, %v2968
      %v3229 = vpack.c.b16 %v2979, %v2969
      %v3230 = vpack.c.b16 %v2980, %v2970
      %v3231 = vpack.c.b16 %v2981, %v2971
      %v3232 = vpack.c.b16 %v2982, %v2972
      %v3233 = vpack.c.b16 %v2983, %v2973
      %v3234 = vpack.c.b16 %v2984, %v2974
      %v3235 = vpack.c.b16 %v2985, %v2975
      %v3236 = vpack.c.b16 %v2986, %v2976
      %v3237 = vpack.c.b16 %v2987, %v2977
      %v3238 = vpack.c.b16 %v2998, %v2988
      %v3239 = vpack.c.b16 %v2999, %v2989
      %v3240 = vpack.c.b16 %v3000, %v2990
      %v3241 = vpack.c.b16 %v3001, %v2991
      %v3242 = vpack.c.b16 %v3002, %v2992
      %v3243 = vpack.c.b16 %v3003, %v2993
      %v3244 = vpack.c.b16 %v3004, %v2994
      %v3245 = vpack.c.b16 %v3005, %v2995
      %v3246 = vpack.c.b16 %v3006, %v2996
      %v3247 = vpack.c.b16 %v3007, %v2997
      %v3248 = vpack.c.b16 %v3018, %v3008
      %v3249 = vpack.c.b16 %v3019, %v3009
      %v3250 = vpack.c.b16 %v3020, %v3010
      %v3251 = vpack.c.b16 %v3021, %v3011
      %v3252 = vpack.c.b16 %v3022, %v3012
      %v3253 = vpack.c.b16 %v3023, %v3013
      %v3254 = vpack.c.b16 %v3024, %v3014
      %v3255 = vpack.c.b16 %v3025, %v3015
      %v3256 = vpack.c.b16 %v3026, %v3016
      %v3257 = vpack.c.b16 %v3027, %v3017
      %v3258 = vpack.c.b16 %v3038, %v3028
      %v3259 = vpack.c.b16 %v3039, %v3029
      %v3260 = vpack.c.b16 %v3040, %v3030
      %v3261 = vpack.c.b16 %v3041, %v3031
      %v3262 = vpack.c.b16 %v3042, %v3032
      %v3263 = vpack.c.b16 %v3043, %v3033
      %v3264 = vpack.c.b16 %v3044, %v3034
      %v3265 = vpack.c.b16 %v3045, %v3035
      %v3266 = vpack.c.b16 %v3046, %v3036
      %v3267 = vpack.c.b16 %v3047, %v3037
      %v3268 = vpack.c.b16 %v3058, %v3048
      %v3269 = vpack.c.b16 %v3059, %v3049
      %v3270 = vpack.c.b16 %v3060, %v3050
      %v3271 = vpack.c.b16 %v3061, %v3051
      %v3272 = vpack.c.b16 %v3062, %v3052
      %v3273 = vpack.c.b16 %v3063, %v3053
      %v3274 = vpack.c.b16 %v3064, %v3054
      %v3275 = vpack.c.b16 %v3065, %v3055
      %v3276 = vpack.c.b16 %v3066, %v3056
      %v3277 = vpack.c.b16 %v3067, %v3057
      %v3278 = vpack.c.b16 %v3078, %v3068
      %v3279 = vpack.c.b16 %v3079, %v3069
      %v3280 = vpack.c.b16 %v3080, %v3070
      %v3281 = vpack.c.b16 %v3081, %v3071
      %v3282 = vpack.c.b16 %v3082, %v3072
      %v3283 = vpack.c.b16 %v3083, %v3073
      %v3284 = vpack.c.b16 %v3084, %v3074
      %v3285 = vpack.c.b16 %v3085, %v3075
      %v3286 = vpack.c.b16 %v3086, %v3076
      %v3287 = vpack.c.b16 %v3087, %v3077
      %v3288 = vpack.c.b16 %v3098, %v3088
      %v3289 = vpack.c.b16 %v3099, %v3089
      %v3290 = vpack.c.b16 %v3100, %v3090
      %v3291 = vpack.c.b16 %v3101, %v3091
      %v3292 = vpack.c.b16 %v3102, %v3092
      %v3293 = vpack.c.b16 %v3103, %v3093
      %v3294 = vpack.c.b16 %v3104, %v3094
      %v3295 = vpack.c.b16 %v3105, %v3095
      %v3296 = vpack.c.b16 %v3106, %v3096
      %v3297 = vpack.c.b16 %v3107, %v3097
      %v3298 = vpack.c.b16 %v3118, %v3108
      %v3299 = vpack.c.b16 %v3119, %v3109
      %v3300 = vpack.c.b16 %v3120, %v3110
      %v3301 = vpack.c.b16 %v3121, %v3111
      %v3302 = vpack.c.b16 %v3122, %v3112
      %v3303 = vpack.c.b16 %v3123, %v3113
      %v3304 = vpack.c.b16 %v3124, %v3114
      %v3305 = vpack.c.b16 %v3125, %v3115
      %v3306 = vpack.c.b16 %v3126, %v3116
      %v3307 = vpack.c.b16 %v3127, %v3117
      %v3308 = vpack.c.b16 %v3138, %v3128
      %v3309 = vpack.c.b16 %v3139, %v3129
      %v3310 = vpack.c.b16 %v3140, %v3130
      %v3311 = vpack.c.b16 %v3141, %v3131
      %v3312 = vpack.c.b16 %v3142, %v3132
      %v3313 = vpack.c.b16 %v3143, %v3133
      %v3314 = vpack.c.b16 %v3144, %v3134
      %v3315 = vpack.c.b16 %v3145, %v3135
      %v3316 = vpack.c.b16 %v3146, %v3136
      %v3317 = vpack.c.b16 %v3147, %v3137
      %v3318 = vpack.c.b16 %v3158, %v3148
      %v3319 = vpack.c.b16 %v3159, %v3149
      %v3320 = vpack.c.b16 %v3160, %v3150
      %v3321 = vpack.c.b16 %v3161, %v3151
      %v3322 = vpack.c.b16 %v3162, %v3152
      %v3323 = vpack.c.b16 %v3163, %v3153
      %v3324 = vpack.c.b16 %v3164, %v3154
      %v3325 = vpack.c.b16 %v3165, %v3155
      %v3326 = vpack.c.b16 %v3166, %v3156
      %v3327 = vpack.c.b16 %v3167, %v3157
      %3488 = vmatprep.subr.bf16.mxu0 %v3169
      %3489 = vmatpush1.bf16.msra.mxu0 %v3168
      %3490 = vmatprep.subr.bf16.mxu0 %v3179
      %3491 = vmatpush1.bf16.msra.mxu0 %v3178
      %3492 = vmatprep.subr.bf16.mxu0 %v3189
      %3493 = vmatpush1.bf16.msra.mxu0 %v3188
      %3494 = vmatprep.subr.bf16.mxu0 %v3199
      %3495 = vmatpush1.bf16.msra.mxu0 %v3198
      %3496 = vmatprep.subr.bf16.mxu0 %v3209
      %3497 = vmatpush1.bf16.msra.mxu0 %v3208
      %3498 = vmatprep.subr.bf16.mxu0 %v3219
      %3499 = vmatpush1.bf16.msra.mxu0 %v3218
      %3500 = vmatprep.subr.bf16.mxu0 %v3229
      %3501 = vmatpush1.bf16.msra.mxu0 %v3228
      %3502 = vmatprep.subr.bf16.mxu0 %v3239
      %3503 = vmatpush1.bf16.msra.mxu0 %v3238
      %3504 = vmatprep.subr.bf16.mxu0 %v3249
      %3505 = vmatpush1.bf16.msra.mxu0 %v3248
      %3506 = vmatprep.subr.bf16.mxu0 %v3259
      %3507 = vmatpush1.bf16.msra.mxu0 %v3258
      %3508 = vmatprep.subr.bf16.mxu0 %v3269
      %3509 = vmatpush1.bf16.msra.mxu0 %v3268
      %3510 = vmatprep.subr.bf16.mxu0 %v3279
      %3511 = vmatpush1.bf16.msra.mxu0 %v3278
      %3512 = vmatprep.subr.bf16.mxu0 %v3289
      %3513 = vmatpush1.bf16.msra.mxu0 %v3288
      %3514 = vmatprep.subr.bf16.mxu0 %v3299
      %3515 = vmatpush1.bf16.msra.mxu0 %v3298
      %3516 = vmatprep.subr.bf16.mxu0 %v3309
      %3517 = vmatpush1.bf16.msra.mxu0 %v3308
      %3518 = vmatprep.subr.bf16.mxu0 %v3319
      %3519 = vmatpush1.bf16.msra.mxu0 %v3318
      %3520 = vmatprep.mubr.bf16.mxu0 %v2685
      %3521 = vmatmul.mubr.bf16.gmra.mrb[0].mxu0 %v2684
      %v3522 = vpop.f32.mrb[0].mxu0
      %v3523 = vadd.f32 0.0, %v3522
      %v3524 = vpop.f32.mrb[0].mxu0
      %v3525 = vadd.f32 0.0, %v3524
      %v3526 = vpop.f32.mrb[0].mxu0
      %v3527 = vpop.f32.mrb[0].mxu0
      %3528 = vdwg.mxu0
      %3529 = vmatprep.subr.bf16.mxu0 %v3171
      %3530 = vmatpush1.bf16.msra.mxu0 %v3170
      %3531 = vmatprep.subr.bf16.mxu0 %v3181
      %3532 = vmatpush1.bf16.msra.mxu0 %v3180
      %3533 = vmatprep.subr.bf16.mxu0 %v3191
      %3534 = vmatpush1.bf16.msra.mxu0 %v3190
      %3535 = vmatprep.subr.bf16.mxu0 %v3201
      %3536 = vmatpush1.bf16.msra.mxu0 %v3200
      %3537 = vmatprep.subr.bf16.mxu0 %v3211
      %3538 = vmatpush1.bf16.msra.mxu0 %v3210
      %3539 = vmatprep.subr.bf16.mxu0 %v3221
      %3540 = vmatpush1.bf16.msra.mxu0 %v3220
      %3541 = vmatprep.subr.bf16.mxu0 %v3231
      %3542 = vmatpush1.bf16.msra.mxu0 %v3230
      %3543 = vmatprep.subr.bf16.mxu0 %v3241
      %3544 = vmatpush1.bf16.msra.mxu0 %v3240
      %3545 = vmatprep.subr.bf16.mxu0 %v3251
      %3546 = vmatpush1.bf16.msra.mxu0 %v3250
      %3547 = vmatprep.subr.bf16.mxu0 %v3261
      %3548 = vmatpush1.bf16.msra.mxu0 %v3260
      %3549 = vmatprep.subr.bf16.mxu0 %v3271
      %3550 = vmatpush1.bf16.msra.mxu0 %v3270
      %3551 = vmatprep.subr.bf16.mxu0 %v3281
      %3552 = vmatpush1.bf16.msra.mxu0 %v3280
      %3553 = vmatprep.subr.bf16.mxu0 %v3291
      %3554 = vmatpush1.bf16.msra.mxu0 %v3290
      %3555 = vmatprep.subr.bf16.mxu0 %v3301
      %3556 = vmatpush1.bf16.msra.mxu0 %v3300
      %3557 = vmatprep.subr.bf16.mxu0 %v3311
      %3558 = vmatpush1.bf16.msra.mxu0 %v3310
      %3559 = vmatprep.subr.bf16.mxu0 %v3321
      %3560 = vmatpush1.bf16.msra.mxu0 %v3320
      %3561 = vmatprep.mubr.bf16.mxu0 %v2685
      %3562 = vmatmul.mubr.bf16.gmra.mrb[0].mxu0 %v2684
      %v3563 = vpop.f32.mrb[0].mxu0
      %v3564 = vadd.f32 0.0, %v3563
      %v3565 = vpop.f32.mrb[0].mxu0
      %v3566 = vadd.f32 0.0, %v3565
      %v3567 = vpop.f32.mrb[0].mxu0
      %v3568 = vpop.f32.mrb[0].mxu0
      %3569 = vdwg.mxu0
      %3570 = vmatprep.subr.bf16.mxu0 %v3173
      %3571 = vmatpush1.bf16.msra.mxu0 %v3172
      %3572 = vmatprep.subr.bf16.mxu0 %v3183
      %3573 = vmatpush1.bf16.msra.mxu0 %v3182
      %3574 = vmatprep.subr.bf16.mxu0 %v3193
      %3575 = vmatpush1.bf16.msra.mxu0 %v3192
      %3576 = vmatprep.subr.bf16.mxu0 %v3203
      %3577 = vmatpush1.bf16.msra.mxu0 %v3202
      %3578 = vmatprep.subr.bf16.mxu0 %v3213
      %3579 = vmatpush1.bf16.msra.mxu0 %v3212
      %3580 = vmatprep.subr.bf16.mxu0 %v3223
      %3581 = vmatpush1.bf16.msra.mxu0 %v3222
      %3582 = vmatprep.subr.bf16.mxu0 %v3233
      %3583 = vmatpush1.bf16.msra.mxu0 %v3232
      %3584 = vmatprep.subr.bf16.mxu0 %v3243
      %3585 = vmatpush1.bf16.msra.mxu0 %v3242
      %3586 = vmatprep.subr.bf16.mxu0 %v3253
      %3587 = vmatpush1.bf16.msra.mxu0 %v3252
      %3588 = vmatprep.subr.bf16.mxu0 %v3263
      %3589 = vmatpush1.bf16.msra.mxu0 %v3262
      %3590 = vmatprep.subr.bf16.mxu0 %v3273
      %3591 = vmatpush1.bf16.msra.mxu0 %v3272
      %3592 = vmatprep.subr.bf16.mxu0 %v3283
      %3593 = vmatpush1.bf16.msra.mxu0 %v3282
      %3594 = vmatprep.subr.bf16.mxu0 %v3293
      %3595 = vmatpush1.bf16.msra.mxu0 %v3292
      %3596 = vmatprep.subr.bf16.mxu0 %v3303
      %3597 = vmatpush1.bf16.msra.mxu0 %v3302
      %3598 = vmatprep.subr.bf16.mxu0 %v3313
      %3599 = vmatpush1.bf16.msra.mxu0 %v3312
      %3600 = vmatprep.subr.bf16.mxu0 %v3323
      %3601 = vmatpush1.bf16.msra.mxu0 %v3322
      %3602 = vmatprep.mubr.bf16.mxu0 %v2685
      %3603 = vmatmul.mubr.bf16.gmra.mrb[0].mxu0 %v2684
      %v3604 = vpop.f32.mrb[0].mxu0
      %v3605 = vadd.f32 0.0, %v3604
      %v3606 = vpop.f32.mrb[0].mxu0
      %v3607 = vadd.f32 0.0, %v3606
      %v3608 = vpop.f32.mrb[0].mxu0
      %v3609 = vpop.f32.mrb[0].mxu0
      %3610 = vdwg.mxu0
      %3611 = vmatprep.subr.bf16.mxu0 %v3175
      %3612 = vmatpush1.bf16.msra.mxu0 %v3174
      %3613 = vmatprep.subr.bf16.mxu0 %v3185
      %3614 = vmatpush1.bf16.msra.mxu0 %v3184
      %3615 = vmatprep.subr.bf16.mxu0 %v3195
      %3616 = vmatpush1.bf16.msra.mxu0 %v3194
      %3617 = vmatprep.subr.bf16.mxu0 %v3205
      %3618 = vmatpush1.bf16.msra.mxu0 %v3204
      %3619 = vmatprep.subr.bf16.mxu0 %v3215
      %3620 = vmatpush1.bf16.msra.mxu0 %v3214
      %3621 = vmatprep.subr.bf16.mxu0 %v3225
      %3622 = vmatpush1.bf16.msra.mxu0 %v3224
      %3623 = vmatprep.subr.bf16.mxu0 %v3235
      %3624 = vmatpush1.bf16.msra.mxu0 %v3234
      %3625 = vmatprep.subr.bf16.mxu0 %v3245
      %3626 = vmatpush1.bf16.msra.mxu0 %v3244
      %3627 = vmatprep.subr.bf16.mxu0 %v3255
      %3628 = vmatpush1.bf16.msra.mxu0 %v3254
      %3629 = vmatprep.subr.bf16.mxu0 %v3265
      %3630 = vmatpush1.bf16.msra.mxu0 %v3264
      %3631 = vmatprep.subr.bf16.mxu0 %v3275
      %3632 = vmatpush1.bf16.msra.mxu0 %v3274
      %3633 = vmatprep.subr.bf16.mxu0 %v3285
      %3634 = vmatpush1.bf16.msra.mxu0 %v3284
      %3635 = vmatprep.subr.bf16.mxu0 %v3295
      %3636 = vmatpush1.bf16.msra.mxu0 %v3294
      %3637 = vmatprep.subr.bf16.mxu0 %v3305
      %3638 = vmatpush1.bf16.msra.mxu0 %v3304
      %3639 = vmatprep.subr.bf16.mxu0 %v3315
      %3640 = vmatpush1.bf16.msra.mxu0 %v3314
      %3641 = vmatprep.subr.bf16.mxu0 %v3325
      %3642 = vmatpush1.bf16.msra.mxu0 %v3324
      %3643 = vmatprep.mubr.bf16.mxu0 %v2685
      %3644 = vmatmul.mubr.bf16.gmra.mrb[0].mxu0 %v2684
      %v3645 = vpop.f32.mrb[0].mxu0
      %v3646 = vadd.f32 0.0, %v3645
      %v3647 = vpop.f32.mrb[0].mxu0
      %v3648 = vadd.f32 0.0, %v3647
      %v3649 = vpop.f32.mrb[0].mxu0
      %v3650 = vpop.f32.mrb[0].mxu0
      %3651 = vdwg.mxu0
      %3652 = vmatprep.subr.bf16.mxu0 %v3177
      %3653 = vmatpush1.bf16.msra.mxu0 %v3176
      %3654 = vmatprep.subr.bf16.mxu0 %v3187
      %3655 = vmatpush1.bf16.msra.mxu0 %v3186
      %3656 = vmatprep.subr.bf16.mxu0 %v3197
      %3657 = vmatpush1.bf16.msra.mxu0 %v3196
      %3658 = vmatprep.subr.bf16.mxu0 %v3207
      %3659 = vmatpush1.bf16.msra.mxu0 %v3206
      %3660 = vmatprep.subr.bf16.mxu0 %v3217
      %3661 = vmatpush1.bf16.msra.mxu0 %v3216
      %3662 = vmatprep.subr.bf16.mxu0 %v3227
      %3663 = vmatpush1.bf16.msra.mxu0 %v3226
      %3664 = vmatprep.subr.bf16.mxu0 %v3237
      %3665 = vmatpush1.bf16.msra.mxu0 %v3236
      %3666 = vmatprep.subr.bf16.mxu0 %v3247
      %3667 = vmatpush1.bf16.msra.mxu0 %v3246
      %3668 = vmatprep.subr.bf16.mxu0 %v3257
      %3669 = vmatpush1.bf16.msra.mxu0 %v3256
      %3670 = vmatprep.subr.bf16.mxu0 %v3267
      %3671 = vmatpush1.bf16.msra.mxu0 %v3266
      %3672 = vmatprep.subr.bf16.mxu0 %v3277
      %3673 = vmatpush1.bf16.msra.mxu0 %v3276
      %3674 = vmatprep.subr.bf16.mxu0 %v3287
      %3675 = vmatpush1.bf16.msra.mxu0 %v3286
      %3676 = vmatprep.subr.bf16.mxu0 %v3297
      %3677 = vmatpush1.bf16.msra.mxu0 %v3296
      %3678 = vmatprep.subr.bf16.mxu0 %v3307
      %3679 = vmatpush1.bf16.msra.mxu0 %v3306
      %3680 = vmatprep.subr.bf16.mxu0 %v3317
      %3681 = vmatpush1.bf16.msra.mxu0 %v3316
      %3682 = vmatprep.subr.bf16.mxu0 %v3327
      %3683 = vmatpush1.bf16.msra.mxu0 %v3326
      %3684 = vmatprep.mubr.bf16.mxu0 %v2685
      %3685 = vmatmul.mubr.bf16.gmra.mrb[0].mxu0 %v2684
      %v3686 = vpop.f32.mrb[0].mxu0
      %v3687 = vadd.f32 0.0, %v3686
      %v3688 = vpop.f32.mrb[0].mxu0
      %v3689 = vadd.f32 0.0, %v3688
      %v3690 = vpop.f32.mrb[0].mxu0
      %v3691 = vpop.f32.mrb[0].mxu0
      %3692 = vdwg.mxu0
      %v3693 = vadd.f32 %v2352, %v3523
      %v3694 = vadd.f32 %v2354, %v3525
      %v3695 = vadd.f32 %v2393, %v3564
      %v3696 = vadd.f32 %v2395, %v3566
      %v3697 = vadd.f32 %v2434, %v3605
      %v3698 = vadd.f32 %v2436, %v3607
      %v3699 = vadd.f32 %v2475, %v3646
      %v3700 = vadd.f32 %v2477, %v3648
      %v3701 = vadd.f32 %v2516, %v3687
      %v3702 = vadd.f32 %v2518, %v3689
      %v3703 = vld [vmem:[%s1 + $0xf00] sm:$0xff]
      %v3704 = vld [vmem:[%s1 + $0xf08] sm:$0xff]
      %v3705 = vld [vmem:[%s1 + $0xf10] sm:$0xff]
      %v3706 = vld [vmem:[%s1 + $0xf18] sm:$0xff]
      %v3707 = vld [vmem:[%s1 + $0xf20] sm:$0xff]
      %v3708 = vld [vmem:[%s1 + $0xf28] sm:$0xff]
      %v3709 = vld [vmem:[%s1 + $0xf30] sm:$0xff]
      %v3710 = vld [vmem:[%s1 + $0xf38] sm:$0xff]
      %v3711 = vld [vmem:[%s1 + $0xf40] sm:$0xff]
      %v3712 = vld [vmem:[%s1 + $0xf48] sm:$0xff]
      %v3713 = vld [vmem:[%s1 + $0xf50] sm:$0xff]
      %v3714 = vld [vmem:[%s1 + $0xf58] sm:$0xff]
      %v3715 = vld [vmem:[%s1 + $0xf60] sm:$0xff]
      %v3716 = vld [vmem:[%s1 + $0xf68] sm:$0xff]
      %v3717 = vld [vmem:[%s1 + $0xf70] sm:$0xff]
      %v3718 = vld [vmem:[%s1 + $0xf78] sm:$0xff]
      %v3719 = vld [vmem:[%s1 + $0xf80] sm:$0xff]
      %v3720 = vld [vmem:[%s1 + $0xf88] sm:$0xff]
      %v3721 = vld [vmem:[%s1 + $0xf90] sm:$0xff]
      %v3722 = vld [vmem:[%s1 + $0xf98] sm:$0xff]
      %v3723 = vld [vmem:[%s1 + $0xfa0] sm:$0xff]
      %v3724 = vld [vmem:[%s1 + $0xfa8] sm:$0xff]
      %v3725 = vld [vmem:[%s1 + $0xfb0] sm:$0xff]
      %v3726 = vld [vmem:[%s1 + $0xfb8] sm:$0xff]
      %v3727 = vld [vmem:[%s1 + $0xfc0] sm:$0xff]
      %v3728 = vld [vmem:[%s1 + $0xfc8] sm:$0xff]
      %v3729 = vld [vmem:[%s1 + $0xfd0] sm:$0xff]
      %v3730 = vld [vmem:[%s1 + $0xfd8] sm:$0xff]
      %v3731 = vld [vmem:[%s1 + $0xfe0] sm:$0xff]
      %v3732 = vld [vmem:[%s1 + $0xfe8] sm:$0xff]
      %v3733 = vld [vmem:[%s1 + $0xff0] sm:$0xff]
      %v3734 = vld [vmem:[%s1 + $0xff8] sm:$0xff]
      %v3735 = vld [vmem:[%s1 + $0x1000] sm:$0xff]
      %v3736 = vld [vmem:[%s1 + $0x1008] sm:$0xff]
      %v3737 = vld [vmem:[%s1 + $0x1010] sm:$0xff]
      %v3738 = vld [vmem:[%s1 + $0x1018] sm:$0xff]
      %v3739 = vld [vmem:[%s1 + $0x1020] sm:$0xff]
      %v3740 = vld [vmem:[%s1 + $0x1028] sm:$0xff]
      %v3741 = vld [vmem:[%s1 + $0x1030] sm:$0xff]
      %v3742 = vld [vmem:[%s1 + $0x1038] sm:$0xff]
      %v3743 = vld [vmem:[%s1 + $0x1040] sm:$0xff]
      %v3744 = vld [vmem:[%s1 + $0x1048] sm:$0xff]
      %v3745 = vld [vmem:[%s1 + $0x1050] sm:$0xff]
      %v3746 = vld [vmem:[%s1 + $0x1058] sm:$0xff]
      %v3747 = vld [vmem:[%s1 + $0x1060] sm:$0xff]
      %v3748 = vld [vmem:[%s1 + $0x1068] sm:$0xff]
      %v3749 = vld [vmem:[%s1 + $0x1070] sm:$0xff]
      %v3750 = vld [vmem:[%s1 + $0x1078] sm:$0xff]
      %v3751 = vld [vmem:[%s1 + $0x1080] sm:$0xff]
      %v3752 = vld [vmem:[%s1 + $0x1088] sm:$0xff]
      %v3753 = vld [vmem:[%s1 + $0x1090] sm:$0xff]
      %v3754 = vld [vmem:[%s1 + $0x1098] sm:$0xff]
      %v3755 = vld [vmem:[%s1 + $0x10a0] sm:$0xff]
      %v3756 = vld [vmem:[%s1 + $0x10a8] sm:$0xff]
      %v3757 = vld [vmem:[%s1 + $0x10b0] sm:$0xff]
      %v3758 = vld [vmem:[%s1 + $0x10b8] sm:$0xff]
      %v3759 = vld [vmem:[%s1 + $0x10c0] sm:$0xff]
      %v3760 = vld [vmem:[%s1 + $0x10c8] sm:$0xff]
      %v3761 = vld [vmem:[%s1 + $0x10d0] sm:$0xff]
      %v3762 = vld [vmem:[%s1 + $0x10d8] sm:$0xff]
      %v3763 = vld [vmem:[%s1 + $0x10e0] sm:$0xff]
      %v3764 = vld [vmem:[%s1 + $0x10e8] sm:$0xff]
      %v3765 = vld [vmem:[%s1 + $0x10f0] sm:$0xff]
      %v3766 = vld [vmem:[%s1 + $0x10f8] sm:$0xff]
      %v3767 = vld [vmem:[%s1 + $0x1100] sm:$0xff]
      %v3768 = vld [vmem:[%s1 + $0x1108] sm:$0xff]
      %v3769 = vld [vmem:[%s1 + $0x1110] sm:$0xff]
      %v3770 = vld [vmem:[%s1 + $0x1118] sm:$0xff]
      %v3771 = vld [vmem:[%s1 + $0x1120] sm:$0xff]
      %v3772 = vld [vmem:[%s1 + $0x1128] sm:$0xff]
      %v3773 = vld [vmem:[%s1 + $0x1130] sm:$0xff]
      %v3774 = vld [vmem:[%s1 + $0x1138] sm:$0xff]
      %v3775 = vld [vmem:[%s1 + $0x1140] sm:$0xff]
      %v3776 = vld [vmem:[%s1 + $0x1148] sm:$0xff]
      %v3777 = vld [vmem:[%s1 + $0x1150] sm:$0xff]
      %v3778 = vld [vmem:[%s1 + $0x1158] sm:$0xff]
      %v3779 = vld [vmem:[%s1 + $0x1160] sm:$0xff]
      %v3780 = vld [vmem:[%s1 + $0x1168] sm:$0xff]
      %v3781 = vld [vmem:[%s1 + $0x1170] sm:$0xff]
      %v3782 = vld [vmem:[%s1 + $0x1178] sm:$0xff]
      %v3783 = vld [vmem:[%s1 + $0x1180] sm:$0xff]
      %v3784 = vld [vmem:[%s1 + $0x1188] sm:$0xff]
      %v3785 = vld [vmem:[%s1 + $0x1190] sm:$0xff]
      %v3786 = vld [vmem:[%s1 + $0x1198] sm:$0xff]
      %v3787 = vld [vmem:[%s1 + $0x11a0] sm:$0xff]
      %v3788 = vld [vmem:[%s1 + $0x11a8] sm:$0xff]
      %v3789 = vld [vmem:[%s1 + $0x11b0] sm:$0xff]
      %v3790 = vld [vmem:[%s1 + $0x11b8] sm:$0xff]
      %v3791 = vld [vmem:[%s1 + $0x11c0] sm:$0xff]
      %v3792 = vld [vmem:[%s1 + $0x11c8] sm:$0xff]
      %v3793 = vld [vmem:[%s1 + $0x11d0] sm:$0xff]
      %v3794 = vld [vmem:[%s1 + $0x11d8] sm:$0xff]
      %v3795 = vld [vmem:[%s1 + $0x11e0] sm:$0xff]
      %v3796 = vld [vmem:[%s1 + $0x11e8] sm:$0xff]
      %v3797 = vld [vmem:[%s1 + $0x11f0] sm:$0xff]
      %v3798 = vld [vmem:[%s1 + $0x11f8] sm:$0xff]
      %v3799 = vld [vmem:[%s1 + $0x1200] sm:$0xff]
      %v3800 = vld [vmem:[%s1 + $0x1208] sm:$0xff]
      %v3801 = vld [vmem:[%s1 + $0x1210] sm:$0xff]
      %v3802 = vld [vmem:[%s1 + $0x1218] sm:$0xff]
      %v3803 = vld [vmem:[%s1 + $0x1220] sm:$0xff]
      %v3804 = vld [vmem:[%s1 + $0x1228] sm:$0xff]
      %v3805 = vld [vmem:[%s1 + $0x1230] sm:$0xff]
      %v3806 = vld [vmem:[%s1 + $0x1238] sm:$0xff]
      %v3807 = vld [vmem:[%s1 + $0x1240] sm:$0xff]
      %v3808 = vld [vmem:[%s1 + $0x1248] sm:$0xff]
      %v3809 = vld [vmem:[%s1 + $0x1250] sm:$0xff]
      %v3810 = vld [vmem:[%s1 + $0x1258] sm:$0xff]
      %v3811 = vld [vmem:[%s1 + $0x1260] sm:$0xff]
      %v3812 = vld [vmem:[%s1 + $0x1268] sm:$0xff]
      %v3813 = vld [vmem:[%s1 + $0x1270] sm:$0xff]
      %v3814 = vld [vmem:[%s1 + $0x1278] sm:$0xff]
      %v3815 = vld [vmem:[%s1 + $0x1280] sm:$0xff]
      %v3816 = vld [vmem:[%s1 + $0x1288] sm:$0xff]
      %v3817 = vld [vmem:[%s1 + $0x1290] sm:$0xff]
      %v3818 = vld [vmem:[%s1 + $0x1298] sm:$0xff]
      %v3819 = vld [vmem:[%s1 + $0x12a0] sm:$0xff]
      %v3820 = vld [vmem:[%s1 + $0x12a8] sm:$0xff]
      %v3821 = vld [vmem:[%s1 + $0x12b0] sm:$0xff]
      %v3822 = vld [vmem:[%s1 + $0x12b8] sm:$0xff]
      %v3823 = vld [vmem:[%s1 + $0x12c0] sm:$0xff]
      %v3824 = vld [vmem:[%s1 + $0x12c8] sm:$0xff]
      %v3825 = vld [vmem:[%s1 + $0x12d0] sm:$0xff]
      %v3826 = vld [vmem:[%s1 + $0x12d8] sm:$0xff]
      %v3827 = vld [vmem:[%s1 + $0x12e0] sm:$0xff]
      %v3828 = vld [vmem:[%s1 + $0x12e8] sm:$0xff]
      %v3829 = vld [vmem:[%s1 + $0x12f0] sm:$0xff]
      %v3830 = vld [vmem:[%s1 + $0x12f8] sm:$0xff]
      %v3831 = vld [vmem:[%s1 + $0x1300] sm:$0xff]
      %v3832 = vld [vmem:[%s1 + $0x1308] sm:$0xff]
      %v3833 = vld [vmem:[%s1 + $0x1310] sm:$0xff]
      %v3834 = vld [vmem:[%s1 + $0x1318] sm:$0xff]
      %v3835 = vld [vmem:[%s1 + $0x1320] sm:$0xff]
      %v3836 = vld [vmem:[%s1 + $0x1328] sm:$0xff]
      %v3837 = vld [vmem:[%s1 + $0x1330] sm:$0xff]
      %v3838 = vld [vmem:[%s1 + $0x1338] sm:$0xff]
      %v3839 = vld [vmem:[%s1 + $0x1340] sm:$0xff]
      %v3840 = vld [vmem:[%s1 + $0x1348] sm:$0xff]
      %v3841 = vld [vmem:[%s1 + $0x1350] sm:$0xff]
      %v3842 = vld [vmem:[%s1 + $0x1358] sm:$0xff]
      %v3843 = vld [vmem:[%s1 + $0x1360] sm:$0xff]
      %v3844 = vld [vmem:[%s1 + $0x1368] sm:$0xff]
      %v3845 = vld [vmem:[%s1 + $0x1370] sm:$0xff]
      %v3846 = vld [vmem:[%s1 + $0x1378] sm:$0xff]
      %v3847 = vld [vmem:[%s1 + $0x1380] sm:$0xff]
      %v3848 = vld [vmem:[%s1 + $0x1388] sm:$0xff]
      %v3849 = vld [vmem:[%s1 + $0x1390] sm:$0xff]
      %v3850 = vld [vmem:[%s1 + $0x1398] sm:$0xff]
      %v3851 = vld [vmem:[%s1 + $0x13a0] sm:$0xff]
      %v3852 = vld [vmem:[%s1 + $0x13a8] sm:$0xff]
      %v3853 = vld [vmem:[%s1 + $0x13b0] sm:$0xff]
      %v3854 = vld [vmem:[%s1 + $0x13b8] sm:$0xff]
      %v3855 = vld [vmem:[%s1 + $0x13c0] sm:$0xff]
      %v3856 = vld [vmem:[%s1 + $0x13c8] sm:$0xff]
      %v3857 = vld [vmem:[%s1 + $0x13d0] sm:$0xff]
      %v3858 = vld [vmem:[%s1 + $0x13d8] sm:$0xff]
      %v3859 = vld [vmem:[%s1 + $0x13e0] sm:$0xff]
      %v3860 = vld [vmem:[%s1 + $0x13e8] sm:$0xff]
      %v3861 = vld [vmem:[%s1 + $0x13f0] sm:$0xff]
      %v3862 = vld [vmem:[%s1 + $0x13f8] sm:$0xff]
      %v3863 = vrot.slane %v497, 1
      %v3864 = vrot.slane %v499, 2
      %v3865 = vor.u32 %v3863, %v3864
      %v3866 = vrot.slane %v504, 1
      %v3867 = vrot.slane %v506, 2
      %v3868 = vor.u32 %v3866, %v3867
      %v4031 = vunpack.c.l.b16 %v3703
      %v4032 = vunpack.c.h.b16 %v3703
      %v4033 = vunpack.c.l.b16 %v3704
      %v4034 = vunpack.c.h.b16 %v3704
      %v4035 = vunpack.c.l.b16 %v3705
      %v4036 = vunpack.c.h.b16 %v3705
      %v4037 = vunpack.c.l.b16 %v3706
      %v4038 = vunpack.c.h.b16 %v3706
      %v4039 = vunpack.c.l.b16 %v3707
      %v4040 = vunpack.c.h.b16 %v3707
      %v4041 = vunpack.c.l.b16 %v3708
      %v4042 = vunpack.c.h.b16 %v3708
      %v4043 = vunpack.c.l.b16 %v3709
      %v4044 = vunpack.c.h.b16 %v3709
      %v4045 = vunpack.c.l.b16 %v3710
      %v4046 = vunpack.c.h.b16 %v3710
      %v4047 = vunpack.c.l.b16 %v3711
      %v4048 = vunpack.c.h.b16 %v3711
      %v4049 = vunpack.c.l.b16 %v3712
      %v4050 = vunpack.c.h.b16 %v3712
      %v4051 = vunpack.c.l.b16 %v3713
      %v4052 = vunpack.c.h.b16 %v3713
      %v4053 = vunpack.c.l.b16 %v3714
      %v4054 = vunpack.c.h.b16 %v3714
      %v4055 = vunpack.c.l.b16 %v3715
      %v4056 = vunpack.c.h.b16 %v3715
      %v4057 = vunpack.c.l.b16 %v3716
      %v4058 = vunpack.c.h.b16 %v3716
      %v4059 = vunpack.c.l.b16 %v3717
      %v4060 = vunpack.c.h.b16 %v3717
      %v4061 = vunpack.c.l.b16 %v3718
      %v4062 = vunpack.c.h.b16 %v3718
      %v4063 = vunpack.c.l.b16 %v3719
      %v4064 = vunpack.c.h.b16 %v3719
      %v4065 = vunpack.c.l.b16 %v3720
      %v4066 = vunpack.c.h.b16 %v3720
      %v4067 = vunpack.c.l.b16 %v3721
      %v4068 = vunpack.c.h.b16 %v3721
      %v4069 = vunpack.c.l.b16 %v3722
      %v4070 = vunpack.c.h.b16 %v3722
      %v4071 = vunpack.c.l.b16 %v3723
      %v4072 = vunpack.c.h.b16 %v3723
      %v4073 = vunpack.c.l.b16 %v3724
      %v4074 = vunpack.c.h.b16 %v3724
      %v4075 = vunpack.c.l.b16 %v3725
      %v4076 = vunpack.c.h.b16 %v3725
      %v4077 = vunpack.c.l.b16 %v3726
      %v4078 = vunpack.c.h.b16 %v3726
      %v4079 = vunpack.c.l.b16 %v3727
      %v4080 = vunpack.c.h.b16 %v3727
      %v4081 = vunpack.c.l.b16 %v3728
      %v4082 = vunpack.c.h.b16 %v3728
      %v4083 = vunpack.c.l.b16 %v3729
      %v4084 = vunpack.c.h.b16 %v3729
      %v4085 = vunpack.c.l.b16 %v3730
      %v4086 = vunpack.c.h.b16 %v3730
      %v4087 = vunpack.c.l.b16 %v3731
      %v4088 = vunpack.c.h.b16 %v3731
      %v4089 = vunpack.c.l.b16 %v3732
      %v4090 = vunpack.c.h.b16 %v3732
      %v4091 = vunpack.c.l.b16 %v3733
      %v4092 = vunpack.c.h.b16 %v3733
      %v4093 = vunpack.c.l.b16 %v3734
      %v4094 = vunpack.c.h.b16 %v3734
      %v4095 = vunpack.c.l.b16 %v3735
      %v4096 = vunpack.c.h.b16 %v3735
      %v4097 = vunpack.c.l.b16 %v3736
      %v4098 = vunpack.c.h.b16 %v3736
      %v4099 = vunpack.c.l.b16 %v3737
      %v4100 = vunpack.c.h.b16 %v3737
      %v4101 = vunpack.c.l.b16 %v3738
      %v4102 = vunpack.c.h.b16 %v3738
      %v4103 = vunpack.c.l.b16 %v3739
      %v4104 = vunpack.c.h.b16 %v3739
      %v4105 = vunpack.c.l.b16 %v3740
      %v4106 = vunpack.c.h.b16 %v3740
      %v4107 = vunpack.c.l.b16 %v3741
      %v4108 = vunpack.c.h.b16 %v3741
      %v4109 = vunpack.c.l.b16 %v3742
      %v4110 = vunpack.c.h.b16 %v3742
      %v4111 = vunpack.c.l.b16 %v3743
      %v4112 = vunpack.c.h.b16 %v3743
      %v4113 = vunpack.c.l.b16 %v3744
      %v4114 = vunpack.c.h.b16 %v3744
      %v4115 = vunpack.c.l.b16 %v3745
      %v4116 = vunpack.c.h.b16 %v3745
      %v4117 = vunpack.c.l.b16 %v3746
      %v4118 = vunpack.c.h.b16 %v3746
      %v4119 = vunpack.c.l.b16 %v3747
      %v4120 = vunpack.c.h.b16 %v3747
      %v4121 = vunpack.c.l.b16 %v3748
      %v4122 = vunpack.c.h.b16 %v3748
      %v4123 = vunpack.c.l.b16 %v3749
      %v4124 = vunpack.c.h.b16 %v3749
      %v4125 = vunpack.c.l.b16 %v3750
      %v4126 = vunpack.c.h.b16 %v3750
      %v4127 = vunpack.c.l.b16 %v3751
      %v4128 = vunpack.c.h.b16 %v3751
      %v4129 = vunpack.c.l.b16 %v3752
      %v4130 = vunpack.c.h.b16 %v3752
      %v4131 = vunpack.c.l.b16 %v3753
      %v4132 = vunpack.c.h.b16 %v3753
      %v4133 = vunpack.c.l.b16 %v3754
      %v4134 = vunpack.c.h.b16 %v3754
      %v4135 = vunpack.c.l.b16 %v3755
      %v4136 = vunpack.c.h.b16 %v3755
      %v4137 = vunpack.c.l.b16 %v3756
      %v4138 = vunpack.c.h.b16 %v3756
      %v4139 = vunpack.c.l.b16 %v3757
      %v4140 = vunpack.c.h.b16 %v3757
      %v4141 = vunpack.c.l.b16 %v3758
      %v4142 = vunpack.c.h.b16 %v3758
      %v4143 = vunpack.c.l.b16 %v3759
      %v4144 = vunpack.c.h.b16 %v3759
      %v4145 = vunpack.c.l.b16 %v3760
      %v4146 = vunpack.c.h.b16 %v3760
      %v4147 = vunpack.c.l.b16 %v3761
      %v4148 = vunpack.c.h.b16 %v3761
      %v4149 = vunpack.c.l.b16 %v3762
      %v4150 = vunpack.c.h.b16 %v3762
      %v4151 = vunpack.c.l.b16 %v3763
      %v4152 = vunpack.c.h.b16 %v3763
      %v4153 = vunpack.c.l.b16 %v3764
      %v4154 = vunpack.c.h.b16 %v3764
      %v4155 = vunpack.c.l.b16 %v3765
      %v4156 = vunpack.c.h.b16 %v3765
      %v4157 = vunpack.c.l.b16 %v3766
      %v4158 = vunpack.c.h.b16 %v3766
      %v4159 = vunpack.c.l.b16 %v3767
      %v4160 = vunpack.c.h.b16 %v3767
      %v4161 = vunpack.c.l.b16 %v3768
      %v4162 = vunpack.c.h.b16 %v3768
      %v4163 = vunpack.c.l.b16 %v3769
      %v4164 = vunpack.c.h.b16 %v3769
      %v4165 = vunpack.c.l.b16 %v3770
      %v4166 = vunpack.c.h.b16 %v3770
      %v4167 = vunpack.c.l.b16 %v3771
      %v4168 = vunpack.c.h.b16 %v3771
      %v4169 = vunpack.c.l.b16 %v3772
      %v4170 = vunpack.c.h.b16 %v3772
      %v4171 = vunpack.c.l.b16 %v3773
      %v4172 = vunpack.c.h.b16 %v3773
      %v4173 = vunpack.c.l.b16 %v3774
      %v4174 = vunpack.c.h.b16 %v3774
      %v4175 = vunpack.c.l.b16 %v3775
      %v4176 = vunpack.c.h.b16 %v3775
      %v4177 = vunpack.c.l.b16 %v3776
      %v4178 = vunpack.c.h.b16 %v3776
      %v4179 = vunpack.c.l.b16 %v3777
      %v4180 = vunpack.c.h.b16 %v3777
      %v4181 = vunpack.c.l.b16 %v3778
      %v4182 = vunpack.c.h.b16 %v3778
      %v4183 = vunpack.c.l.b16 %v3779
      %v4184 = vunpack.c.h.b16 %v3779
      %v4185 = vunpack.c.l.b16 %v3780
      %v4186 = vunpack.c.h.b16 %v3780
      %v4187 = vunpack.c.l.b16 %v3781
      %v4188 = vunpack.c.h.b16 %v3781
      %v4189 = vunpack.c.l.b16 %v3782
      %v4190 = vunpack.c.h.b16 %v3782
      %v4191 = vunpack.c.l.b16 %v3783
      %v4192 = vunpack.c.h.b16 %v3783
      %v4193 = vunpack.c.l.b16 %v3784
      %v4194 = vunpack.c.h.b16 %v3784
      %v4195 = vunpack.c.l.b16 %v3785
      %v4196 = vunpack.c.h.b16 %v3785
      %v4197 = vunpack.c.l.b16 %v3786
      %v4198 = vunpack.c.h.b16 %v3786
      %v4199 = vunpack.c.l.b16 %v3787
      %v4200 = vunpack.c.h.b16 %v3787
      %v4201 = vunpack.c.l.b16 %v3788
      %v4202 = vunpack.c.h.b16 %v3788
      %v4203 = vunpack.c.l.b16 %v3789
      %v4204 = vunpack.c.h.b16 %v3789
      %v4205 = vunpack.c.l.b16 %v3790
      %v4206 = vunpack.c.h.b16 %v3790
      %v4207 = vunpack.c.l.b16 %v3791
      %v4208 = vunpack.c.h.b16 %v3791
      %v4209 = vunpack.c.l.b16 %v3792
      %v4210 = vunpack.c.h.b16 %v3792
      %v4211 = vunpack.c.l.b16 %v3793
      %v4212 = vunpack.c.h.b16 %v3793
      %v4213 = vunpack.c.l.b16 %v3794
      %v4214 = vunpack.c.h.b16 %v3794
      %v4215 = vunpack.c.l.b16 %v3795
      %v4216 = vunpack.c.h.b16 %v3795
      %v4217 = vunpack.c.l.b16 %v3796
      %v4218 = vunpack.c.h.b16 %v3796
      %v4219 = vunpack.c.l.b16 %v3797
      %v4220 = vunpack.c.h.b16 %v3797
      %v4221 = vunpack.c.l.b16 %v3798
      %v4222 = vunpack.c.h.b16 %v3798
      %v4223 = vunpack.c.l.b16 %v3799
      %v4224 = vunpack.c.h.b16 %v3799
      %v4225 = vunpack.c.l.b16 %v3800
      %v4226 = vunpack.c.h.b16 %v3800
      %v4227 = vunpack.c.l.b16 %v3801
      %v4228 = vunpack.c.h.b16 %v3801
      %v4229 = vunpack.c.l.b16 %v3802
      %v4230 = vunpack.c.h.b16 %v3802
      %v4231 = vunpack.c.l.b16 %v3803
      %v4232 = vunpack.c.h.b16 %v3803
      %v4233 = vunpack.c.l.b16 %v3804
      %v4234 = vunpack.c.h.b16 %v3804
      %v4235 = vunpack.c.l.b16 %v3805
      %v4236 = vunpack.c.h.b16 %v3805
      %v4237 = vunpack.c.l.b16 %v3806
      %v4238 = vunpack.c.h.b16 %v3806
      %v4239 = vunpack.c.l.b16 %v3807
      %v4240 = vunpack.c.h.b16 %v3807
      %v4241 = vunpack.c.l.b16 %v3808
      %v4242 = vunpack.c.h.b16 %v3808
      %v4243 = vunpack.c.l.b16 %v3809
      %v4244 = vunpack.c.h.b16 %v3809
      %v4245 = vunpack.c.l.b16 %v3810
      %v4246 = vunpack.c.h.b16 %v3810
      %v4247 = vunpack.c.l.b16 %v3811
      %v4248 = vunpack.c.h.b16 %v3811
      %v4249 = vunpack.c.l.b16 %v3812
      %v4250 = vunpack.c.h.b16 %v3812
      %v4251 = vunpack.c.l.b16 %v3813
      %v4252 = vunpack.c.h.b16 %v3813
      %v4253 = vunpack.c.l.b16 %v3814
      %v4254 = vunpack.c.h.b16 %v3814
      %v4255 = vunpack.c.l.b16 %v3815
      %v4256 = vunpack.c.h.b16 %v3815
      %v4257 = vunpack.c.l.b16 %v3816
      %v4258 = vunpack.c.h.b16 %v3816
      %v4259 = vunpack.c.l.b16 %v3817
      %v4260 = vunpack.c.h.b16 %v3817
      %v4261 = vunpack.c.l.b16 %v3818
      %v4262 = vunpack.c.h.b16 %v3818
      %v4263 = vunpack.c.l.b16 %v3819
      %v4264 = vunpack.c.h.b16 %v3819
      %v4265 = vunpack.c.l.b16 %v3820
      %v4266 = vunpack.c.h.b16 %v3820
      %v4267 = vunpack.c.l.b16 %v3821
      %v4268 = vunpack.c.h.b16 %v3821
      %v4269 = vunpack.c.l.b16 %v3822
      %v4270 = vunpack.c.h.b16 %v3822
      %v4271 = vunpack.c.l.b16 %v3823
      %v4272 = vunpack.c.h.b16 %v3823
      %v4273 = vunpack.c.l.b16 %v3824
      %v4274 = vunpack.c.h.b16 %v3824
      %v4275 = vunpack.c.l.b16 %v3825
      %v4276 = vunpack.c.h.b16 %v3825
      %v4277 = vunpack.c.l.b16 %v3826
      %v4278 = vunpack.c.h.b16 %v3826
      %v4279 = vunpack.c.l.b16 %v3827
      %v4280 = vunpack.c.h.b16 %v3827
      %v4281 = vunpack.c.l.b16 %v3828
      %v4282 = vunpack.c.h.b16 %v3828
      %v4283 = vunpack.c.l.b16 %v3829
      %v4284 = vunpack.c.h.b16 %v3829
      %v4285 = vunpack.c.l.b16 %v3830
      %v4286 = vunpack.c.h.b16 %v3830
      %v4287 = vunpack.c.l.b16 %v3831
      %v4288 = vunpack.c.h.b16 %v3831
      %v4289 = vunpack.c.l.b16 %v3832
      %v4290 = vunpack.c.h.b16 %v3832
      %v4291 = vunpack.c.l.b16 %v3833
      %v4292 = vunpack.c.h.b16 %v3833
      %v4293 = vunpack.c.l.b16 %v3834
      %v4294 = vunpack.c.h.b16 %v3834
      %v4295 = vunpack.c.l.b16 %v3835
      %v4296 = vunpack.c.h.b16 %v3835
      %v4297 = vunpack.c.l.b16 %v3836
      %v4298 = vunpack.c.h.b16 %v3836
      %v4299 = vunpack.c.l.b16 %v3837
      %v4300 = vunpack.c.h.b16 %v3837
      %v4301 = vunpack.c.l.b16 %v3838
      %v4302 = vunpack.c.h.b16 %v3838
      %v4303 = vunpack.c.l.b16 %v3839
      %v4304 = vunpack.c.h.b16 %v3839
      %v4305 = vunpack.c.l.b16 %v3840
      %v4306 = vunpack.c.h.b16 %v3840
      %v4307 = vunpack.c.l.b16 %v3841
      %v4308 = vunpack.c.h.b16 %v3841
      %v4309 = vunpack.c.l.b16 %v3842
      %v4310 = vunpack.c.h.b16 %v3842
      %v4311 = vunpack.c.l.b16 %v3843
      %v4312 = vunpack.c.h.b16 %v3843
      %v4313 = vunpack.c.l.b16 %v3844
      %v4314 = vunpack.c.h.b16 %v3844
      %v4315 = vunpack.c.l.b16 %v3845
      %v4316 = vunpack.c.h.b16 %v3845
      %v4317 = vunpack.c.l.b16 %v3846
      %v4318 = vunpack.c.h.b16 %v3846
      %v4319 = vunpack.c.l.b16 %v3847
      %v4320 = vunpack.c.h.b16 %v3847
      %v4321 = vunpack.c.l.b16 %v3848
      %v4322 = vunpack.c.h.b16 %v3848
      %v4323 = vunpack.c.l.b16 %v3849
      %v4324 = vunpack.c.h.b16 %v3849
      %v4325 = vunpack.c.l.b16 %v3850
      %v4326 = vunpack.c.h.b16 %v3850
      %v4327 = vunpack.c.l.b16 %v3851
      %v4328 = vunpack.c.h.b16 %v3851
      %v4329 = vunpack.c.l.b16 %v3852
      %v4330 = vunpack.c.h.b16 %v3852
      %v4331 = vunpack.c.l.b16 %v3853
      %v4332 = vunpack.c.h.b16 %v3853
      %v4333 = vunpack.c.l.b16 %v3854
      %v4334 = vunpack.c.h.b16 %v3854
      %v4335 = vunpack.c.l.b16 %v3855
      %v4336 = vunpack.c.h.b16 %v3855
      %v4337 = vunpack.c.l.b16 %v3856
      %v4338 = vunpack.c.h.b16 %v3856
      %v4339 = vunpack.c.l.b16 %v3857
      %v4340 = vunpack.c.h.b16 %v3857
      %v4341 = vunpack.c.l.b16 %v3858
      %v4342 = vunpack.c.h.b16 %v3858
      %v4343 = vunpack.c.l.b16 %v3859
      %v4344 = vunpack.c.h.b16 %v3859
      %v4345 = vunpack.c.l.b16 %v3860
      %v4346 = vunpack.c.h.b16 %v3860
      %v4347 = vunpack.c.l.b16 %v3861
      %v4348 = vunpack.c.h.b16 %v3861
      %v4349 = vunpack.c.l.b16 %v3862
      %v4350 = vunpack.c.h.b16 %v3862
      %v4351 = vpack.c.b16 %v4041, %v4031
      %v4352 = vpack.c.b16 %v4042, %v4032
      %v4353 = vpack.c.b16 %v4043, %v4033
      %v4354 = vpack.c.b16 %v4044, %v4034
      %v4355 = vpack.c.b16 %v4045, %v4035
      %v4356 = vpack.c.b16 %v4046, %v4036
      %v4357 = vpack.c.b16 %v4047, %v4037
      %v4358 = vpack.c.b16 %v4048, %v4038
      %v4359 = vpack.c.b16 %v4049, %v4039
      %v4360 = vpack.c.b16 %v4050, %v4040
      %v4361 = vpack.c.b16 %v4061, %v4051
      %v4362 = vpack.c.b16 %v4062, %v4052
      %v4363 = vpack.c.b16 %v4063, %v4053
      %v4364 = vpack.c.b16 %v4064, %v4054
      %v4365 = vpack.c.b16 %v4065, %v4055
      %v4366 = vpack.c.b16 %v4066, %v4056
      %v4367 = vpack.c.b16 %v4067, %v4057
      %v4368 = vpack.c.b16 %v4068, %v4058
      %v4369 = vpack.c.b16 %v4069, %v4059
      %v4370 = vpack.c.b16 %v4070, %v4060
      %v4371 = vpack.c.b16 %v4081, %v4071
      %v4372 = vpack.c.b16 %v4082, %v4072
      %v4373 = vpack.c.b16 %v4083, %v4073
      %v4374 = vpack.c.b16 %v4084, %v4074
      %v4375 = vpack.c.b16 %v4085, %v4075
      %v4376 = vpack.c.b16 %v4086, %v4076
      %v4377 = vpack.c.b16 %v4087, %v4077
      %v4378 = vpack.c.b16 %v4088, %v4078
      %v4379 = vpack.c.b16 %v4089, %v4079
      %v4380 = vpack.c.b16 %v4090, %v4080
      %v4381 = vpack.c.b16 %v4101, %v4091
      %v4382 = vpack.c.b16 %v4102, %v4092
      %v4383 = vpack.c.b16 %v4103, %v4093
      %v4384 = vpack.c.b16 %v4104, %v4094
      %v4385 = vpack.c.b16 %v4105, %v4095
      %v4386 = vpack.c.b16 %v4106, %v4096
      %v4387 = vpack.c.b16 %v4107, %v4097
      %v4388 = vpack.c.b16 %v4108, %v4098
      %v4389 = vpack.c.b16 %v4109, %v4099
      %v4390 = vpack.c.b16 %v4110, %v4100
      %v4391 = vpack.c.b16 %v4121, %v4111
      %v4392 = vpack.c.b16 %v4122, %v4112
      %v4393 = vpack.c.b16 %v4123, %v4113
      %v4394 = vpack.c.b16 %v4124, %v4114
      %v4395 = vpack.c.b16 %v4125, %v4115
      %v4396 = vpack.c.b16 %v4126, %v4116
      %v4397 = vpack.c.b16 %v4127, %v4117
      %v4398 = vpack.c.b16 %v4128, %v4118
      %v4399 = vpack.c.b16 %v4129, %v4119
      %v4400 = vpack.c.b16 %v4130, %v4120
      %v4401 = vpack.c.b16 %v4141, %v4131
      %v4402 = vpack.c.b16 %v4142, %v4132
      %v4403 = vpack.c.b16 %v4143, %v4133
      %v4404 = vpack.c.b16 %v4144, %v4134
      %v4405 = vpack.c.b16 %v4145, %v4135
      %v4406 = vpack.c.b16 %v4146, %v4136
      %v4407 = vpack.c.b16 %v4147, %v4137
      %v4408 = vpack.c.b16 %v4148, %v4138
      %v4409 = vpack.c.b16 %v4149, %v4139
      %v4410 = vpack.c.b16 %v4150, %v4140
      %v4411 = vpack.c.b16 %v4161, %v4151
      %v4412 = vpack.c.b16 %v4162, %v4152
      %v4413 = vpack.c.b16 %v4163, %v4153
      %v4414 = vpack.c.b16 %v4164, %v4154
      %v4415 = vpack.c.b16 %v4165, %v4155
      %v4416 = vpack.c.b16 %v4166, %v4156
      %v4417 = vpack.c.b16 %v4167, %v4157
      %v4418 = vpack.c.b16 %v4168, %v4158
      %v4419 = vpack.c.b16 %v4169, %v4159
      %v4420 = vpack.c.b16 %v4170, %v4160
      %v4421 = vpack.c.b16 %v4181, %v4171
      %v4422 = vpack.c.b16 %v4182, %v4172
      %v4423 = vpack.c.b16 %v4183, %v4173
      %v4424 = vpack.c.b16 %v4184, %v4174
      %v4425 = vpack.c.b16 %v4185, %v4175
      %v4426 = vpack.c.b16 %v4186, %v4176
      %v4427 = vpack.c.b16 %v4187, %v4177
      %v4428 = vpack.c.b16 %v4188, %v4178
      %v4429 = vpack.c.b16 %v4189, %v4179
      %v4430 = vpack.c.b16 %v4190, %v4180
      %v4431 = vpack.c.b16 %v4201, %v4191
      %v4432 = vpack.c.b16 %v4202, %v4192
      %v4433 = vpack.c.b16 %v4203, %v4193
      %v4434 = vpack.c.b16 %v4204, %v4194
      %v4435 = vpack.c.b16 %v4205, %v4195
      %v4436 = vpack.c.b16 %v4206, %v4196
      %v4437 = vpack.c.b16 %v4207, %v4197
      %v4438 = vpack.c.b16 %v4208, %v4198
      %v4439 = vpack.c.b16 %v4209, %v4199
      %v4440 = vpack.c.b16 %v4210, %v4200
      %v4441 = vpack.c.b16 %v4221, %v4211
      %v4442 = vpack.c.b16 %v4222, %v4212
      %v4443 = vpack.c.b16 %v4223, %v4213
      %v4444 = vpack.c.b16 %v4224, %v4214
      %v4445 = vpack.c.b16 %v4225, %v4215
      %v4446 = vpack.c.b16 %v4226, %v4216
      %v4447 = vpack.c.b16 %v4227, %v4217
      %v4448 = vpack.c.b16 %v4228, %v4218
      %v4449 = vpack.c.b16 %v4229, %v4219
      %v4450 = vpack.c.b16 %v4230, %v4220
      %v4451 = vpack.c.b16 %v4241, %v4231
      %v4452 = vpack.c.b16 %v4242, %v4232
      %v4453 = vpack.c.b16 %v4243, %v4233
      %v4454 = vpack.c.b16 %v4244, %v4234
      %v4455 = vpack.c.b16 %v4245, %v4235
      %v4456 = vpack.c.b16 %v4246, %v4236
      %v4457 = vpack.c.b16 %v4247, %v4237
      %v4458 = vpack.c.b16 %v4248, %v4238
      %v4459 = vpack.c.b16 %v4249, %v4239
      %v4460 = vpack.c.b16 %v4250, %v4240
      %v4461 = vpack.c.b16 %v4261, %v4251
      %v4462 = vpack.c.b16 %v4262, %v4252
      %v4463 = vpack.c.b16 %v4263, %v4253
      %v4464 = vpack.c.b16 %v4264, %v4254
      %v4465 = vpack.c.b16 %v4265, %v4255
      %v4466 = vpack.c.b16 %v4266, %v4256
      %v4467 = vpack.c.b16 %v4267, %v4257
      %v4468 = vpack.c.b16 %v4268, %v4258
      %v4469 = vpack.c.b16 %v4269, %v4259
      %v4470 = vpack.c.b16 %v4270, %v4260
      %v4471 = vpack.c.b16 %v4281, %v4271
      %v4472 = vpack.c.b16 %v4282, %v4272
      %v4473 = vpack.c.b16 %v4283, %v4273
      %v4474 = vpack.c.b16 %v4284, %v4274
      %v4475 = vpack.c.b16 %v4285, %v4275
      %v4476 = vpack.c.b16 %v4286, %v4276
      %v4477 = vpack.c.b16 %v4287, %v4277
      %v4478 = vpack.c.b16 %v4288, %v4278
      %v4479 = vpack.c.b16 %v4289, %v4279
      %v4480 = vpack.c.b16 %v4290, %v4280
      %v4481 = vpack.c.b16 %v4301, %v4291
      %v4482 = vpack.c.b16 %v4302, %v4292
      %v4483 = vpack.c.b16 %v4303, %v4293
      %v4484 = vpack.c.b16 %v4304, %v4294
      %v4485 = vpack.c.b16 %v4305, %v4295
      %v4486 = vpack.c.b16 %v4306, %v4296
      %v4487 = vpack.c.b16 %v4307, %v4297
      %v4488 = vpack.c.b16 %v4308, %v4298
      %v4489 = vpack.c.b16 %v4309, %v4299
      %v4490 = vpack.c.b16 %v4310, %v4300
      %v4491 = vpack.c.b16 %v4321, %v4311
      %v4492 = vpack.c.b16 %v4322, %v4312
      %v4493 = vpack.c.b16 %v4323, %v4313
      %v4494 = vpack.c.b16 %v4324, %v4314
      %v4495 = vpack.c.b16 %v4325, %v4315
      %v4496 = vpack.c.b16 %v4326, %v4316
      %v4497 = vpack.c.b16 %v4327, %v4317
      %v4498 = vpack.c.b16 %v4328, %v4318
      %v4499 = vpack.c.b16 %v4329, %v4319
      %v4500 = vpack.c.b16 %v4330, %v4320
      %v4501 = vpack.c.b16 %v4341, %v4331
      %v4502 = vpack.c.b16 %v4342, %v4332
      %v4503 = vpack.c.b16 %v4343, %v4333
      %v4504 = vpack.c.b16 %v4344, %v4334
      %v4505 = vpack.c.b16 %v4345, %v4335
      %v4506 = vpack.c.b16 %v4346, %v4336
      %v4507 = vpack.c.b16 %v4347, %v4337
      %v4508 = vpack.c.b16 %v4348, %v4338
      %v4509 = vpack.c.b16 %v4349, %v4339
      %v4510 = vpack.c.b16 %v4350, %v4340
      %4671 = vmatprep.subr.bf16.mxu0 %v4352
      %4672 = vmatpush1.bf16.msra.mxu0 %v4351
      %4673 = vmatprep.subr.bf16.mxu0 %v4362
      %4674 = vmatpush1.bf16.msra.mxu0 %v4361
      %4675 = vmatprep.subr.bf16.mxu0 %v4372
      %4676 = vmatpush1.bf16.msra.mxu0 %v4371
      %4677 = vmatprep.subr.bf16.mxu0 %v4382
      %4678 = vmatpush1.bf16.msra.mxu0 %v4381
      %4679 = vmatprep.subr.bf16.mxu0 %v4392
      %4680 = vmatpush1.bf16.msra.mxu0 %v4391
      %4681 = vmatprep.subr.bf16.mxu0 %v4402
      %4682 = vmatpush1.bf16.msra.mxu0 %v4401
      %4683 = vmatprep.subr.bf16.mxu0 %v4412
      %4684 = vmatpush1.bf16.msra.mxu0 %v4411
      %4685 = vmatprep.subr.bf16.mxu0 %v4422
      %4686 = vmatpush1.bf16.msra.mxu0 %v4421
      %4687 = vmatprep.subr.bf16.mxu0 %v4432
      %4688 = vmatpush1.bf16.msra.mxu0 %v4431
      %4689 = vmatprep.subr.bf16.mxu0 %v4442
      %4690 = vmatpush1.bf16.msra.mxu0 %v4441
      %4691 = vmatprep.subr.bf16.mxu0 %v4452
      %4692 = vmatpush1.bf16.msra.mxu0 %v4451
      %4693 = vmatprep.subr.bf16.mxu0 %v4462
      %4694 = vmatpush1.bf16.msra.mxu0 %v4461
      %4695 = vmatprep.subr.bf16.mxu0 %v4472
      %4696 = vmatpush1.bf16.msra.mxu0 %v4471
      %4697 = vmatprep.subr.bf16.mxu0 %v4482
      %4698 = vmatpush1.bf16.msra.mxu0 %v4481
      %4699 = vmatprep.subr.bf16.mxu0 %v4492
      %4700 = vmatpush1.bf16.msra.mxu0 %v4491
      %4701 = vmatprep.subr.bf16.mxu0 %v4502
      %4702 = vmatpush1.bf16.msra.mxu0 %v4501
      %4703 = vmatprep.mubr.bf16.mxu0 %v3868
      %4704 = vmatmul.mubr.bf16.gmra.mrb[0].mxu0 %v3865
      %v4705 = vpop.f32.mrb[0].mxu0
      %v4706 = vadd.f32 0.0, %v4705
      %v4707 = vpop.f32.mrb[0].mxu0
      %v4708 = vadd.f32 0.0, %v4707
      %v4709 = vpop.f32.mrb[0].mxu0
      %v4710 = vpop.f32.mrb[0].mxu0
      %4711 = vdwg.mxu0
      %4712 = vmatprep.subr.bf16.mxu0 %v4354
      %4713 = vmatpush1.bf16.msra.mxu0 %v4353
      %4714 = vmatprep.subr.bf16.mxu0 %v4364
      %4715 = vmatpush1.bf16.msra.mxu0 %v4363
      %4716 = vmatprep.subr.bf16.mxu0 %v4374
      %4717 = vmatpush1.bf16.msra.mxu0 %v4373
      %4718 = vmatprep.subr.bf16.mxu0 %v4384
      %4719 = vmatpush1.bf16.msra.mxu0 %v4383
      %4720 = vmatprep.subr.bf16.mxu0 %v4394
      %4721 = vmatpush1.bf16.msra.mxu0 %v4393
      %4722 = vmatprep.subr.bf16.mxu0 %v4404
      %4723 = vmatpush1.bf16.msra.mxu0 %v4403
      %4724 = vmatprep.subr.bf16.mxu0 %v4414
      %4725 = vmatpush1.bf16.msra.mxu0 %v4413
      %4726 = vmatprep.subr.bf16.mxu0 %v4424
      %4727 = vmatpush1.bf16.msra.mxu0 %v4423
      %4728 = vmatprep.subr.bf16.mxu0 %v4434
      %4729 = vmatpush1.bf16.msra.mxu0 %v4433
      %4730 = vmatprep.subr.bf16.mxu0 %v4444
      %4731 = vmatpush1.bf16.msra.mxu0 %v4443
      %4732 = vmatprep.subr.bf16.mxu0 %v4454
      %4733 = vmatpush1.bf16.msra.mxu0 %v4453
      %4734 = vmatprep.subr.bf16.mxu0 %v4464
      %4735 = vmatpush1.bf16.msra.mxu0 %v4463
      %4736 = vmatprep.subr.bf16.mxu0 %v4474
      %4737 = vmatpush1.bf16.msra.mxu0 %v4473
      %4738 = vmatprep.subr.bf16.mxu0 %v4484
      %4739 = vmatpush1.bf16.msra.mxu0 %v4483
      %4740 = vmatprep.subr.bf16.mxu0 %v4494
      %4741 = vmatpush1.bf16.msra.mxu0 %v4493
      %4742 = vmatprep.subr.bf16.mxu0 %v4504
      %4743 = vmatpush1.bf16.msra.mxu0 %v4503
      %4744 = vmatprep.mubr.bf16.mxu0 %v3868
      %4745 = vmatmul.mubr.bf16.gmra.mrb[0].mxu0 %v3865
      %v4746 = vpop.f32.mrb[0].mxu0
      %v4747 = vadd.f32 0.0, %v4746
      %v4748 = vpop.f32.mrb[0].mxu0
      %v4749 = vadd.f32 0.0, %v4748
      %v4750 = vpop.f32.mrb[0].mxu0
      %v4751 = vpop.f32.mrb[0].mxu0
      %4752 = vdwg.mxu0
      %4753 = vmatprep.subr.bf16.mxu0 %v4356
      %4754 = vmatpush1.bf16.msra.mxu0 %v4355
      %4755 = vmatprep.subr.bf16.mxu0 %v4366
      %4756 = vmatpush1.bf16.msra.mxu0 %v4365
      %4757 = vmatprep.subr.bf16.mxu0 %v4376
      %4758 = vmatpush1.bf16.msra.mxu0 %v4375
      %4759 = vmatprep.subr.bf16.mxu0 %v4386
      %4760 = vmatpush1.bf16.msra.mxu0 %v4385
      %4761 = vmatprep.subr.bf16.mxu0 %v4396
      %4762 = vmatpush1.bf16.msra.mxu0 %v4395
      %4763 = vmatprep.subr.bf16.mxu0 %v4406
      %4764 = vmatpush1.bf16.msra.mxu0 %v4405
      %4765 = vmatprep.subr.bf16.mxu0 %v4416
      %4766 = vmatpush1.bf16.msra.mxu0 %v4415
      %4767 = vmatprep.subr.bf16.mxu0 %v4426
      %4768 = vmatpush1.bf16.msra.mxu0 %v4425
      %4769 = vmatprep.subr.bf16.mxu0 %v4436
      %4770 = vmatpush1.bf16.msra.mxu0 %v4435
      %4771 = vmatprep.subr.bf16.mxu0 %v4446
      %4772 = vmatpush1.bf16.msra.mxu0 %v4445
      %4773 = vmatprep.subr.bf16.mxu0 %v4456
      %4774 = vmatpush1.bf16.msra.mxu0 %v4455
      %4775 = vmatprep.subr.bf16.mxu0 %v4466
      %4776 = vmatpush1.bf16.msra.mxu0 %v4465
      %4777 = vmatprep.subr.bf16.mxu0 %v4476
      %4778 = vmatpush1.bf16.msra.mxu0 %v4475
      %4779 = vmatprep.subr.bf16.mxu0 %v4486
      %4780 = vmatpush1.bf16.msra.mxu0 %v4485
      %4781 = vmatprep.subr.bf16.mxu0 %v4496
      %4782 = vmatpush1.bf16.msra.mxu0 %v4495
      %4783 = vmatprep.subr.bf16.mxu0 %v4506
      %4784 = vmatpush1.bf16.msra.mxu0 %v4505
      %4785 = vmatprep.mubr.bf16.mxu0 %v3868
      %4786 = vmatmul.mubr.bf16.gmra.mrb[0].mxu0 %v3865
      %v4787 = vpop.f32.mrb[0].mxu0
      %v4788 = vadd.f32 0.0, %v4787
      %v4789 = vpop.f32.mrb[0].mxu0
      %v4790 = vadd.f32 0.0, %v4789
      %v4791 = vpop.f32.mrb[0].mxu0
      %v4792 = vpop.f32.mrb[0].mxu0
      %4793 = vdwg.mxu0
      %4794 = vmatprep.subr.bf16.mxu0 %v4358
      %4795 = vmatpush1.bf16.msra.mxu0 %v4357
      %4796 = vmatprep.subr.bf16.mxu0 %v4368
      %4797 = vmatpush1.bf16.msra.mxu0 %v4367
      %4798 = vmatprep.subr.bf16.mxu0 %v4378
      %4799 = vmatpush1.bf16.msra.mxu0 %v4377
      %4800 = vmatprep.subr.bf16.mxu0 %v4388
      %4801 = vmatpush1.bf16.msra.mxu0 %v4387
      %4802 = vmatprep.subr.bf16.mxu0 %v4398
      %4803 = vmatpush1.bf16.msra.mxu0 %v4397
      %4804 = vmatprep.subr.bf16.mxu0 %v4408
      %4805 = vmatpush1.bf16.msra.mxu0 %v4407
      %4806 = vmatprep.subr.bf16.mxu0 %v4418
      %4807 = vmatpush1.bf16.msra.mxu0 %v4417
      %4808 = vmatprep.subr.bf16.mxu0 %v4428
      %4809 = vmatpush1.bf16.msra.mxu0 %v4427
      %4810 = vmatprep.subr.bf16.mxu0 %v4438
      %4811 = vmatpush1.bf16.msra.mxu0 %v4437
      %4812 = vmatprep.subr.bf16.mxu0 %v4448
      %4813 = vmatpush1.bf16.msra.mxu0 %v4447
      %4814 = vmatprep.subr.bf16.mxu0 %v4458
      %4815 = vmatpush1.bf16.msra.mxu0 %v4457
      %4816 = vmatprep.subr.bf16.mxu0 %v4468
      %4817 = vmatpush1.bf16.msra.mxu0 %v4467
      %4818 = vmatprep.subr.bf16.mxu0 %v4478
      %4819 = vmatpush1.bf16.msra.mxu0 %v4477
      %4820 = vmatprep.subr.bf16.mxu0 %v4488
      %4821 = vmatpush1.bf16.msra.mxu0 %v4487
      %4822 = vmatprep.subr.bf16.mxu0 %v4498
      %4823 = vmatpush1.bf16.msra.mxu0 %v4497
      %4824 = vmatprep.subr.bf16.mxu0 %v4508
      %4825 = vmatpush1.bf16.msra.mxu0 %v4507
      %4826 = vmatprep.mubr.bf16.mxu0 %v3868
      %4827 = vmatmul.mubr.bf16.gmra.mrb[0].mxu0 %v3865
      %v4828 = vpop.f32.mrb[0].mxu0
      %v4829 = vadd.f32 0.0, %v4828
      %v4830 = vpop.f32.mrb[0].mxu0
      %v4831 = vadd.f32 0.0, %v4830
      %v4832 = vpop.f32.mrb[0].mxu0
      %v4833 = vpop.f32.mrb[0].mxu0
      %4834 = vdwg.mxu0
      %4835 = vmatprep.subr.bf16.mxu0 %v4360
      %4836 = vmatpush1.bf16.msra.mxu0 %v4359
      %4837 = vmatprep.subr.bf16.mxu0 %v4370
      %4838 = vmatpush1.bf16.msra.mxu0 %v4369
      %4839 = vmatprep.subr.bf16.mxu0 %v4380
      %4840 = vmatpush1.bf16.msra.mxu0 %v4379
      %4841 = vmatprep.subr.bf16.mxu0 %v4390
      %4842 = vmatpush1.bf16.msra.mxu0 %v4389
      %4843 = vmatprep.subr.bf16.mxu0 %v4400
      %4844 = vmatpush1.bf16.msra.mxu0 %v4399
      %4845 = vmatprep.subr.bf16.mxu0 %v4410
      %4846 = vmatpush1.bf16.msra.mxu0 %v4409
      %4847 = vmatprep.subr.bf16.mxu0 %v4420
      %4848 = vmatpush1.bf16.msra.mxu0 %v4419
      %4849 = vmatprep.subr.bf16.mxu0 %v4430
      %4850 = vmatpush1.bf16.msra.mxu0 %v4429
      %4851 = vmatprep.subr.bf16.mxu0 %v4440
      %4852 = vmatpush1.bf16.msra.mxu0 %v4439
      %4853 = vmatprep.subr.bf16.mxu0 %v4450
      %4854 = vmatpush1.bf16.msra.mxu0 %v4449
      %4855 = vmatprep.subr.bf16.mxu0 %v4460
      %4856 = vmatpush1.bf16.msra.mxu0 %v4459
      %4857 = vmatprep.subr.bf16.mxu0 %v4470
      %4858 = vmatpush1.bf16.msra.mxu0 %v4469
      %4859 = vmatprep.subr.bf16.mxu0 %v4480
      %4860 = vmatpush1.bf16.msra.mxu0 %v4479
      %4861 = vmatprep.subr.bf16.mxu0 %v4490
      %4862 = vmatpush1.bf16.msra.mxu0 %v4489
      %4863 = vmatprep.subr.bf16.mxu0 %v4500
      %4864 = vmatpush1.bf16.msra.mxu0 %v4499
      %4865 = vmatprep.subr.bf16.mxu0 %v4510
      %4866 = vmatpush1.bf16.msra.mxu0 %v4509
      %4867 = vmatprep.mubr.bf16.mxu0 %v3868
      %4868 = vmatmul.mubr.bf16.gmra.mrb[0].mxu0 %v3865
      %v4869 = vpop.f32.mrb[0].mxu0
      %v4870 = vadd.f32 0.0, %v4869
      %v4871 = vpop.f32.mrb[0].mxu0
      %v4872 = vadd.f32 0.0, %v4871
      %v4873 = vpop.f32.mrb[0].mxu0
      %v4874 = vpop.f32.mrb[0].mxu0
      %4875 = vdwg.mxu0
      %v4876 = vadd.f32 %v3693, %v4706
      %v4877 = vadd.f32 %v3694, %v4708
      %v4878 = vadd.f32 %v3695, %v4747
      %v4879 = vadd.f32 %v3696, %v4749
      %v4880 = vadd.f32 %v3697, %v4788
      %v4881 = vadd.f32 %v3698, %v4790
      %v4882 = vadd.f32 %v3699, %v4829
      %v4883 = vadd.f32 %v3700, %v4831
      %v4884 = vadd.f32 %v3701, %v4870
      %v4885 = vadd.f32 %v3702, %v4872
      %v4886 = vmul.f32 %v4876, %v4876
      %v4887 = vmul.f32 %v4877, %v4877
      %v4888 = vmul.f32 %v4878, %v4878
      %v4889 = vmul.f32 %v4879, %v4879
      %v4890 = vmul.f32 %v4880, %v4880
      %v4891 = vmul.f32 %v4881, %v4881
      %v4892 = vmul.f32 %v4882, %v4882
      %v4893 = vmul.f32 %v4883, %v4883
      %v4894 = vmul.f32 %v4884, %v4884
      %v4895 = vmul.f32 %v4885, %v4885
      %v4896 = vadd.f32 %v4886, %v4891
      %v4897 = vadd.f32 %v4887, %v4892
      %v4898 = vadd.f32 %v4888, %v4893
      %v4899 = vadd.f32 %v4889, %v4894
      %v4900 = vadd.f32 %v4890, %v4895
      %v4901 = vadd.f32 %v4896, 1e-09
      %v4902 = vadd.f32 %v4897, 1e-09
      %v4903 = vadd.f32 %v4898, 1e-09
      %v4904 = vadd.f32 %v4899, 1e-09
      %v4905 = vadd.f32 %v4900, 1e-09
      %v4906 = vrsqrt.pop %v4901
      %v4907 = vmul.f32 %v4901, %v4906
      %vm4908 = vcmp.eq.f32.partialorder %v4901, inf
      %v4909 = vsel %vm4908, %v4901, %v4907
      %vm4910 = vcmp.eq.f32.partialorder %v4901, 0.0
      %v4911 = vand.u32 %v4901, 2147483648
      %v4912 = vsel %vm4910, %v4911, %v4909
      %v4913 = vrsqrt.pop %v4902
      %v4914 = vmul.f32 %v4902, %v4913
      %vm4915 = vcmp.eq.f32.partialorder %v4902, inf
      %v4916 = vsel %vm4915, %v4902, %v4914
      %vm4917 = vcmp.eq.f32.partialorder %v4902, 0.0
      %v4918 = vand.u32 %v4902, 2147483648
      %v4919 = vsel %vm4917, %v4918, %v4916
      %v4920 = vrsqrt.pop %v4903
      %v4921 = vmul.f32 %v4903, %v4920
      %vm4922 = vcmp.eq.f32.partialorder %v4903, inf
      %v4923 = vsel %vm4922, %v4903, %v4921
      %vm4924 = vcmp.eq.f32.partialorder %v4903, 0.0
      %v4925 = vand.u32 %v4903, 2147483648
      %v4926 = vsel %vm4924, %v4925, %v4923
      %v4927 = vrsqrt.pop %v4904
      %v4928 = vmul.f32 %v4904, %v4927
      %vm4929 = vcmp.eq.f32.partialorder %v4904, inf
      %v4930 = vsel %vm4929, %v4904, %v4928
      %vm4931 = vcmp.eq.f32.partialorder %v4904, 0.0
      %v4932 = vand.u32 %v4904, 2147483648
      %v4933 = vsel %vm4931, %v4932, %v4930
      %v4934 = vrsqrt.pop %v4905
      %v4935 = vmul.f32 %v4905, %v4934
      %vm4936 = vcmp.eq.f32.partialorder %v4905, inf
      %v4937 = vsel %vm4936, %v4905, %v4935
      %vm4938 = vcmp.eq.f32.partialorder %v4905, 0.0
      %v4939 = vand.u32 %v4905, 2147483648
      %v4940 = vsel %vm4938, %v4939, %v4937
      %v4941 = vpack.c.bf16 %v4912, %v4912
      %v4942 = vpack.c.bf16 %v4919, %v4919
      %v4943 = vpack.c.bf16 %v4926, %v4926
      %v4944 = vpack.c.bf16 %v4933, %v4933
      %v4945 = vpack.c.bf16 %v4940, %v4940
      %v4946 = vld [vmem:[%s2] sm:$0xf]
      %v4947 = vld [vmem:[%s2 + $0x4] sm:$0xf]
      %v4948 = vld [vmem:[%s2 + $0x8] sm:$0xf]
      %v4949 = vld [vmem:[%s2 + $0xc] sm:$0xf]
      %v4950 = vld [vmem:[%s2 + $0x10] sm:$0xf]
      %v4951 = vld [vmem:[%s2 + $0x14] sm:$0xf]
      %v4952 = vld [vmem:[%s2 + $0x18] sm:$0xf]
      %v4953 = vld [vmem:[%s2 + $0x1c] sm:$0xf]
      %v4954 = vld [vmem:[%s2 + $0x20] sm:$0xf]
      %v4955 = vld [vmem:[%s2 + $0x24] sm:$0xf]
      %v4956 = vld [vmem:[%s2 + $0x28] sm:$0xf]
      %v4957 = vld [vmem:[%s2 + $0x2c] sm:$0xf]
      %v4958 = vld [vmem:[%s2 + $0x30] sm:$0xf]
      %v4959 = vld [vmem:[%s2 + $0x34] sm:$0xf]
      %v4960 = vld [vmem:[%s2 + $0x38] sm:$0xf]
      %v4961 = vld [vmem:[%s2 + $0x3c] sm:$0xf]
      %v4962 = vld [vmem:[%s2 + $0x40] sm:$0xf]
      %v4963 = vld [vmem:[%s2 + $0x44] sm:$0xf]
      %v4964 = vld [vmem:[%s2 + $0x48] sm:$0xf]
      %v4965 = vld [vmem:[%s2 + $0x4c] sm:$0xf]
      %v4966 = vld [vmem:[%s2 + $0x50] sm:$0xf]
      %v4967 = vld [vmem:[%s2 + $0x54] sm:$0xf]
      %v4968 = vld [vmem:[%s2 + $0x58] sm:$0xf]
      %v4969 = vld [vmem:[%s2 + $0x5c] sm:$0xf]
      %v4970 = vld [vmem:[%s2 + $0x60] sm:$0xf]
      %v4971 = vld [vmem:[%s2 + $0x64] sm:$0xf]
      %v4972 = vld [vmem:[%s2 + $0x68] sm:$0xf]
      %v4973 = vld [vmem:[%s2 + $0x6c] sm:$0xf]
      %v4974 = vld [vmem:[%s2 + $0x70] sm:$0xf]
      %v4975 = vld [vmem:[%s2 + $0x74] sm:$0xf]
      %v4976 = vld [vmem:[%s2 + $0x78] sm:$0xf]
      %v4977 = vld [vmem:[%s2 + $0x7c] sm:$0xf]
      %v4978 = vld [vmem:[%s2 + $0x80] sm:$0xf]
      %v4979 = vld [vmem:[%s2 + $0x84] sm:$0xf]
      %v4980 = vld [vmem:[%s2 + $0x88] sm:$0xf]
      %v4981 = vld [vmem:[%s2 + $0x8c] sm:$0xf]
      %v4982 = vld [vmem:[%s2 + $0x90] sm:$0xf]
      %v4983 = vld [vmem:[%s2 + $0x94] sm:$0xf]
      %v4984 = vld [vmem:[%s2 + $0x98] sm:$0xf]
      %v4985 = vld [vmem:[%s2 + $0x9c] sm:$0xf]
      %v4986 = vld [vmem:[%s2 + $0xa0] sm:$0xf]
      %v4987 = vld [vmem:[%s2 + $0xa4] sm:$0xf]
      %v4988 = vld [vmem:[%s2 + $0xa8] sm:$0xf]
      %v4989 = vld [vmem:[%s2 + $0xac] sm:$0xf]
      %v4990 = vld [vmem:[%s2 + $0xb0] sm:$0xf]
      %v4991 = vld [vmem:[%s2 + $0xb4] sm:$0xf]
      %v4992 = vld [vmem:[%s2 + $0xb8] sm:$0xf]
      %v4993 = vld [vmem:[%s2 + $0xbc] sm:$0xf]
      %v4994 = vld [vmem:[%s2 + $0xc0] sm:$0xf]
      %v4995 = vld [vmem:[%s2 + $0xc4] sm:$0xf]
      %v4996 = vld [vmem:[%s2 + $0xc8] sm:$0xf]
      %v4997 = vld [vmem:[%s2 + $0xcc] sm:$0xf]
      %v4998 = vld [vmem:[%s2 + $0xd0] sm:$0xf]
      %v4999 = vld [vmem:[%s2 + $0xd4] sm:$0xf]
      %v5000 = vld [vmem:[%s2 + $0xd8] sm:$0xf]
      %v5001 = vld [vmem:[%s2 + $0xdc] sm:$0xf]
      %v5002 = vld [vmem:[%s2 + $0xe0] sm:$0xf]
      %v5003 = vld [vmem:[%s2 + $0xe4] sm:$0xf]
      %v5004 = vld [vmem:[%s2 + $0xe8] sm:$0xf]
      %v5005 = vld [vmem:[%s2 + $0xec] sm:$0xf]
      %v5006 = vld [vmem:[%s2 + $0xf0] sm:$0xf]
      %v5007 = vld [vmem:[%s2 + $0xf4] sm:$0xf]
      %v5008 = vld [vmem:[%s2 + $0xf8] sm:$0xf]
      %v5009 = vld [vmem:[%s2 + $0xfc] sm:$0xf]
      %v5010 = vld [vmem:[%s2 + $0x100] sm:$0xf]
      %v5011 = vld [vmem:[%s2 + $0x104] sm:$0xf]
      %v5012 = vld [vmem:[%s2 + $0x108] sm:$0xf]
      %v5013 = vld [vmem:[%s2 + $0x10c] sm:$0xf]
      %v5014 = vld [vmem:[%s2 + $0x110] sm:$0xf]
      %v5015 = vld [vmem:[%s2 + $0x114] sm:$0xf]
      %v5016 = vld [vmem:[%s2 + $0x118] sm:$0xf]
      %v5017 = vld [vmem:[%s2 + $0x11c] sm:$0xf]
      %v5018 = vld [vmem:[%s2 + $0x120] sm:$0xf]
      %v5019 = vld [vmem:[%s2 + $0x124] sm:$0xf]
      %v5020 = vld [vmem:[%s2 + $0x128] sm:$0xf]
      %v5021 = vld [vmem:[%s2 + $0x12c] sm:$0xf]
      %v5022 = vld [vmem:[%s2 + $0x130] sm:$0xf]
      %v5023 = vld [vmem:[%s2 + $0x134] sm:$0xf]
      %v5024 = vld [vmem:[%s2 + $0x138] sm:$0xf]
      %v5025 = vld [vmem:[%s2 + $0x13c] sm:$0xf]
      %v5106 = vunpack.c.l.b16 %v4946
      %v5107 = vunpack.c.l.b16 %v4947
      %v5108 = vunpack.c.l.b16 %v4948
      %v5109 = vunpack.c.l.b16 %v4949
      %v5110 = vunpack.c.l.b16 %v4950
      %v5111 = vunpack.c.l.b16 %v4951
      %v5112 = vunpack.c.l.b16 %v4952
      %v5113 = vunpack.c.l.b16 %v4953
      %v5114 = vunpack.c.l.b16 %v4954
      %v5115 = vunpack.c.l.b16 %v4955
      %v5116 = vunpack.c.l.b16 %v4956
      %v5117 = vunpack.c.l.b16 %v4957
      %v5118 = vunpack.c.l.b16 %v4958
      %v5119 = vunpack.c.l.b16 %v4959
      %v5120 = vunpack.c.l.b16 %v4960
      %v5121 = vunpack.c.l.b16 %v4961
      %v5122 = vunpack.c.l.b16 %v4962
      %v5123 = vunpack.c.l.b16 %v4963
      %v5124 = vunpack.c.l.b16 %v4964
      %v5125 = vunpack.c.l.b16 %v4965
      %v5126 = vunpack.c.l.b16 %v4966
      %v5127 = vunpack.c.l.b16 %v4967
      %v5128 = vunpack.c.l.b16 %v4968
      %v5129 = vunpack.c.l.b16 %v4969
      %v5130 = vunpack.c.l.b16 %v4970
      %v5131 = vunpack.c.l.b16 %v4971
      %v5132 = vunpack.c.l.b16 %v4972
      %v5133 = vunpack.c.l.b16 %v4973
      %v5134 = vunpack.c.l.b16 %v4974
      %v5135 = vunpack.c.l.b16 %v4975
      %v5136 = vunpack.c.l.b16 %v4976
      %v5137 = vunpack.c.l.b16 %v4977
      %v5138 = vunpack.c.l.b16 %v4978
      %v5139 = vunpack.c.l.b16 %v4979
      %v5140 = vunpack.c.l.b16 %v4980
      %v5141 = vunpack.c.l.b16 %v4981
      %v5142 = vunpack.c.l.b16 %v4982
      %v5143 = vunpack.c.l.b16 %v4983
      %v5144 = vunpack.c.l.b16 %v4984
      %v5145 = vunpack.c.l.b16 %v4985
      %v5146 = vunpack.c.l.b16 %v4986
      %v5147 = vunpack.c.l.b16 %v4987
      %v5148 = vunpack.c.l.b16 %v4988
      %v5149 = vunpack.c.l.b16 %v4989
      %v5150 = vunpack.c.l.b16 %v4990
      %v5151 = vunpack.c.l.b16 %v4991
      %v5152 = vunpack.c.l.b16 %v4992
      %v5153 = vunpack.c.l.b16 %v4993
      %v5154 = vunpack.c.l.b16 %v4994
      %v5155 = vunpack.c.l.b16 %v4995
      %v5156 = vunpack.c.l.b16 %v4996
      %v5157 = vunpack.c.l.b16 %v4997
      %v5158 = vunpack.c.l.b16 %v4998
      %v5159 = vunpack.c.l.b16 %v4999
      %v5160 = vunpack.c.l.b16 %v5000
      %v5161 = vunpack.c.l.b16 %v5001
      %v5162 = vunpack.c.l.b16 %v5002
      %v5163 = vunpack.c.l.b16 %v5003
      %v5164 = vunpack.c.l.b16 %v5004
      %v5165 = vunpack.c.l.b16 %v5005
      %v5166 = vunpack.c.l.b16 %v5006
      %v5167 = vunpack.c.l.b16 %v5007
      %v5168 = vunpack.c.l.b16 %v5008
      %v5169 = vunpack.c.l.b16 %v5009
      %v5170 = vunpack.c.l.b16 %v5010
      %v5171 = vunpack.c.l.b16 %v5011
      %v5172 = vunpack.c.l.b16 %v5012
      %v5173 = vunpack.c.l.b16 %v5013
      %v5174 = vunpack.c.l.b16 %v5014
      %v5175 = vunpack.c.l.b16 %v5015
      %v5176 = vunpack.c.l.b16 %v5016
      %v5177 = vunpack.c.l.b16 %v5017
      %v5178 = vunpack.c.l.b16 %v5018
      %v5179 = vunpack.c.l.b16 %v5019
      %v5180 = vunpack.c.l.b16 %v5020
      %v5181 = vunpack.c.l.b16 %v5021
      %v5182 = vunpack.c.l.b16 %v5022
      %v5183 = vunpack.c.l.b16 %v5023
      %v5184 = vunpack.c.l.b16 %v5024
      %v5185 = vunpack.c.l.b16 %v5025
      %v5186 = vpack.c.b16 %v5107, %v5106
      %v5187 = vpack.c.b16 %v5109, %v5108
      %v5188 = vpack.c.b16 %v5111, %v5110
      %v5189 = vpack.c.b16 %v5113, %v5112
      %v5190 = vpack.c.b16 %v5115, %v5114
      %v5191 = vpack.c.b16 %v5117, %v5116
      %v5192 = vpack.c.b16 %v5119, %v5118
      %v5193 = vpack.c.b16 %v5121, %v5120
      %v5194 = vpack.c.b16 %v5123, %v5122
      %v5195 = vpack.c.b16 %v5125, %v5124
      %v5196 = vpack.c.b16 %v5127, %v5126
      %v5197 = vpack.c.b16 %v5129, %v5128
      %v5198 = vpack.c.b16 %v5131, %v5130
      %v5199 = vpack.c.b16 %v5133, %v5132
      %v5200 = vpack.c.b16 %v5135, %v5134
      %v5201 = vpack.c.b16 %v5137, %v5136
      %v5202 = vpack.c.b16 %v5139, %v5138
      %v5203 = vpack.c.b16 %v5141, %v5140
      %v5204 = vpack.c.b16 %v5143, %v5142
      %v5205 = vpack.c.b16 %v5145, %v5144
      %v5206 = vpack.c.b16 %v5147, %v5146
      %v5207 = vpack.c.b16 %v5149, %v5148
      %v5208 = vpack.c.b16 %v5151, %v5150
      %v5209 = vpack.c.b16 %v5153, %v5152
      %v5210 = vpack.c.b16 %v5155, %v5154
      %v5211 = vpack.c.b16 %v5157, %v5156
      %v5212 = vpack.c.b16 %v5159, %v5158
      %v5213 = vpack.c.b16 %v5161, %v5160
      %v5214 = vpack.c.b16 %v5163, %v5162
      %v5215 = vpack.c.b16 %v5165, %v5164
      %v5216 = vpack.c.b16 %v5167, %v5166
      %v5217 = vpack.c.b16 %v5169, %v5168
      %v5218 = vpack.c.b16 %v5171, %v5170
      %v5219 = vpack.c.b16 %v5173, %v5172
      %v5220 = vpack.c.b16 %v5175, %v5174
      %v5221 = vpack.c.b16 %v5177, %v5176
      %v5222 = vpack.c.b16 %v5179, %v5178
      %v5223 = vpack.c.b16 %v5181, %v5180
      %v5224 = vpack.c.b16 %v5183, %v5182
      %v5225 = vpack.c.b16 %v5185, %v5184
      %5266 = vmatprep.subr.bf16.mxu0 0
      %5267 = vmatpush1.bf16.msra.mxu0 %v5186
      %5268 = vmatprep.subr.bf16.mxu0 0
      %5269 = vmatpush1.bf16.msra.mxu0 %v5187
      %5270 = vmatprep.subr.bf16.mxu0 0
      %5271 = vmatpush1.bf16.msra.mxu0 %v5188
      %5272 = vmatprep.subr.bf16.mxu0 0
      %5273 = vmatpush1.bf16.msra.mxu0 %v5189
      %5274 = vmatprep.subr.bf16.mxu0 0
      %5275 = vmatpush1.bf16.msra.mxu0 %v5190
      %5276 = vmatprep.subr.bf16.mxu0 0
      %5277 = vmatpush1.bf16.msra.mxu0 %v5191
      %5278 = vmatprep.subr.bf16.mxu0 0
      %5279 = vmatpush1.bf16.msra.mxu0 %v5192
      %5280 = vmatprep.subr.bf16.mxu0 0
      %5281 = vmatpush1.bf16.msra.mxu0 %v5193
      %5282 = vmatprep.subr.bf16.mxu0 0
      %5283 = vmatpush1.bf16.msra.mxu0 %v5194
      %5284 = vmatprep.subr.bf16.mxu0 0
      %5285 = vmatpush1.bf16.msra.mxu0 %v5195
      %5286 = vmatprep.subr.bf16.mxu0 0
      %5287 = vmatpush1.bf16.msra.mxu0 %v5196
      %5288 = vmatprep.subr.bf16.mxu0 0
      %5289 = vmatpush1.bf16.msra.mxu0 %v5197
      %5290 = vmatprep.subr.bf16.mxu0 0
      %5291 = vmatpush1.bf16.msra.mxu0 %v5198
      %5292 = vmatprep.subr.bf16.mxu0 0
      %5293 = vmatpush1.bf16.msra.mxu0 %v5199
      %5294 = vmatprep.subr.bf16.mxu0 0
      %5295 = vmatpush1.bf16.msra.mxu0 %v5200
      %5296 = vmatprep.subr.bf16.mxu0 0
      %5297 = vmatpush1.bf16.msra.mxu0 %v5201
      %5298 = vmatprep.mubr.bf16.mxu0 %v4942
      %5299 = vmatmul.mubr.bf16.gmra.mrb[0].mxu0 %v4941
      %v5300 = vpop.f32.mrb[0].mxu0
      %v5301 = vadd.f32 0.0, %v5300
      %v5302 = vpop.f32.mrb[0].mxu0
      %v5303 = vpop.f32.mrb[0].mxu0
      %v5304 = vpop.f32.mrb[0].mxu0
      %5305 = vdwg.mxu0
      %5306 = vmatprep.subr.bf16.mxu0 0
      %5307 = vmatpush1.bf16.msra.mxu0 %v5202
      %5308 = vmatprep.subr.bf16.mxu0 0
      %5309 = vmatpush1.bf16.msra.mxu0 %v5203
      %5310 = vmatprep.subr.bf16.mxu0 0
      %5311 = vmatpush1.bf16.msra.mxu0 %v5204
      %5312 = vmatprep.subr.bf16.mxu0 0
      %5313 = vmatpush1.bf16.msra.mxu0 %v5205
      %5314 = vmatprep.subr.bf16.mxu0 0
      %5315 = vmatpush1.bf16.msra.mxu0 %v5206
      %5316 = vmatprep.subr.bf16.mxu0 0
      %5317 = vmatpush1.bf16.msra.mxu0 %v5207
      %5318 = vmatprep.subr.bf16.mxu0 0
      %5319 = vmatpush1.bf16.msra.mxu0 %v5208
      %5320 = vmatprep.subr.bf16.mxu0 0
      %5321 = vmatpush1.bf16.msra.mxu0 %v5209
      %5322 = vmatprep.subr.bf16.mxu0 0
      %5323 = vmatpush1.bf16.msra.mxu0 %v5210
      %5324 = vmatprep.subr.bf16.mxu0 0
      %5325 = vmatpush1.bf16.msra.mxu0 %v5211
      %5326 = vmatprep.subr.bf16.mxu0 0
      %5327 = vmatpush1.bf16.msra.mxu0 %v5212
      %5328 = vmatprep.subr.bf16.mxu0 0
      %5329 = vmatpush1.bf16.msra.mxu0 %v5213
      %5330 = vmatprep.subr.bf16.mxu0 0
      %5331 = vmatpush1.bf16.msra.mxu0 %v5214
      %5332 = vmatprep.subr.bf16.mxu0 0
      %5333 = vmatpush1.bf16.msra.mxu0 %v5215
      %5334 = vmatprep.subr.bf16.mxu0 0
      %5335 = vmatpush1.bf16.msra.mxu0 %v5216
      %5336 = vmatprep.subr.bf16.mxu0 0
      %5337 = vmatpush1.bf16.msra.mxu0 %v5217
      %5338 = vmatprep.mubr.bf16.mxu0 %v4944
      %5339 = vmatmul.mubr.bf16.gmra.mrb[0].mxu0 %v4943
      %v5340 = vpop.f32.mrb[0].mxu0
      %v5341 = vadd.f32 %v5301, %v5340
      %v5342 = vpop.f32.mrb[0].mxu0
      %v5343 = vpop.f32.mrb[0].mxu0
      %v5344 = vpop.f32.mrb[0].mxu0
      %5345 = vdwg.mxu0
      %5346 = vmatprep.subr.bf16.mxu0 0
      %5347 = vmatpush1.bf16.msra.mxu0 %v5218
      %5348 = vmatprep.subr.bf16.mxu0 0
      %5349 = vmatpush1.bf16.msra.mxu0 %v5219
      %5350 = vmatprep.subr.bf16.mxu0 0
      %5351 = vmatpush1.bf16.msra.mxu0 %v5220
      %5352 = vmatprep.subr.bf16.mxu0 0
      %5353 = vmatpush1.bf16.msra.mxu0 %v5221
      %5354 = vmatprep.subr.bf16.mxu0 0
      %5355 = vmatpush1.bf16.msra.mxu0 %v5222
      %5356 = vmatprep.subr.bf16.mxu0 0
      %5357 = vmatpush1.bf16.msra.mxu0 %v5223
      %5358 = vmatprep.subr.bf16.mxu0 0
      %5359 = vmatpush1.bf16.msra.mxu0 %v5224
      %5360 = vmatprep.subr.bf16.mxu0 0
      %5361 = vmatpush1.bf16.msra.mxu0 %v5225
      %5362 = vmatprep.subr.bf16.mxu0 0
      %5363 = vmatpush1.bf16.msra.mxu0 0
      %5364 = vmatprep.subr.bf16.mxu0 0
      %5365 = vmatpush1.bf16.msra.mxu0 0
      %5366 = vmatprep.subr.bf16.mxu0 0
      %5367 = vmatpush1.bf16.msra.mxu0 0
      %5368 = vmatprep.subr.bf16.mxu0 0
      %5369 = vmatpush1.bf16.msra.mxu0 0
      %5370 = vmatprep.subr.bf16.mxu0 0
      %5371 = vmatpush1.bf16.msra.mxu0 0
      %5372 = vmatprep.subr.bf16.mxu0 0
      %5373 = vmatpush1.bf16.msra.mxu0 0
      %5374 = vmatprep.subr.bf16.mxu0 0
      %5375 = vmatpush1.bf16.msra.mxu0 0
      %5376 = vmatprep.subr.bf16.mxu0 0
      %5377 = vmatpush1.bf16.msra.mxu0 0
      %5378 = vmatprep.mubr.bf16.mxu0 0
      %5379 = vmatmul.mubr.bf16.gmra.mrb[0].mxu0 %v4945
      %v5380 = vpop.f32.mrb[0].mxu0
      %v5381 = vadd.f32 %v5341, %v5380
      %v5382 = vpop.f32.mrb[0].mxu0
      %v5383 = vpop.f32.mrb[0].mxu0
      %v5384 = vpop.f32.mrb[0].mxu0
      %5385 = vdwg.mxu0
      %v5386 = vmax.f32 %v5381, 1e-05
      %v5387 = vlog2.pop %v5386
      %v5388 = vmul.f32 %v5387, 0.6931472
      %5389 = vst [vmem:[%s168] sm:$0xff] %v5388
      %p5390 = scmp.lt.s32.totalorder %s14, 1
      %s5391 = scalar_select %p5390, %s14, 1
      %s5392 = smul.addr %s5391, 8
      %s5393 = scalar_lea.vmem %s3, %s5392
      // Predicated region
      $region33: #{_lambda_.3} parent=31 // pred_check
        %p5394 = pneg %p100
      $region34: #{_lambda_.3} parent=31 // pred_check_branch
        %5396 = sbr.rel (%p5394) target = $region36
      $region35: #{_lambda_.3} parent=31 // pred_region
        _
      $region36: #{_lambda_.3} parent=31 // pred_fallthru
        _
    $region32: #{_lambda_.3} parent=5 // pred_fallthru
      _
    %p5397 = scmp.le.s32.totalorder 2, %s9
    // Predicated region
    $region37: #{_lambda_.3} parent=5 // pred_check
      %p5398 = pneg %p5397
    $region38: #{_lambda_.3} parent=5 // pred_check_branch
      %5400 = sbr.rel (%p5398) target = $region40
    $region39: #{_lambda_.3} parent=5 // pred_region
      %s5401 = ssub.s32 %s9, 2
      // Predicated region
      $region41: #{_lambda_.3} parent=39 // pred_check
        %p5402 = pneg %p106
      $region42: #{_lambda_.3} parent=39 // pred_check_branch
        %5404 = sbr.rel (%p5402) target = $region44
      $region43: #{_lambda_.3} parent=39 // pred_region
        %p5405 = scmp.lt.s32.totalorder %s15, 1
        %s5406 = scalar_select %p5405, %s15, 1
        %s5407 = smul.addr %s5406, 8
        %s5408 = scalar_lea.vmem %s3, %s5407
      $region44: #{_lambda_.3} parent=39 // pred_fallthru
        _
    $region40: #{_lambda_.3} parent=5 // pred_fallthru
      _
  $region6: #{_lambda_.3} parent=0 // loop_footer
    %s13 = sadd.s32 1, %s9
  $region7: #{_lambda_.3} parent=0 // loop_footer_branch
    %8 = sbr.rel target = $region3
  $region8: #{_lambda_.3} parent=0 // loop_exit
    _

// kernel: _lambda_.5
$region0: #{_lambda_.5}
  #allocation0 [shape = 'u32[]', space=smem, size = 0x4, offset = 0x4, fixed_abs, tag = 'smem constant byte address 0x4 - core index']
  #allocation1 [shape = 'u32[144,128]{1,0:T(1,128)}', space=vmem, size = 0x12000, scoped, tag = 'internal scratch']
  %s0 = inlined_call_operand.vmem [shape: f32[4,11,256], index: 0, kind: input, shape index: {}]
  %s1 = inlined_call_operand.vmem [shape: bf16[1024,1280], index: 1, kind: input, shape index: {}]
  %s2 = inlined_call_operand.vmem [shape: bf16[640,128], index: 2, kind: input, shape index: {}]
  %s3 = inlined_call_operand.hbm [shape: f32[4,8,128], index: 3, kind: output, shape index: {}]
  %s4 = sld [smem:[#allocation0]]
  $region45: #{_lambda_.5} parent=0
    _
  %s6 = ssub.s32 1, %s4
  %s7 = scalar_select 0, %s6, %s4
  $region1: #{_lambda_.5} parent=0
    #allocation2 [shape = 'u8[16384]{0}', space=vmem, size = 0x4000, scoped, tag = 'output window, operand 0']
    #allocation3 [shape = 's32[2]{0}', space=sflag, size = 0x8, scoped, tag = 'scoped memory for _lambda_.5']
    %8 = vsyncpa [#allocation3], 0
    %s9 = scalar_lea.sflag [#allocation3], 1
    %10 = vsyncpa %s9, 0
    loop: start=0, step=1, limit=4
    $region2: #{_lambda_.5} parent=1 // loop_pre_header
      _
    $region3: #{_lambda_.5} parent=1 // loop_header
      %s12 = sphi 0, %s16
      %p13 = scmp.ge.s32.totalorder %s12, 4
      %s22 = sphi 0, %s24
      %s25 = sphi 0, %s22
      %s26 = sphi 0, %s25
      %s42 = sphi 0, %s26
      %s46 = sphi 0, %s46
      %s48 = sphi 0, %s46
      %s49 = sphi 0, %s48
      %s63 = sphi 0, %s49
      %s67 = sphi 0, %s67
      %s69 = sphi 0, %s67
      %s70 = sphi 0, %s69
      %s84 = sphi 0, %s70
      %s90 = sphi 0, %s92
      %s93 = sphi 0, %s90
      %s94 = sphi 0, %s93
      %s110 = sphi 0, %s94
    $region4: #{_lambda_.5} parent=1 // loop_header_branch
      %15 = sbr.rel (%p13) target = $region8
    $region5: #{_lambda_.5} parent=1 // loop_body
      %s17 = ssub.s32 %s12, 1
      %s18 = ssub.s32 %s12, 2
      %s19 = sadd.s32 %s12, 1
      %s20 = ssub.s32 %s12, %s19
      %p21 = scmp.eq.s32.totalorder %s20, 0
      %s23 = sadd.s32 %s22, 1
      %s24 = scalar_select %p21, %s22, %s23
      %p27 = pneg %p21
      %p28 = scmp.eq.s32.totalorder %s12, 1
      %p29 = por %p27, %p28
      %p30 = scmp.ne.s32.totalorder %s22, %s25
      %p31 = scmp.eq.s32.totalorder %s12, 0
      %p32 = por %p30, %p31
      %p33 = scmp.ne.s32.totalorder %s22, %s25
      %p34 = scmp.eq.s32.totalorder %s17, 1
      %p35 = por %p33, %p34
      %p36 = scmp.ne.s32.totalorder %s25, %s26
      %p37 = scmp.eq.s32.totalorder %s17, 0
      %p38 = por %p36, %p37
      %p39 = scmp.ne.s32.totalorder %s25, %s26
      %p40 = scmp.eq.s32.totalorder %s18, 1
      %p41 = por %p39, %p40
      %p43 = scmp.ne.s32.totalorder %s26, %s42
      %p44 = scmp.eq.s32.totalorder %s18, 0
      %p45 = por %p43, %p44
      %s47 = sadd.s32 %s46, 1
      %p50 = scmp.eq.s32.totalorder %s12, 1
      %p51 = scmp.ne.s32.totalorder %s46, %s48
      %p52 = scmp.eq.s32.totalorder %s12, 0
      %p53 = por %p51, %p52
      %p54 = scmp.ne.s32.totalorder %s46, %s48
      %p55 = scmp.eq.s32.totalorder %s17, 1
      %p56 = por %p54, %p55
      %p57 = scmp.ne.s32.totalorder %s48, %s49
      %p58 = scmp.eq.s32.totalorder %s17, 0
      %p59 = por %p57, %p58
      %p60 = scmp.ne.s32.totalorder %s48, %s49
      %p61 = scmp.eq.s32.totalorder %s18, 1
      %p62 = por %p60, %p61
      %p64 = scmp.ne.s32.totalorder %s49, %s63
      %p65 = scmp.eq.s32.totalorder %s18, 0
      %p66 = por %p64, %p65
      %s68 = sadd.s32 %s67, 1
      %p71 = scmp.eq.s32.totalorder %s12, 1
      %p72 = scmp.ne.s32.totalorder %s67, %s69
      %p73 = scmp.eq.s32.totalorder %s12, 0
      %p74 = por %p72, %p73
      %p75 = scmp.ne.s32.totalorder %s67, %s69
      %p76 = scmp.eq.s32.totalorder %s17, 1
      %p77 = por %p75, %p76
      %p78 = scmp.ne.s32.totalorder %s69, %s70
      %p79 = scmp.eq.s32.totalorder %s17, 0
      %p80 = por %p78, %p79
      %p81 = scmp.ne.s32.totalorder %s69, %s70
      %p82 = scmp.eq.s32.totalorder %s18, 1
      %p83 = por %p81, %p82
      %p85 = scmp.ne.s32.totalorder %s70, %s84
      %p86 = scmp.eq.s32.totalorder %s18, 0
      %p87 = por %p85, %p86
      %s88 = ssub.s32 %s12, %s19
      %p89 = scmp.eq.s32.totalorder %s88, 0
      %s91 = sadd.s32 %s90, 1
      %s92 = scalar_select %p89, %s90, %s91
      %p95 = pneg %p89
      %p96 = scmp.eq.s32.totalorder %s12, 1
      %p97 = por %p95, %p96
      %p98 = scmp.ne.s32.totalorder %s90, %s93
      %p99 = scmp.eq.s32.totalorder %s12, 0
      %p100 = por %p98, %p99
      %p101 = scmp.ne.s32.totalorder %s90, %s93
      %p102 = scmp.eq.s32.totalorder %s17, 1
      %p103 = por %p101, %p102
      %p104 = scmp.ne.s32.totalorder %s93, %s94
      %p105 = scmp.eq.s32.totalorder %s17, 0
      %p106 = por %p104, %p105
      %p107 = scmp.ne.s32.totalorder %s93, %s94
      %p108 = scmp.eq.s32.totalorder %s18, 1
      %p109 = por %p107, %p108
      %p111 = scmp.ne.s32.totalorder %s94, %s110
      %p112 = scmp.eq.s32.totalorder %s18, 0
      %p113 = por %p111, %p112
      %p114 = scmp.le.s32.totalorder 1, %s12
      %p115 = scmp.lt.s32.totalorder %s12, 3
      %p116 = pnand %p114, %p115
      %p117 = pneg %p116
      // Predicated region
      $region9: #{_lambda_.5} parent=5 // pred_check
        _
      $region10: #{_lambda_.5} parent=5 // pred_check_branch
        %119 = sbr.rel (%p116) target = $region12
      $region11: #{_lambda_.5} parent=5 // pred_region
        %s120 = ssub.s32 %s12, 1
        // Predicated region
        $region13: #{_lambda_.5} parent=11 // pred_check
          %p121 = pneg %p59
        $region14: #{_lambda_.5} parent=11 // pred_check_branch
          %123 = sbr.rel (%p121) target = $region16
        $region15: #{_lambda_.5} parent=11 // pred_region
          _
        $region16: #{_lambda_.5} parent=11 // pred_fallthru
          _
        // Predicated region
        $region17: #{_lambda_.5} parent=11 // pred_check
          %p124 = pneg %p80
        $region18: #{_lambda_.5} parent=11 // pred_check_branch
          %126 = sbr.rel (%p124) target = $region20
        $region19: #{_lambda_.5} parent=11 // pred_region
          _
        $region20: #{_lambda_.5} parent=11 // pred_fallthru
          _
      $region12: #{_lambda_.5} parent=5 // pred_fallthru
        _
      %p127 = scmp.lt.s32.totalorder %s12, 2
      // Predicated region
      $region21: #{_lambda_.5} parent=5 // pred_check
        %p128 = pneg %p127
      $region22: #{_lambda_.5} parent=5 // pred_check_branch
        %130 = sbr.rel (%p128) target = $region24
      $region23: #{_lambda_.5} parent=5 // pred_region
        // Predicated region
        $region25: #{_lambda_.5} parent=23 // pred_check
          %p131 = pneg %p32
        $region26: #{_lambda_.5} parent=23 // pred_check_branch
          %133 = sbr.rel (%p131) target = $region28
        $region27: #{_lambda_.5} parent=23 // pred_region
          %s134 = smul.u32 2, %s12
          %p135 = scmp.lt.s32.totalorder %s134, 3
          %s136 = scalar_select %p135, %s134, 3
          %s137 = smul.addr %s136, 4
          %s138 = smul.addr %s137, 8
          %s139 = scalar_lea.vmem %s0, %s138
          %s140 = smul.u32 2, %s12
        $region28: #{_lambda_.5} parent=23 // pred_fallthru
          _
      $region24: #{_lambda_.5} parent=5 // pred_fallthru
        _
      %p141 = scmp.le.s32.totalorder 1, %s12
      %p142 = scmp.lt.s32.totalorder %s12, 3
      %p143 = pnand %p141, %p142
      %p144 = pneg %p143
      // Predicated region
      $region29: #{_lambda_.5} parent=5 // pred_check
        _
      $region30: #{_lambda_.5} parent=5 // pred_check_branch
        %146 = sbr.rel (%p143) target = $region32
      $region31: #{_lambda_.5} parent=5 // pred_region
        %s147 = ssub.s32 %s12, 1
        %s148 = smul.u32 2, %s17
        %p149 = scmp.lt.s32.totalorder %s148, 3
        %s150 = scalar_select %p149, %s148, 3
        %s151 = smul.addr %s150, 4
        %s152 = smul.addr %s151, 8
        %s153 = scalar_lea.vmem %s0, %s152
        %p154 = pneg %p38
        %p155 = pneg %p35
        %p156 = pneg %p59
        %p157 = pneg %p56
        %p158 = pneg %p80
        %p159 = pneg %p77
        %p160 = pneg %p106
        %p161 = pneg %p103
        %s162 = sand.u32 %s93, 1
        %s163 = scalar_lea.sflag [#allocation3], %s162
        %s164 = sand.u32 %s93, 1
        %s165 = smul.addr %s164, 16
        %s166 = scalar_lea.vmem [#allocation2], %s165
        %s167 = smul.u32 2, %s17
        %p168 = scmp.lt.s32.totalorder %s167, 3
        %s169 = scalar_select %p168, %s167, 3
        %s170 = smul.addr %s169, 4
        %s171 = smul.addr %s170, 8
        %s172 = scalar_lea.vmem %s0, %s171
        %s173 = smul.u32 2, %s17
        %s174 = smul.u32 2, %s17
        %v176 = vld [vmem:[%s172] sm:$0xff]
        %v177 = vld [vmem:[%s172 + $0x8] sm:$0xff]
        %v178 = vld [vmem:[%s172 + $0x10] sm:$0x7]
        %v179 = vld [vmem:[%s172 + $0x18] sm:$0x7]
        %v180 = vld [vmem:[%s172 + $0x20] sm:$0xff]
        %v181 = vld [vmem:[%s172 + $0x28] sm:$0xff]
        %v182 = vld [vmem:[%s172 + $0x30] sm:$0x7]
        %v183 = vld [vmem:[%s172 + $0x38] sm:$0x7]
        %v184 = vpack.c.bf16 %v178, %v176
        %v185 = vpack.c.bf16 %v179, %v177
        %v186 = vpack.c.bf16 %v182, %v180
        %v187 = vpack.c.bf16 %v183, %v181
        %v192 = vunpack.c.l.b16 %v184
        %v193 = vunpack.c.l.b16 %v185
        %v194 = vunpack.c.l.b16 %v186
        %v195 = vunpack.c.l.b16 %v187
        %v196 = vld [vmem:[%s1] sm:$0xff]
        %v197 = vld [vmem:[%s1 + $0x8] sm:$0xff]
        %v198 = vld [vmem:[%s1 + $0x10] sm:$0xff]
        %v199 = vld [vmem:[%s1 + $0x18] sm:$0xff]
        %v200 = vld [vmem:[%s1 + $0x20] sm:$0xff]
        %v201 = vld [vmem:[%s1 + $0x28] sm:$0xff]
        %v202 = vld [vmem:[%s1 + $0x30] sm:$0xff]
        %v203 = vld [vmem:[%s1 + $0x38] sm:$0xff]
        %v204 = vld [vmem:[%s1 + $0x40] sm:$0xff]
        %v205 = vld [vmem:[%s1 + $0x48] sm:$0xff]
        %v206 = vld [vmem:[%s1 + $0x50] sm:$0xff]
        %v207 = vld [vmem:[%s1 + $0x58] sm:$0xff]
        %v208 = vld [vmem:[%s1 + $0x60] sm:$0xff]
        %v209 = vld [vmem:[%s1 + $0x68] sm:$0xff]
        %v210 = vld [vmem:[%s1 + $0x70] sm:$0xff]
        %v211 = vld [vmem:[%s1 + $0x78] sm:$0xff]
        %v212 = vld [vmem:[%s1 + $0x80] sm:$0xff]
        %v213 = vld [vmem:[%s1 + $0x88] sm:$0xff]
        %v214 = vld [vmem:[%s1 + $0x90] sm:$0xff]
        %v215 = vld [vmem:[%s1 + $0x98] sm:$0xff]
        %v216 = vld [vmem:[%s1 + $0xa0] sm:$0xff]
        %v217 = vld [vmem:[%s1 + $0xa8] sm:$0xff]
        %v218 = vld [vmem:[%s1 + $0xb0] sm:$0xff]
        %v219 = vld [vmem:[%s1 + $0xb8] sm:$0xff]
        %v220 = vld [vmem:[%s1 + $0xc0] sm:$0xff]
        %v221 = vld [vmem:[%s1 + $0xc8] sm:$0xff]
        %v222 = vld [vmem:[%s1 + $0xd0] sm:$0xff]
        %v223 = vld [vmem:[%s1 + $0xd8] sm:$0xff]
        %v224 = vld [vmem:[%s1 + $0xe0] sm:$0xff]
        %v225 = vld [vmem:[%s1 + $0xe8] sm:$0xff]
        %v226 = vld [vmem:[%s1 + $0xf0] sm:$0xff]
        %v227 = vld [vmem:[%s1 + $0xf8] sm:$0xff]
        %v228 = vld [vmem:[%s1 + $0x100] sm:$0xff]
        %v229 = vld [vmem:[%s1 + $0x108] sm:$0xff]
        %v230 = vld [vmem:[%s1 + $0x110] sm:$0xff]
        %v231 = vld [vmem:[%s1 + $0x118] sm:$0xff]
        %v232 = vld [vmem:[%s1 + $0x120] sm:$0xff]
        %v233 = vld [vmem:[%s1 + $0x128] sm:$0xff]
        %v234 = vld [vmem:[%s1 + $0x130] sm:$0xff]
        %v235 = vld [vmem:[%s1 + $0x138] sm:$0xff]
        %v236 = vld [vmem:[%s1 + $0x140] sm:$0xff]
        %v237 = vld [vmem:[%s1 + $0x148] sm:$0xff]
        %v238 = vld [vmem:[%s1 + $0x150] sm:$0xff]
        %v239 = vld [vmem:[%s1 + $0x158] sm:$0xff]
        %v240 = vld [vmem:[%s1 + $0x160] sm:$0xff]
        %v241 = vld [vmem:[%s1 + $0x168] sm:$0xff]
        %v242 = vld [vmem:[%s1 + $0x170] sm:$0xff]
        %v243 = vld [vmem:[%s1 + $0x178] sm:$0xff]
        %v244 = vld [vmem:[%s1 + $0x180] sm:$0xff]
        %v245 = vld [vmem:[%s1 + $0x188] sm:$0xff]
        %v246 = vld [vmem:[%s1 + $0x190] sm:$0xff]
        %v247 = vld [vmem:[%s1 + $0x198] sm:$0xff]
        %v248 = vld [vmem:[%s1 + $0x1a0] sm:$0xff]
        %v249 = vld [vmem:[%s1 + $0x1a8] sm:$0xff]
        %v250 = vld [vmem:[%s1 + $0x1b0] sm:$0xff]
        %v251 = vld [vmem:[%s1 + $0x1b8] sm:$0xff]
        %v252 = vld [vmem:[%s1 + $0x1c0] sm:$0xff]
        %v253 = vld [vmem:[%s1 + $0x1c8] sm:$0xff]
        %v254 = vld [vmem:[%s1 + $0x1d0] sm:$0xff]
        %v255 = vld [vmem:[%s1 + $0x1d8] sm:$0xff]
        %v256 = vld [vmem:[%s1 + $0x1e0] sm:$0xff]
        %v257 = vld [vmem:[%s1 + $0x1e8] sm:$0xff]
        %v258 = vld [vmem:[%s1 + $0x1f0] sm:$0xff]
        %v259 = vld [vmem:[%s1 + $0x1f8] sm:$0xff]
        %v260 = vld [vmem:[%s1 + $0x200] sm:$0xff]
        %v261 = vld [vmem:[%s1 + $0x208] sm:$0xff]
        %v262 = vld [vmem:[%s1 + $0x210] sm:$0xff]
        %v263 = vld [vmem:[%s1 + $0x218] sm:$0xff]
        %v264 = vld [vmem:[%s1 + $0x220] sm:$0xff]
        %v265 = vld [vmem:[%s1 + $0x228] sm:$0xff]
        %v266 = vld [vmem:[%s1 + $0x230] sm:$0xff]
        %v267 = vld [vmem:[%s1 + $0x238] sm:$0xff]
        %v268 = vld [vmem:[%s1 + $0x240] sm:$0xff]
        %v269 = vld [vmem:[%s1 + $0x248] sm:$0xff]
        %v270 = vld [vmem:[%s1 + $0x250] sm:$0xff]
        %v271 = vld [vmem:[%s1 + $0x258] sm:$0xff]
        %v272 = vld [vmem:[%s1 + $0x260] sm:$0xff]
        %v273 = vld [vmem:[%s1 + $0x268] sm:$0xff]
        %v274 = vld [vmem:[%s1 + $0x270] sm:$0xff]
        %v275 = vld [vmem:[%s1 + $0x278] sm:$0xff]
        %v276 = vld [vmem:[%s1 + $0x280] sm:$0xff]
        %v277 = vld [vmem:[%s1 + $0x288] sm:$0xff]
        %v278 = vld [vmem:[%s1 + $0x290] sm:$0xff]
        %v279 = vld [vmem:[%s1 + $0x298] sm:$0xff]
        %v280 = vld [vmem:[%s1 + $0x2a0] sm:$0xff]
        %v281 = vld [vmem:[%s1 + $0x2a8] sm:$0xff]
        %v282 = vld [vmem:[%s1 + $0x2b0] sm:$0xff]
        %v283 = vld [vmem:[%s1 + $0x2b8] sm:$0xff]
        %v284 = vld [vmem:[%s1 + $0x2c0] sm:$0xff]
        %v285 = vld [vmem:[%s1 + $0x2c8] sm:$0xff]
        %v286 = vld [vmem:[%s1 + $0x2d0] sm:$0xff]
        %v287 = vld [vmem:[%s1 + $0x2d8] sm:$0xff]
        %v288 = vld [vmem:[%s1 + $0x2e0] sm:$0xff]
        %v289 = vld [vmem:[%s1 + $0x2e8] sm:$0xff]
        %v290 = vld [vmem:[%s1 + $0x2f0] sm:$0xff]
        %v291 = vld [vmem:[%s1 + $0x2f8] sm:$0xff]
        %v292 = vld [vmem:[%s1 + $0x300] sm:$0xff]
        %v293 = vld [vmem:[%s1 + $0x308] sm:$0xff]
        %v294 = vld [vmem:[%s1 + $0x310] sm:$0xff]
        %v295 = vld [vmem:[%s1 + $0x318] sm:$0xff]
        %v296 = vld [vmem:[%s1 + $0x320] sm:$0xff]
        %v297 = vld [vmem:[%s1 + $0x328] sm:$0xff]
        %v298 = vld [vmem:[%s1 + $0x330] sm:$0xff]
        %v299 = vld [vmem:[%s1 + $0x338] sm:$0xff]
        %v300 = vld [vmem:[%s1 + $0x340] sm:$0xff]
        %v301 = vld [vmem:[%s1 + $0x348] sm:$0xff]
        %v302 = vld [vmem:[%s1 + $0x350] sm:$0xff]
        %v303 = vld [vmem:[%s1 + $0x358] sm:$0xff]
        %v304 = vld [vmem:[%s1 + $0x360] sm:$0xff]
        %v305 = vld [vmem:[%s1 + $0x368] sm:$0xff]
        %v306 = vld [vmem:[%s1 + $0x370] sm:$0xff]
        %v307 = vld [vmem:[%s1 + $0x378] sm:$0xff]
        %v308 = vld [vmem:[%s1 + $0x380] sm:$0xff]
        %v309 = vld [vmem:[%s1 + $0x388] sm:$0xff]
        %v310 = vld [vmem:[%s1 + $0x390] sm:$0xff]
        %v311 = vld [vmem:[%s1 + $0x398] sm:$0xff]
        %v312 = vld [vmem:[%s1 + $0x3a0] sm:$0xff]
        %v313 = vld [vmem:[%s1 + $0x3a8] sm:$0xff]
        %v314 = vld [vmem:[%s1 + $0x3b0] sm:$0xff]
        %v315 = vld [vmem:[%s1 + $0x3b8] sm:$0xff]
        %v316 = vld [vmem:[%s1 + $0x3c0] sm:$0xff]
        %v317 = vld [vmem:[%s1 + $0x3c8] sm:$0xff]
        %v318 = vld [vmem:[%s1 + $0x3d0] sm:$0xff]
        %v319 = vld [vmem:[%s1 + $0x3d8] sm:$0xff]
        %v320 = vld [vmem:[%s1 + $0x3e0] sm:$0xff]
        %v321 = vld [vmem:[%s1 + $0x3e8] sm:$0xff]
        %v322 = vld [vmem:[%s1 + $0x3f0] sm:$0xff]
        %v323 = vld [vmem:[%s1 + $0x3f8] sm:$0xff]
        %v324 = vld [vmem:[%s1 + $0x400] sm:$0xff]
        %v325 = vld [vmem:[%s1 + $0x408] sm:$0xff]
        %v326 = vld [vmem:[%s1 + $0x410] sm:$0xff]
        %v327 = vld [vmem:[%s1 + $0x418] sm:$0xff]
        %v328 = vld [vmem:[%s1 + $0x420] sm:$0xff]
        %v329 = vld [vmem:[%s1 + $0x428] sm:$0xff]
        %v330 = vld [vmem:[%s1 + $0x430] sm:$0xff]
        %v331 = vld [vmem:[%s1 + $0x438] sm:$0xff]
        %v332 = vld [vmem:[%s1 + $0x440] sm:$0xff]
        %v333 = vld [vmem:[%s1 + $0x448] sm:$0xff]
        %v334 = vld [vmem:[%s1 + $0x450] sm:$0xff]
        %v335 = vld [vmem:[%s1 + $0x458] sm:$0xff]
        %v336 = vld [vmem:[%s1 + $0x460] sm:$0xff]
        %v337 = vld [vmem:[%s1 + $0x468] sm:$0xff]
        %v338 = vld [vmem:[%s1 + $0x470] sm:$0xff]
        %v339 = vld [vmem:[%s1 + $0x478] sm:$0xff]
        %v340 = vld [vmem:[%s1 + $0x480] sm:$0xff]
        %v341 = vld [vmem:[%s1 + $0x488] sm:$0xff]
        %v342 = vld [vmem:[%s1 + $0x490] sm:$0xff]
        %v343 = vld [vmem:[%s1 + $0x498] sm:$0xff]
        %v344 = vld [vmem:[%s1 + $0x4a0] sm:$0xff]
        %v345 = vld [vmem:[%s1 + $0x4a8] sm:$0xff]
        %v346 = vld [vmem:[%s1 + $0x4b0] sm:$0xff]
        %v347 = vld [vmem:[%s1 + $0x4b8] sm:$0xff]
        %v348 = vld [vmem:[%s1 + $0x4c0] sm:$0xff]
        %v349 = vld [vmem:[%s1 + $0x4c8] sm:$0xff]
        %v350 = vld [vmem:[%s1 + $0x4d0] sm:$0xff]
        %v351 = vld [vmem:[%s1 + $0x4d8] sm:$0xff]
        %v352 = vld [vmem:[%s1 + $0x4e0] sm:$0xff]
        %v353 = vld [vmem:[%s1 + $0x4e8] sm:$0xff]
        %v354 = vld [vmem:[%s1 + $0x4f0] sm:$0xff]
        %v355 = vld [vmem:[%s1 + $0x4f8] sm:$0xff]
        %v356 = vunpack.c.h.b16 %v184
        %v357 = vunpack.c.h.b16 %v185
        %v358 = vunpack.c.h.b16 %v186
        %v359 = vunpack.c.h.b16 %v187
        %v360 = vpack.c.b16 %v193, %v192
        %v361 = vpack.c.b16 %v357, %v356
        %v362 = vpack.c.b16 %v195, %v194
        %v363 = vpack.c.b16 %v359, %v358
        %vm364 = vsmask.f32 3328
        %vm365 = vsmask.f32 7440
        %vm366 = vmor %vm364, %vm365
        %v368 = vshrl.u32 %v360, 16
        %v370 = vrot.slane %v368, 4
        %v371 = vshll.u32 %v360, 16
        %v373 = vrot.slane %v371, 5
        %v374 = vor.u32 %v370, %v373
        %v375 = vrot.slane %v374, 4
        %v377 = vshll.u32 %v361, 16
        %v379 = vrot.slane %v377, 5
        %v380 = vsel %vm366, %v375, %v379
        %v382 = vshrl.u32 %v362, 16
        %v384 = vrot.slane %v382, 4
        %v385 = vshll.u32 %v362, 16
        %v387 = vrot.slane %v385, 5
        %v388 = vor.u32 %v384, %v387
        %v389 = vrot.slane %v388, 4
        %v391 = vshll.u32 %v363, 16
        %v393 = vrot.slane %v391, 5
        %v394 = vsel %vm366, %v389, %v393
        %v395 = vld [vmem:[%s1 + $0x500] sm:$0xff]
        %v396 = vld [vmem:[%s1 + $0x508] sm:$0xff]
        %v397 = vld [vmem:[%s1 + $0x510] sm:$0xff]
        %v398 = vld [vmem:[%s1 + $0x518] sm:$0xff]
        %v399 = vld [vmem:[%s1 + $0x520] sm:$0xff]
        %v400 = vld [vmem:[%s1 + $0x528] sm:$0xff]
        %v401 = vld [vmem:[%s1 + $0x530] sm:$0xff]
        %v402 = vld [vmem:[%s1 + $0x538] sm:$0xff]
        %v403 = vld [vmem:[%s1 + $0x540] sm:$0xff]
        %v404 = vld [vmem:[%s1 + $0x548] sm:$0xff]
        %v405 = vld [vmem:[%s1 + $0x550] sm:$0xff]
        %v406 = vld [vmem:[%s1 + $0x558] sm:$0xff]
        %v407 = vld [vmem:[%s1 + $0x560] sm:$0xff]
        %v408 = vld [vmem:[%s1 + $0x568] sm:$0xff]
        %v409 = vld [vmem:[%s1 + $0x570] sm:$0xff]
        %v410 = vld [vmem:[%s1 + $0x578] sm:$0xff]
        %v411 = vld [vmem:[%s1 + $0x580] sm:$0xff]
        %v412 = vld [vmem:[%s1 + $0x588] sm:$0xff]
        %v413 = vld [vmem:[%s1 + $0x590] sm:$0xff]
        %v414 = vld [vmem:[%s1 + $0x598] sm:$0xff]
        %v415 = vld [vmem:[%s1 + $0x5a0] sm:$0xff]
        %v416 = vld [vmem:[%s1 + $0x5a8] sm:$0xff]
        %v417 = vld [vmem:[%s1 + $0x5b0] sm:$0xff]
        %v418 = vld [vmem:[%s1 + $0x5b8] sm:$0xff]
        %v419 = vld [vmem:[%s1 + $0x5c0] sm:$0xff]
        %v420 = vld [vmem:[%s1 + $0x5c8] sm:$0xff]
        %v421 = vld [vmem:[%s1 + $0x5d0] sm:$0xff]
        %v422 = vld [vmem:[%s1 + $0x5d8] sm:$0xff]
        %v423 = vld [vmem:[%s1 + $0x5e0] sm:$0xff]
        %v424 = vld [vmem:[%s1 + $0x5e8] sm:$0xff]
        %v425 = vld [vmem:[%s1 + $0x5f0] sm:$0xff]
        %v426 = vld [vmem:[%s1 + $0x5f8] sm:$0xff]
        %v427 = vld [vmem:[%s1 + $0x600] sm:$0xff]
        %v428 = vld [vmem:[%s1 + $0x608] sm:$0xff]
        %v429 = vld [vmem:[%s1 + $0x610] sm:$0xff]
        %v430 = vld [vmem:[%s1 + $0x618] sm:$0xff]
        %v431 = vld [vmem:[%s1 + $0x620] sm:$0xff]
        %v432 = vld [vmem:[%s1 + $0x628] sm:$0xff]
        %v433 = vld [vmem:[%s1 + $0x630] sm:$0xff]
        %v434 = vld [vmem:[%s1 + $0x638] sm:$0xff]
        %v435 = vld [vmem:[%s1 + $0x640] sm:$0xff]
        %v436 = vld [vmem:[%s1 + $0x648] sm:$0xff]
        %v437 = vld [vmem:[%s1 + $0x650] sm:$0xff]
        %v438 = vld [vmem:[%s1 + $0x658] sm:$0xff]
        %v439 = vld [vmem:[%s1 + $0x660] sm:$0xff]
        %v440 = vld [vmem:[%s1 + $0x668] sm:$0xff]
        %v441 = vld [vmem:[%s1 + $0x670] sm:$0xff]
        %v442 = vld [vmem:[%s1 + $0x678] sm:$0xff]
        %v443 = vld [vmem:[%s1 + $0x680] sm:$0xff]
        %v444 = vld [vmem:[%s1 + $0x688] sm:$0xff]
        %v445 = vld [vmem:[%s1 + $0x690] sm:$0xff]
        %v446 = vld [vmem:[%s1 + $0x698] sm:$0xff]
        %v447 = vld [vmem:[%s1 + $0x6a0] sm:$0xff]
        %v448 = vld [vmem:[%s1 + $0x6a8] sm:$0xff]
        %v449 = vld [vmem:[%s1 + $0x6b0] sm:$0xff]
        %v450 = vld [vmem:[%s1 + $0x6b8] sm:$0xff]
        %v451 = vld [vmem:[%s1 + $0x6c0] sm:$0xff]
        %v452 = vld [vmem:[%s1 + $0x6c8] sm:$0xff]
        %v453 = vld [vmem:[%s1 + $0x6d0] sm:$0xff]
        %v454 = vld [vmem:[%s1 + $0x6d8] sm:$0xff]
        %v455 = vld [vmem:[%s1 + $0x6e0] sm:$0xff]
        %v456 = vld [vmem:[%s1 + $0x6e8] sm:$0xff]
        %v457 = vld [vmem:[%s1 + $0x6f0] sm:$0xff]
        %v458 = vld [vmem:[%s1 + $0x6f8] sm:$0xff]
        %v459 = vld [vmem:[%s1 + $0x700] sm:$0xff]
        %v460 = vld [vmem:[%s1 + $0x708] sm:$0xff]
        %v461 = vld [vmem:[%s1 + $0x710] sm:$0xff]
        %v462 = vld [vmem:[%s1 + $0x718] sm:$0xff]
        %v463 = vld [vmem:[%s1 + $0x720] sm:$0xff]
        %v464 = vld [vmem:[%s1 + $0x728] sm:$0xff]
        %v465 = vld [vmem:[%s1 + $0x730] sm:$0xff]
        %v466 = vld [vmem:[%s1 + $0x738] sm:$0xff]
        %v467 = vld [vmem:[%s1 + $0x740] sm:$0xff]
        %v468 = vld [vmem:[%s1 + $0x748] sm:$0xff]
        %v469 = vld [vmem:[%s1 + $0x750] sm:$0xff]
        %v470 = vld [vmem:[%s1 + $0x758] sm:$0xff]
        %v471 = vld [vmem:[%s1 + $0x760] sm:$0xff]
        %v472 = vld [vmem:[%s1 + $0x768] sm:$0xff]
        %v473 = vld [vmem:[%s1 + $0x770] sm:$0xff]
        %v474 = vld [vmem:[%s1 + $0x778] sm:$0xff]
        %v475 = vld [vmem:[%s1 + $0x780] sm:$0xff]
        %v476 = vld [vmem:[%s1 + $0x788] sm:$0xff]
        %v477 = vld [vmem:[%s1 + $0x790] sm:$0xff]
        %v478 = vld [vmem:[%s1 + $0x798] sm:$0xff]
        %v479 = vld [vmem:[%s1 + $0x7a0] sm:$0xff]
        %v480 = vld [vmem:[%s1 + $0x7a8] sm:$0xff]
        %v481 = vld [vmem:[%s1 + $0x7b0] sm:$0xff]
        %v482 = vld [vmem:[%s1 + $0x7b8] sm:$0xff]
        %v483 = vld [vmem:[%s1 + $0x7c0] sm:$0xff]
        %v484 = vld [vmem:[%s1 + $0x7c8] sm:$0xff]
        %v485 = vld [vmem:[%s1 + $0x7d0] sm:$0xff]
        %v486 = vld [vmem:[%s1 + $0x7d8] sm:$0xff]
        %v487 = vld [vmem:[%s1 + $0x7e0] sm:$0xff]
        %v488 = vld [vmem:[%s1 + $0x7e8] sm:$0xff]
        %v489 = vld [vmem:[%s1 + $0x7f0] sm:$0xff]
        %v490 = vld [vmem:[%s1 + $0x7f8] sm:$0xff]
        %v491 = vld [vmem:[%s1 + $0x800] sm:$0xff]
        %v492 = vld [vmem:[%s1 + $0x808] sm:$0xff]
        %v493 = vld [vmem:[%s1 + $0x810] sm:$0xff]
        %v494 = vld [vmem:[%s1 + $0x818] sm:$0xff]
        %v495 = vld [vmem:[%s1 + $0x820] sm:$0xff]
        %v496 = vld [vmem:[%s1 + $0x828] sm:$0xff]
        %v497 = vld [vmem:[%s1 + $0x830] sm:$0xff]
        %v498 = vld [vmem:[%s1 + $0x838] sm:$0xff]
        %v499 = vld [vmem:[%s1 + $0x840] sm:$0xff]
        %v500 = vld [vmem:[%s1 + $0x848] sm:$0xff]
        %v501 = vld [vmem:[%s1 + $0x850] sm:$0xff]
        %v502 = vld [vmem:[%s1 + $0x858] sm:$0xff]
        %v503 = vld [vmem:[%s1 + $0x860] sm:$0xff]
        %v504 = vld [vmem:[%s1 + $0x868] sm:$0xff]
        %v505 = vld [vmem:[%s1 + $0x870] sm:$0xff]
        %v506 = vld [vmem:[%s1 + $0x878] sm:$0xff]
        %v507 = vld [vmem:[%s1 + $0x880] sm:$0xff]
        %v508 = vld [vmem:[%s1 + $0x888] sm:$0xff]
        %v509 = vld [vmem:[%s1 + $0x890] sm:$0xff]
        %v510 = vld [vmem:[%s1 + $0x898] sm:$0xff]
        %v511 = vld [vmem:[%s1 + $0x8a0] sm:$0xff]
        %v512 = vld [vmem:[%s1 + $0x8a8] sm:$0xff]
        %v513 = vld [vmem:[%s1 + $0x8b0] sm:$0xff]
        %v514 = vld [vmem:[%s1 + $0x8b8] sm:$0xff]
        %v515 = vld [vmem:[%s1 + $0x8c0] sm:$0xff]
        %v516 = vld [vmem:[%s1 + $0x8c8] sm:$0xff]
        %v517 = vld [vmem:[%s1 + $0x8d0] sm:$0xff]
        %v518 = vld [vmem:[%s1 + $0x8d8] sm:$0xff]
        %v519 = vld [vmem:[%s1 + $0x8e0] sm:$0xff]
        %v520 = vld [vmem:[%s1 + $0x8e8] sm:$0xff]
        %v521 = vld [vmem:[%s1 + $0x8f0] sm:$0xff]
        %v522 = vld [vmem:[%s1 + $0x8f8] sm:$0xff]
        %v523 = vld [vmem:[%s1 + $0x900] sm:$0xff]
        %v524 = vld [vmem:[%s1 + $0x908] sm:$0xff]
        %v525 = vld [vmem:[%s1 + $0x910] sm:$0xff]
        %v526 = vld [vmem:[%s1 + $0x918] sm:$0xff]
        %v527 = vld [vmem:[%s1 + $0x920] sm:$0xff]
        %v528 = vld [vmem:[%s1 + $0x928] sm:$0xff]
        %v529 = vld [vmem:[%s1 + $0x930] sm:$0xff]
        %v530 = vld [vmem:[%s1 + $0x938] sm:$0xff]
        %v531 = vld [vmem:[%s1 + $0x940] sm:$0xff]
        %v532 = vld [vmem:[%s1 + $0x948] sm:$0xff]
        %v533 = vld [vmem:[%s1 + $0x950] sm:$0xff]
        %v534 = vld [vmem:[%s1 + $0x958] sm:$0xff]
        %v535 = vld [vmem:[%s1 + $0x960] sm:$0xff]
        %v536 = vld [vmem:[%s1 + $0x968] sm:$0xff]
        %v537 = vld [vmem:[%s1 + $0x970] sm:$0xff]
        %v538 = vld [vmem:[%s1 + $0x978] sm:$0xff]
        %v539 = vld [vmem:[%s1 + $0x980] sm:$0xff]
        %v540 = vld [vmem:[%s1 + $0x988] sm:$0xff]
        %v541 = vld [vmem:[%s1 + $0x990] sm:$0xff]
        %v542 = vld [vmem:[%s1 + $0x998] sm:$0xff]
        %v543 = vld [vmem:[%s1 + $0x9a0] sm:$0xff]
        %v544 = vld [vmem:[%s1 + $0x9a8] sm:$0xff]
        %v545 = vld [vmem:[%s1 + $0x9b0] sm:$0xff]
        %v546 = vld [vmem:[%s1 + $0x9b8] sm:$0xff]
        %v547 = vld [vmem:[%s1 + $0x9c0] sm:$0xff]
        %v548 = vld [vmem:[%s1 + $0x9c8] sm:$0xff]
        %v549 = vld [vmem:[%s1 + $0x9d0] sm:$0xff]
        %v550 = vld [vmem:[%s1 + $0x9d8] sm:$0xff]
        %v551 = vld [vmem:[%s1 + $0x9e0] sm:$0xff]
        %v552 = vld [vmem:[%s1 + $0x9e8] sm:$0xff]
        %v553 = vld [vmem:[%s1 + $0x9f0] sm:$0xff]
        %v554 = vld [vmem:[%s1 + $0x9f8] sm:$0xff]
        %v555 = vunpack.c.l.b16 %v380
        %v556 = vunpack.c.h.b16 %v380
        %v557 = vunpack.c.l.b16 %v394
        %v558 = vunpack.c.h.b16 %v394
        %v559 = vpack.c.b16 %v557, %v555
        %v560 = vpack.c.b16 %v558, %v556
        %v723 = vunpack.c.l.b16 %v395
        %v724 = vunpack.c.h.b16 %v395
        %v725 = vunpack.c.l.b16 %v396
        %v726 = vunpack.c.h.b16 %v396
        %v727 = vunpack.c.l.b16 %v397
        %v728 = vunpack.c.h.b16 %v397
        %v729 = vunpack.c.l.b16 %v398
        %v730 = vunpack.c.h.b16 %v398
        %v731 = vunpack.c.l.b16 %v399
        %v732 = vunpack.c.h.b16 %v399
        %v733 = vunpack.c.l.b16 %v400
        %v734 = vunpack.c.h.b16 %v400
        %v735 = vunpack.c.l.b16 %v401
        %v736 = vunpack.c.h.b16 %v401
        %v737 = vunpack.c.l.b16 %v402
        %v738 = vunpack.c.h.b16 %v402
        %v739 = vunpack.c.l.b16 %v403
        %v740 = vunpack.c.h.b16 %v403
        %v741 = vunpack.c.l.b16 %v404
        %v742 = vunpack.c.h.b16 %v404
        %v743 = vunpack.c.l.b16 %v405
        %v744 = vunpack.c.h.b16 %v405
        %v745 = vunpack.c.l.b16 %v406
        %v746 = vunpack.c.h.b16 %v406
        %v747 = vunpack.c.l.b16 %v407
        %v748 = vunpack.c.h.b16 %v407
        %v749 = vunpack.c.l.b16 %v408
        %v750 = vunpack.c.h.b16 %v408
        %v751 = vunpack.c.l.b16 %v409
        %v752 = vunpack.c.h.b16 %v409
        %v753 = vunpack.c.l.b16 %v410
        %v754 = vunpack.c.h.b16 %v410
        %v755 = vunpack.c.l.b16 %v411
        %v756 = vunpack.c.h.b16 %v411
        %v757 = vunpack.c.l.b16 %v412
        %v758 = vunpack.c.h.b16 %v412
        %v759 = vunpack.c.l.b16 %v413
        %v760 = vunpack.c.h.b16 %v413
        %v761 = vunpack.c.l.b16 %v414
        %v762 = vunpack.c.h.b16 %v414
        %v763 = vunpack.c.l.b16 %v415
        %v764 = vunpack.c.h.b16 %v415
        %v765 = vunpack.c.l.b16 %v416
        %v766 = vunpack.c.h.b16 %v416
        %v767 = vunpack.c.l.b16 %v417
        %v768 = vunpack.c.h.b16 %v417
        %v769 = vunpack.c.l.b16 %v418
        %v770 = vunpack.c.h.b16 %v418
        %v771 = vunpack.c.l.b16 %v419
        %v772 = vunpack.c.h.b16 %v419
        %v773 = vunpack.c.l.b16 %v420
        %v774 = vunpack.c.h.b16 %v420
        %v775 = vunpack.c.l.b16 %v421
        %v776 = vunpack.c.h.b16 %v421
        %v777 = vunpack.c.l.b16 %v422
        %v778 = vunpack.c.h.b16 %v422
        %v779 = vunpack.c.l.b16 %v423
        %v780 = vunpack.c.h.b16 %v423
        %v781 = vunpack.c.l.b16 %v424
        %v782 = vunpack.c.h.b16 %v424
        %v783 = vunpack.c.l.b16 %v425
        %v784 = vunpack.c.h.b16 %v425
        %v785 = vunpack.c.l.b16 %v426
        %v786 = vunpack.c.h.b16 %v426
        %v787 = vunpack.c.l.b16 %v427
        %v788 = vunpack.c.h.b16 %v427
        %v789 = vunpack.c.l.b16 %v428
        %v790 = vunpack.c.h.b16 %v428
        %v791 = vunpack.c.l.b16 %v429
        %v792 = vunpack.c.h.b16 %v429
        %v793 = vunpack.c.l.b16 %v430
        %v794 = vunpack.c.h.b16 %v430
        %v795 = vunpack.c.l.b16 %v431
        %v796 = vunpack.c.h.b16 %v431
        %v797 = vunpack.c.l.b16 %v432
        %v798 = vunpack.c.h.b16 %v432
        %v799 = vunpack.c.l.b16 %v433
        %v800 = vunpack.c.h.b16 %v433
        %v801 = vunpack.c.l.b16 %v434
        %v802 = vunpack.c.h.b16 %v434
        %v803 = vunpack.c.l.b16 %v435
        %v804 = vunpack.c.h.b16 %v435
        %v805 = vunpack.c.l.b16 %v436
        %v806 = vunpack.c.h.b16 %v436
        %v807 = vunpack.c.l.b16 %v437
        %v808 = vunpack.c.h.b16 %v437
        %v809 = vunpack.c.l.b16 %v438
        %v810 = vunpack.c.h.b16 %v438
        %v811 = vunpack.c.l.b16 %v439
        %v812 = vunpack.c.h.b16 %v439
        %v813 = vunpack.c.l.b16 %v440
        %v814 = vunpack.c.h.b16 %v440
        %v815 = vunpack.c.l.b16 %v441
        %v816 = vunpack.c.h.b16 %v441
        %v817 = vunpack.c.l.b16 %v442
        %v818 = vunpack.c.h.b16 %v442
        %v819 = vunpack.c.l.b16 %v443
        %v820 = vunpack.c.h.b16 %v443
        %v821 = vunpack.c.l.b16 %v444
        %v822 = vunpack.c.h.b16 %v444
        %v823 = vunpack.c.l.b16 %v445
        %v824 = vunpack.c.h.b16 %v445
        %v825 = vunpack.c.l.b16 %v446
        %v826 = vunpack.c.h.b16 %v446
        %v827 = vunpack.c.l.b16 %v447
        %v828 = vunpack.c.h.b16 %v447
        %v829 = vunpack.c.l.b16 %v448
        %v830 = vunpack.c.h.b16 %v448
        %v831 = vunpack.c.l.b16 %v449
        %v832 = vunpack.c.h.b16 %v449
        %v833 = vunpack.c.l.b16 %v450
        %v834 = vunpack.c.h.b16 %v450
        %v835 = vunpack.c.l.b16 %v451
        %v836 = vunpack.c.h.b16 %v451
        %v837 = vunpack.c.l.b16 %v452
        %v838 = vunpack.c.h.b16 %v452
        %v839 = vunpack.c.l.b16 %v453
        %v840 = vunpack.c.h.b16 %v453
        %v841 = vunpack.c.l.b16 %v454
        %v842 = vunpack.c.h.b16 %v454
        %v843 = vunpack.c.l.b16 %v455
        %v844 = vunpack.c.h.b16 %v455
        %v845 = vunpack.c.l.b16 %v456
        %v846 = vunpack.c.h.b16 %v456
        %v847 = vunpack.c.l.b16 %v457
        %v848 = vunpack.c.h.b16 %v457
        %v849 = vunpack.c.l.b16 %v458
        %v850 = vunpack.c.h.b16 %v458
        %v851 = vunpack.c.l.b16 %v459
        %v852 = vunpack.c.h.b16 %v459
        %v853 = vunpack.c.l.b16 %v460
        %v854 = vunpack.c.h.b16 %v460
        %v855 = vunpack.c.l.b16 %v461
        %v856 = vunpack.c.h.b16 %v461
        %v857 = vunpack.c.l.b16 %v462
        %v858 = vunpack.c.h.b16 %v462
        %v859 = vunpack.c.l.b16 %v463
        %v860 = vunpack.c.h.b16 %v463
        %v861 = vunpack.c.l.b16 %v464
        %v862 = vunpack.c.h.b16 %v464
        %v863 = vunpack.c.l.b16 %v465
        %v864 = vunpack.c.h.b16 %v465
        %v865 = vunpack.c.l.b16 %v466
        %v866 = vunpack.c.h.b16 %v466
        %v867 = vunpack.c.l.b16 %v467
        %v868 = vunpack.c.h.b16 %v467
        %v869 = vunpack.c.l.b16 %v468
        %v870 = vunpack.c.h.b16 %v468
        %v871 = vunpack.c.l.b16 %v469
        %v872 = vunpack.c.h.b16 %v469
        %v873 = vunpack.c.l.b16 %v470
        %v874 = vunpack.c.h.b16 %v470
        %v875 = vunpack.c.l.b16 %v471
        %v876 = vunpack.c.h.b16 %v471
        %v877 = vunpack.c.l.b16 %v472
        %v878 = vunpack.c.h.b16 %v472
        %v879 = vunpack.c.l.b16 %v473
        %v880 = vunpack.c.h.b16 %v473
        %v881 = vunpack.c.l.b16 %v474
        %v882 = vunpack.c.h.b16 %v474
        %v883 = vunpack.c.l.b16 %v475
        %v884 = vunpack.c.h.b16 %v475
        %v885 = vunpack.c.l.b16 %v476
        %v886 = vunpack.c.h.b16 %v476
        %v887 = vunpack.c.l.b16 %v477
        %v888 = vunpack.c.h.b16 %v477
        %v889 = vunpack.c.l.b16 %v478
        %v890 = vunpack.c.h.b16 %v478
        %v891 = vunpack.c.l.b16 %v479
        %v892 = vunpack.c.h.b16 %v479
        %v893 = vunpack.c.l.b16 %v480
        %v894 = vunpack.c.h.b16 %v480
        %v895 = vunpack.c.l.b16 %v481
        %v896 = vunpack.c.h.b16 %v481
        %v897 = vunpack.c.l.b16 %v482
        %v898 = vunpack.c.h.b16 %v482
        %v899 = vunpack.c.l.b16 %v483
        %v900 = vunpack.c.h.b16 %v483
        %v901 = vunpack.c.l.b16 %v484
        %v902 = vunpack.c.h.b16 %v484
        %v903 = vunpack.c.l.b16 %v485
        %v904 = vunpack.c.h.b16 %v485
        %v905 = vunpack.c.l.b16 %v486
        %v906 = vunpack.c.h.b16 %v486
        %v907 = vunpack.c.l.b16 %v487
        %v908 = vunpack.c.h.b16 %v487
        %v909 = vunpack.c.l.b16 %v488
        %v910 = vunpack.c.h.b16 %v488
        %v911 = vunpack.c.l.b16 %v489
        %v912 = vunpack.c.h.b16 %v489
        %v913 = vunpack.c.l.b16 %v490
        %v914 = vunpack.c.h.b16 %v490
        %v915 = vunpack.c.l.b16 %v491
        %v916 = vunpack.c.h.b16 %v491
        %v917 = vunpack.c.l.b16 %v492
        %v918 = vunpack.c.h.b16 %v492
        %v919 = vunpack.c.l.b16 %v493
        %v920 = vunpack.c.h.b16 %v493
        %v921 = vunpack.c.l.b16 %v494
        %v922 = vunpack.c.h.b16 %v494
        %v923 = vunpack.c.l.b16 %v495
        %v924 = vunpack.c.h.b16 %v495
        %v925 = vunpack.c.l.b16 %v496
        %v926 = vunpack.c.h.b16 %v496
        %v927 = vunpack.c.l.b16 %v497
        %v928 = vunpack.c.h.b16 %v497
        %v929 = vunpack.c.l.b16 %v498
        %v930 = vunpack.c.h.b16 %v498
        %v931 = vunpack.c.l.b16 %v499
        %v932 = vunpack.c.h.b16 %v499
        %v933 = vunpack.c.l.b16 %v500
        %v934 = vunpack.c.h.b16 %v500
        %v935 = vunpack.c.l.b16 %v501
        %v936 = vunpack.c.h.b16 %v501
        %v937 = vunpack.c.l.b16 %v502
        %v938 = vunpack.c.h.b16 %v502
        %v939 = vunpack.c.l.b16 %v503
        %v940 = vunpack.c.h.b16 %v503
        %v941 = vunpack.c.l.b16 %v504
        %v942 = vunpack.c.h.b16 %v504
        %v943 = vunpack.c.l.b16 %v505
        %v944 = vunpack.c.h.b16 %v505
        %v945 = vunpack.c.l.b16 %v506
        %v946 = vunpack.c.h.b16 %v506
        %v947 = vunpack.c.l.b16 %v507
        %v948 = vunpack.c.h.b16 %v507
        %v949 = vunpack.c.l.b16 %v508
        %v950 = vunpack.c.h.b16 %v508
        %v951 = vunpack.c.l.b16 %v509
        %v952 = vunpack.c.h.b16 %v509
        %v953 = vunpack.c.l.b16 %v510
        %v954 = vunpack.c.h.b16 %v510
        %v955 = vunpack.c.l.b16 %v511
        %v956 = vunpack.c.h.b16 %v511
        %v957 = vunpack.c.l.b16 %v512
        %v958 = vunpack.c.h.b16 %v512
        %v959 = vunpack.c.l.b16 %v513
        %v960 = vunpack.c.h.b16 %v513
        %v961 = vunpack.c.l.b16 %v514
        %v962 = vunpack.c.h.b16 %v514
        %v963 = vunpack.c.l.b16 %v515
        %v964 = vunpack.c.h.b16 %v515
        %v965 = vunpack.c.l.b16 %v516
        %v966 = vunpack.c.h.b16 %v516
        %v967 = vunpack.c.l.b16 %v517
        %v968 = vunpack.c.h.b16 %v517
        %v969 = vunpack.c.l.b16 %v518
        %v970 = vunpack.c.h.b16 %v518
        %v971 = vunpack.c.l.b16 %v519
        %v972 = vunpack.c.h.b16 %v519
        %v973 = vunpack.c.l.b16 %v520
        %v974 = vunpack.c.h.b16 %v520
        %v975 = vunpack.c.l.b16 %v521
        %v976 = vunpack.c.h.b16 %v521
        %v977 = vunpack.c.l.b16 %v522
        %v978 = vunpack.c.h.b16 %v522
        %v979 = vunpack.c.l.b16 %v523
        %v980 = vunpack.c.h.b16 %v523
        %v981 = vunpack.c.l.b16 %v524
        %v982 = vunpack.c.h.b16 %v524
        %v983 = vunpack.c.l.b16 %v525
        %v984 = vunpack.c.h.b16 %v525
        %v985 = vunpack.c.l.b16 %v526
        %v986 = vunpack.c.h.b16 %v526
        %v987 = vunpack.c.l.b16 %v527
        %v988 = vunpack.c.h.b16 %v527
        %v989 = vunpack.c.l.b16 %v528
        %v990 = vunpack.c.h.b16 %v528
        %v991 = vunpack.c.l.b16 %v529
        %v992 = vunpack.c.h.b16 %v529
        %v993 = vunpack.c.l.b16 %v530
        %v994 = vunpack.c.h.b16 %v530
        %v995 = vunpack.c.l.b16 %v531
        %v996 = vunpack.c.h.b16 %v531
        %v997 = vunpack.c.l.b16 %v532
        %v998 = vunpack.c.h.b16 %v532
        %v999 = vunpack.c.l.b16 %v533
        %v1000 = vunpack.c.h.b16 %v533
        %v1001 = vunpack.c.l.b16 %v534
        %v1002 = vunpack.c.h.b16 %v534
        %v1003 = vunpack.c.l.b16 %v535
        %v1004 = vunpack.c.h.b16 %v535
        %v1005 = vunpack.c.l.b16 %v536
        %v1006 = vunpack.c.h.b16 %v536
        %v1007 = vunpack.c.l.b16 %v537
        %v1008 = vunpack.c.h.b16 %v537
        %v1009 = vunpack.c.l.b16 %v538
        %v1010 = vunpack.c.h.b16 %v538
        %v1011 = vunpack.c.l.b16 %v539
        %v1012 = vunpack.c.h.b16 %v539
        %v1013 = vunpack.c.l.b16 %v540
        %v1014 = vunpack.c.h.b16 %v540
        %v1015 = vunpack.c.l.b16 %v541
        %v1016 = vunpack.c.h.b16 %v541
        %v1017 = vunpack.c.l.b16 %v542
        %v1018 = vunpack.c.h.b16 %v542
        %v1019 = vunpack.c.l.b16 %v543
        %v1020 = vunpack.c.h.b16 %v543
        %v1021 = vunpack.c.l.b16 %v544
        %v1022 = vunpack.c.h.b16 %v544
        %v1023 = vunpack.c.l.b16 %v545
        %v1024 = vunpack.c.h.b16 %v545
        %v1025 = vunpack.c.l.b16 %v546
        %v1026 = vunpack.c.h.b16 %v546
        %v1027 = vunpack.c.l.b16 %v547
        %v1028 = vunpack.c.h.b16 %v547
        %v1029 = vunpack.c.l.b16 %v548
        %v1030 = vunpack.c.h.b16 %v548
        %v1031 = vunpack.c.l.b16 %v549
        %v1032 = vunpack.c.h.b16 %v549
        %v1033 = vunpack.c.l.b16 %v550
        %v1034 = vunpack.c.h.b16 %v550
        %v1035 = vunpack.c.l.b16 %v551
        %v1036 = vunpack.c.h.b16 %v551
        %v1037 = vunpack.c.l.b16 %v552
        %v1038 = vunpack.c.h.b16 %v552
        %v1039 = vunpack.c.l.b16 %v553
        %v1040 = vunpack.c.h.b16 %v553
        %v1041 = vunpack.c.l.b16 %v554
        %v1042 = vunpack.c.h.b16 %v554
        %v1043 = vpack.c.b16 %v733, %v723
        %v1044 = vpack.c.b16 %v734, %v724
        %v1045 = vpack.c.b16 %v735, %v725
        %v1046 = vpack.c.b16 %v736, %v726
        %v1047 = vpack.c.b16 %v737, %v727
        %v1048 = vpack.c.b16 %v738, %v728
        %v1049 = vpack.c.b16 %v739, %v729
        %v1050 = vpack.c.b16 %v740, %v730
        %v1051 = vpack.c.b16 %v741, %v731
        %v1052 = vpack.c.b16 %v742, %v732
        %v1053 = vpack.c.b16 %v753, %v743
        %v1054 = vpack.c.b16 %v754, %v744
        %v1055 = vpack.c.b16 %v755, %v745
        %v1056 = vpack.c.b16 %v756, %v746
        %v1057 = vpack.c.b16 %v757, %v747
        %v1058 = vpack.c.b16 %v758, %v748
        %v1059 = vpack.c.b16 %v759, %v749
        %v1060 = vpack.c.b16 %v760, %v750
        %v1061 = vpack.c.b16 %v761, %v751
        %v1062 = vpack.c.b16 %v762, %v752
        %v1063 = vpack.c.b16 %v773, %v763
        %v1064 = vpack.c.b16 %v774, %v764
        %v1065 = vpack.c.b16 %v775, %v765
        %v1066 = vpack.c.b16 %v776, %v766
        %v1067 = vpack.c.b16 %v777, %v767
        %v1068 = vpack.c.b16 %v778, %v768
        %v1069 = vpack.c.b16 %v779, %v769
        %v1070 = vpack.c.b16 %v780, %v770
        %v1071 = vpack.c.b16 %v781, %v771
        %v1072 = vpack.c.b16 %v782, %v772
        %v1073 = vpack.c.b16 %v793, %v783
        %v1074 = vpack.c.b16 %v794, %v784
        %v1075 = vpack.c.b16 %v795, %v785
        %v1076 = vpack.c.b16 %v796, %v786
        %v1077 = vpack.c.b16 %v797, %v787
        %v1078 = vpack.c.b16 %v798, %v788
        %v1079 = vpack.c.b16 %v799, %v789
        %v1080 = vpack.c.b16 %v800, %v790
        %v1081 = vpack.c.b16 %v801, %v791
        %v1082 = vpack.c.b16 %v802, %v792
        %v1083 = vpack.c.b16 %v813, %v803
        %v1084 = vpack.c.b16 %v814, %v804
        %v1085 = vpack.c.b16 %v815, %v805
        %v1086 = vpack.c.b16 %v816, %v806
        %v1087 = vpack.c.b16 %v817, %v807
        %v1088 = vpack.c.b16 %v818, %v808
        %v1089 = vpack.c.b16 %v819, %v809
        %v1090 = vpack.c.b16 %v820, %v810
        %v1091 = vpack.c.b16 %v821, %v811
        %v1092 = vpack.c.b16 %v822, %v812
        %v1093 = vpack.c.b16 %v833, %v823
        %v1094 = vpack.c.b16 %v834, %v824
        %v1095 = vpack.c.b16 %v835, %v825
        %v1096 = vpack.c.b16 %v836, %v826
        %v1097 = vpack.c.b16 %v837, %v827
        %v1098 = vpack.c.b16 %v838, %v828
        %v1099 = vpack.c.b16 %v839, %v829
        %v1100 = vpack.c.b16 %v840, %v830
        %v1101 = vpack.c.b16 %v841, %v831
        %v1102 = vpack.c.b16 %v842, %v832
        %v1103 = vpack.c.b16 %v853, %v843
        %v1104 = vpack.c.b16 %v854, %v844
        %v1105 = vpack.c.b16 %v855, %v845
        %v1106 = vpack.c.b16 %v856, %v846
        %v1107 = vpack.c.b16 %v857, %v847
        %v1108 = vpack.c.b16 %v858, %v848
        %v1109 = vpack.c.b16 %v859, %v849
        %v1110 = vpack.c.b16 %v860, %v850
        %v1111 = vpack.c.b16 %v861, %v851
        %v1112 = vpack.c.b16 %v862, %v852
        %v1113 = vpack.c.b16 %v873, %v863
        %v1114 = vpack.c.b16 %v874, %v864
        %v1115 = vpack.c.b16 %v875, %v865
        %v1116 = vpack.c.b16 %v876, %v866
        %v1117 = vpack.c.b16 %v877, %v867
        %v1118 = vpack.c.b16 %v878, %v868
        %v1119 = vpack.c.b16 %v879, %v869
        %v1120 = vpack.c.b16 %v880, %v870
        %v1121 = vpack.c.b16 %v881, %v871
        %v1122 = vpack.c.b16 %v882, %v872
        %v1123 = vpack.c.b16 %v893, %v883
        %v1124 = vpack.c.b16 %v894, %v884
        %v1125 = vpack.c.b16 %v895, %v885
        %v1126 = vpack.c.b16 %v896, %v886
        %v1127 = vpack.c.b16 %v897, %v887
        %v1128 = vpack.c.b16 %v898, %v888
        %v1129 = vpack.c.b16 %v899, %v889
        %v1130 = vpack.c.b16 %v900, %v890
        %v1131 = vpack.c.b16 %v901, %v891
        %v1132 = vpack.c.b16 %v902, %v892
        %v1133 = vpack.c.b16 %v913, %v903
        %v1134 = vpack.c.b16 %v914, %v904
        %v1135 = vpack.c.b16 %v915, %v905
        %v1136 = vpack.c.b16 %v916, %v906
        %v1137 = vpack.c.b16 %v917, %v907
        %v1138 = vpack.c.b16 %v918, %v908
        %v1139 = vpack.c.b16 %v919, %v909
        %v1140 = vpack.c.b16 %v920, %v910
        %v1141 = vpack.c.b16 %v921, %v911
        %v1142 = vpack.c.b16 %v922, %v912
        %v1143 = vpack.c.b16 %v933, %v923
        %v1144 = vpack.c.b16 %v934, %v924
        %v1145 = vpack.c.b16 %v935, %v925
        %v1146 = vpack.c.b16 %v936, %v926
        %v1147 = vpack.c.b16 %v937, %v927
        %v1148 = vpack.c.b16 %v938, %v928
        %v1149 = vpack.c.b16 %v939, %v929
        %v1150 = vpack.c.b16 %v940, %v930
        %v1151 = vpack.c.b16 %v941, %v931
        %v1152 = vpack.c.b16 %v942, %v932
        %v1153 = vpack.c.b16 %v953, %v943
        %v1154 = vpack.c.b16 %v954, %v944
        %v1155 = vpack.c.b16 %v955, %v945
        %v1156 = vpack.c.b16 %v956, %v946
        %v1157 = vpack.c.b16 %v957, %v947
        %v1158 = vpack.c.b16 %v958, %v948
        %v1159 = vpack.c.b16 %v959, %v949
        %v1160 = vpack.c.b16 %v960, %v950
        %v1161 = vpack.c.b16 %v961, %v951
        %v1162 = vpack.c.b16 %v962, %v952
        %v1163 = vpack.c.b16 %v973, %v963
        %v1164 = vpack.c.b16 %v974, %v964
        %v1165 = vpack.c.b16 %v975, %v965
        %v1166 = vpack.c.b16 %v976, %v966
        %v1167 = vpack.c.b16 %v977, %v967
        %v1168 = vpack.c.b16 %v978, %v968
        %v1169 = vpack.c.b16 %v979, %v969
        %v1170 = vpack.c.b16 %v980, %v970
        %v1171 = vpack.c.b16 %v981, %v971
        %v1172 = vpack.c.b16 %v982, %v972
        %v1173 = vpack.c.b16 %v993, %v983
        %v1174 = vpack.c.b16 %v994, %v984
        %v1175 = vpack.c.b16 %v995, %v985
        %v1176 = vpack.c.b16 %v996, %v986
        %v1177 = vpack.c.b16 %v997, %v987
        %v1178 = vpack.c.b16 %v998, %v988
        %v1179 = vpack.c.b16 %v999, %v989
        %v1180 = vpack.c.b16 %v1000, %v990
        %v1181 = vpack.c.b16 %v1001, %v991
        %v1182 = vpack.c.b16 %v1002, %v992
        %v1183 = vpack.c.b16 %v1013, %v1003
        %v1184 = vpack.c.b16 %v1014, %v1004
        %v1185 = vpack.c.b16 %v1015, %v1005
        %v1186 = vpack.c.b16 %v1016, %v1006
        %v1187 = vpack.c.b16 %v1017, %v1007
        %v1188 = vpack.c.b16 %v1018, %v1008
        %v1189 = vpack.c.b16 %v1019, %v1009
        %v1190 = vpack.c.b16 %v1020, %v1010
        %v1191 = vpack.c.b16 %v1021, %v1011
        %v1192 = vpack.c.b16 %v1022, %v1012
        %v1193 = vpack.c.b16 %v1033, %v1023
        %v1194 = vpack.c.b16 %v1034, %v1024
        %v1195 = vpack.c.b16 %v1035, %v1025
        %v1196 = vpack.c.b16 %v1036, %v1026
        %v1197 = vpack.c.b16 %v1037, %v1027
        %v1198 = vpack.c.b16 %v1038, %v1028
        %v1199 = vpack.c.b16 %v1039, %v1029
        %v1200 = vpack.c.b16 %v1040, %v1030
        %v1201 = vpack.c.b16 %v1041, %v1031
        %v1202 = vpack.c.b16 %v1042, %v1032
        %1363 = vmatprep.subr.bf16.mxu0 %v1044
        %1364 = vmatpush1.bf16.msra.mxu0 %v1043
        %1365 = vmatprep.subr.bf16.mxu0 %v1054
        %1366 = vmatpush1.bf16.msra.mxu0 %v1053
        %1367 = vmatprep.subr.bf16.mxu0 %v1064
        %1368 = vmatpush1.bf16.msra.mxu0 %v1063
        %1369 = vmatprep.subr.bf16.mxu0 %v1074
        %1370 = vmatpush1.bf16.msra.mxu0 %v1073
        %1371 = vmatprep.subr.bf16.mxu0 %v1084
        %1372 = vmatpush1.bf16.msra.mxu0 %v1083
        %1373 = vmatprep.subr.bf16.mxu0 %v1094
        %1374 = vmatpush1.bf16.msra.mxu0 %v1093
        %1375 = vmatprep.subr.bf16.mxu0 %v1104
        %1376 = vmatpush1.bf16.msra.mxu0 %v1103
        %1377 = vmatprep.subr.bf16.mxu0 %v1114
        %1378 = vmatpush1.bf16.msra.mxu0 %v1113
        %1379 = vmatprep.subr.bf16.mxu0 %v1124
        %1380 = vmatpush1.bf16.msra.mxu0 %v1123
        %1381 = vmatprep.subr.bf16.mxu0 %v1134
        %1382 = vmatpush1.bf16.msra.mxu0 %v1133
        %1383 = vmatprep.subr.bf16.mxu0 %v1144
        %1384 = vmatpush1.bf16.msra.mxu0 %v1143
        %1385 = vmatprep.subr.bf16.mxu0 %v1154
        %1386 = vmatpush1.bf16.msra.mxu0 %v1153
        %1387 = vmatprep.subr.bf16.mxu0 %v1164
        %1388 = vmatpush1.bf16.msra.mxu0 %v1163
        %1389 = vmatprep.subr.bf16.mxu0 %v1174
        %1390 = vmatpush1.bf16.msra.mxu0 %v1173
        %1391 = vmatprep.subr.bf16.mxu0 %v1184
        %1392 = vmatpush1.bf16.msra.mxu0 %v1183
        %1393 = vmatprep.subr.bf16.mxu0 %v1194
        %1394 = vmatpush1.bf16.msra.mxu0 %v1193
        %1395 = vmatprep.mubr.bf16.mxu0 %v560
        %1396 = vmatmul.mubr.bf16.gmra.mrb[0].mxu0 %v559
        %v1397 = vpop.f32.mrb[0].mxu0
        %v1398 = vadd.f32 0.0, %v1397
        %v1399 = vpop.f32.mrb[0].mxu0
        %v1400 = vadd.f32 0.0, %v1399
        %v1401 = vpop.f32.mrb[0].mxu0
        %v1402 = vadd.f32 0.0, %v1401
        %v1403 = vpop.f32.mrb[0].mxu0
        %v1404 = vadd.f32 0.0, %v1403
        %1405 = vdwg.mxu0
        %1406 = vmatprep.subr.bf16.mxu0 %v1046
        %1407 = vmatpush1.bf16.msra.mxu0 %v1045
        %1408 = vmatprep.subr.bf16.mxu0 %v1056
        %1409 = vmatpush1.bf16.msra.mxu0 %v1055
        %1410 = vmatprep.subr.bf16.mxu0 %v1066
        %1411 = vmatpush1.bf16.msra.mxu0 %v1065
        %1412 = vmatprep.subr.bf16.mxu0 %v1076
        %1413 = vmatpush1.bf16.msra.mxu0 %v1075
        %1414 = vmatprep.subr.bf16.mxu0 %v1086
        %1415 = vmatpush1.bf16.msra.mxu0 %v1085
        %1416 = vmatprep.subr.bf16.mxu0 %v1096
        %1417 = vmatpush1.bf16.msra.mxu0 %v1095
        %1418 = vmatprep.subr.bf16.mxu0 %v1106
        %1419 = vmatpush1.bf16.msra.mxu0 %v1105
        %1420 = vmatprep.subr.bf16.mxu0 %v1116
        %1421 = vmatpush1.bf16.msra.mxu0 %v1115
        %1422 = vmatprep.subr.bf16.mxu0 %v1126
        %1423 = vmatpush1.bf16.msra.mxu0 %v1125
        %1424 = vmatprep.subr.bf16.mxu0 %v1136
        %1425 = vmatpush1.bf16.msra.mxu0 %v1135
        %1426 = vmatprep.subr.bf16.mxu0 %v1146
        %1427 = vmatpush1.bf16.msra.mxu0 %v1145
        %1428 = vmatprep.subr.bf16.mxu0 %v1156
        %1429 = vmatpush1.bf16.msra.mxu0 %v1155
        %1430 = vmatprep.subr.bf16.mxu0 %v1166
        %1431 = vmatpush1.bf16.msra.mxu0 %v1165
        %1432 = vmatprep.subr.bf16.mxu0 %v1176
        %1433 = vmatpush1.bf16.msra.mxu0 %v1175
        %1434 = vmatprep.subr.bf16.mxu0 %v1186
        %1435 = vmatpush1.bf16.msra.mxu0 %v1185
        %1436 = vmatprep.subr.bf16.mxu0 %v1196
        %1437 = vmatpush1.bf16.msra.mxu0 %v1195
        %1438 = vmatprep.mubr.bf16.mxu0 %v560
        %1439 = vmatmul.mubr.bf16.gmra.mrb[0].mxu0 %v559
        %v1440 = vpop.f32.mrb[0].mxu0
        %v1441 = vadd.f32 0.0, %v1440
        %v1442 = vpop.f32.mrb[0].mxu0
        %v1443 = vadd.f32 0.0, %v1442
        %v1444 = vpop.f32.mrb[0].mxu0
        %v1445 = vadd.f32 0.0, %v1444
        %v1446 = vpop.f32.mrb[0].mxu0
        %v1447 = vadd.f32 0.0, %v1446
        %1448 = vdwg.mxu0
        %1449 = vmatprep.subr.bf16.mxu0 %v1048
        %1450 = vmatpush1.bf16.msra.mxu0 %v1047
        %1451 = vmatprep.subr.bf16.mxu0 %v1058
        %1452 = vmatpush1.bf16.msra.mxu0 %v1057
        %1453 = vmatprep.subr.bf16.mxu0 %v1068
        %1454 = vmatpush1.bf16.msra.mxu0 %v1067
        %1455 = vmatprep.subr.bf16.mxu0 %v1078
        %1456 = vmatpush1.bf16.msra.mxu0 %v1077
        %1457 = vmatprep.subr.bf16.mxu0 %v1088
        %1458 = vmatpush1.bf16.msra.mxu0 %v1087
        %1459 = vmatprep.subr.bf16.mxu0 %v1098
        %1460 = vmatpush1.bf16.msra.mxu0 %v1097
        %1461 = vmatprep.subr.bf16.mxu0 %v1108
        %1462 = vmatpush1.bf16.msra.mxu0 %v1107
        %1463 = vmatprep.subr.bf16.mxu0 %v1118
        %1464 = vmatpush1.bf16.msra.mxu0 %v1117
        %1465 = vmatprep.subr.bf16.mxu0 %v1128
        %1466 = vmatpush1.bf16.msra.mxu0 %v1127
        %1467 = vmatprep.subr.bf16.mxu0 %v1138
        %1468 = vmatpush1.bf16.msra.mxu0 %v1137
        %1469 = vmatprep.subr.bf16.mxu0 %v1148
        %1470 = vmatpush1.bf16.msra.mxu0 %v1147
        %1471 = vmatprep.subr.bf16.mxu0 %v1158
        %1472 = vmatpush1.bf16.msra.mxu0 %v1157
        %1473 = vmatprep.subr.bf16.mxu0 %v1168
        %1474 = vmatpush1.bf16.msra.mxu0 %v1167
        %1475 = vmatprep.subr.bf16.mxu0 %v1178
        %1476 = vmatpush1.bf16.msra.mxu0 %v1177
        %1477 = vmatprep.subr.bf16.mxu0 %v1188
        %1478 = vmatpush1.bf16.msra.mxu0 %v1187
        %1479 = vmatprep.subr.bf16.mxu0 %v1198
        %1480 = vmatpush1.bf16.msra.mxu0 %v1197
        %1481 = vmatprep.mubr.bf16.mxu0 %v560
        %1482 = vmatmul.mubr.bf16.gmra.mrb[0].mxu0 %v559
        %v1483 = vpop.f32.mrb[0].mxu0
        %v1484 = vadd.f32 0.0, %v1483
        %v1485 = vpop.f32.mrb[0].mxu0
        %v1486 = vadd.f32 0.0, %v1485
        %v1487 = vpop.f32.mrb[0].mxu0
        %v1488 = vadd.f32 0.0, %v1487
        %v1489 = vpop.f32.mrb[0].mxu0
        %v1490 = vadd.f32 0.0, %v1489
        %1491 = vdwg.mxu0
        %1492 = vmatprep.subr.bf16.mxu0 %v1050
        %1493 = vmatpush1.bf16.msra.mxu0 %v1049
        %1494 = vmatprep.subr.bf16.mxu0 %v1060
        %1495 = vmatpush1.bf16.msra.mxu0 %v1059
        %1496 = vmatprep.subr.bf16.mxu0 %v1070
        %1497 = vmatpush1.bf16.msra.mxu0 %v1069
        %1498 = vmatprep.subr.bf16.mxu0 %v1080
        %1499 = vmatpush1.bf16.msra.mxu0 %v1079
        %1500 = vmatprep.subr.bf16.mxu0 %v1090
        %1501 = vmatpush1.bf16.msra.mxu0 %v1089
        %1502 = vmatprep.subr.bf16.mxu0 %v1100
        %1503 = vmatpush1.bf16.msra.mxu0 %v1099
        %1504 = vmatprep.subr.bf16.mxu0 %v1110
        %1505 = vmatpush1.bf16.msra.mxu0 %v1109
        %1506 = vmatprep.subr.bf16.mxu0 %v1120
        %1507 = vmatpush1.bf16.msra.mxu0 %v1119
        %1508 = vmatprep.subr.bf16.mxu0 %v1130
        %1509 = vmatpush1.bf16.msra.mxu0 %v1129
        %1510 = vmatprep.subr.bf16.mxu0 %v1140
        %1511 = vmatpush1.bf16.msra.mxu0 %v1139
        %1512 = vmatprep.subr.bf16.mxu0 %v1150
        %1513 = vmatpush1.bf16.msra.mxu0 %v1149
        %1514 = vmatprep.subr.bf16.mxu0 %v1160
        %1515 = vmatpush1.bf16.msra.mxu0 %v1159
        %1516 = vmatprep.subr.bf16.mxu0 %v1170
        %1517 = vmatpush1.bf16.msra.mxu0 %v1169
        %1518 = vmatprep.subr.bf16.mxu0 %v1180
        %1519 = vmatpush1.bf16.msra.mxu0 %v1179
        %1520 = vmatprep.subr.bf16.mxu0 %v1190
        %1521 = vmatpush1.bf16.msra.mxu0 %v1189
        %1522 = vmatprep.subr.bf16.mxu0 %v1200
        %1523 = vmatpush1.bf16.msra.mxu0 %v1199
        %1524 = vmatprep.mubr.bf16.mxu0 %v560
        %1525 = vmatmul.mubr.bf16.gmra.mrb[0].mxu0 %v559
        %v1526 = vpop.f32.mrb[0].mxu0
        %v1527 = vadd.f32 0.0, %v1526
        %v1528 = vpop.f32.mrb[0].mxu0
        %v1529 = vadd.f32 0.0, %v1528
        %v1530 = vpop.f32.mrb[0].mxu0
        %v1531 = vadd.f32 0.0, %v1530
        %v1532 = vpop.f32.mrb[0].mxu0
        %v1533 = vadd.f32 0.0, %v1532
        %1534 = vdwg.mxu0
        %1535 = vmatprep.subr.bf16.mxu0 %v1052
        %1536 = vmatpush1.bf16.msra.mxu0 %v1051
        %1537 = vmatprep.subr.bf16.mxu0 %v1062
        %1538 = vmatpush1.bf16.msra.mxu0 %v1061
        %1539 = vmatprep.subr.bf16.mxu0 %v1072
        %1540 = vmatpush1.bf16.msra.mxu0 %v1071
        %1541 = vmatprep.subr.bf16.mxu0 %v1082
        %1542 = vmatpush1.bf16.msra.mxu0 %v1081
        %1543 = vmatprep.subr.bf16.mxu0 %v1092
        %1544 = vmatpush1.bf16.msra.mxu0 %v1091
        %1545 = vmatprep.subr.bf16.mxu0 %v1102
        %1546 = vmatpush1.bf16.msra.mxu0 %v1101
        %1547 = vmatprep.subr.bf16.mxu0 %v1112
        %1548 = vmatpush1.bf16.msra.mxu0 %v1111
        %1549 = vmatprep.subr.bf16.mxu0 %v1122
        %1550 = vmatpush1.bf16.msra.mxu0 %v1121
        %1551 = vmatprep.subr.bf16.mxu0 %v1132
        %1552 = vmatpush1.bf16.msra.mxu0 %v1131
        %1553 = vmatprep.subr.bf16.mxu0 %v1142
        %1554 = vmatpush1.bf16.msra.mxu0 %v1141
        %1555 = vmatprep.subr.bf16.mxu0 %v1152
        %1556 = vmatpush1.bf16.msra.mxu0 %v1151
        %1557 = vmatprep.subr.bf16.mxu0 %v1162
        %1558 = vmatpush1.bf16.msra.mxu0 %v1161
        %1559 = vmatprep.subr.bf16.mxu0 %v1172
        %1560 = vmatpush1.bf16.msra.mxu0 %v1171
        %1561 = vmatprep.subr.bf16.mxu0 %v1182
        %1562 = vmatpush1.bf16.msra.mxu0 %v1181
        %1563 = vmatprep.subr.bf16.mxu0 %v1192
        %1564 = vmatpush1.bf16.msra.mxu0 %v1191
        %1565 = vmatprep.subr.bf16.mxu0 %v1202
        %1566 = vmatpush1.bf16.msra.mxu0 %v1201
        %1567 = vmatprep.mubr.bf16.mxu0 %v560
        %1568 = vmatmul.mubr.bf16.gmra.mrb[0].mxu0 %v559
        %v1569 = vpop.f32.mrb[0].mxu0
        %v1570 = vadd.f32 0.0, %v1569
        %v1571 = vpop.f32.mrb[0].mxu0
        %v1572 = vadd.f32 0.0, %v1571
        %v1573 = vpop.f32.mrb[0].mxu0
        %v1574 = vadd.f32 0.0, %v1573
        %v1575 = vpop.f32.mrb[0].mxu0
        %v1576 = vadd.f32 0.0, %v1575
        %1577 = vdwg.mxu0
        %v1578 = vpack.c.b16 %v194, %v192
        %v1579 = vpack.c.b16 %v195, %v193
        %v1742 = vunpack.c.l.b16 %v196
        %v1743 = vunpack.c.h.b16 %v196
        %v1744 = vunpack.c.l.b16 %v197
        %v1745 = vunpack.c.h.b16 %v197
        %v1746 = vunpack.c.l.b16 %v198
        %v1747 = vunpack.c.h.b16 %v198
        %v1748 = vunpack.c.l.b16 %v199
        %v1749 = vunpack.c.h.b16 %v199
        %v1750 = vunpack.c.l.b16 %v200
        %v1751 = vunpack.c.h.b16 %v200
        %v1752 = vunpack.c.l.b16 %v201
        %v1753 = vunpack.c.h.b16 %v201
        %v1754 = vunpack.c.l.b16 %v202
        %v1755 = vunpack.c.h.b16 %v202
        %v1756 = vunpack.c.l.b16 %v203
        %v1757 = vunpack.c.h.b16 %v203
        %v1758 = vunpack.c.l.b16 %v204
        %v1759 = vunpack.c.h.b16 %v204
        %v1760 = vunpack.c.l.b16 %v205
        %v1761 = vunpack.c.h.b16 %v205
        %v1762 = vunpack.c.l.b16 %v206
        %v1763 = vunpack.c.h.b16 %v206
        %v1764 = vunpack.c.l.b16 %v207
        %v1765 = vunpack.c.h.b16 %v207
        %v1766 = vunpack.c.l.b16 %v208
        %v1767 = vunpack.c.h.b16 %v208
        %v1768 = vunpack.c.l.b16 %v209
        %v1769 = vunpack.c.h.b16 %v209
        %v1770 = vunpack.c.l.b16 %v210
        %v1771 = vunpack.c.h.b16 %v210
        %v1772 = vunpack.c.l.b16 %v211
        %v1773 = vunpack.c.h.b16 %v211
        %v1774 = vunpack.c.l.b16 %v212
        %v1775 = vunpack.c.h.b16 %v212
        %v1776 = vunpack.c.l.b16 %v213
        %v1777 = vunpack.c.h.b16 %v213
        %v1778 = vunpack.c.l.b16 %v214
        %v1779 = vunpack.c.h.b16 %v214
        %v1780 = vunpack.c.l.b16 %v215
        %v1781 = vunpack.c.h.b16 %v215
        %v1782 = vunpack.c.l.b16 %v216
        %v1783 = vunpack.c.h.b16 %v216
        %v1784 = vunpack.c.l.b16 %v217
        %v1785 = vunpack.c.h.b16 %v217
        %v1786 = vunpack.c.l.b16 %v218
        %v1787 = vunpack.c.h.b16 %v218
        %v1788 = vunpack.c.l.b16 %v219
        %v1789 = vunpack.c.h.b16 %v219
        %v1790 = vunpack.c.l.b16 %v220
        %v1791 = vunpack.c.h.b16 %v220
        %v1792 = vunpack.c.l.b16 %v221
        %v1793 = vunpack.c.h.b16 %v221
        %v1794 = vunpack.c.l.b16 %v222
        %v1795 = vunpack.c.h.b16 %v222
        %v1796 = vunpack.c.l.b16 %v223
        %v1797 = vunpack.c.h.b16 %v223
        %v1798 = vunpack.c.l.b16 %v224
        %v1799 = vunpack.c.h.b16 %v224
        %v1800 = vunpack.c.l.b16 %v225
        %v1801 = vunpack.c.h.b16 %v225
        %v1802 = vunpack.c.l.b16 %v226
        %v1803 = vunpack.c.h.b16 %v226
        %v1804 = vunpack.c.l.b16 %v227
        %v1805 = vunpack.c.h.b16 %v227
        %v1806 = vunpack.c.l.b16 %v228
        %v1807 = vunpack.c.h.b16 %v228
        %v1808 = vunpack.c.l.b16 %v229
        %v1809 = vunpack.c.h.b16 %v229
        %v1810 = vunpack.c.l.b16 %v230
        %v1811 = vunpack.c.h.b16 %v230
        %v1812 = vunpack.c.l.b16 %v231
        %v1813 = vunpack.c.h.b16 %v231
        %v1814 = vunpack.c.l.b16 %v232
        %v1815 = vunpack.c.h.b16 %v232
        %v1816 = vunpack.c.l.b16 %v233
        %v1817 = vunpack.c.h.b16 %v233
        %v1818 = vunpack.c.l.b16 %v234
        %v1819 = vunpack.c.h.b16 %v234
        %v1820 = vunpack.c.l.b16 %v235
        %v1821 = vunpack.c.h.b16 %v235
        %v1822 = vunpack.c.l.b16 %v236
        %v1823 = vunpack.c.h.b16 %v236
        %v1824 = vunpack.c.l.b16 %v237
        %v1825 = vunpack.c.h.b16 %v237
        %v1826 = vunpack.c.l.b16 %v238
        %v1827 = vunpack.c.h.b16 %v238
        %v1828 = vunpack.c.l.b16 %v239
        %v1829 = vunpack.c.h.b16 %v239
        %v1830 = vunpack.c.l.b16 %v240
        %v1831 = vunpack.c.h.b16 %v240
        %v1832 = vunpack.c.l.b16 %v241
        %v1833 = vunpack.c.h.b16 %v241
        %v1834 = vunpack.c.l.b16 %v242
        %v1835 = vunpack.c.h.b16 %v242
        %v1836 = vunpack.c.l.b16 %v243
        %v1837 = vunpack.c.h.b16 %v243
        %v1838 = vunpack.c.l.b16 %v244
        %v1839 = vunpack.c.h.b16 %v244
        %v1840 = vunpack.c.l.b16 %v245
        %v1841 = vunpack.c.h.b16 %v245
        %v1842 = vunpack.c.l.b16 %v246
        %v1843 = vunpack.c.h.b16 %v246
        %v1844 = vunpack.c.l.b16 %v247
        %v1845 = vunpack.c.h.b16 %v247
        %v1846 = vunpack.c.l.b16 %v248
        %v1847 = vunpack.c.h.b16 %v248
        %v1848 = vunpack.c.l.b16 %v249
        %v1849 = vunpack.c.h.b16 %v249
        %v1850 = vunpack.c.l.b16 %v250
        %v1851 = vunpack.c.h.b16 %v250
        %v1852 = vunpack.c.l.b16 %v251
        %v1853 = vunpack.c.h.b16 %v251
        %v1854 = vunpack.c.l.b16 %v252
        %v1855 = vunpack.c.h.b16 %v252
        %v1856 = vunpack.c.l.b16 %v253
        %v1857 = vunpack.c.h.b16 %v253
        %v1858 = vunpack.c.l.b16 %v254
        %v1859 = vunpack.c.h.b16 %v254
        %v1860 = vunpack.c.l.b16 %v255
        %v1861 = vunpack.c.h.b16 %v255
        %v1862 = vunpack.c.l.b16 %v256
        %v1863 = vunpack.c.h.b16 %v256
        %v1864 = vunpack.c.l.b16 %v257
        %v1865 = vunpack.c.h.b16 %v257
        %v1866 = vunpack.c.l.b16 %v258
        %v1867 = vunpack.c.h.b16 %v258
        %v1868 = vunpack.c.l.b16 %v259
        %v1869 = vunpack.c.h.b16 %v259
        %v1870 = vunpack.c.l.b16 %v260
        %v1871 = vunpack.c.h.b16 %v260
        %v1872 = vunpack.c.l.b16 %v261
        %v1873 = vunpack.c.h.b16 %v261
        %v1874 = vunpack.c.l.b16 %v262
        %v1875 = vunpack.c.h.b16 %v262
        %v1876 = vunpack.c.l.b16 %v263
        %v1877 = vunpack.c.h.b16 %v263
        %v1878 = vunpack.c.l.b16 %v264
        %v1879 = vunpack.c.h.b16 %v264
        %v1880 = vunpack.c.l.b16 %v265
        %v1881 = vunpack.c.h.b16 %v265
        %v1882 = vunpack.c.l.b16 %v266
        %v1883 = vunpack.c.h.b16 %v266
        %v1884 = vunpack.c.l.b16 %v267
        %v1885 = vunpack.c.h.b16 %v267
        %v1886 = vunpack.c.l.b16 %v268
        %v1887 = vunpack.c.h.b16 %v268
        %v1888 = vunpack.c.l.b16 %v269
        %v1889 = vunpack.c.h.b16 %v269
        %v1890 = vunpack.c.l.b16 %v270
        %v1891 = vunpack.c.h.b16 %v270
        %v1892 = vunpack.c.l.b16 %v271
        %v1893 = vunpack.c.h.b16 %v271
        %v1894 = vunpack.c.l.b16 %v272
        %v1895 = vunpack.c.h.b16 %v272
        %v1896 = vunpack.c.l.b16 %v273
        %v1897 = vunpack.c.h.b16 %v273
        %v1898 = vunpack.c.l.b16 %v274
        %v1899 = vunpack.c.h.b16 %v274
        %v1900 = vunpack.c.l.b16 %v275
        %v1901 = vunpack.c.h.b16 %v275
        %v1902 = vunpack.c.l.b16 %v276
        %v1903 = vunpack.c.h.b16 %v276
        %v1904 = vunpack.c.l.b16 %v277
        %v1905 = vunpack.c.h.b16 %v277
        %v1906 = vunpack.c.l.b16 %v278
        %v1907 = vunpack.c.h.b16 %v278
        %v1908 = vunpack.c.l.b16 %v279
        %v1909 = vunpack.c.h.b16 %v279
        %v1910 = vunpack.c.l.b16 %v280
        %v1911 = vunpack.c.h.b16 %v280
        %v1912 = vunpack.c.l.b16 %v281
        %v1913 = vunpack.c.h.b16 %v281
        %v1914 = vunpack.c.l.b16 %v282
        %v1915 = vunpack.c.h.b16 %v282
        %v1916 = vunpack.c.l.b16 %v283
        %v1917 = vunpack.c.h.b16 %v283
        %v1918 = vunpack.c.l.b16 %v284
        %v1919 = vunpack.c.h.b16 %v284
        %v1920 = vunpack.c.l.b16 %v285
        %v1921 = vunpack.c.h.b16 %v285
        %v1922 = vunpack.c.l.b16 %v286
        %v1923 = vunpack.c.h.b16 %v286
        %v1924 = vunpack.c.l.b16 %v287
        %v1925 = vunpack.c.h.b16 %v287
        %v1926 = vunpack.c.l.b16 %v288
        %v1927 = vunpack.c.h.b16 %v288
        %v1928 = vunpack.c.l.b16 %v289
        %v1929 = vunpack.c.h.b16 %v289
        %v1930 = vunpack.c.l.b16 %v290
        %v1931 = vunpack.c.h.b16 %v290
        %v1932 = vunpack.c.l.b16 %v291
        %v1933 = vunpack.c.h.b16 %v291
        %v1934 = vunpack.c.l.b16 %v292
        %v1935 = vunpack.c.h.b16 %v292
        %v1936 = vunpack.c.l.b16 %v293
        %v1937 = vunpack.c.h.b16 %v293
        %v1938 = vunpack.c.l.b16 %v294
        %v1939 = vunpack.c.h.b16 %v294
        %v1940 = vunpack.c.l.b16 %v295
        %v1941 = vunpack.c.h.b16 %v295
        %v1942 = vunpack.c.l.b16 %v296
        %v1943 = vunpack.c.h.b16 %v296
        %v1944 = vunpack.c.l.b16 %v297
        %v1945 = vunpack.c.h.b16 %v297
        %v1946 = vunpack.c.l.b16 %v298
        %v1947 = vunpack.c.h.b16 %v298
        %v1948 = vunpack.c.l.b16 %v299
        %v1949 = vunpack.c.h.b16 %v299
        %v1950 = vunpack.c.l.b16 %v300
        %v1951 = vunpack.c.h.b16 %v300
        %v1952 = vunpack.c.l.b16 %v301
        %v1953 = vunpack.c.h.b16 %v301
        %v1954 = vunpack.c.l.b16 %v302
        %v1955 = vunpack.c.h.b16 %v302
        %v1956 = vunpack.c.l.b16 %v303
        %v1957 = vunpack.c.h.b16 %v303
        %v1958 = vunpack.c.l.b16 %v304
        %v1959 = vunpack.c.h.b16 %v304
        %v1960 = vunpack.c.l.b16 %v305
        %v1961 = vunpack.c.h.b16 %v305
        %v1962 = vunpack.c.l.b16 %v306
        %v1963 = vunpack.c.h.b16 %v306
        %v1964 = vunpack.c.l.b16 %v307
        %v1965 = vunpack.c.h.b16 %v307
        %v1966 = vunpack.c.l.b16 %v308
        %v1967 = vunpack.c.h.b16 %v308
        %v1968 = vunpack.c.l.b16 %v309
        %v1969 = vunpack.c.h.b16 %v309
        %v1970 = vunpack.c.l.b16 %v310
        %v1971 = vunpack.c.h.b16 %v310
        %v1972 = vunpack.c.l.b16 %v311
        %v1973 = vunpack.c.h.b16 %v311
        %v1974 = vunpack.c.l.b16 %v312
        %v1975 = vunpack.c.h.b16 %v312
        %v1976 = vunpack.c.l.b16 %v313
        %v1977 = vunpack.c.h.b16 %v313
        %v1978 = vunpack.c.l.b16 %v314
        %v1979 = vunpack.c.h.b16 %v314
        %v1980 = vunpack.c.l.b16 %v315
        %v1981 = vunpack.c.h.b16 %v315
        %v1982 = vunpack.c.l.b16 %v316
        %v1983 = vunpack.c.h.b16 %v316
        %v1984 = vunpack.c.l.b16 %v317
        %v1985 = vunpack.c.h.b16 %v317
        %v1986 = vunpack.c.l.b16 %v318
        %v1987 = vunpack.c.h.b16 %v318
        %v1988 = vunpack.c.l.b16 %v319
        %v1989 = vunpack.c.h.b16 %v319
        %v1990 = vunpack.c.l.b16 %v320
        %v1991 = vunpack.c.h.b16 %v320
        %v1992 = vunpack.c.l.b16 %v321
        %v1993 = vunpack.c.h.b16 %v321
        %v1994 = vunpack.c.l.b16 %v322
        %v1995 = vunpack.c.h.b16 %v322
        %v1996 = vunpack.c.l.b16 %v323
        %v1997 = vunpack.c.h.b16 %v323
        %v1998 = vunpack.c.l.b16 %v324
        %v1999 = vunpack.c.h.b16 %v324
        %v2000 = vunpack.c.l.b16 %v325
        %v2001 = vunpack.c.h.b16 %v325
        %v2002 = vunpack.c.l.b16 %v326
        %v2003 = vunpack.c.h.b16 %v326
        %v2004 = vunpack.c.l.b16 %v327
        %v2005 = vunpack.c.h.b16 %v327
        %v2006 = vunpack.c.l.b16 %v328
        %v2007 = vunpack.c.h.b16 %v328
        %v2008 = vunpack.c.l.b16 %v329
        %v2009 = vunpack.c.h.b16 %v329
        %v2010 = vunpack.c.l.b16 %v330
        %v2011 = vunpack.c.h.b16 %v330
        %v2012 = vunpack.c.l.b16 %v331
        %v2013 = vunpack.c.h.b16 %v331
        %v2014 = vunpack.c.l.b16 %v332
        %v2015 = vunpack.c.h.b16 %v332
        %v2016 = vunpack.c.l.b16 %v333
        %v2017 = vunpack.c.h.b16 %v333
        %v2018 = vunpack.c.l.b16 %v334
        %v2019 = vunpack.c.h.b16 %v334
        %v2020 = vunpack.c.l.b16 %v335
        %v2021 = vunpack.c.h.b16 %v335
        %v2022 = vunpack.c.l.b16 %v336
        %v2023 = vunpack.c.h.b16 %v336
        %v2024 = vunpack.c.l.b16 %v337
        %v2025 = vunpack.c.h.b16 %v337
        %v2026 = vunpack.c.l.b16 %v338
        %v2027 = vunpack.c.h.b16 %v338
        %v2028 = vunpack.c.l.b16 %v339
        %v2029 = vunpack.c.h.b16 %v339
        %v2030 = vunpack.c.l.b16 %v340
        %v2031 = vunpack.c.h.b16 %v340
        %v2032 = vunpack.c.l.b16 %v341
        %v2033 = vunpack.c.h.b16 %v341
        %v2034 = vunpack.c.l.b16 %v342
        %v2035 = vunpack.c.h.b16 %v342
        %v2036 = vunpack.c.l.b16 %v343
        %v2037 = vunpack.c.h.b16 %v343
        %v2038 = vunpack.c.l.b16 %v344
        %v2039 = vunpack.c.h.b16 %v344
        %v2040 = vunpack.c.l.b16 %v345
        %v2041 = vunpack.c.h.b16 %v345
        %v2042 = vunpack.c.l.b16 %v346
        %v2043 = vunpack.c.h.b16 %v346
        %v2044 = vunpack.c.l.b16 %v347
        %v2045 = vunpack.c.h.b16 %v347
        %v2046 = vunpack.c.l.b16 %v348
        %v2047 = vunpack.c.h.b16 %v348
        %v2048 = vunpack.c.l.b16 %v349
        %v2049 = vunpack.c.h.b16 %v349
        %v2050 = vunpack.c.l.b16 %v350
        %v2051 = vunpack.c.h.b16 %v350
        %v2052 = vunpack.c.l.b16 %v351
        %v2053 = vunpack.c.h.b16 %v351
        %v2054 = vunpack.c.l.b16 %v352
        %v2055 = vunpack.c.h.b16 %v352
        %v2056 = vunpack.c.l.b16 %v353
        %v2057 = vunpack.c.h.b16 %v353
        %v2058 = vunpack.c.l.b16 %v354
        %v2059 = vunpack.c.h.b16 %v354
        %v2060 = vunpack.c.l.b16 %v355
        %v2061 = vunpack.c.h.b16 %v355
        %v2062 = vpack.c.b16 %v1752, %v1742
        %v2063 = vpack.c.b16 %v1753, %v1743
        %v2064 = vpack.c.b16 %v1754, %v1744
        %v2065 = vpack.c.b16 %v1755, %v1745
        %v2066 = vpack.c.b16 %v1756, %v1746
        %v2067 = vpack.c.b16 %v1757, %v1747
        %v2068 = vpack.c.b16 %v1758, %v1748
        %v2069 = vpack.c.b16 %v1759, %v1749
        %v2070 = vpack.c.b16 %v1760, %v1750
        %v2071 = vpack.c.b16 %v1761, %v1751
        %v2072 = vpack.c.b16 %v1772, %v1762
        %v2073 = vpack.c.b16 %v1773, %v1763
        %v2074 = vpack.c.b16 %v1774, %v1764
        %v2075 = vpack.c.b16 %v1775, %v1765
        %v2076 = vpack.c.b16 %v1776, %v1766
        %v2077 = vpack.c.b16 %v1777, %v1767
        %v2078 = vpack.c.b16 %v1778, %v1768
        %v2079 = vpack.c.b16 %v1779, %v1769
        %v2080 = vpack.c.b16 %v1780, %v1770
        %v2081 = vpack.c.b16 %v1781, %v1771
        %v2082 = vpack.c.b16 %v1792, %v1782
        %v2083 = vpack.c.b16 %v1793, %v1783
        %v2084 = vpack.c.b16 %v1794, %v1784
        %v2085 = vpack.c.b16 %v1795, %v1785
        %v2086 = vpack.c.b16 %v1796, %v1786
        %v2087 = vpack.c.b16 %v1797, %v1787
        %v2088 = vpack.c.b16 %v1798, %v1788
        %v2089 = vpack.c.b16 %v1799, %v1789
        %v2090 = vpack.c.b16 %v1800, %v1790
        %v2091 = vpack.c.b16 %v1801, %v1791
        %v2092 = vpack.c.b16 %v1812, %v1802
        %v2093 = vpack.c.b16 %v1813, %v1803
        %v2094 = vpack.c.b16 %v1814, %v1804
        %v2095 = vpack.c.b16 %v1815, %v1805
        %v2096 = vpack.c.b16 %v1816, %v1806
        %v2097 = vpack.c.b16 %v1817, %v1807
        %v2098 = vpack.c.b16 %v1818, %v1808
        %v2099 = vpack.c.b16 %v1819, %v1809
        %v2100 = vpack.c.b16 %v1820, %v1810
        %v2101 = vpack.c.b16 %v1821, %v1811
        %v2102 = vpack.c.b16 %v1832, %v1822
        %v2103 = vpack.c.b16 %v1833, %v1823
        %v2104 = vpack.c.b16 %v1834, %v1824
        %v2105 = vpack.c.b16 %v1835, %v1825
        %v2106 = vpack.c.b16 %v1836, %v1826
        %v2107 = vpack.c.b16 %v1837, %v1827
        %v2108 = vpack.c.b16 %v1838, %v1828
        %v2109 = vpack.c.b16 %v1839, %v1829
        %v2110 = vpack.c.b16 %v1840, %v1830
        %v2111 = vpack.c.b16 %v1841, %v1831
        %v2112 = vpack.c.b16 %v1852, %v1842
        %v2113 = vpack.c.b16 %v1853, %v1843
        %v2114 = vpack.c.b16 %v1854, %v1844
        %v2115 = vpack.c.b16 %v1855, %v1845
        %v2116 = vpack.c.b16 %v1856, %v1846
        %v2117 = vpack.c.b16 %v1857, %v1847
        %v2118 = vpack.c.b16 %v1858, %v1848
        %v2119 = vpack.c.b16 %v1859, %v1849
        %v2120 = vpack.c.b16 %v1860, %v1850
        %v2121 = vpack.c.b16 %v1861, %v1851
        %v2122 = vpack.c.b16 %v1872, %v1862
        %v2123 = vpack.c.b16 %v1873, %v1863
        %v2124 = vpack.c.b16 %v1874, %v1864
        %v2125 = vpack.c.b16 %v1875, %v1865
        %v2126 = vpack.c.b16 %v1876, %v1866
        %v2127 = vpack.c.b16 %v1877, %v1867
        %v2128 = vpack.c.b16 %v1878, %v1868
        %v2129 = vpack.c.b16 %v1879, %v1869
        %v2130 = vpack.c.b16 %v1880, %v1870
        %v2131 = vpack.c.b16 %v1881, %v1871
        %v2132 = vpack.c.b16 %v1892, %v1882
        %v2133 = vpack.c.b16 %v1893, %v1883
        %v2134 = vpack.c.b16 %v1894, %v1884
        %v2135 = vpack.c.b16 %v1895, %v1885
        %v2136 = vpack.c.b16 %v1896, %v1886
        %v2137 = vpack.c.b16 %v1897, %v1887
        %v2138 = vpack.c.b16 %v1898, %v1888
        %v2139 = vpack.c.b16 %v1899, %v1889
        %v2140 = vpack.c.b16 %v1900, %v1890
        %v2141 = vpack.c.b16 %v1901, %v1891
        %v2142 = vpack.c.b16 %v1912, %v1902
        %v2143 = vpack.c.b16 %v1913, %v1903
        %v2144 = vpack.c.b16 %v1914, %v1904
        %v2145 = vpack.c.b16 %v1915, %v1905
        %v2146 = vpack.c.b16 %v1916, %v1906
        %v2147 = vpack.c.b16 %v1917, %v1907
        %v2148 = vpack.c.b16 %v1918, %v1908
        %v2149 = vpack.c.b16 %v1919, %v1909
        %v2150 = vpack.c.b16 %v1920, %v1910
        %v2151 = vpack.c.b16 %v1921, %v1911
        %v2152 = vpack.c.b16 %v1932, %v1922
        %v2153 = vpack.c.b16 %v1933, %v1923
        %v2154 = vpack.c.b16 %v1934, %v1924
        %v2155 = vpack.c.b16 %v1935, %v1925
        %v2156 = vpack.c.b16 %v1936, %v1926
        %v2157 = vpack.c.b16 %v1937, %v1927
        %v2158 = vpack.c.b16 %v1938, %v1928
        %v2159 = vpack.c.b16 %v1939, %v1929
        %v2160 = vpack.c.b16 %v1940, %v1930
        %v2161 = vpack.c.b16 %v1941, %v1931
        %v2162 = vpack.c.b16 %v1952, %v1942
        %v2163 = vpack.c.b16 %v1953, %v1943
        %v2164 = vpack.c.b16 %v1954, %v1944
        %v2165 = vpack.c.b16 %v1955, %v1945
        %v2166 = vpack.c.b16 %v1956, %v1946
        %v2167 = vpack.c.b16 %v1957, %v1947
        %v2168 = vpack.c.b16 %v1958, %v1948
        %v2169 = vpack.c.b16 %v1959, %v1949
        %v2170 = vpack.c.b16 %v1960, %v1950
        %v2171 = vpack.c.b16 %v1961, %v1951
        %v2172 = vpack.c.b16 %v1972, %v1962
        %v2173 = vpack.c.b16 %v1973, %v1963
        %v2174 = vpack.c.b16 %v1974, %v1964
        %v2175 = vpack.c.b16 %v1975, %v1965
        %v2176 = vpack.c.b16 %v1976, %v1966
        %v2177 = vpack.c.b16 %v1977, %v1967
        %v2178 = vpack.c.b16 %v1978, %v1968
        %v2179 = vpack.c.b16 %v1979, %v1969
        %v2180 = vpack.c.b16 %v1980, %v1970
        %v2181 = vpack.c.b16 %v1981, %v1971
        %v2182 = vpack.c.b16 %v1992, %v1982
        %v2183 = vpack.c.b16 %v1993, %v1983
        %v2184 = vpack.c.b16 %v1994, %v1984
        %v2185 = vpack.c.b16 %v1995, %v1985
        %v2186 = vpack.c.b16 %v1996, %v1986
        %v2187 = vpack.c.b16 %v1997, %v1987
        %v2188 = vpack.c.b16 %v1998, %v1988
        %v2189 = vpack.c.b16 %v1999, %v1989
        %v2190 = vpack.c.b16 %v2000, %v1990
        %v2191 = vpack.c.b16 %v2001, %v1991
        %v2192 = vpack.c.b16 %v2012, %v2002
        %v2193 = vpack.c.b16 %v2013, %v2003
        %v2194 = vpack.c.b16 %v2014, %v2004
        %v2195 = vpack.c.b16 %v2015, %v2005
        %v2196 = vpack.c.b16 %v2016, %v2006
        %v2197 = vpack.c.b16 %v2017, %v2007
        %v2198 = vpack.c.b16 %v2018, %v2008
        %v2199 = vpack.c.b16 %v2019, %v2009
        %v2200 = vpack.c.b16 %v2020, %v2010
        %v2201 = vpack.c.b16 %v2021, %v2011
        %v2202 = vpack.c.b16 %v2032, %v2022
        %v2203 = vpack.c.b16 %v2033, %v2023
        %v2204 = vpack.c.b16 %v2034, %v2024
        %v2205 = vpack.c.b16 %v2035, %v2025
        %v2206 = vpack.c.b16 %v2036, %v2026
        %v2207 = vpack.c.b16 %v2037, %v2027
        %v2208 = vpack.c.b16 %v2038, %v2028
        %v2209 = vpack.c.b16 %v2039, %v2029
        %v2210 = vpack.c.b16 %v2040, %v2030
        %v2211 = vpack.c.b16 %v2041, %v2031
        %v2212 = vpack.c.b16 %v2052, %v2042
        %v2213 = vpack.c.b16 %v2053, %v2043
        %v2214 = vpack.c.b16 %v2054, %v2044
        %v2215 = vpack.c.b16 %v2055, %v2045
        %v2216 = vpack.c.b16 %v2056, %v2046
        %v2217 = vpack.c.b16 %v2057, %v2047
        %v2218 = vpack.c.b16 %v2058, %v2048
        %v2219 = vpack.c.b16 %v2059, %v2049
        %v2220 = vpack.c.b16 %v2060, %v2050
        %v2221 = vpack.c.b16 %v2061, %v2051
        %2382 = vmatprep.subr.bf16.mxu0 %v2063
        %2383 = vmatpush1.bf16.msra.mxu0 %v2062
        %2384 = vmatprep.subr.bf16.mxu0 %v2073
        %2385 = vmatpush1.bf16.msra.mxu0 %v2072
        %2386 = vmatprep.subr.bf16.mxu0 %v2083
        %2387 = vmatpush1.bf16.msra.mxu0 %v2082
        %2388 = vmatprep.subr.bf16.mxu0 %v2093
        %2389 = vmatpush1.bf16.msra.mxu0 %v2092
        %2390 = vmatprep.subr.bf16.mxu0 %v2103
        %2391 = vmatpush1.bf16.msra.mxu0 %v2102
        %2392 = vmatprep.subr.bf16.mxu0 %v2113
        %2393 = vmatpush1.bf16.msra.mxu0 %v2112
        %2394 = vmatprep.subr.bf16.mxu0 %v2123
        %2395 = vmatpush1.bf16.msra.mxu0 %v2122
        %2396 = vmatprep.subr.bf16.mxu0 %v2133
        %2397 = vmatpush1.bf16.msra.mxu0 %v2132
        %2398 = vmatprep.subr.bf16.mxu0 %v2143
        %2399 = vmatpush1.bf16.msra.mxu0 %v2142
        %2400 = vmatprep.subr.bf16.mxu0 %v2153
        %2401 = vmatpush1.bf16.msra.mxu0 %v2152
        %2402 = vmatprep.subr.bf16.mxu0 %v2163
        %2403 = vmatpush1.bf16.msra.mxu0 %v2162
        %2404 = vmatprep.subr.bf16.mxu0 %v2173
        %2405 = vmatpush1.bf16.msra.mxu0 %v2172
        %2406 = vmatprep.subr.bf16.mxu0 %v2183
        %2407 = vmatpush1.bf16.msra.mxu0 %v2182
        %2408 = vmatprep.subr.bf16.mxu0 %v2193
        %2409 = vmatpush1.bf16.msra.mxu0 %v2192
        %2410 = vmatprep.subr.bf16.mxu0 %v2203
        %2411 = vmatpush1.bf16.msra.mxu0 %v2202
        %2412 = vmatprep.subr.bf16.mxu0 %v2213
        %2413 = vmatpush1.bf16.msra.mxu0 %v2212
        %2414 = vmatprep.mubr.bf16.mxu0 %v1579
        %2415 = vmatmul.mubr.bf16.gmra.mrb[0].mxu0 %v1578
        %v2416 = vpop.f32.mrb[0].mxu0
        %v2417 = vadd.f32 %v1398, %v2416
        %v2418 = vpop.f32.mrb[0].mxu0
        %v2419 = vadd.f32 %v1400, %v2418
        %v2420 = vpop.f32.mrb[0].mxu0
        %v2421 = vadd.f32 %v1402, %v2420
        %v2422 = vpop.f32.mrb[0].mxu0
        %v2423 = vadd.f32 %v1404, %v2422
        %2424 = vdwg.mxu0
        %2425 = vmatprep.subr.bf16.mxu0 %v2065
        %2426 = vmatpush1.bf16.msra.mxu0 %v2064
        %2427 = vmatprep.subr.bf16.mxu0 %v2075
        %2428 = vmatpush1.bf16.msra.mxu0 %v2074
        %2429 = vmatprep.subr.bf16.mxu0 %v2085
        %2430 = vmatpush1.bf16.msra.mxu0 %v2084
        %2431 = vmatprep.subr.bf16.mxu0 %v2095
        %2432 = vmatpush1.bf16.msra.mxu0 %v2094
        %2433 = vmatprep.subr.bf16.mxu0 %v2105
        %2434 = vmatpush1.bf16.msra.mxu0 %v2104
        %2435 = vmatprep.subr.bf16.mxu0 %v2115
        %2436 = vmatpush1.bf16.msra.mxu0 %v2114
        %2437 = vmatprep.subr.bf16.mxu0 %v2125
        %2438 = vmatpush1.bf16.msra.mxu0 %v2124
        %2439 = vmatprep.subr.bf16.mxu0 %v2135
        %2440 = vmatpush1.bf16.msra.mxu0 %v2134
        %2441 = vmatprep.subr.bf16.mxu0 %v2145
        %2442 = vmatpush1.bf16.msra.mxu0 %v2144
        %2443 = vmatprep.subr.bf16.mxu0 %v2155
        %2444 = vmatpush1.bf16.msra.mxu0 %v2154
        %2445 = vmatprep.subr.bf16.mxu0 %v2165
        %2446 = vmatpush1.bf16.msra.mxu0 %v2164
        %2447 = vmatprep.subr.bf16.mxu0 %v2175
        %2448 = vmatpush1.bf16.msra.mxu0 %v2174
        %2449 = vmatprep.subr.bf16.mxu0 %v2185
        %2450 = vmatpush1.bf16.msra.mxu0 %v2184
        %2451 = vmatprep.subr.bf16.mxu0 %v2195
        %2452 = vmatpush1.bf16.msra.mxu0 %v2194
        %2453 = vmatprep.subr.bf16.mxu0 %v2205
        %2454 = vmatpush1.bf16.msra.mxu0 %v2204
        %2455 = vmatprep.subr.bf16.mxu0 %v2215
        %2456 = vmatpush1.bf16.msra.mxu0 %v2214
        %2457 = vmatprep.mubr.bf16.mxu0 %v1579
        %2458 = vmatmul.mubr.bf16.gmra.mrb[0].mxu0 %v1578
        %v2459 = vpop.f32.mrb[0].mxu0
        %v2460 = vadd.f32 %v1441, %v2459
        %v2461 = vpop.f32.mrb[0].mxu0
        %v2462 = vadd.f32 %v1443, %v2461
        %v2463 = vpop.f32.mrb[0].mxu0
        %v2464 = vadd.f32 %v1445, %v2463
        %v2465 = vpop.f32.mrb[0].mxu0
        %v2466 = vadd.f32 %v1447, %v2465
        %2467 = vdwg.mxu0
        %2468 = vmatprep.subr.bf16.mxu0 %v2067
        %2469 = vmatpush1.bf16.msra.mxu0 %v2066
        %2470 = vmatprep.subr.bf16.mxu0 %v2077
        %2471 = vmatpush1.bf16.msra.mxu0 %v2076
        %2472 = vmatprep.subr.bf16.mxu0 %v2087
        %2473 = vmatpush1.bf16.msra.mxu0 %v2086
        %2474 = vmatprep.subr.bf16.mxu0 %v2097
        %2475 = vmatpush1.bf16.msra.mxu0 %v2096
        %2476 = vmatprep.subr.bf16.mxu0 %v2107
        %2477 = vmatpush1.bf16.msra.mxu0 %v2106
        %2478 = vmatprep.subr.bf16.mxu0 %v2117
        %2479 = vmatpush1.bf16.msra.mxu0 %v2116
        %2480 = vmatprep.subr.bf16.mxu0 %v2127
        %2481 = vmatpush1.bf16.msra.mxu0 %v2126
        %2482 = vmatprep.subr.bf16.mxu0 %v2137
        %2483 = vmatpush1.bf16.msra.mxu0 %v2136
        %2484 = vmatprep.subr.bf16.mxu0 %v2147
        %2485 = vmatpush1.bf16.msra.mxu0 %v2146
        %2486 = vmatprep.subr.bf16.mxu0 %v2157
        %2487 = vmatpush1.bf16.msra.mxu0 %v2156
        %2488 = vmatprep.subr.bf16.mxu0 %v2167
        %2489 = vmatpush1.bf16.msra.mxu0 %v2166
        %2490 = vmatprep.subr.bf16.mxu0 %v2177
        %2491 = vmatpush1.bf16.msra.mxu0 %v2176
        %2492 = vmatprep.subr.bf16.mxu0 %v2187
        %2493 = vmatpush1.bf16.msra.mxu0 %v2186
        %2494 = vmatprep.subr.bf16.mxu0 %v2197
        %2495 = vmatpush1.bf16.msra.mxu0 %v2196
        %2496 = vmatprep.subr.bf16.mxu0 %v2207
        %2497 = vmatpush1.bf16.msra.mxu0 %v2206
        %2498 = vmatprep.subr.bf16.mxu0 %v2217
        %2499 = vmatpush1.bf16.msra.mxu0 %v2216
        %2500 = vmatprep.mubr.bf16.mxu0 %v1579
        %2501 = vmatmul.mubr.bf16.gmra.mrb[0].mxu0 %v1578
        %v2502 = vpop.f32.mrb[0].mxu0
        %v2503 = vadd.f32 %v1484, %v2502
        %v2504 = vpop.f32.mrb[0].mxu0
        %v2505 = vadd.f32 %v1486, %v2504
        %v2506 = vpop.f32.mrb[0].mxu0
        %v2507 = vadd.f32 %v1488, %v2506
        %v2508 = vpop.f32.mrb[0].mxu0
        %v2509 = vadd.f32 %v1490, %v2508
        %2510 = vdwg.mxu0
        %2511 = vmatprep.subr.bf16.mxu0 %v2069
        %2512 = vmatpush1.bf16.msra.mxu0 %v2068
        %2513 = vmatprep.subr.bf16.mxu0 %v2079
        %2514 = vmatpush1.bf16.msra.mxu0 %v2078
        %2515 = vmatprep.subr.bf16.mxu0 %v2089
        %2516 = vmatpush1.bf16.msra.mxu0 %v2088
        %2517 = vmatprep.subr.bf16.mxu0 %v2099
        %2518 = vmatpush1.bf16.msra.mxu0 %v2098
        %2519 = vmatprep.subr.bf16.mxu0 %v2109
        %2520 = vmatpush1.bf16.msra.mxu0 %v2108
        %2521 = vmatprep.subr.bf16.mxu0 %v2119
        %2522 = vmatpush1.bf16.msra.mxu0 %v2118
        %2523 = vmatprep.subr.bf16.mxu0 %v2129
        %2524 = vmatpush1.bf16.msra.mxu0 %v2128
        %2525 = vmatprep.subr.bf16.mxu0 %v2139
        %2526 = vmatpush1.bf16.msra.mxu0 %v2138
        %2527 = vmatprep.subr.bf16.mxu0 %v2149
        %2528 = vmatpush1.bf16.msra.mxu0 %v2148
        %2529 = vmatprep.subr.bf16.mxu0 %v2159
        %2530 = vmatpush1.bf16.msra.mxu0 %v2158
        %2531 = vmatprep.subr.bf16.mxu0 %v2169
        %2532 = vmatpush1.bf16.msra.mxu0 %v2168
        %2533 = vmatprep.subr.bf16.mxu0 %v2179
        %2534 = vmatpush1.bf16.msra.mxu0 %v2178
        %2535 = vmatprep.subr.bf16.mxu0 %v2189
        %2536 = vmatpush1.bf16.msra.mxu0 %v2188
        %2537 = vmatprep.subr.bf16.mxu0 %v2199
        %2538 = vmatpush1.bf16.msra.mxu0 %v2198
        %2539 = vmatprep.subr.bf16.mxu0 %v2209
        %2540 = vmatpush1.bf16.msra.mxu0 %v2208
        %2541 = vmatprep.subr.bf16.mxu0 %v2219
        %2542 = vmatpush1.bf16.msra.mxu0 %v2218
        %2543 = vmatprep.mubr.bf16.mxu0 %v1579
        %2544 = vmatmul.mubr.bf16.gmra.mrb[0].mxu0 %v1578
        %v2545 = vpop.f32.mrb[0].mxu0
        %v2546 = vadd.f32 %v1527, %v2545
        %v2547 = vpop.f32.mrb[0].mxu0
        %v2548 = vadd.f32 %v1529, %v2547
        %v2549 = vpop.f32.mrb[0].mxu0
        %v2550 = vadd.f32 %v1531, %v2549
        %v2551 = vpop.f32.mrb[0].mxu0
        %v2552 = vadd.f32 %v1533, %v2551
        %2553 = vdwg.mxu0
        %2554 = vmatprep.subr.bf16.mxu0 %v2071
        %2555 = vmatpush1.bf16.msra.mxu0 %v2070
        %2556 = vmatprep.subr.bf16.mxu0 %v2081
        %2557 = vmatpush1.bf16.msra.mxu0 %v2080
        %2558 = vmatprep.subr.bf16.mxu0 %v2091
        %2559 = vmatpush1.bf16.msra.mxu0 %v2090
        %2560 = vmatprep.subr.bf16.mxu0 %v2101
        %2561 = vmatpush1.bf16.msra.mxu0 %v2100
        %2562 = vmatprep.subr.bf16.mxu0 %v2111
        %2563 = vmatpush1.bf16.msra.mxu0 %v2110
        %2564 = vmatprep.subr.bf16.mxu0 %v2121
        %2565 = vmatpush1.bf16.msra.mxu0 %v2120
        %2566 = vmatprep.subr.bf16.mxu0 %v2131
        %2567 = vmatpush1.bf16.msra.mxu0 %v2130
        %2568 = vmatprep.subr.bf16.mxu0 %v2141
        %2569 = vmatpush1.bf16.msra.mxu0 %v2140
        %2570 = vmatprep.subr.bf16.mxu0 %v2151
        %2571 = vmatpush1.bf16.msra.mxu0 %v2150
        %2572 = vmatprep.subr.bf16.mxu0 %v2161
        %2573 = vmatpush1.bf16.msra.mxu0 %v2160
        %2574 = vmatprep.subr.bf16.mxu0 %v2171
        %2575 = vmatpush1.bf16.msra.mxu0 %v2170
        %2576 = vmatprep.subr.bf16.mxu0 %v2181
        %2577 = vmatpush1.bf16.msra.mxu0 %v2180
        %2578 = vmatprep.subr.bf16.mxu0 %v2191
        %2579 = vmatpush1.bf16.msra.mxu0 %v2190
        %2580 = vmatprep.subr.bf16.mxu0 %v2201
        %2581 = vmatpush1.bf16.msra.mxu0 %v2200
        %2582 = vmatprep.subr.bf16.mxu0 %v2211
        %2583 = vmatpush1.bf16.msra.mxu0 %v2210
        %2584 = vmatprep.subr.bf16.mxu0 %v2221
        %2585 = vmatpush1.bf16.msra.mxu0 %v2220
        %2586 = vmatprep.mubr.bf16.mxu0 %v1579
        %2587 = vmatmul.mubr.bf16.gmra.mrb[0].mxu0 %v1578
        %v2588 = vpop.f32.mrb[0].mxu0
        %v2589 = vadd.f32 %v1570, %v2588
        %v2590 = vpop.f32.mrb[0].mxu0
        %v2591 = vadd.f32 %v1572, %v2590
        %v2592 = vpop.f32.mrb[0].mxu0
        %v2593 = vadd.f32 %v1574, %v2592
        %v2594 = vpop.f32.mrb[0].mxu0
        %v2595 = vadd.f32 %v1576, %v2594
        %2596 = vdwg.mxu0
        %vm2597 = vcmask 1042432
        %vm2598 = vcmask 1046532
        %vm2599 = vmor %vm2597, %vm2598
        %v2600 = vrot.slane %v360, 5
        %v2601 = vrot.slane %v2600, 4
        %v2602 = vrot.slane %v361, 5
        %v2603 = vsel %vm2599, %v2601, %v2602
        %v2604 = vrot.slane %v362, 5
        %v2605 = vrot.slane %v2604, 4
        %v2606 = vrot.slane %v363, 5
        %v2607 = vsel %vm2599, %v2605, %v2606
        %v2608 = vld [vmem:[%s1 + $0xa00] sm:$0xff]
        %v2609 = vld [vmem:[%s1 + $0xa08] sm:$0xff]
        %v2610 = vld [vmem:[%s1 + $0xa10] sm:$0xff]
        %v2611 = vld [vmem:[%s1 + $0xa18] sm:$0xff]
        %v2612 = vld [vmem:[%s1 + $0xa20] sm:$0xff]
        %v2613 = vld [vmem:[%s1 + $0xa28] sm:$0xff]
        %v2614 = vld [vmem:[%s1 + $0xa30] sm:$0xff]
        %v2615 = vld [vmem:[%s1 + $0xa38] sm:$0xff]
        %v2616 = vld [vmem:[%s1 + $0xa40] sm:$0xff]
        %v2617 = vld [vmem:[%s1 + $0xa48] sm:$0xff]
        %v2618 = vld [vmem:[%s1 + $0xa50] sm:$0xff]
        %v2619 = vld [vmem:[%s1 + $0xa58] sm:$0xff]
        %v2620 = vld [vmem:[%s1 + $0xa60] sm:$0xff]
        %v2621 = vld [vmem:[%s1 + $0xa68] sm:$0xff]
        %v2622 = vld [vmem:[%s1 + $0xa70] sm:$0xff]
        %v2623 = vld [vmem:[%s1 + $0xa78] sm:$0xff]
        %v2624 = vld [vmem:[%s1 + $0xa80] sm:$0xff]
        %v2625 = vld [vmem:[%s1 + $0xa88] sm:$0xff]
        %v2626 = vld [vmem:[%s1 + $0xa90] sm:$0xff]
        %v2627 = vld [vmem:[%s1 + $0xa98] sm:$0xff]
        %v2628 = vld [vmem:[%s1 + $0xaa0] sm:$0xff]
        %v2629 = vld [vmem:[%s1 + $0xaa8] sm:$0xff]
        %v2630 = vld [vmem:[%s1 + $0xab0] sm:$0xff]
        %v2631 = vld [vmem:[%s1 + $0xab8] sm:$0xff]
        %v2632 = vld [vmem:[%s1 + $0xac0] sm:$0xff]
        %v2633 = vld [vmem:[%s1 + $0xac8] sm:$0xff]
        %v2634 = vld [vmem:[%s1 + $0xad0] sm:$0xff]
        %v2635 = vld [vmem:[%s1 + $0xad8] sm:$0xff]
        %v2636 = vld [vmem:[%s1 + $0xae0] sm:$0xff]
        %v2637 = vld [vmem:[%s1 + $0xae8] sm:$0xff]
        %v2638 = vld [vmem:[%s1 + $0xaf0] sm:$0xff]
        %v2639 = vld [vmem:[%s1 + $0xaf8] sm:$0xff]
        %v2640 = vld [vmem:[%s1 + $0xb00] sm:$0xff]
        %v2641 = vld [vmem:[%s1 + $0xb08] sm:$0xff]
        %v2642 = vld [vmem:[%s1 + $0xb10] sm:$0xff]
        %v2643 = vld [vmem:[%s1 + $0xb18] sm:$0xff]
        %v2644 = vld [vmem:[%s1 + $0xb20] sm:$0xff]
        %v2645 = vld [vmem:[%s1 + $0xb28] sm:$0xff]
        %v2646 = vld [vmem:[%s1 + $0xb30] sm:$0xff]
        %v2647 = vld [vmem:[%s1 + $0xb38] sm:$0xff]
        %v2648 = vld [vmem:[%s1 + $0xb40] sm:$0xff]
        %v2649 = vld [vmem:[%s1 + $0xb48] sm:$0xff]
        %v2650 = vld [vmem:[%s1 + $0xb50] sm:$0xff]
        %v2651 = vld [vmem:[%s1 + $0xb58] sm:$0xff]
        %v2652 = vld [vmem:[%s1 + $0xb60] sm:$0xff]
        %v2653 = vld [vmem:[%s1 + $0xb68] sm:$0xff]
        %v2654 = vld [vmem:[%s1 + $0xb70] sm:$0xff]
        %v2655 = vld [vmem:[%s1 + $0xb78] sm:$0xff]
        %v2656 = vld [vmem:[%s1 + $0xb80] sm:$0xff]
        %v2657 = vld [vmem:[%s1 + $0xb88] sm:$0xff]
        %v2658 = vld [vmem:[%s1 + $0xb90] sm:$0xff]
        %v2659 = vld [vmem:[%s1 + $0xb98] sm:$0xff]
        %v2660 = vld [vmem:[%s1 + $0xba0] sm:$0xff]
        %v2661 = vld [vmem:[%s1 + $0xba8] sm:$0xff]
        %v2662 = vld [vmem:[%s1 + $0xbb0] sm:$0xff]
        %v2663 = vld [vmem:[%s1 + $0xbb8] sm:$0xff]
        %v2664 = vld [vmem:[%s1 + $0xbc0] sm:$0xff]
        %v2665 = vld [vmem:[%s1 + $0xbc8] sm:$0xff]
        %v2666 = vld [vmem:[%s1 + $0xbd0] sm:$0xff]
        %v2667 = vld [vmem:[%s1 + $0xbd8] sm:$0xff]
        %v2668 = vld [vmem:[%s1 + $0xbe0] sm:$0xff]
        %v2669 = vld [vmem:[%s1 + $0xbe8] sm:$0xff]
        %v2670 = vld [vmem:[%s1 + $0xbf0] sm:$0xff]
        %v2671 = vld [vmem:[%s1 + $0xbf8] sm:$0xff]
        %v2672 = vld [vmem:[%s1 + $0xc00] sm:$0xff]
        %v2673 = vld [vmem:[%s1 + $0xc08] sm:$0xff]
        %v2674 = vld [vmem:[%s1 + $0xc10] sm:$0xff]
        %v2675 = vld [vmem:[%s1 + $0xc18] sm:$0xff]
        %v2676 = vld [vmem:[%s1 + $0xc20] sm:$0xff]
        %v2677 = vld [vmem:[%s1 + $0xc28] sm:$0xff]
        %v2678 = vld [vmem:[%s1 + $0xc30] sm:$0xff]
        %v2679 = vld [vmem:[%s1 + $0xc38] sm:$0xff]
        %v2680 = vld [vmem:[%s1 + $0xc40] sm:$0xff]
        %v2681 = vld [vmem:[%s1 + $0xc48] sm:$0xff]
        %v2682 = vld [vmem:[%s1 + $0xc50] sm:$0xff]
        %v2683 = vld [vmem:[%s1 + $0xc58] sm:$0xff]
        %v2684 = vld [vmem:[%s1 + $0xc60] sm:$0xff]
        %v2685 = vld [vmem:[%s1 + $0xc68] sm:$0xff]
        %v2686 = vld [vmem:[%s1 + $0xc70] sm:$0xff]
        %v2687 = vld [vmem:[%s1 + $0xc78] sm:$0xff]
        %v2688 = vld [vmem:[%s1 + $0xc80] sm:$0xff]
        %v2689 = vld [vmem:[%s1 + $0xc88] sm:$0xff]
        %v2690 = vld [vmem:[%s1 + $0xc90] sm:$0xff]
        %v2691 = vld [vmem:[%s1 + $0xc98] sm:$0xff]
        %v2692 = vld [vmem:[%s1 + $0xca0] sm:$0xff]
        %v2693 = vld [vmem:[%s1 + $0xca8] sm:$0xff]
        %v2694 = vld [vmem:[%s1 + $0xcb0] sm:$0xff]
        %v2695 = vld [vmem:[%s1 + $0xcb8] sm:$0xff]
        %v2696 = vld [vmem:[%s1 + $0xcc0] sm:$0xff]
        %v2697 = vld [vmem:[%s1 + $0xcc8] sm:$0xff]
        %v2698 = vld [vmem:[%s1 + $0xcd0] sm:$0xff]
        %v2699 = vld [vmem:[%s1 + $0xcd8] sm:$0xff]
        %v2700 = vld [vmem:[%s1 + $0xce0] sm:$0xff]
        %v2701 = vld [vmem:[%s1 + $0xce8] sm:$0xff]
        %v2702 = vld [vmem:[%s1 + $0xcf0] sm:$0xff]
        %v2703 = vld [vmem:[%s1 + $0xcf8] sm:$0xff]
        %v2704 = vld [vmem:[%s1 + $0xd00] sm:$0xff]
        %v2705 = vld [vmem:[%s1 + $0xd08] sm:$0xff]
        %v2706 = vld [vmem:[%s1 + $0xd10] sm:$0xff]
        %v2707 = vld [vmem:[%s1 + $0xd18] sm:$0xff]
        %v2708 = vld [vmem:[%s1 + $0xd20] sm:$0xff]
        %v2709 = vld [vmem:[%s1 + $0xd28] sm:$0xff]
        %v2710 = vld [vmem:[%s1 + $0xd30] sm:$0xff]
        %v2711 = vld [vmem:[%s1 + $0xd38] sm:$0xff]
        %v2712 = vld [vmem:[%s1 + $0xd40] sm:$0xff]
        %v2713 = vld [vmem:[%s1 + $0xd48] sm:$0xff]
        %v2714 = vld [vmem:[%s1 + $0xd50] sm:$0xff]
        %v2715 = vld [vmem:[%s1 + $0xd58] sm:$0xff]
        %v2716 = vld [vmem:[%s1 + $0xd60] sm:$0xff]
        %v2717 = vld [vmem:[%s1 + $0xd68] sm:$0xff]
        %v2718 = vld [vmem:[%s1 + $0xd70] sm:$0xff]
        %v2719 = vld [vmem:[%s1 + $0xd78] sm:$0xff]
        %v2720 = vld [vmem:[%s1 + $0xd80] sm:$0xff]
        %v2721 = vld [vmem:[%s1 + $0xd88] sm:$0xff]
        %v2722 = vld [vmem:[%s1 + $0xd90] sm:$0xff]
        %v2723 = vld [vmem:[%s1 + $0xd98] sm:$0xff]
        %v2724 = vld [vmem:[%s1 + $0xda0] sm:$0xff]
        %v2725 = vld [vmem:[%s1 + $0xda8] sm:$0xff]
        %v2726 = vld [vmem:[%s1 + $0xdb0] sm:$0xff]
        %v2727 = vld [vmem:[%s1 + $0xdb8] sm:$0xff]
        %v2728 = vld [vmem:[%s1 + $0xdc0] sm:$0xff]
        %v2729 = vld [vmem:[%s1 + $0xdc8] sm:$0xff]
        %v2730 = vld [vmem:[%s1 + $0xdd0] sm:$0xff]
        %v2731 = vld [vmem:[%s1 + $0xdd8] sm:$0xff]
        %v2732 = vld [vmem:[%s1 + $0xde0] sm:$0xff]
        %v2733 = vld [vmem:[%s1 + $0xde8] sm:$0xff]
        %v2734 = vld [vmem:[%s1 + $0xdf0] sm:$0xff]
        %v2735 = vld [vmem:[%s1 + $0xdf8] sm:$0xff]
        %v2736 = vld [vmem:[%s1 + $0xe00] sm:$0xff]
        %v2737 = vld [vmem:[%s1 + $0xe08] sm:$0xff]
        %v2738 = vld [vmem:[%s1 + $0xe10] sm:$0xff]
        %v2739 = vld [vmem:[%s1 + $0xe18] sm:$0xff]
        %v2740 = vld [vmem:[%s1 + $0xe20] sm:$0xff]
        %v2741 = vld [vmem:[%s1 + $0xe28] sm:$0xff]
        %v2742 = vld [vmem:[%s1 + $0xe30] sm:$0xff]
        %v2743 = vld [vmem:[%s1 + $0xe38] sm:$0xff]
        %v2744 = vld [vmem:[%s1 + $0xe40] sm:$0xff]
        %v2745 = vld [vmem:[%s1 + $0xe48] sm:$0xff]
        %v2746 = vld [vmem:[%s1 + $0xe50] sm:$0xff]
        %v2747 = vld [vmem:[%s1 + $0xe58] sm:$0xff]
        %v2748 = vld [vmem:[%s1 + $0xe60] sm:$0xff]
        %v2749 = vld [vmem:[%s1 + $0xe68] sm:$0xff]
        %v2750 = vld [vmem:[%s1 + $0xe70] sm:$0xff]
        %v2751 = vld [vmem:[%s1 + $0xe78] sm:$0xff]
        %v2752 = vld [vmem:[%s1 + $0xe80] sm:$0xff]
        %v2753 = vld [vmem:[%s1 + $0xe88] sm:$0xff]
        %v2754 = vld [vmem:[%s1 + $0xe90] sm:$0xff]
        %v2755 = vld [vmem:[%s1 + $0xe98] sm:$0xff]
        %v2756 = vld [vmem:[%s1 + $0xea0] sm:$0xff]
        %v2757 = vld [vmem:[%s1 + $0xea8] sm:$0xff]
        %v2758 = vld [vmem:[%s1 + $0xeb0] sm:$0xff]
        %v2759 = vld [vmem:[%s1 + $0xeb8] sm:$0xff]
        %v2760 = vld [vmem:[%s1 + $0xec0] sm:$0xff]
        %v2761 = vld [vmem:[%s1 + $0xec8] sm:$0xff]
        %v2762 = vld [vmem:[%s1 + $0xed0] sm:$0xff]
        %v2763 = vld [vmem:[%s1 + $0xed8] sm:$0xff]
        %v2764 = vld [vmem:[%s1 + $0xee0] sm:$0xff]
        %v2765 = vld [vmem:[%s1 + $0xee8] sm:$0xff]
        %v2766 = vld [vmem:[%s1 + $0xef0] sm:$0xff]
        %v2767 = vld [vmem:[%s1 + $0xef8] sm:$0xff]
        %v2768 = vunpack.c.l.b16 %v2603
        %v2769 = vunpack.c.h.b16 %v2603
        %v2770 = vunpack.c.l.b16 %v2607
        %v2771 = vunpack.c.h.b16 %v2607
        %v2772 = vpack.c.b16 %v2770, %v2768
        %v2773 = vpack.c.b16 %v2771, %v2769
        %v2936 = vunpack.c.l.b16 %v2608
        %v2937 = vunpack.c.h.b16 %v2608
        %v2938 = vunpack.c.l.b16 %v2609
        %v2939 = vunpack.c.h.b16 %v2609
        %v2940 = vunpack.c.l.b16 %v2610
        %v2941 = vunpack.c.h.b16 %v2610
        %v2942 = vunpack.c.l.b16 %v2611
        %v2943 = vunpack.c.h.b16 %v2611
        %v2944 = vunpack.c.l.b16 %v2612
        %v2945 = vunpack.c.h.b16 %v2612
        %v2946 = vunpack.c.l.b16 %v2613
        %v2947 = vunpack.c.h.b16 %v2613
        %v2948 = vunpack.c.l.b16 %v2614
        %v2949 = vunpack.c.h.b16 %v2614
        %v2950 = vunpack.c.l.b16 %v2615
        %v2951 = vunpack.c.h.b16 %v2615
        %v2952 = vunpack.c.l.b16 %v2616
        %v2953 = vunpack.c.h.b16 %v2616
        %v2954 = vunpack.c.l.b16 %v2617
        %v2955 = vunpack.c.h.b16 %v2617
        %v2956 = vunpack.c.l.b16 %v2618
        %v2957 = vunpack.c.h.b16 %v2618
        %v2958 = vunpack.c.l.b16 %v2619
        %v2959 = vunpack.c.h.b16 %v2619
        %v2960 = vunpack.c.l.b16 %v2620
        %v2961 = vunpack.c.h.b16 %v2620
        %v2962 = vunpack.c.l.b16 %v2621
        %v2963 = vunpack.c.h.b16 %v2621
        %v2964 = vunpack.c.l.b16 %v2622
        %v2965 = vunpack.c.h.b16 %v2622
        %v2966 = vunpack.c.l.b16 %v2623
        %v2967 = vunpack.c.h.b16 %v2623
        %v2968 = vunpack.c.l.b16 %v2624
        %v2969 = vunpack.c.h.b16 %v2624
        %v2970 = vunpack.c.l.b16 %v2625
        %v2971 = vunpack.c.h.b16 %v2625
        %v2972 = vunpack.c.l.b16 %v2626
        %v2973 = vunpack.c.h.b16 %v2626
        %v2974 = vunpack.c.l.b16 %v2627
        %v2975 = vunpack.c.h.b16 %v2627
        %v2976 = vunpack.c.l.b16 %v2628
        %v2977 = vunpack.c.h.b16 %v2628
        %v2978 = vunpack.c.l.b16 %v2629
        %v2979 = vunpack.c.h.b16 %v2629
        %v2980 = vunpack.c.l.b16 %v2630
        %v2981 = vunpack.c.h.b16 %v2630
        %v2982 = vunpack.c.l.b16 %v2631
        %v2983 = vunpack.c.h.b16 %v2631
        %v2984 = vunpack.c.l.b16 %v2632
        %v2985 = vunpack.c.h.b16 %v2632
        %v2986 = vunpack.c.l.b16 %v2633
        %v2987 = vunpack.c.h.b16 %v2633
        %v2988 = vunpack.c.l.b16 %v2634
        %v2989 = vunpack.c.h.b16 %v2634
        %v2990 = vunpack.c.l.b16 %v2635
        %v2991 = vunpack.c.h.b16 %v2635
        %v2992 = vunpack.c.l.b16 %v2636
        %v2993 = vunpack.c.h.b16 %v2636
        %v2994 = vunpack.c.l.b16 %v2637
        %v2995 = vunpack.c.h.b16 %v2637
        %v2996 = vunpack.c.l.b16 %v2638
        %v2997 = vunpack.c.h.b16 %v2638
        %v2998 = vunpack.c.l.b16 %v2639
        %v2999 = vunpack.c.h.b16 %v2639
        %v3000 = vunpack.c.l.b16 %v2640
        %v3001 = vunpack.c.h.b16 %v2640
        %v3002 = vunpack.c.l.b16 %v2641
        %v3003 = vunpack.c.h.b16 %v2641
        %v3004 = vunpack.c.l.b16 %v2642
        %v3005 = vunpack.c.h.b16 %v2642
        %v3006 = vunpack.c.l.b16 %v2643
        %v3007 = vunpack.c.h.b16 %v2643
        %v3008 = vunpack.c.l.b16 %v2644
        %v3009 = vunpack.c.h.b16 %v2644
        %v3010 = vunpack.c.l.b16 %v2645
        %v3011 = vunpack.c.h.b16 %v2645
        %v3012 = vunpack.c.l.b16 %v2646
        %v3013 = vunpack.c.h.b16 %v2646
        %v3014 = vunpack.c.l.b16 %v2647
        %v3015 = vunpack.c.h.b16 %v2647
        %v3016 = vunpack.c.l.b16 %v2648
        %v3017 = vunpack.c.h.b16 %v2648
        %v3018 = vunpack.c.l.b16 %v2649
        %v3019 = vunpack.c.h.b16 %v2649
        %v3020 = vunpack.c.l.b16 %v2650
        %v3021 = vunpack.c.h.b16 %v2650
        %v3022 = vunpack.c.l.b16 %v2651
        %v3023 = vunpack.c.h.b16 %v2651
        %v3024 = vunpack.c.l.b16 %v2652
        %v3025 = vunpack.c.h.b16 %v2652
        %v3026 = vunpack.c.l.b16 %v2653
        %v3027 = vunpack.c.h.b16 %v2653
        %v3028 = vunpack.c.l.b16 %v2654
        %v3029 = vunpack.c.h.b16 %v2654
        %v3030 = vunpack.c.l.b16 %v2655
        %v3031 = vunpack.c.h.b16 %v2655
        %v3032 = vunpack.c.l.b16 %v2656
        %v3033 = vunpack.c.h.b16 %v2656
        %v3034 = vunpack.c.l.b16 %v2657
        %v3035 = vunpack.c.h.b16 %v2657
        %v3036 = vunpack.c.l.b16 %v2658
        %v3037 = vunpack.c.h.b16 %v2658
        %v3038 = vunpack.c.l.b16 %v2659
        %v3039 = vunpack.c.h.b16 %v2659
        %v3040 = vunpack.c.l.b16 %v2660
        %v3041 = vunpack.c.h.b16 %v2660
        %v3042 = vunpack.c.l.b16 %v2661
        %v3043 = vunpack.c.h.b16 %v2661
        %v3044 = vunpack.c.l.b16 %v2662
        %v3045 = vunpack.c.h.b16 %v2662
        %v3046 = vunpack.c.l.b16 %v2663
        %v3047 = vunpack.c.h.b16 %v2663
        %v3048 = vunpack.c.l.b16 %v2664
        %v3049 = vunpack.c.h.b16 %v2664
        %v3050 = vunpack.c.l.b16 %v2665
        %v3051 = vunpack.c.h.b16 %v2665
        %v3052 = vunpack.c.l.b16 %v2666
        %v3053 = vunpack.c.h.b16 %v2666
        %v3054 = vunpack.c.l.b16 %v2667
        %v3055 = vunpack.c.h.b16 %v2667
        %v3056 = vunpack.c.l.b16 %v2668
        %v3057 = vunpack.c.h.b16 %v2668
        %v3058 = vunpack.c.l.b16 %v2669
        %v3059 = vunpack.c.h.b16 %v2669
        %v3060 = vunpack.c.l.b16 %v2670
        %v3061 = vunpack.c.h.b16 %v2670
        %v3062 = vunpack.c.l.b16 %v2671
        %v3063 = vunpack.c.h.b16 %v2671
        %v3064 = vunpack.c.l.b16 %v2672
        %v3065 = vunpack.c.h.b16 %v2672
        %v3066 = vunpack.c.l.b16 %v2673
        %v3067 = vunpack.c.h.b16 %v2673
        %v3068 = vunpack.c.l.b16 %v2674
        %v3069 = vunpack.c.h.b16 %v2674
        %v3070 = vunpack.c.l.b16 %v2675
        %v3071 = vunpack.c.h.b16 %v2675
        %v3072 = vunpack.c.l.b16 %v2676
        %v3073 = vunpack.c.h.b16 %v2676
        %v3074 = vunpack.c.l.b16 %v2677
        %v3075 = vunpack.c.h.b16 %v2677
        %v3076 = vunpack.c.l.b16 %v2678
        %v3077 = vunpack.c.h.b16 %v2678
        %v3078 = vunpack.c.l.b16 %v2679
        %v3079 = vunpack.c.h.b16 %v2679
        %v3080 = vunpack.c.l.b16 %v2680
        %v3081 = vunpack.c.h.b16 %v2680
        %v3082 = vunpack.c.l.b16 %v2681
        %v3083 = vunpack.c.h.b16 %v2681
        %v3084 = vunpack.c.l.b16 %v2682
        %v3085 = vunpack.c.h.b16 %v2682
        %v3086 = vunpack.c.l.b16 %v2683
        %v3087 = vunpack.c.h.b16 %v2683
        %v3088 = vunpack.c.l.b16 %v2684
        %v3089 = vunpack.c.h.b16 %v2684
        %v3090 = vunpack.c.l.b16 %v2685
        %v3091 = vunpack.c.h.b16 %v2685
        %v3092 = vunpack.c.l.b16 %v2686
        %v3093 = vunpack.c.h.b16 %v2686
        %v3094 = vunpack.c.l.b16 %v2687
        %v3095 = vunpack.c.h.b16 %v2687
        %v3096 = vunpack.c.l.b16 %v2688
        %v3097 = vunpack.c.h.b16 %v2688
        %v3098 = vunpack.c.l.b16 %v2689
        %v3099 = vunpack.c.h.b16 %v2689
        %v3100 = vunpack.c.l.b16 %v2690
        %v3101 = vunpack.c.h.b16 %v2690
        %v3102 = vunpack.c.l.b16 %v2691
        %v3103 = vunpack.c.h.b16 %v2691
        %v3104 = vunpack.c.l.b16 %v2692
        %v3105 = vunpack.c.h.b16 %v2692
        %v3106 = vunpack.c.l.b16 %v2693
        %v3107 = vunpack.c.h.b16 %v2693
        %v3108 = vunpack.c.l.b16 %v2694
        %v3109 = vunpack.c.h.b16 %v2694
        %v3110 = vunpack.c.l.b16 %v2695
        %v3111 = vunpack.c.h.b16 %v2695
        %v3112 = vunpack.c.l.b16 %v2696
        %v3113 = vunpack.c.h.b16 %v2696
        %v3114 = vunpack.c.l.b16 %v2697
        %v3115 = vunpack.c.h.b16 %v2697
        %v3116 = vunpack.c.l.b16 %v2698
        %v3117 = vunpack.c.h.b16 %v2698
        %v3118 = vunpack.c.l.b16 %v2699
        %v3119 = vunpack.c.h.b16 %v2699
        %v3120 = vunpack.c.l.b16 %v2700
        %v3121 = vunpack.c.h.b16 %v2700
        %v3122 = vunpack.c.l.b16 %v2701
        %v3123 = vunpack.c.h.b16 %v2701
        %v3124 = vunpack.c.l.b16 %v2702
        %v3125 = vunpack.c.h.b16 %v2702
        %v3126 = vunpack.c.l.b16 %v2703
        %v3127 = vunpack.c.h.b16 %v2703
        %v3128 = vunpack.c.l.b16 %v2704
        %v3129 = vunpack.c.h.b16 %v2704
        %v3130 = vunpack.c.l.b16 %v2705
        %v3131 = vunpack.c.h.b16 %v2705
        %v3132 = vunpack.c.l.b16 %v2706
        %v3133 = vunpack.c.h.b16 %v2706
        %v3134 = vunpack.c.l.b16 %v2707
        %v3135 = vunpack.c.h.b16 %v2707
        %v3136 = vunpack.c.l.b16 %v2708
        %v3137 = vunpack.c.h.b16 %v2708
        %v3138 = vunpack.c.l.b16 %v2709
        %v3139 = vunpack.c.h.b16 %v2709
        %v3140 = vunpack.c.l.b16 %v2710
        %v3141 = vunpack.c.h.b16 %v2710
        %v3142 = vunpack.c.l.b16 %v2711
        %v3143 = vunpack.c.h.b16 %v2711
        %v3144 = vunpack.c.l.b16 %v2712
        %v3145 = vunpack.c.h.b16 %v2712
        %v3146 = vunpack.c.l.b16 %v2713
        %v3147 = vunpack.c.h.b16 %v2713
        %v3148 = vunpack.c.l.b16 %v2714
        %v3149 = vunpack.c.h.b16 %v2714
        %v3150 = vunpack.c.l.b16 %v2715
        %v3151 = vunpack.c.h.b16 %v2715
        %v3152 = vunpack.c.l.b16 %v2716
        %v3153 = vunpack.c.h.b16 %v2716
        %v3154 = vunpack.c.l.b16 %v2717
        %v3155 = vunpack.c.h.b16 %v2717
        %v3156 = vunpack.c.l.b16 %v2718
        %v3157 = vunpack.c.h.b16 %v2718
        %v3158 = vunpack.c.l.b16 %v2719
        %v3159 = vunpack.c.h.b16 %v2719
        %v3160 = vunpack.c.l.b16 %v2720
        %v3161 = vunpack.c.h.b16 %v2720
        %v3162 = vunpack.c.l.b16 %v2721
        %v3163 = vunpack.c.h.b16 %v2721
        %v3164 = vunpack.c.l.b16 %v2722
        %v3165 = vunpack.c.h.b16 %v2722
        %v3166 = vunpack.c.l.b16 %v2723
        %v3167 = vunpack.c.h.b16 %v2723
        %v3168 = vunpack.c.l.b16 %v2724
        %v3169 = vunpack.c.h.b16 %v2724
        %v3170 = vunpack.c.l.b16 %v2725
        %v3171 = vunpack.c.h.b16 %v2725
        %v3172 = vunpack.c.l.b16 %v2726
        %v3173 = vunpack.c.h.b16 %v2726
        %v3174 = vunpack.c.l.b16 %v2727
        %v3175 = vunpack.c.h.b16 %v2727
        %v3176 = vunpack.c.l.b16 %v2728
        %v3177 = vunpack.c.h.b16 %v2728
        %v3178 = vunpack.c.l.b16 %v2729
        %v3179 = vunpack.c.h.b16 %v2729
        %v3180 = vunpack.c.l.b16 %v2730
        %v3181 = vunpack.c.h.b16 %v2730
        %v3182 = vunpack.c.l.b16 %v2731
        %v3183 = vunpack.c.h.b16 %v2731
        %v3184 = vunpack.c.l.b16 %v2732
        %v3185 = vunpack.c.h.b16 %v2732
        %v3186 = vunpack.c.l.b16 %v2733
        %v3187 = vunpack.c.h.b16 %v2733
        %v3188 = vunpack.c.l.b16 %v2734
        %v3189 = vunpack.c.h.b16 %v2734
        %v3190 = vunpack.c.l.b16 %v2735
        %v3191 = vunpack.c.h.b16 %v2735
        %v3192 = vunpack.c.l.b16 %v2736
        %v3193 = vunpack.c.h.b16 %v2736
        %v3194 = vunpack.c.l.b16 %v2737
        %v3195 = vunpack.c.h.b16 %v2737
        %v3196 = vunpack.c.l.b16 %v2738
        %v3197 = vunpack.c.h.b16 %v2738
        %v3198 = vunpack.c.l.b16 %v2739
        %v3199 = vunpack.c.h.b16 %v2739
        %v3200 = vunpack.c.l.b16 %v2740
        %v3201 = vunpack.c.h.b16 %v2740
        %v3202 = vunpack.c.l.b16 %v2741
        %v3203 = vunpack.c.h.b16 %v2741
        %v3204 = vunpack.c.l.b16 %v2742
        %v3205 = vunpack.c.h.b16 %v2742
        %v3206 = vunpack.c.l.b16 %v2743
        %v3207 = vunpack.c.h.b16 %v2743
        %v3208 = vunpack.c.l.b16 %v2744
        %v3209 = vunpack.c.h.b16 %v2744
        %v3210 = vunpack.c.l.b16 %v2745
        %v3211 = vunpack.c.h.b16 %v2745
        %v3212 = vunpack.c.l.b16 %v2746
        %v3213 = vunpack.c.h.b16 %v2746
        %v3214 = vunpack.c.l.b16 %v2747
        %v3215 = vunpack.c.h.b16 %v2747
        %v3216 = vunpack.c.l.b16 %v2748
        %v3217 = vunpack.c.h.b16 %v2748
        %v3218 = vunpack.c.l.b16 %v2749
        %v3219 = vunpack.c.h.b16 %v2749
        %v3220 = vunpack.c.l.b16 %v2750
        %v3221 = vunpack.c.h.b16 %v2750
        %v3222 = vunpack.c.l.b16 %v2751
        %v3223 = vunpack.c.h.b16 %v2751
        %v3224 = vunpack.c.l.b16 %v2752
        %v3225 = vunpack.c.h.b16 %v2752
        %v3226 = vunpack.c.l.b16 %v2753
        %v3227 = vunpack.c.h.b16 %v2753
        %v3228 = vunpack.c.l.b16 %v2754
        %v3229 = vunpack.c.h.b16 %v2754
        %v3230 = vunpack.c.l.b16 %v2755
        %v3231 = vunpack.c.h.b16 %v2755
        %v3232 = vunpack.c.l.b16 %v2756
        %v3233 = vunpack.c.h.b16 %v2756
        %v3234 = vunpack.c.l.b16 %v2757
        %v3235 = vunpack.c.h.b16 %v2757
        %v3236 = vunpack.c.l.b16 %v2758
        %v3237 = vunpack.c.h.b16 %v2758
        %v3238 = vunpack.c.l.b16 %v2759
        %v3239 = vunpack.c.h.b16 %v2759
        %v3240 = vunpack.c.l.b16 %v2760
        %v3241 = vunpack.c.h.b16 %v2760
        %v3242 = vunpack.c.l.b16 %v2761
        %v3243 = vunpack.c.h.b16 %v2761
        %v3244 = vunpack.c.l.b16 %v2762
        %v3245 = vunpack.c.h.b16 %v2762
        %v3246 = vunpack.c.l.b16 %v2763
        %v3247 = vunpack.c.h.b16 %v2763
        %v3248 = vunpack.c.l.b16 %v2764
        %v3249 = vunpack.c.h.b16 %v2764
        %v3250 = vunpack.c.l.b16 %v2765
        %v3251 = vunpack.c.h.b16 %v2765
        %v3252 = vunpack.c.l.b16 %v2766
        %v3253 = vunpack.c.h.b16 %v2766
        %v3254 = vunpack.c.l.b16 %v2767
        %v3255 = vunpack.c.h.b16 %v2767
        %v3256 = vpack.c.b16 %v2946, %v2936
        %v3257 = vpack.c.b16 %v2947, %v2937
        %v3258 = vpack.c.b16 %v2948, %v2938
        %v3259 = vpack.c.b16 %v2949, %v2939
        %v3260 = vpack.c.b16 %v2950, %v2940
        %v3261 = vpack.c.b16 %v2951, %v2941
        %v3262 = vpack.c.b16 %v2952, %v2942
        %v3263 = vpack.c.b16 %v2953, %v2943
        %v3264 = vpack.c.b16 %v2954, %v2944
        %v3265 = vpack.c.b16 %v2955, %v2945
        %v3266 = vpack.c.b16 %v2966, %v2956
        %v3267 = vpack.c.b16 %v2967, %v2957
        %v3268 = vpack.c.b16 %v2968, %v2958
        %v3269 = vpack.c.b16 %v2969, %v2959
        %v3270 = vpack.c.b16 %v2970, %v2960
        %v3271 = vpack.c.b16 %v2971, %v2961
        %v3272 = vpack.c.b16 %v2972, %v2962
        %v3273 = vpack.c.b16 %v2973, %v2963
        %v3274 = vpack.c.b16 %v2974, %v2964
        %v3275 = vpack.c.b16 %v2975, %v2965
        %v3276 = vpack.c.b16 %v2986, %v2976
        %v3277 = vpack.c.b16 %v2987, %v2977
        %v3278 = vpack.c.b16 %v2988, %v2978
        %v3279 = vpack.c.b16 %v2989, %v2979
        %v3280 = vpack.c.b16 %v2990, %v2980
        %v3281 = vpack.c.b16 %v2991, %v2981
        %v3282 = vpack.c.b16 %v2992, %v2982
        %v3283 = vpack.c.b16 %v2993, %v2983
        %v3284 = vpack.c.b16 %v2994, %v2984
        %v3285 = vpack.c.b16 %v2995, %v2985
        %v3286 = vpack.c.b16 %v3006, %v2996
        %v3287 = vpack.c.b16 %v3007, %v2997
        %v3288 = vpack.c.b16 %v3008, %v2998
        %v3289 = vpack.c.b16 %v3009, %v2999
        %v3290 = vpack.c.b16 %v3010, %v3000
        %v3291 = vpack.c.b16 %v3011, %v3001
        %v3292 = vpack.c.b16 %v3012, %v3002
        %v3293 = vpack.c.b16 %v3013, %v3003
        %v3294 = vpack.c.b16 %v3014, %v3004
        %v3295 = vpack.c.b16 %v3015, %v3005
        %v3296 = vpack.c.b16 %v3026, %v3016
        %v3297 = vpack.c.b16 %v3027, %v3017
        %v3298 = vpack.c.b16 %v3028, %v3018
        %v3299 = vpack.c.b16 %v3029, %v3019
        %v3300 = vpack.c.b16 %v3030, %v3020
        %v3301 = vpack.c.b16 %v3031, %v3021
        %v3302 = vpack.c.b16 %v3032, %v3022
        %v3303 = vpack.c.b16 %v3033, %v3023
        %v3304 = vpack.c.b16 %v3034, %v3024
        %v3305 = vpack.c.b16 %v3035, %v3025
        %v3306 = vpack.c.b16 %v3046, %v3036
        %v3307 = vpack.c.b16 %v3047, %v3037
        %v3308 = vpack.c.b16 %v3048, %v3038
        %v3309 = vpack.c.b16 %v3049, %v3039
        %v3310 = vpack.c.b16 %v3050, %v3040
        %v3311 = vpack.c.b16 %v3051, %v3041
        %v3312 = vpack.c.b16 %v3052, %v3042
        %v3313 = vpack.c.b16 %v3053, %v3043
        %v3314 = vpack.c.b16 %v3054, %v3044
        %v3315 = vpack.c.b16 %v3055, %v3045
        %v3316 = vpack.c.b16 %v3066, %v3056
        %v3317 = vpack.c.b16 %v3067, %v3057
        %v3318 = vpack.c.b16 %v3068, %v3058
        %v3319 = vpack.c.b16 %v3069, %v3059
        %v3320 = vpack.c.b16 %v3070, %v3060
        %v3321 = vpack.c.b16 %v3071, %v3061
        %v3322 = vpack.c.b16 %v3072, %v3062
        %v3323 = vpack.c.b16 %v3073, %v3063
        %v3324 = vpack.c.b16 %v3074, %v3064
        %v3325 = vpack.c.b16 %v3075, %v3065
        %v3326 = vpack.c.b16 %v3086, %v3076
        %v3327 = vpack.c.b16 %v3087, %v3077
        %v3328 = vpack.c.b16 %v3088, %v3078
        %v3329 = vpack.c.b16 %v3089, %v3079
        %v3330 = vpack.c.b16 %v3090, %v3080
        %v3331 = vpack.c.b16 %v3091, %v3081
        %v3332 = vpack.c.b16 %v3092, %v3082
        %v3333 = vpack.c.b16 %v3093, %v3083
        %v3334 = vpack.c.b16 %v3094, %v3084
        %v3335 = vpack.c.b16 %v3095, %v3085
        %v3336 = vpack.c.b16 %v3106, %v3096
        %v3337 = vpack.c.b16 %v3107, %v3097
        %v3338 = vpack.c.b16 %v3108, %v3098
        %v3339 = vpack.c.b16 %v3109, %v3099
        %v3340 = vpack.c.b16 %v3110, %v3100
        %v3341 = vpack.c.b16 %v3111, %v3101
        %v3342 = vpack.c.b16 %v3112, %v3102
        %v3343 = vpack.c.b16 %v3113, %v3103
        %v3344 = vpack.c.b16 %v3114, %v3104
        %v3345 = vpack.c.b16 %v3115, %v3105
        %v3346 = vpack.c.b16 %v3126, %v3116
        %v3347 = vpack.c.b16 %v3127, %v3117
        %v3348 = vpack.c.b16 %v3128, %v3118
        %v3349 = vpack.c.b16 %v3129, %v3119
        %v3350 = vpack.c.b16 %v3130, %v3120
        %v3351 = vpack.c.b16 %v3131, %v3121
        %v3352 = vpack.c.b16 %v3132, %v3122
        %v3353 = vpack.c.b16 %v3133, %v3123
        %v3354 = vpack.c.b16 %v3134, %v3124
        %v3355 = vpack.c.b16 %v3135, %v3125
        %v3356 = vpack.c.b16 %v3146, %v3136
        %v3357 = vpack.c.b16 %v3147, %v3137
        %v3358 = vpack.c.b16 %v3148, %v3138
        %v3359 = vpack.c.b16 %v3149, %v3139
        %v3360 = vpack.c.b16 %v3150, %v3140
        %v3361 = vpack.c.b16 %v3151, %v3141
        %v3362 = vpack.c.b16 %v3152, %v3142
        %v3363 = vpack.c.b16 %v3153, %v3143
        %v3364 = vpack.c.b16 %v3154, %v3144
        %v3365 = vpack.c.b16 %v3155, %v3145
        %v3366 = vpack.c.b16 %v3166, %v3156
        %v3367 = vpack.c.b16 %v3167, %v3157
        %v3368 = vpack.c.b16 %v3168, %v3158
        %v3369 = vpack.c.b16 %v3169, %v3159
        %v3370 = vpack.c.b16 %v3170, %v3160
        %v3371 = vpack.c.b16 %v3171, %v3161
        %v3372 = vpack.c.b16 %v3172, %v3162
        %v3373 = vpack.c.b16 %v3173, %v3163
        %v3374 = vpack.c.b16 %v3174, %v3164
        %v3375 = vpack.c.b16 %v3175, %v3165
        %v3376 = vpack.c.b16 %v3186, %v3176
        %v3377 = vpack.c.b16 %v3187, %v3177
        %v3378 = vpack.c.b16 %v3188, %v3178
        %v3379 = vpack.c.b16 %v3189, %v3179
        %v3380 = vpack.c.b16 %v3190, %v3180
        %v3381 = vpack.c.b16 %v3191, %v3181
        %v3382 = vpack.c.b16 %v3192, %v3182
        %v3383 = vpack.c.b16 %v3193, %v3183
        %v3384 = vpack.c.b16 %v3194, %v3184
        %v3385 = vpack.c.b16 %v3195, %v3185
        %v3386 = vpack.c.b16 %v3206, %v3196
        %v3387 = vpack.c.b16 %v3207, %v3197
        %v3388 = vpack.c.b16 %v3208, %v3198
        %v3389 = vpack.c.b16 %v3209, %v3199
        %v3390 = vpack.c.b16 %v3210, %v3200
        %v3391 = vpack.c.b16 %v3211, %v3201
        %v3392 = vpack.c.b16 %v3212, %v3202
        %v3393 = vpack.c.b16 %v3213, %v3203
        %v3394 = vpack.c.b16 %v3214, %v3204
        %v3395 = vpack.c.b16 %v3215, %v3205
        %v3396 = vpack.c.b16 %v3226, %v3216
        %v3397 = vpack.c.b16 %v3227, %v3217
        %v3398 = vpack.c.b16 %v3228, %v3218
        %v3399 = vpack.c.b16 %v3229, %v3219
        %v3400 = vpack.c.b16 %v3230, %v3220
        %v3401 = vpack.c.b16 %v3231, %v3221
        %v3402 = vpack.c.b16 %v3232, %v3222
        %v3403 = vpack.c.b16 %v3233, %v3223
        %v3404 = vpack.c.b16 %v3234, %v3224
        %v3405 = vpack.c.b16 %v3235, %v3225
        %v3406 = vpack.c.b16 %v3246, %v3236
        %v3407 = vpack.c.b16 %v3247, %v3237
        %v3408 = vpack.c.b16 %v3248, %v3238
        %v3409 = vpack.c.b16 %v3249, %v3239
        %v3410 = vpack.c.b16 %v3250, %v3240
        %v3411 = vpack.c.b16 %v3251, %v3241
        %v3412 = vpack.c.b16 %v3252, %v3242
        %v3413 = vpack.c.b16 %v3253, %v3243
        %v3414 = vpack.c.b16 %v3254, %v3244
        %v3415 = vpack.c.b16 %v3255, %v3245
        %3576 = vmatprep.subr.bf16.mxu0 %v3257
        %3577 = vmatpush1.bf16.msra.mxu0 %v3256
        %3578 = vmatprep.subr.bf16.mxu0 %v3267
        %3579 = vmatpush1.bf16.msra.mxu0 %v3266
        %3580 = vmatprep.subr.bf16.mxu0 %v3277
        %3581 = vmatpush1.bf16.msra.mxu0 %v3276
        %3582 = vmatprep.subr.bf16.mxu0 %v3287
        %3583 = vmatpush1.bf16.msra.mxu0 %v3286
        %3584 = vmatprep.subr.bf16.mxu0 %v3297
        %3585 = vmatpush1.bf16.msra.mxu0 %v3296
        %3586 = vmatprep.subr.bf16.mxu0 %v3307
        %3587 = vmatpush1.bf16.msra.mxu0 %v3306
        %3588 = vmatprep.subr.bf16.mxu0 %v3317
        %3589 = vmatpush1.bf16.msra.mxu0 %v3316
        %3590 = vmatprep.subr.bf16.mxu0 %v3327
        %3591 = vmatpush1.bf16.msra.mxu0 %v3326
        %3592 = vmatprep.subr.bf16.mxu0 %v3337
        %3593 = vmatpush1.bf16.msra.mxu0 %v3336
        %3594 = vmatprep.subr.bf16.mxu0 %v3347
        %3595 = vmatpush1.bf16.msra.mxu0 %v3346
        %3596 = vmatprep.subr.bf16.mxu0 %v3357
        %3597 = vmatpush1.bf16.msra.mxu0 %v3356
        %3598 = vmatprep.subr.bf16.mxu0 %v3367
        %3599 = vmatpush1.bf16.msra.mxu0 %v3366
        %3600 = vmatprep.subr.bf16.mxu0 %v3377
        %3601 = vmatpush1.bf16.msra.mxu0 %v3376
        %3602 = vmatprep.subr.bf16.mxu0 %v3387
        %3603 = vmatpush1.bf16.msra.mxu0 %v3386
        %3604 = vmatprep.subr.bf16.mxu0 %v3397
        %3605 = vmatpush1.bf16.msra.mxu0 %v3396
        %3606 = vmatprep.subr.bf16.mxu0 %v3407
        %3607 = vmatpush1.bf16.msra.mxu0 %v3406
        %3608 = vmatprep.mubr.bf16.mxu0 %v2773
        %3609 = vmatmul.mubr.bf16.gmra.mrb[0].mxu0 %v2772
        %v3610 = vpop.f32.mrb[0].mxu0
        %v3611 = vadd.f32 0.0, %v3610
        %v3612 = vpop.f32.mrb[0].mxu0
        %v3613 = vadd.f32 0.0, %v3612
        %v3614 = vpop.f32.mrb[0].mxu0
        %v3615 = vadd.f32 0.0, %v3614
        %v3616 = vpop.f32.mrb[0].mxu0
        %v3617 = vadd.f32 0.0, %v3616
        %3618 = vdwg.mxu0
        %3619 = vmatprep.subr.bf16.mxu0 %v3259
        %3620 = vmatpush1.bf16.msra.mxu0 %v3258
        %3621 = vmatprep.subr.bf16.mxu0 %v3269
        %3622 = vmatpush1.bf16.msra.mxu0 %v3268
        %3623 = vmatprep.subr.bf16.mxu0 %v3279
        %3624 = vmatpush1.bf16.msra.mxu0 %v3278
        %3625 = vmatprep.subr.bf16.mxu0 %v3289
        %3626 = vmatpush1.bf16.msra.mxu0 %v3288
        %3627 = vmatprep.subr.bf16.mxu0 %v3299
        %3628 = vmatpush1.bf16.msra.mxu0 %v3298
        %3629 = vmatprep.subr.bf16.mxu0 %v3309
        %3630 = vmatpush1.bf16.msra.mxu0 %v3308
        %3631 = vmatprep.subr.bf16.mxu0 %v3319
        %3632 = vmatpush1.bf16.msra.mxu0 %v3318
        %3633 = vmatprep.subr.bf16.mxu0 %v3329
        %3634 = vmatpush1.bf16.msra.mxu0 %v3328
        %3635 = vmatprep.subr.bf16.mxu0 %v3339
        %3636 = vmatpush1.bf16.msra.mxu0 %v3338
        %3637 = vmatprep.subr.bf16.mxu0 %v3349
        %3638 = vmatpush1.bf16.msra.mxu0 %v3348
        %3639 = vmatprep.subr.bf16.mxu0 %v3359
        %3640 = vmatpush1.bf16.msra.mxu0 %v3358
        %3641 = vmatprep.subr.bf16.mxu0 %v3369
        %3642 = vmatpush1.bf16.msra.mxu0 %v3368
        %3643 = vmatprep.subr.bf16.mxu0 %v3379
        %3644 = vmatpush1.bf16.msra.mxu0 %v3378
        %3645 = vmatprep.subr.bf16.mxu0 %v3389
        %3646 = vmatpush1.bf16.msra.mxu0 %v3388
        %3647 = vmatprep.subr.bf16.mxu0 %v3399
        %3648 = vmatpush1.bf16.msra.mxu0 %v3398
        %3649 = vmatprep.subr.bf16.mxu0 %v3409
        %3650 = vmatpush1.bf16.msra.mxu0 %v3408
        %3651 = vmatprep.mubr.bf16.mxu0 %v2773
        %3652 = vmatmul.mubr.bf16.gmra.mrb[0].mxu0 %v2772
        %v3653 = vpop.f32.mrb[0].mxu0
        %v3654 = vadd.f32 0.0, %v3653
        %v3655 = vpop.f32.mrb[0].mxu0
        %v3656 = vadd.f32 0.0, %v3655
        %v3657 = vpop.f32.mrb[0].mxu0
        %v3658 = vadd.f32 0.0, %v3657
        %v3659 = vpop.f32.mrb[0].mxu0
        %v3660 = vadd.f32 0.0, %v3659
        %3661 = vdwg.mxu0
        %3662 = vmatprep.subr.bf16.mxu0 %v3261
        %3663 = vmatpush1.bf16.msra.mxu0 %v3260
        %3664 = vmatprep.subr.bf16.mxu0 %v3271
        %3665 = vmatpush1.bf16.msra.mxu0 %v3270
        %3666 = vmatprep.subr.bf16.mxu0 %v3281
        %3667 = vmatpush1.bf16.msra.mxu0 %v3280
        %3668 = vmatprep.subr.bf16.mxu0 %v3291
        %3669 = vmatpush1.bf16.msra.mxu0 %v3290
        %3670 = vmatprep.subr.bf16.mxu0 %v3301
        %3671 = vmatpush1.bf16.msra.mxu0 %v3300
        %3672 = vmatprep.subr.bf16.mxu0 %v3311
        %3673 = vmatpush1.bf16.msra.mxu0 %v3310
        %3674 = vmatprep.subr.bf16.mxu0 %v3321
        %3675 = vmatpush1.bf16.msra.mxu0 %v3320
        %3676 = vmatprep.subr.bf16.mxu0 %v3331
        %3677 = vmatpush1.bf16.msra.mxu0 %v3330
        %3678 = vmatprep.subr.bf16.mxu0 %v3341
        %3679 = vmatpush1.bf16.msra.mxu0 %v3340
        %3680 = vmatprep.subr.bf16.mxu0 %v3351
        %3681 = vmatpush1.bf16.msra.mxu0 %v3350
        %3682 = vmatprep.subr.bf16.mxu0 %v3361
        %3683 = vmatpush1.bf16.msra.mxu0 %v3360
        %3684 = vmatprep.subr.bf16.mxu0 %v3371
        %3685 = vmatpush1.bf16.msra.mxu0 %v3370
        %3686 = vmatprep.subr.bf16.mxu0 %v3381
        %3687 = vmatpush1.bf16.msra.mxu0 %v3380
        %3688 = vmatprep.subr.bf16.mxu0 %v3391
        %3689 = vmatpush1.bf16.msra.mxu0 %v3390
        %3690 = vmatprep.subr.bf16.mxu0 %v3401
        %3691 = vmatpush1.bf16.msra.mxu0 %v3400
        %3692 = vmatprep.subr.bf16.mxu0 %v3411
        %3693 = vmatpush1.bf16.msra.mxu0 %v3410
        %3694 = vmatprep.mubr.bf16.mxu0 %v2773
        %3695 = vmatmul.mubr.bf16.gmra.mrb[0].mxu0 %v2772
        %v3696 = vpop.f32.mrb[0].mxu0
        %v3697 = vadd.f32 0.0, %v3696
        %v3698 = vpop.f32.mrb[0].mxu0
        %v3699 = vadd.f32 0.0, %v3698
        %v3700 = vpop.f32.mrb[0].mxu0
        %v3701 = vadd.f32 0.0, %v3700
        %v3702 = vpop.f32.mrb[0].mxu0
        %v3703 = vadd.f32 0.0, %v3702
        %3704 = vdwg.mxu0
        %3705 = vmatprep.subr.bf16.mxu0 %v3263
        %3706 = vmatpush1.bf16.msra.mxu0 %v3262
        %3707 = vmatprep.subr.bf16.mxu0 %v3273
        %3708 = vmatpush1.bf16.msra.mxu0 %v3272
        %3709 = vmatprep.subr.bf16.mxu0 %v3283
        %3710 = vmatpush1.bf16.msra.mxu0 %v3282
        %3711 = vmatprep.subr.bf16.mxu0 %v3293
        %3712 = vmatpush1.bf16.msra.mxu0 %v3292
        %3713 = vmatprep.subr.bf16.mxu0 %v3303
        %3714 = vmatpush1.bf16.msra.mxu0 %v3302
        %3715 = vmatprep.subr.bf16.mxu0 %v3313
        %3716 = vmatpush1.bf16.msra.mxu0 %v3312
        %3717 = vmatprep.subr.bf16.mxu0 %v3323
        %3718 = vmatpush1.bf16.msra.mxu0 %v3322
        %3719 = vmatprep.subr.bf16.mxu0 %v3333
        %3720 = vmatpush1.bf16.msra.mxu0 %v3332
        %3721 = vmatprep.subr.bf16.mxu0 %v3343
        %3722 = vmatpush1.bf16.msra.mxu0 %v3342
        %3723 = vmatprep.subr.bf16.mxu0 %v3353
        %3724 = vmatpush1.bf16.msra.mxu0 %v3352
        %3725 = vmatprep.subr.bf16.mxu0 %v3363
        %3726 = vmatpush1.bf16.msra.mxu0 %v3362
        %3727 = vmatprep.subr.bf16.mxu0 %v3373
        %3728 = vmatpush1.bf16.msra.mxu0 %v3372
        %3729 = vmatprep.subr.bf16.mxu0 %v3383
        %3730 = vmatpush1.bf16.msra.mxu0 %v3382
        %3731 = vmatprep.subr.bf16.mxu0 %v3393
        %3732 = vmatpush1.bf16.msra.mxu0 %v3392
        %3733 = vmatprep.subr.bf16.mxu0 %v3403
        %3734 = vmatpush1.bf16.msra.mxu0 %v3402
        %3735 = vmatprep.subr.bf16.mxu0 %v3413
        %3736 = vmatpush1.bf16.msra.mxu0 %v3412
        %3737 = vmatprep.mubr.bf16.mxu0 %v2773
        %3738 = vmatmul.mubr.bf16.gmra.mrb[0].mxu0 %v2772
        %v3739 = vpop.f32.mrb[0].mxu0
        %v3740 = vadd.f32 0.0, %v3739
        %v3741 = vpop.f32.mrb[0].mxu0
        %v3742 = vadd.f32 0.0, %v3741
        %v3743 = vpop.f32.mrb[0].mxu0
        %v3744 = vadd.f32 0.0, %v3743
        %v3745 = vpop.f32.mrb[0].mxu0
        %v3746 = vadd.f32 0.0, %v3745
        %3747 = vdwg.mxu0
        %3748 = vmatprep.subr.bf16.mxu0 %v3265
        %3749 = vmatpush1.bf16.msra.mxu0 %v3264
        %3750 = vmatprep.subr.bf16.mxu0 %v3275
        %3751 = vmatpush1.bf16.msra.mxu0 %v3274
        %3752 = vmatprep.subr.bf16.mxu0 %v3285
        %3753 = vmatpush1.bf16.msra.mxu0 %v3284
        %3754 = vmatprep.subr.bf16.mxu0 %v3295
        %3755 = vmatpush1.bf16.msra.mxu0 %v3294
        %3756 = vmatprep.subr.bf16.mxu0 %v3305
        %3757 = vmatpush1.bf16.msra.mxu0 %v3304
        %3758 = vmatprep.subr.bf16.mxu0 %v3315
        %3759 = vmatpush1.bf16.msra.mxu0 %v3314
        %3760 = vmatprep.subr.bf16.mxu0 %v3325
        %3761 = vmatpush1.bf16.msra.mxu0 %v3324
        %3762 = vmatprep.subr.bf16.mxu0 %v3335
        %3763 = vmatpush1.bf16.msra.mxu0 %v3334
        %3764 = vmatprep.subr.bf16.mxu0 %v3345
        %3765 = vmatpush1.bf16.msra.mxu0 %v3344
        %3766 = vmatprep.subr.bf16.mxu0 %v3355
        %3767 = vmatpush1.bf16.msra.mxu0 %v3354
        %3768 = vmatprep.subr.bf16.mxu0 %v3365
        %3769 = vmatpush1.bf16.msra.mxu0 %v3364
        %3770 = vmatprep.subr.bf16.mxu0 %v3375
        %3771 = vmatpush1.bf16.msra.mxu0 %v3374
        %3772 = vmatprep.subr.bf16.mxu0 %v3385
        %3773 = vmatpush1.bf16.msra.mxu0 %v3384
        %3774 = vmatprep.subr.bf16.mxu0 %v3395
        %3775 = vmatpush1.bf16.msra.mxu0 %v3394
        %3776 = vmatprep.subr.bf16.mxu0 %v3405
        %3777 = vmatpush1.bf16.msra.mxu0 %v3404
        %3778 = vmatprep.subr.bf16.mxu0 %v3415
        %3779 = vmatpush1.bf16.msra.mxu0 %v3414
        %3780 = vmatprep.mubr.bf16.mxu0 %v2773
        %3781 = vmatmul.mubr.bf16.gmra.mrb[0].mxu0 %v2772
        %v3782 = vpop.f32.mrb[0].mxu0
        %v3783 = vadd.f32 0.0, %v3782
        %v3784 = vpop.f32.mrb[0].mxu0
        %v3785 = vadd.f32 0.0, %v3784
        %v3786 = vpop.f32.mrb[0].mxu0
        %v3787 = vadd.f32 0.0, %v3786
        %v3788 = vpop.f32.mrb[0].mxu0
        %v3789 = vadd.f32 0.0, %v3788
        %3790 = vdwg.mxu0
        %v3791 = vadd.f32 %v2417, %v3611
        %v3792 = vadd.f32 %v2419, %v3613
        %v3793 = vadd.f32 %v2460, %v3654
        %v3794 = vadd.f32 %v2462, %v3656
        %v3795 = vadd.f32 %v2503, %v3697
        %v3796 = vadd.f32 %v2505, %v3699
        %v3797 = vadd.f32 %v2546, %v3740
        %v3798 = vadd.f32 %v2548, %v3742
        %v3799 = vadd.f32 %v2589, %v3783
        %v3800 = vadd.f32 %v2591, %v3785
        %v3801 = vadd.f32 %v2421, %v3615
        %v3802 = vadd.f32 %v2423, %v3617
        %v3803 = vadd.f32 %v2464, %v3658
        %v3804 = vadd.f32 %v2466, %v3660
        %v3805 = vadd.f32 %v2507, %v3701
        %v3806 = vadd.f32 %v2509, %v3703
        %v3807 = vadd.f32 %v2550, %v3744
        %v3808 = vadd.f32 %v2552, %v3746
        %v3809 = vadd.f32 %v2593, %v3787
        %v3810 = vadd.f32 %v2595, %v3789
        %vm3811 = vsmask.f32 2304
        %vm3812 = vsmask.f32 6416
        %vm3813 = vmor %vm3811, %vm3812
        %v3814 = vrot.slane %v368, 5
        %v3815 = vrot.slane %v371, 6
        %v3816 = vor.u32 %v3814, %v3815
        %v3817 = vrot.slane %v3816, 4
        %v3818 = vshrl.u32 %v361, 16
        %v3820 = vrot.slane %v3818, 5
        %v3821 = vrot.slane %v377, 6
        %v3822 = vor.u32 %v3820, %v3821
        %v3823 = vsel %vm3813, %v3817, %v3822
        %v3824 = vrot.slane %v382, 5
        %v3825 = vrot.slane %v385, 6
        %v3826 = vor.u32 %v3824, %v3825
        %v3827 = vrot.slane %v3826, 4
        %v3828 = vshrl.u32 %v363, 16
        %v3830 = vrot.slane %v3828, 5
        %v3831 = vrot.slane %v391, 6
        %v3832 = vor.u32 %v3830, %v3831
        %v3833 = vsel %vm3813, %v3827, %v3832
        %v3834 = vld [vmem:[%s1 + $0xf00] sm:$0xff]
        %v3835 = vld [vmem:[%s1 + $0xf08] sm:$0xff]
        %v3836 = vld [vmem:[%s1 + $0xf10] sm:$0xff]
        %v3837 = vld [vmem:[%s1 + $0xf18] sm:$0xff]
        %v3838 = vld [vmem:[%s1 + $0xf20] sm:$0xff]
        %v3839 = vld [vmem:[%s1 + $0xf28] sm:$0xff]
        %v3840 = vld [vmem:[%s1 + $0xf30] sm:$0xff]
        %v3841 = vld [vmem:[%s1 + $0xf38] sm:$0xff]
        %v3842 = vld [vmem:[%s1 + $0xf40] sm:$0xff]
        %v3843 = vld [vmem:[%s1 + $0xf48] sm:$0xff]
        %v3844 = vld [vmem:[%s1 + $0xf50] sm:$0xff]
        %v3845 = vld [vmem:[%s1 + $0xf58] sm:$0xff]
        %v3846 = vld [vmem:[%s1 + $0xf60] sm:$0xff]
        %v3847 = vld [vmem:[%s1 + $0xf68] sm:$0xff]
        %v3848 = vld [vmem:[%s1 + $0xf70] sm:$0xff]
        %v3849 = vld [vmem:[%s1 + $0xf78] sm:$0xff]
        %v3850 = vld [vmem:[%s1 + $0xf80] sm:$0xff]
        %v3851 = vld [vmem:[%s1 + $0xf88] sm:$0xff]
        %v3852 = vld [vmem:[%s1 + $0xf90] sm:$0xff]
        %v3853 = vld [vmem:[%s1 + $0xf98] sm:$0xff]
        %v3854 = vld [vmem:[%s1 + $0xfa0] sm:$0xff]
        %v3855 = vld [vmem:[%s1 + $0xfa8] sm:$0xff]
        %v3856 = vld [vmem:[%s1 + $0xfb0] sm:$0xff]
        %v3857 = vld [vmem:[%s1 + $0xfb8] sm:$0xff]
        %v3858 = vld [vmem:[%s1 + $0xfc0] sm:$0xff]
        %v3859 = vld [vmem:[%s1 + $0xfc8] sm:$0xff]
        %v3860 = vld [vmem:[%s1 + $0xfd0] sm:$0xff]
        %v3861 = vld [vmem:[%s1 + $0xfd8] sm:$0xff]
        %v3862 = vld [vmem:[%s1 + $0xfe0] sm:$0xff]
        %v3863 = vld [vmem:[%s1 + $0xfe8] sm:$0xff]
        %v3864 = vld [vmem:[%s1 + $0xff0] sm:$0xff]
        %v3865 = vld [vmem:[%s1 + $0xff8] sm:$0xff]
        %v3866 = vld [vmem:[%s1 + $0x1000] sm:$0xff]
        %v3867 = vld [vmem:[%s1 + $0x1008] sm:$0xff]
        %v3868 = vld [vmem:[%s1 + $0x1010] sm:$0xff]
        %v3869 = vld [vmem:[%s1 + $0x1018] sm:$0xff]
        %v3870 = vld [vmem:[%s1 + $0x1020] sm:$0xff]
        %v3871 = vld [vmem:[%s1 + $0x1028] sm:$0xff]
        %v3872 = vld [vmem:[%s1 + $0x1030] sm:$0xff]
        %v3873 = vld [vmem:[%s1 + $0x1038] sm:$0xff]
        %v3874 = vld [vmem:[%s1 + $0x1040] sm:$0xff]
        %v3875 = vld [vmem:[%s1 + $0x1048] sm:$0xff]
        %v3876 = vld [vmem:[%s1 + $0x1050] sm:$0xff]
        %v3877 = vld [vmem:[%s1 + $0x1058] sm:$0xff]
        %v3878 = vld [vmem:[%s1 + $0x1060] sm:$0xff]
        %v3879 = vld [vmem:[%s1 + $0x1068] sm:$0xff]
        %v3880 = vld [vmem:[%s1 + $0x1070] sm:$0xff]
        %v3881 = vld [vmem:[%s1 + $0x1078] sm:$0xff]
        %v3882 = vld [vmem:[%s1 + $0x1080] sm:$0xff]
        %v3883 = vld [vmem:[%s1 + $0x1088] sm:$0xff]
        %v3884 = vld [vmem:[%s1 + $0x1090] sm:$0xff]
        %v3885 = vld [vmem:[%s1 + $0x1098] sm:$0xff]
        %v3886 = vld [vmem:[%s1 + $0x10a0] sm:$0xff]
        %v3887 = vld [vmem:[%s1 + $0x10a8] sm:$0xff]
        %v3888 = vld [vmem:[%s1 + $0x10b0] sm:$0xff]
        %v3889 = vld [vmem:[%s1 + $0x10b8] sm:$0xff]
        %v3890 = vld [vmem:[%s1 + $0x10c0] sm:$0xff]
        %v3891 = vld [vmem:[%s1 + $0x10c8] sm:$0xff]
        %v3892 = vld [vmem:[%s1 + $0x10d0] sm:$0xff]
        %v3893 = vld [vmem:[%s1 + $0x10d8] sm:$0xff]
        %v3894 = vld [vmem:[%s1 + $0x10e0] sm:$0xff]
        %v3895 = vld [vmem:[%s1 + $0x10e8] sm:$0xff]
        %v3896 = vld [vmem:[%s1 + $0x10f0] sm:$0xff]
        %v3897 = vld [vmem:[%s1 + $0x10f8] sm:$0xff]
        %v3898 = vld [vmem:[%s1 + $0x1100] sm:$0xff]
        %v3899 = vld [vmem:[%s1 + $0x1108] sm:$0xff]
        %v3900 = vld [vmem:[%s1 + $0x1110] sm:$0xff]
        %v3901 = vld [vmem:[%s1 + $0x1118] sm:$0xff]
        %v3902 = vld [vmem:[%s1 + $0x1120] sm:$0xff]
        %v3903 = vld [vmem:[%s1 + $0x1128] sm:$0xff]
        %v3904 = vld [vmem:[%s1 + $0x1130] sm:$0xff]
        %v3905 = vld [vmem:[%s1 + $0x1138] sm:$0xff]
        %v3906 = vld [vmem:[%s1 + $0x1140] sm:$0xff]
        %v3907 = vld [vmem:[%s1 + $0x1148] sm:$0xff]
        %v3908 = vld [vmem:[%s1 + $0x1150] sm:$0xff]
        %v3909 = vld [vmem:[%s1 + $0x1158] sm:$0xff]
        %v3910 = vld [vmem:[%s1 + $0x1160] sm:$0xff]
        %v3911 = vld [vmem:[%s1 + $0x1168] sm:$0xff]
        %v3912 = vld [vmem:[%s1 + $0x1170] sm:$0xff]
        %v3913 = vld [vmem:[%s1 + $0x1178] sm:$0xff]
        %v3914 = vld [vmem:[%s1 + $0x1180] sm:$0xff]
        %v3915 = vld [vmem:[%s1 + $0x1188] sm:$0xff]
        %v3916 = vld [vmem:[%s1 + $0x1190] sm:$0xff]
        %v3917 = vld [vmem:[%s1 + $0x1198] sm:$0xff]
        %v3918 = vld [vmem:[%s1 + $0x11a0] sm:$0xff]
        %v3919 = vld [vmem:[%s1 + $0x11a8] sm:$0xff]
        %v3920 = vld [vmem:[%s1 + $0x11b0] sm:$0xff]
        %v3921 = vld [vmem:[%s1 + $0x11b8] sm:$0xff]
        %v3922 = vld [vmem:[%s1 + $0x11c0] sm:$0xff]
        %v3923 = vld [vmem:[%s1 + $0x11c8] sm:$0xff]
        %v3924 = vld [vmem:[%s1 + $0x11d0] sm:$0xff]
        %v3925 = vld [vmem:[%s1 + $0x11d8] sm:$0xff]
        %v3926 = vld [vmem:[%s1 + $0x11e0] sm:$0xff]
        %v3927 = vld [vmem:[%s1 + $0x11e8] sm:$0xff]
        %v3928 = vld [vmem:[%s1 + $0x11f0] sm:$0xff]
        %v3929 = vld [vmem:[%s1 + $0x11f8] sm:$0xff]
        %v3930 = vld [vmem:[%s1 + $0x1200] sm:$0xff]
        %v3931 = vld [vmem:[%s1 + $0x1208] sm:$0xff]
        %v3932 = vld [vmem:[%s1 + $0x1210] sm:$0xff]
        %v3933 = vld [vmem:[%s1 + $0x1218] sm:$0xff]
        %v3934 = vld [vmem:[%s1 + $0x1220] sm:$0xff]
        %v3935 = vld [vmem:[%s1 + $0x1228] sm:$0xff]
        %v3936 = vld [vmem:[%s1 + $0x1230] sm:$0xff]
        %v3937 = vld [vmem:[%s1 + $0x1238] sm:$0xff]
        %v3938 = vld [vmem:[%s1 + $0x1240] sm:$0xff]
        %v3939 = vld [vmem:[%s1 + $0x1248] sm:$0xff]
        %v3940 = vld [vmem:[%s1 + $0x1250] sm:$0xff]
        %v3941 = vld [vmem:[%s1 + $0x1258] sm:$0xff]
        %v3942 = vld [vmem:[%s1 + $0x1260] sm:$0xff]
        %v3943 = vld [vmem:[%s1 + $0x1268] sm:$0xff]
        %v3944 = vld [vmem:[%s1 + $0x1270] sm:$0xff]
        %v3945 = vld [vmem:[%s1 + $0x1278] sm:$0xff]
        %v3946 = vld [vmem:[%s1 + $0x1280] sm:$0xff]
        %v3947 = vld [vmem:[%s1 + $0x1288] sm:$0xff]
        %v3948 = vld [vmem:[%s1 + $0x1290] sm:$0xff]
        %v3949 = vld [vmem:[%s1 + $0x1298] sm:$0xff]
        %v3950 = vld [vmem:[%s1 + $0x12a0] sm:$0xff]
        %v3951 = vld [vmem:[%s1 + $0x12a8] sm:$0xff]
        %v3952 = vld [vmem:[%s1 + $0x12b0] sm:$0xff]
        %v3953 = vld [vmem:[%s1 + $0x12b8] sm:$0xff]
        %v3954 = vld [vmem:[%s1 + $0x12c0] sm:$0xff]
        %v3955 = vld [vmem:[%s1 + $0x12c8] sm:$0xff]
        %v3956 = vld [vmem:[%s1 + $0x12d0] sm:$0xff]
        %v3957 = vld [vmem:[%s1 + $0x12d8] sm:$0xff]
        %v3958 = vld [vmem:[%s1 + $0x12e0] sm:$0xff]
        %v3959 = vld [vmem:[%s1 + $0x12e8] sm:$0xff]
        %v3960 = vld [vmem:[%s1 + $0x12f0] sm:$0xff]
        %v3961 = vld [vmem:[%s1 + $0x12f8] sm:$0xff]
        %v3962 = vld [vmem:[%s1 + $0x1300] sm:$0xff]
        %v3963 = vld [vmem:[%s1 + $0x1308] sm:$0xff]
        %v3964 = vld [vmem:[%s1 + $0x1310] sm:$0xff]
        %v3965 = vld [vmem:[%s1 + $0x1318] sm:$0xff]
        %v3966 = vld [vmem:[%s1 + $0x1320] sm:$0xff]
        %v3967 = vld [vmem:[%s1 + $0x1328] sm:$0xff]
        %v3968 = vld [vmem:[%s1 + $0x1330] sm:$0xff]
        %v3969 = vld [vmem:[%s1 + $0x1338] sm:$0xff]
        %v3970 = vld [vmem:[%s1 + $0x1340] sm:$0xff]
        %v3971 = vld [vmem:[%s1 + $0x1348] sm:$0xff]
        %v3972 = vld [vmem:[%s1 + $0x1350] sm:$0xff]
        %v3973 = vld [vmem:[%s1 + $0x1358] sm:$0xff]
        %v3974 = vld [vmem:[%s1 + $0x1360] sm:$0xff]
        %v3975 = vld [vmem:[%s1 + $0x1368] sm:$0xff]
        %v3976 = vld [vmem:[%s1 + $0x1370] sm:$0xff]
        %v3977 = vld [vmem:[%s1 + $0x1378] sm:$0xff]
        %v3978 = vld [vmem:[%s1 + $0x1380] sm:$0xff]
        %v3979 = vld [vmem:[%s1 + $0x1388] sm:$0xff]
        %v3980 = vld [vmem:[%s1 + $0x1390] sm:$0xff]
        %v3981 = vld [vmem:[%s1 + $0x1398] sm:$0xff]
        %v3982 = vld [vmem:[%s1 + $0x13a0] sm:$0xff]
        %v3983 = vld [vmem:[%s1 + $0x13a8] sm:$0xff]
        %v3984 = vld [vmem:[%s1 + $0x13b0] sm:$0xff]
        %v3985 = vld [vmem:[%s1 + $0x13b8] sm:$0xff]
        %v3986 = vld [vmem:[%s1 + $0x13c0] sm:$0xff]
        %v3987 = vld [vmem:[%s1 + $0x13c8] sm:$0xff]
        %v3988 = vld [vmem:[%s1 + $0x13d0] sm:$0xff]
        %v3989 = vld [vmem:[%s1 + $0x13d8] sm:$0xff]
        %v3990 = vld [vmem:[%s1 + $0x13e0] sm:$0xff]
        %v3991 = vld [vmem:[%s1 + $0x13e8] sm:$0xff]
        %v3992 = vld [vmem:[%s1 + $0x13f0] sm:$0xff]
        %v3993 = vld [vmem:[%s1 + $0x13f8] sm:$0xff]
        %v3994 = vunpack.c.l.b16 %v3823
        %v3995 = vunpack.c.h.b16 %v3823
        %v3996 = vunpack.c.l.b16 %v3833
        %v3997 = vunpack.c.h.b16 %v3833
        %v3998 = vpack.c.b16 %v3996, %v3994
        %v3999 = vpack.c.b16 %v3997, %v3995
        %v4162 = vunpack.c.l.b16 %v3834
        %v4163 = vunpack.c.h.b16 %v3834
        %v4164 = vunpack.c.l.b16 %v3835
        %v4165 = vunpack.c.h.b16 %v3835
        %v4166 = vunpack.c.l.b16 %v3836
        %v4167 = vunpack.c.h.b16 %v3836
        %v4168 = vunpack.c.l.b16 %v3837
        %v4169 = vunpack.c.h.b16 %v3837
        %v4170 = vunpack.c.l.b16 %v3838
        %v4171 = vunpack.c.h.b16 %v3838
        %v4172 = vunpack.c.l.b16 %v3839
        %v4173 = vunpack.c.h.b16 %v3839
        %v4174 = vunpack.c.l.b16 %v3840
        %v4175 = vunpack.c.h.b16 %v3840
        %v4176 = vunpack.c.l.b16 %v3841
        %v4177 = vunpack.c.h.b16 %v3841
        %v4178 = vunpack.c.l.b16 %v3842
        %v4179 = vunpack.c.h.b16 %v3842
        %v4180 = vunpack.c.l.b16 %v3843
        %v4181 = vunpack.c.h.b16 %v3843
        %v4182 = vunpack.c.l.b16 %v3844
        %v4183 = vunpack.c.h.b16 %v3844
        %v4184 = vunpack.c.l.b16 %v3845
        %v4185 = vunpack.c.h.b16 %v3845
        %v4186 = vunpack.c.l.b16 %v3846
        %v4187 = vunpack.c.h.b16 %v3846
        %v4188 = vunpack.c.l.b16 %v3847
        %v4189 = vunpack.c.h.b16 %v3847
        %v4190 = vunpack.c.l.b16 %v3848
        %v4191 = vunpack.c.h.b16 %v3848
        %v4192 = vunpack.c.l.b16 %v3849
        %v4193 = vunpack.c.h.b16 %v3849
        %v4194 = vunpack.c.l.b16 %v3850
        %v4195 = vunpack.c.h.b16 %v3850
        %v4196 = vunpack.c.l.b16 %v3851
        %v4197 = vunpack.c.h.b16 %v3851
        %v4198 = vunpack.c.l.b16 %v3852
        %v4199 = vunpack.c.h.b16 %v3852
        %v4200 = vunpack.c.l.b16 %v3853
        %v4201 = vunpack.c.h.b16 %v3853
        %v4202 = vunpack.c.l.b16 %v3854
        %v4203 = vunpack.c.h.b16 %v3854
        %v4204 = vunpack.c.l.b16 %v3855
        %v4205 = vunpack.c.h.b16 %v3855
        %v4206 = vunpack.c.l.b16 %v3856
        %v4207 = vunpack.c.h.b16 %v3856
        %v4208 = vunpack.c.l.b16 %v3857
        %v4209 = vunpack.c.h.b16 %v3857
        %v4210 = vunpack.c.l.b16 %v3858
        %v4211 = vunpack.c.h.b16 %v3858
        %v4212 = vunpack.c.l.b16 %v3859
        %v4213 = vunpack.c.h.b16 %v3859
        %v4214 = vunpack.c.l.b16 %v3860
        %v4215 = vunpack.c.h.b16 %v3860
        %v4216 = vunpack.c.l.b16 %v3861
        %v4217 = vunpack.c.h.b16 %v3861
        %v4218 = vunpack.c.l.b16 %v3862
        %v4219 = vunpack.c.h.b16 %v3862
        %v4220 = vunpack.c.l.b16 %v3863
        %v4221 = vunpack.c.h.b16 %v3863
        %v4222 = vunpack.c.l.b16 %v3864
        %v4223 = vunpack.c.h.b16 %v3864
        %v4224 = vunpack.c.l.b16 %v3865
        %v4225 = vunpack.c.h.b16 %v3865
        %v4226 = vunpack.c.l.b16 %v3866
        %v4227 = vunpack.c.h.b16 %v3866
        %v4228 = vunpack.c.l.b16 %v3867
        %v4229 = vunpack.c.h.b16 %v3867
        %v4230 = vunpack.c.l.b16 %v3868
        %v4231 = vunpack.c.h.b16 %v3868
        %v4232 = vunpack.c.l.b16 %v3869
        %v4233 = vunpack.c.h.b16 %v3869
        %v4234 = vunpack.c.l.b16 %v3870
        %v4235 = vunpack.c.h.b16 %v3870
        %v4236 = vunpack.c.l.b16 %v3871
        %v4237 = vunpack.c.h.b16 %v3871
        %v4238 = vunpack.c.l.b16 %v3872
        %v4239 = vunpack.c.h.b16 %v3872
        %v4240 = vunpack.c.l.b16 %v3873
        %v4241 = vunpack.c.h.b16 %v3873
        %v4242 = vunpack.c.l.b16 %v3874
        %v4243 = vunpack.c.h.b16 %v3874
        %v4244 = vunpack.c.l.b16 %v3875
        %v4245 = vunpack.c.h.b16 %v3875
        %v4246 = vunpack.c.l.b16 %v3876
        %v4247 = vunpack.c.h.b16 %v3876
        %v4248 = vunpack.c.l.b16 %v3877
        %v4249 = vunpack.c.h.b16 %v3877
        %v4250 = vunpack.c.l.b16 %v3878
        %v4251 = vunpack.c.h.b16 %v3878
        %v4252 = vunpack.c.l.b16 %v3879
        %v4253 = vunpack.c.h.b16 %v3879
        %v4254 = vunpack.c.l.b16 %v3880
        %v4255 = vunpack.c.h.b16 %v3880
        %v4256 = vunpack.c.l.b16 %v3881
        %v4257 = vunpack.c.h.b16 %v3881
        %v4258 = vunpack.c.l.b16 %v3882
        %v4259 = vunpack.c.h.b16 %v3882
        %v4260 = vunpack.c.l.b16 %v3883
        %v4261 = vunpack.c.h.b16 %v3883
        %v4262 = vunpack.c.l.b16 %v3884
        %v4263 = vunpack.c.h.b16 %v3884
        %v4264 = vunpack.c.l.b16 %v3885
        %v4265 = vunpack.c.h.b16 %v3885
        %v4266 = vunpack.c.l.b16 %v3886
        %v4267 = vunpack.c.h.b16 %v3886
        %v4268 = vunpack.c.l.b16 %v3887
        %v4269 = vunpack.c.h.b16 %v3887
        %v4270 = vunpack.c.l.b16 %v3888
        %v4271 = vunpack.c.h.b16 %v3888
        %v4272 = vunpack.c.l.b16 %v3889
        %v4273 = vunpack.c.h.b16 %v3889
        %v4274 = vunpack.c.l.b16 %v3890
        %v4275 = vunpack.c.h.b16 %v3890
        %v4276 = vunpack.c.l.b16 %v3891
        %v4277 = vunpack.c.h.b16 %v3891
        %v4278 = vunpack.c.l.b16 %v3892
        %v4279 = vunpack.c.h.b16 %v3892
        %v4280 = vunpack.c.l.b16 %v3893
        %v4281 = vunpack.c.h.b16 %v3893
        %v4282 = vunpack.c.l.b16 %v3894
        %v4283 = vunpack.c.h.b16 %v3894
        %v4284 = vunpack.c.l.b16 %v3895
        %v4285 = vunpack.c.h.b16 %v3895
        %v4286 = vunpack.c.l.b16 %v3896
        %v4287 = vunpack.c.h.b16 %v3896
        %v4288 = vunpack.c.l.b16 %v3897
        %v4289 = vunpack.c.h.b16 %v3897
        %v4290 = vunpack.c.l.b16 %v3898
        %v4291 = vunpack.c.h.b16 %v3898
        %v4292 = vunpack.c.l.b16 %v3899
        %v4293 = vunpack.c.h.b16 %v3899
        %v4294 = vunpack.c.l.b16 %v3900
        %v4295 = vunpack.c.h.b16 %v3900
        %v4296 = vunpack.c.l.b16 %v3901
        %v4297 = vunpack.c.h.b16 %v3901
        %v4298 = vunpack.c.l.b16 %v3902
        %v4299 = vunpack.c.h.b16 %v3902
        %v4300 = vunpack.c.l.b16 %v3903
        %v4301 = vunpack.c.h.b16 %v3903
        %v4302 = vunpack.c.l.b16 %v3904
        %v4303 = vunpack.c.h.b16 %v3904
        %v4304 = vunpack.c.l.b16 %v3905
        %v4305 = vunpack.c.h.b16 %v3905
        %v4306 = vunpack.c.l.b16 %v3906
        %v4307 = vunpack.c.h.b16 %v3906
        %v4308 = vunpack.c.l.b16 %v3907
        %v4309 = vunpack.c.h.b16 %v3907
        %v4310 = vunpack.c.l.b16 %v3908
        %v4311 = vunpack.c.h.b16 %v3908
        %v4312 = vunpack.c.l.b16 %v3909
        %v4313 = vunpack.c.h.b16 %v3909
        %v4314 = vunpack.c.l.b16 %v3910
        %v4315 = vunpack.c.h.b16 %v3910
        %v4316 = vunpack.c.l.b16 %v3911
        %v4317 = vunpack.c.h.b16 %v3911
        %v4318 = vunpack.c.l.b16 %v3912
        %v4319 = vunpack.c.h.b16 %v3912
        %v4320 = vunpack.c.l.b16 %v3913
        %v4321 = vunpack.c.h.b16 %v3913
        %v4322 = vunpack.c.l.b16 %v3914
        %v4323 = vunpack.c.h.b16 %v3914
        %v4324 = vunpack.c.l.b16 %v3915
        %v4325 = vunpack.c.h.b16 %v3915
        %v4326 = vunpack.c.l.b16 %v3916
        %v4327 = vunpack.c.h.b16 %v3916
        %v4328 = vunpack.c.l.b16 %v3917
        %v4329 = vunpack.c.h.b16 %v3917
        %v4330 = vunpack.c.l.b16 %v3918
        %v4331 = vunpack.c.h.b16 %v3918
        %v4332 = vunpack.c.l.b16 %v3919
        %v4333 = vunpack.c.h.b16 %v3919
        %v4334 = vunpack.c.l.b16 %v3920
        %v4335 = vunpack.c.h.b16 %v3920
        %v4336 = vunpack.c.l.b16 %v3921
        %v4337 = vunpack.c.h.b16 %v3921
        %v4338 = vunpack.c.l.b16 %v3922
        %v4339 = vunpack.c.h.b16 %v3922
        %v4340 = vunpack.c.l.b16 %v3923
        %v4341 = vunpack.c.h.b16 %v3923
        %v4342 = vunpack.c.l.b16 %v3924
        %v4343 = vunpack.c.h.b16 %v3924
        %v4344 = vunpack.c.l.b16 %v3925
        %v4345 = vunpack.c.h.b16 %v3925
        %v4346 = vunpack.c.l.b16 %v3926
        %v4347 = vunpack.c.h.b16 %v3926
        %v4348 = vunpack.c.l.b16 %v3927
        %v4349 = vunpack.c.h.b16 %v3927
        %v4350 = vunpack.c.l.b16 %v3928
        %v4351 = vunpack.c.h.b16 %v3928
        %v4352 = vunpack.c.l.b16 %v3929
        %v4353 = vunpack.c.h.b16 %v3929
        %v4354 = vunpack.c.l.b16 %v3930
        %v4355 = vunpack.c.h.b16 %v3930
        %v4356 = vunpack.c.l.b16 %v3931
        %v4357 = vunpack.c.h.b16 %v3931
        %v4358 = vunpack.c.l.b16 %v3932
        %v4359 = vunpack.c.h.b16 %v3932
        %v4360 = vunpack.c.l.b16 %v3933
        %v4361 = vunpack.c.h.b16 %v3933
        %v4362 = vunpack.c.l.b16 %v3934
        %v4363 = vunpack.c.h.b16 %v3934
        %v4364 = vunpack.c.l.b16 %v3935
        %v4365 = vunpack.c.h.b16 %v3935
        %v4366 = vunpack.c.l.b16 %v3936
        %v4367 = vunpack.c.h.b16 %v3936
        %v4368 = vunpack.c.l.b16 %v3937
        %v4369 = vunpack.c.h.b16 %v3937
        %v4370 = vunpack.c.l.b16 %v3938
        %v4371 = vunpack.c.h.b16 %v3938
        %v4372 = vunpack.c.l.b16 %v3939
        %v4373 = vunpack.c.h.b16 %v3939
        %v4374 = vunpack.c.l.b16 %v3940
        %v4375 = vunpack.c.h.b16 %v3940
        %v4376 = vunpack.c.l.b16 %v3941
        %v4377 = vunpack.c.h.b16 %v3941
        %v4378 = vunpack.c.l.b16 %v3942
        %v4379 = vunpack.c.h.b16 %v3942
        %v4380 = vunpack.c.l.b16 %v3943
        %v4381 = vunpack.c.h.b16 %v3943
        %v4382 = vunpack.c.l.b16 %v3944
        %v4383 = vunpack.c.h.b16 %v3944
        %v4384 = vunpack.c.l.b16 %v3945
        %v4385 = vunpack.c.h.b16 %v3945
        %v4386 = vunpack.c.l.b16 %v3946
        %v4387 = vunpack.c.h.b16 %v3946
        %v4388 = vunpack.c.l.b16 %v3947
        %v4389 = vunpack.c.h.b16 %v3947
        %v4390 = vunpack.c.l.b16 %v3948
        %v4391 = vunpack.c.h.b16 %v3948
        %v4392 = vunpack.c.l.b16 %v3949
        %v4393 = vunpack.c.h.b16 %v3949
        %v4394 = vunpack.c.l.b16 %v3950
        %v4395 = vunpack.c.h.b16 %v3950
        %v4396 = vunpack.c.l.b16 %v3951
        %v4397 = vunpack.c.h.b16 %v3951
        %v4398 = vunpack.c.l.b16 %v3952
        %v4399 = vunpack.c.h.b16 %v3952
        %v4400 = vunpack.c.l.b16 %v3953
        %v4401 = vunpack.c.h.b16 %v3953
        %v4402 = vunpack.c.l.b16 %v3954
        %v4403 = vunpack.c.h.b16 %v3954
        %v4404 = vunpack.c.l.b16 %v3955
        %v4405 = vunpack.c.h.b16 %v3955
        %v4406 = vunpack.c.l.b16 %v3956
        %v4407 = vunpack.c.h.b16 %v3956
        %v4408 = vunpack.c.l.b16 %v3957
        %v4409 = vunpack.c.h.b16 %v3957
        %v4410 = vunpack.c.l.b16 %v3958
        %v4411 = vunpack.c.h.b16 %v3958
        %v4412 = vunpack.c.l.b16 %v3959
        %v4413 = vunpack.c.h.b16 %v3959
        %v4414 = vunpack.c.l.b16 %v3960
        %v4415 = vunpack.c.h.b16 %v3960
        %v4416 = vunpack.c.l.b16 %v3961
        %v4417 = vunpack.c.h.b16 %v3961
        %v4418 = vunpack.c.l.b16 %v3962
        %v4419 = vunpack.c.h.b16 %v3962
        %v4420 = vunpack.c.l.b16 %v3963
        %v4421 = vunpack.c.h.b16 %v3963
        %v4422 = vunpack.c.l.b16 %v3964
        %v4423 = vunpack.c.h.b16 %v3964
        %v4424 = vunpack.c.l.b16 %v3965
        %v4425 = vunpack.c.h.b16 %v3965
        %v4426 = vunpack.c.l.b16 %v3966
        %v4427 = vunpack.c.h.b16 %v3966
        %v4428 = vunpack.c.l.b16 %v3967
        %v4429 = vunpack.c.h.b16 %v3967
        %v4430 = vunpack.c.l.b16 %v3968
        %v4431 = vunpack.c.h.b16 %v3968
        %v4432 = vunpack.c.l.b16 %v3969
        %v4433 = vunpack.c.h.b16 %v3969
        %v4434 = vunpack.c.l.b16 %v3970
        %v4435 = vunpack.c.h.b16 %v3970
        %v4436 = vunpack.c.l.b16 %v3971
        %v4437 = vunpack.c.h.b16 %v3971
        %v4438 = vunpack.c.l.b16 %v3972
        %v4439 = vunpack.c.h.b16 %v3972
        %v4440 = vunpack.c.l.b16 %v3973
        %v4441 = vunpack.c.h.b16 %v3973
        %v4442 = vunpack.c.l.b16 %v3974
        %v4443 = vunpack.c.h.b16 %v3974
        %v4444 = vunpack.c.l.b16 %v3975
        %v4445 = vunpack.c.h.b16 %v3975
        %v4446 = vunpack.c.l.b16 %v3976
        %v4447 = vunpack.c.h.b16 %v3976
        %v4448 = vunpack.c.l.b16 %v3977
        %v4449 = vunpack.c.h.b16 %v3977
        %v4450 = vunpack.c.l.b16 %v3978
        %v4451 = vunpack.c.h.b16 %v3978
        %v4452 = vunpack.c.l.b16 %v3979
        %v4453 = vunpack.c.h.b16 %v3979
        %v4454 = vunpack.c.l.b16 %v3980
        %v4455 = vunpack.c.h.b16 %v3980
        %v4456 = vunpack.c.l.b16 %v3981
        %v4457 = vunpack.c.h.b16 %v3981
        %v4458 = vunpack.c.l.b16 %v3982
        %v4459 = vunpack.c.h.b16 %v3982
        %v4460 = vunpack.c.l.b16 %v3983
        %v4461 = vunpack.c.h.b16 %v3983
        %v4462 = vunpack.c.l.b16 %v3984
        %v4463 = vunpack.c.h.b16 %v3984
        %v4464 = vunpack.c.l.b16 %v3985
        %v4465 = vunpack.c.h.b16 %v3985
        %v4466 = vunpack.c.l.b16 %v3986
        %v4467 = vunpack.c.h.b16 %v3986
        %v4468 = vunpack.c.l.b16 %v3987
        %v4469 = vunpack.c.h.b16 %v3987
        %v4470 = vunpack.c.l.b16 %v3988
        %v4471 = vunpack.c.h.b16 %v3988
        %v4472 = vunpack.c.l.b16 %v3989
        %v4473 = vunpack.c.h.b16 %v3989
        %v4474 = vunpack.c.l.b16 %v3990
        %v4475 = vunpack.c.h.b16 %v3990
        %v4476 = vunpack.c.l.b16 %v3991
        %v4477 = vunpack.c.h.b16 %v3991
        %v4478 = vunpack.c.l.b16 %v3992
        %v4479 = vunpack.c.h.b16 %v3992
        %v4480 = vunpack.c.l.b16 %v3993
        %v4481 = vunpack.c.h.b16 %v3993
        %v4482 = vpack.c.b16 %v4172, %v4162
        %v4483 = vpack.c.b16 %v4173, %v4163
        %v4484 = vpack.c.b16 %v4174, %v4164
        %v4485 = vpack.c.b16 %v4175, %v4165
        %v4486 = vpack.c.b16 %v4176, %v4166
        %v4487 = vpack.c.b16 %v4177, %v4167
        %v4488 = vpack.c.b16 %v4178, %v4168
        %v4489 = vpack.c.b16 %v4179, %v4169
        %v4490 = vpack.c.b16 %v4180, %v4170
        %v4491 = vpack.c.b16 %v4181, %v4171
        %v4492 = vpack.c.b16 %v4192, %v4182
        %v4493 = vpack.c.b16 %v4193, %v4183
        %v4494 = vpack.c.b16 %v4194, %v4184
        %v4495 = vpack.c.b16 %v4195, %v4185
        %v4496 = vpack.c.b16 %v4196, %v4186
        %v4497 = vpack.c.b16 %v4197, %v4187
        %v4498 = vpack.c.b16 %v4198, %v4188
        %v4499 = vpack.c.b16 %v4199, %v4189
        %v4500 = vpack.c.b16 %v4200, %v4190
        %v4501 = vpack.c.b16 %v4201, %v4191
        %v4502 = vpack.c.b16 %v4212, %v4202
        %v4503 = vpack.c.b16 %v4213, %v4203
        %v4504 = vpack.c.b16 %v4214, %v4204
        %v4505 = vpack.c.b16 %v4215, %v4205
        %v4506 = vpack.c.b16 %v4216, %v4206
        %v4507 = vpack.c.b16 %v4217, %v4207
        %v4508 = vpack.c.b16 %v4218, %v4208
        %v4509 = vpack.c.b16 %v4219, %v4209
        %v4510 = vpack.c.b16 %v4220, %v4210
        %v4511 = vpack.c.b16 %v4221, %v4211
        %v4512 = vpack.c.b16 %v4232, %v4222
        %v4513 = vpack.c.b16 %v4233, %v4223
        %v4514 = vpack.c.b16 %v4234, %v4224
        %v4515 = vpack.c.b16 %v4235, %v4225
        %v4516 = vpack.c.b16 %v4236, %v4226
        %v4517 = vpack.c.b16 %v4237, %v4227
        %v4518 = vpack.c.b16 %v4238, %v4228
        %v4519 = vpack.c.b16 %v4239, %v4229
        %v4520 = vpack.c.b16 %v4240, %v4230
        %v4521 = vpack.c.b16 %v4241, %v4231
        %v4522 = vpack.c.b16 %v4252, %v4242
        %v4523 = vpack.c.b16 %v4253, %v4243
        %v4524 = vpack.c.b16 %v4254, %v4244
        %v4525 = vpack.c.b16 %v4255, %v4245
        %v4526 = vpack.c.b16 %v4256, %v4246
        %v4527 = vpack.c.b16 %v4257, %v4247
        %v4528 = vpack.c.b16 %v4258, %v4248
        %v4529 = vpack.c.b16 %v4259, %v4249
        %v4530 = vpack.c.b16 %v4260, %v4250
        %v4531 = vpack.c.b16 %v4261, %v4251
        %v4532 = vpack.c.b16 %v4272, %v4262
        %v4533 = vpack.c.b16 %v4273, %v4263
        %v4534 = vpack.c.b16 %v4274, %v4264
        %v4535 = vpack.c.b16 %v4275, %v4265
        %v4536 = vpack.c.b16 %v4276, %v4266
        %v4537 = vpack.c.b16 %v4277, %v4267
        %v4538 = vpack.c.b16 %v4278, %v4268
        %v4539 = vpack.c.b16 %v4279, %v4269
        %v4540 = vpack.c.b16 %v4280, %v4270
        %v4541 = vpack.c.b16 %v4281, %v4271
        %v4542 = vpack.c.b16 %v4292, %v4282
        %v4543 = vpack.c.b16 %v4293, %v4283
        %v4544 = vpack.c.b16 %v4294, %v4284
        %v4545 = vpack.c.b16 %v4295, %v4285
        %v4546 = vpack.c.b16 %v4296, %v4286
        %v4547 = vpack.c.b16 %v4297, %v4287
        %v4548 = vpack.c.b16 %v4298, %v4288
        %v4549 = vpack.c.b16 %v4299, %v4289
        %v4550 = vpack.c.b16 %v4300, %v4290
        %v4551 = vpack.c.b16 %v4301, %v4291
        %v4552 = vpack.c.b16 %v4312, %v4302
        %v4553 = vpack.c.b16 %v4313, %v4303
        %v4554 = vpack.c.b16 %v4314, %v4304
        %v4555 = vpack.c.b16 %v4315, %v4305
        %v4556 = vpack.c.b16 %v4316, %v4306
        %v4557 = vpack.c.b16 %v4317, %v4307
        %v4558 = vpack.c.b16 %v4318, %v4308
        %v4559 = vpack.c.b16 %v4319, %v4309
        %v4560 = vpack.c.b16 %v4320, %v4310
        %v4561 = vpack.c.b16 %v4321, %v4311
        %v4562 = vpack.c.b16 %v4332, %v4322
        %v4563 = vpack.c.b16 %v4333, %v4323
        %v4564 = vpack.c.b16 %v4334, %v4324
        %v4565 = vpack.c.b16 %v4335, %v4325
        %v4566 = vpack.c.b16 %v4336, %v4326
        %v4567 = vpack.c.b16 %v4337, %v4327
        %v4568 = vpack.c.b16 %v4338, %v4328
        %v4569 = vpack.c.b16 %v4339, %v4329
        %v4570 = vpack.c.b16 %v4340, %v4330
        %v4571 = vpack.c.b16 %v4341, %v4331
        %v4572 = vpack.c.b16 %v4352, %v4342
        %v4573 = vpack.c.b16 %v4353, %v4343
        %v4574 = vpack.c.b16 %v4354, %v4344
        %v4575 = vpack.c.b16 %v4355, %v4345
        %v4576 = vpack.c.b16 %v4356, %v4346
        %v4577 = vpack.c.b16 %v4357, %v4347
        %v4578 = vpack.c.b16 %v4358, %v4348
        %v4579 = vpack.c.b16 %v4359, %v4349
        %v4580 = vpack.c.b16 %v4360, %v4350
        %v4581 = vpack.c.b16 %v4361, %v4351
        %v4582 = vpack.c.b16 %v4372, %v4362
        %v4583 = vpack.c.b16 %v4373, %v4363
        %v4584 = vpack.c.b16 %v4374, %v4364
        %v4585 = vpack.c.b16 %v4375, %v4365
        %v4586 = vpack.c.b16 %v4376, %v4366
        %v4587 = vpack.c.b16 %v4377, %v4367
        %v4588 = vpack.c.b16 %v4378, %v4368
        %v4589 = vpack.c.b16 %v4379, %v4369
        %v4590 = vpack.c.b16 %v4380, %v4370
        %v4591 = vpack.c.b16 %v4381, %v4371
        %v4592 = vpack.c.b16 %v4392, %v4382
        %v4593 = vpack.c.b16 %v4393, %v4383
        %v4594 = vpack.c.b16 %v4394, %v4384
        %v4595 = vpack.c.b16 %v4395, %v4385
        %v4596 = vpack.c.b16 %v4396, %v4386
        %v4597 = vpack.c.b16 %v4397, %v4387
        %v4598 = vpack.c.b16 %v4398, %v4388
        %v4599 = vpack.c.b16 %v4399, %v4389
        %v4600 = vpack.c.b16 %v4400, %v4390
        %v4601 = vpack.c.b16 %v4401, %v4391
        %v4602 = vpack.c.b16 %v4412, %v4402
        %v4603 = vpack.c.b16 %v4413, %v4403
        %v4604 = vpack.c.b16 %v4414, %v4404
        %v4605 = vpack.c.b16 %v4415, %v4405
        %v4606 = vpack.c.b16 %v4416, %v4406
        %v4607 = vpack.c.b16 %v4417, %v4407
        %v4608 = vpack.c.b16 %v4418, %v4408
        %v4609 = vpack.c.b16 %v4419, %v4409
        %v4610 = vpack.c.b16 %v4420, %v4410
        %v4611 = vpack.c.b16 %v4421, %v4411
        %v4612 = vpack.c.b16 %v4432, %v4422
        %v4613 = vpack.c.b16 %v4433, %v4423
        %v4614 = vpack.c.b16 %v4434, %v4424
        %v4615 = vpack.c.b16 %v4435, %v4425
        %v4616 = vpack.c.b16 %v4436, %v4426
        %v4617 = vpack.c.b16 %v4437, %v4427
        %v4618 = vpack.c.b16 %v4438, %v4428
        %v4619 = vpack.c.b16 %v4439, %v4429
        %v4620 = vpack.c.b16 %v4440, %v4430
        %v4621 = vpack.c.b16 %v4441, %v4431
        %v4622 = vpack.c.b16 %v4452, %v4442
        %v4623 = vpack.c.b16 %v4453, %v4443
        %v4624 = vpack.c.b16 %v4454, %v4444
        %v4625 = vpack.c.b16 %v4455, %v4445
        %v4626 = vpack.c.b16 %v4456, %v4446
        %v4627 = vpack.c.b16 %v4457, %v4447
        %v4628 = vpack.c.b16 %v4458, %v4448
        %v4629 = vpack.c.b16 %v4459, %v4449
        %v4630 = vpack.c.b16 %v4460, %v4450
        %v4631 = vpack.c.b16 %v4461, %v4451
        %v4632 = vpack.c.b16 %v4472, %v4462
        %v4633 = vpack.c.b16 %v4473, %v4463
        %v4634 = vpack.c.b16 %v4474, %v4464
        %v4635 = vpack.c.b16 %v4475, %v4465
        %v4636 = vpack.c.b16 %v4476, %v4466
        %v4637 = vpack.c.b16 %v4477, %v4467
        %v4638 = vpack.c.b16 %v4478, %v4468
        %v4639 = vpack.c.b16 %v4479, %v4469
        %v4640 = vpack.c.b16 %v4480, %v4470
        %v4641 = vpack.c.b16 %v4481, %v4471
        %4802 = vmatprep.subr.bf16.mxu0 %v4483
        %4803 = vmatpush1.bf16.msra.mxu0 %v4482
        %4804 = vmatprep.subr.bf16.mxu0 %v4493
        %4805 = vmatpush1.bf16.msra.mxu0 %v4492
        %4806 = vmatprep.subr.bf16.mxu0 %v4503
        %4807 = vmatpush1.bf16.msra.mxu0 %v4502
        %4808 = vmatprep.subr.bf16.mxu0 %v4513
        %4809 = vmatpush1.bf16.msra.mxu0 %v4512
        %4810 = vmatprep.subr.bf16.mxu0 %v4523
        %4811 = vmatpush1.bf16.msra.mxu0 %v4522
        %4812 = vmatprep.subr.bf16.mxu0 %v4533
        %4813 = vmatpush1.bf16.msra.mxu0 %v4532
        %4814 = vmatprep.subr.bf16.mxu0 %v4543
        %4815 = vmatpush1.bf16.msra.mxu0 %v4542
        %4816 = vmatprep.subr.bf16.mxu0 %v4553
        %4817 = vmatpush1.bf16.msra.mxu0 %v4552
        %4818 = vmatprep.subr.bf16.mxu0 %v4563
        %4819 = vmatpush1.bf16.msra.mxu0 %v4562
        %4820 = vmatprep.subr.bf16.mxu0 %v4573
        %4821 = vmatpush1.bf16.msra.mxu0 %v4572
        %4822 = vmatprep.subr.bf16.mxu0 %v4583
        %4823 = vmatpush1.bf16.msra.mxu0 %v4582
        %4824 = vmatprep.subr.bf16.mxu0 %v4593
        %4825 = vmatpush1.bf16.msra.mxu0 %v4592
        %4826 = vmatprep.subr.bf16.mxu0 %v4603
        %4827 = vmatpush1.bf16.msra.mxu0 %v4602
        %4828 = vmatprep.subr.bf16.mxu0 %v4613
        %4829 = vmatpush1.bf16.msra.mxu0 %v4612
        %4830 = vmatprep.subr.bf16.mxu0 %v4623
        %4831 = vmatpush1.bf16.msra.mxu0 %v4622
        %4832 = vmatprep.subr.bf16.mxu0 %v4633
        %4833 = vmatpush1.bf16.msra.mxu0 %v4632
        %4834 = vmatprep.mubr.bf16.mxu0 %v3999
        %4835 = vmatmul.mubr.bf16.gmra.mrb[0].mxu0 %v3998
        %v4836 = vpop.f32.mrb[0].mxu0
        %v4837 = vadd.f32 0.0, %v4836
        %v4838 = vpop.f32.mrb[0].mxu0
        %v4839 = vadd.f32 0.0, %v4838
        %v4840 = vpop.f32.mrb[0].mxu0
        %v4841 = vadd.f32 0.0, %v4840
        %v4842 = vpop.f32.mrb[0].mxu0
        %v4843 = vadd.f32 0.0, %v4842
        %4844 = vdwg.mxu0
        %4845 = vmatprep.subr.bf16.mxu0 %v4485
        %4846 = vmatpush1.bf16.msra.mxu0 %v4484
        %4847 = vmatprep.subr.bf16.mxu0 %v4495
        %4848 = vmatpush1.bf16.msra.mxu0 %v4494
        %4849 = vmatprep.subr.bf16.mxu0 %v4505
        %4850 = vmatpush1.bf16.msra.mxu0 %v4504
        %4851 = vmatprep.subr.bf16.mxu0 %v4515
        %4852 = vmatpush1.bf16.msra.mxu0 %v4514
        %4853 = vmatprep.subr.bf16.mxu0 %v4525
        %4854 = vmatpush1.bf16.msra.mxu0 %v4524
        %4855 = vmatprep.subr.bf16.mxu0 %v4535
        %4856 = vmatpush1.bf16.msra.mxu0 %v4534
        %4857 = vmatprep.subr.bf16.mxu0 %v4545
        %4858 = vmatpush1.bf16.msra.mxu0 %v4544
        %4859 = vmatprep.subr.bf16.mxu0 %v4555
        %4860 = vmatpush1.bf16.msra.mxu0 %v4554
        %4861 = vmatprep.subr.bf16.mxu0 %v4565
        %4862 = vmatpush1.bf16.msra.mxu0 %v4564
        %4863 = vmatprep.subr.bf16.mxu0 %v4575
        %4864 = vmatpush1.bf16.msra.mxu0 %v4574
        %4865 = vmatprep.subr.bf16.mxu0 %v4585
        %4866 = vmatpush1.bf16.msra.mxu0 %v4584
        %4867 = vmatprep.subr.bf16.mxu0 %v4595
        %4868 = vmatpush1.bf16.msra.mxu0 %v4594
        %4869 = vmatprep.subr.bf16.mxu0 %v4605
        %4870 = vmatpush1.bf16.msra.mxu0 %v4604
        %4871 = vmatprep.subr.bf16.mxu0 %v4615
        %4872 = vmatpush1.bf16.msra.mxu0 %v4614
        %4873 = vmatprep.subr.bf16.mxu0 %v4625
        %4874 = vmatpush1.bf16.msra.mxu0 %v4624
        %4875 = vmatprep.subr.bf16.mxu0 %v4635
        %4876 = vmatpush1.bf16.msra.mxu0 %v4634
        %4877 = vmatprep.mubr.bf16.mxu0 %v3999
        %4878 = vmatmul.mubr.bf16.gmra.mrb[0].mxu0 %v3998
        %v4879 = vpop.f32.mrb[0].mxu0
        %v4880 = vadd.f32 0.0, %v4879
        %v4881 = vpop.f32.mrb[0].mxu0
        %v4882 = vadd.f32 0.0, %v4881
        %v4883 = vpop.f32.mrb[0].mxu0
        %v4884 = vadd.f32 0.0, %v4883
        %v4885 = vpop.f32.mrb[0].mxu0
        %v4886 = vadd.f32 0.0, %v4885
        %4887 = vdwg.mxu0
        %4888 = vmatprep.subr.bf16.mxu0 %v4487
        %4889 = vmatpush1.bf16.msra.mxu0 %v4486
        %4890 = vmatprep.subr.bf16.mxu0 %v4497
        %4891 = vmatpush1.bf16.msra.mxu0 %v4496
        %4892 = vmatprep.subr.bf16.mxu0 %v4507
        %4893 = vmatpush1.bf16.msra.mxu0 %v4506
        %4894 = vmatprep.subr.bf16.mxu0 %v4517
        %4895 = vmatpush1.bf16.msra.mxu0 %v4516
        %4896 = vmatprep.subr.bf16.mxu0 %v4527
        %4897 = vmatpush1.bf16.msra.mxu0 %v4526
        %4898 = vmatprep.subr.bf16.mxu0 %v4537
        %4899 = vmatpush1.bf16.msra.mxu0 %v4536
        %4900 = vmatprep.subr.bf16.mxu0 %v4547
        %4901 = vmatpush1.bf16.msra.mxu0 %v4546
        %4902 = vmatprep.subr.bf16.mxu0 %v4557
        %4903 = vmatpush1.bf16.msra.mxu0 %v4556
        %4904 = vmatprep.subr.bf16.mxu0 %v4567
        %4905 = vmatpush1.bf16.msra.mxu0 %v4566
        %4906 = vmatprep.subr.bf16.mxu0 %v4577
        %4907 = vmatpush1.bf16.msra.mxu0 %v4576
        %4908 = vmatprep.subr.bf16.mxu0 %v4587
        %4909 = vmatpush1.bf16.msra.mxu0 %v4586
        %4910 = vmatprep.subr.bf16.mxu0 %v4597
        %4911 = vmatpush1.bf16.msra.mxu0 %v4596
        %4912 = vmatprep.subr.bf16.mxu0 %v4607
        %4913 = vmatpush1.bf16.msra.mxu0 %v4606
        %4914 = vmatprep.subr.bf16.mxu0 %v4617
        %4915 = vmatpush1.bf16.msra.mxu0 %v4616
        %4916 = vmatprep.subr.bf16.mxu0 %v4627
        %4917 = vmatpush1.bf16.msra.mxu0 %v4626
        %4918 = vmatprep.subr.bf16.mxu0 %v4637
        %4919 = vmatpush1.bf16.msra.mxu0 %v4636
        %4920 = vmatprep.mubr.bf16.mxu0 %v3999
        %4921 = vmatmul.mubr.bf16.gmra.mrb[0].mxu0 %v3998
        %v4922 = vpop.f32.mrb[0].mxu0
        %v4923 = vadd.f32 0.0, %v4922
        %v4924 = vpop.f32.mrb[0].mxu0
        %v4925 = vadd.f32 0.0, %v4924
        %v4926 = vpop.f32.mrb[0].mxu0
        %v4927 = vadd.f32 0.0, %v4926
        %v4928 = vpop.f32.mrb[0].mxu0
        %v4929 = vadd.f32 0.0, %v4928
        %4930 = vdwg.mxu0
        %4931 = vmatprep.subr.bf16.mxu0 %v4489
        %4932 = vmatpush1.bf16.msra.mxu0 %v4488
        %4933 = vmatprep.subr.bf16.mxu0 %v4499
        %4934 = vmatpush1.bf16.msra.mxu0 %v4498
        %4935 = vmatprep.subr.bf16.mxu0 %v4509
        %4936 = vmatpush1.bf16.msra.mxu0 %v4508
        %4937 = vmatprep.subr.bf16.mxu0 %v4519
        %4938 = vmatpush1.bf16.msra.mxu0 %v4518
        %4939 = vmatprep.subr.bf16.mxu0 %v4529
        %4940 = vmatpush1.bf16.msra.mxu0 %v4528
        %4941 = vmatprep.subr.bf16.mxu0 %v4539
        %4942 = vmatpush1.bf16.msra.mxu0 %v4538
        %4943 = vmatprep.subr.bf16.mxu0 %v4549
        %4944 = vmatpush1.bf16.msra.mxu0 %v4548
        %4945 = vmatprep.subr.bf16.mxu0 %v4559
        %4946 = vmatpush1.bf16.msra.mxu0 %v4558
        %4947 = vmatprep.subr.bf16.mxu0 %v4569
        %4948 = vmatpush1.bf16.msra.mxu0 %v4568
        %4949 = vmatprep.subr.bf16.mxu0 %v4579
        %4950 = vmatpush1.bf16.msra.mxu0 %v4578
        %4951 = vmatprep.subr.bf16.mxu0 %v4589
        %4952 = vmatpush1.bf16.msra.mxu0 %v4588
        %4953 = vmatprep.subr.bf16.mxu0 %v4599
        %4954 = vmatpush1.bf16.msra.mxu0 %v4598
        %4955 = vmatprep.subr.bf16.mxu0 %v4609
        %4956 = vmatpush1.bf16.msra.mxu0 %v4608
        %4957 = vmatprep.subr.bf16.mxu0 %v4619
        %4958 = vmatpush1.bf16.msra.mxu0 %v4618
        %4959 = vmatprep.subr.bf16.mxu0 %v4629
        %4960 = vmatpush1.bf16.msra.mxu0 %v4628
        %4961 = vmatprep.subr.bf16.mxu0 %v4639
        %4962 = vmatpush1.bf16.msra.mxu0 %v4638
        %4963 = vmatprep.mubr.bf16.mxu0 %v3999
        %4964 = vmatmul.mubr.bf16.gmra.mrb[0].mxu0 %v3998
        %v4965 = vpop.f32.mrb[0].mxu0
        %v4966 = vadd.f32 0.0, %v4965
        %v4967 = vpop.f32.mrb[0].mxu0
        %v4968 = vadd.f32 0.0, %v4967
        %v4969 = vpop.f32.mrb[0].mxu0
        %v4970 = vadd.f32 0.0, %v4969
        %v4971 = vpop.f32.mrb[0].mxu0
        %v4972 = vadd.f32 0.0, %v4971
        %4973 = vdwg.mxu0
        %4974 = vmatprep.subr.bf16.mxu0 %v4491
        %4975 = vmatpush1.bf16.msra.mxu0 %v4490
        %4976 = vmatprep.subr.bf16.mxu0 %v4501
        %4977 = vmatpush1.bf16.msra.mxu0 %v4500
        %4978 = vmatprep.subr.bf16.mxu0 %v4511
        %4979 = vmatpush1.bf16.msra.mxu0 %v4510
        %4980 = vmatprep.subr.bf16.mxu0 %v4521
        %4981 = vmatpush1.bf16.msra.mxu0 %v4520
        %4982 = vmatprep.subr.bf16.mxu0 %v4531
        %4983 = vmatpush1.bf16.msra.mxu0 %v4530
        %4984 = vmatprep.subr.bf16.mxu0 %v4541
        %4985 = vmatpush1.bf16.msra.mxu0 %v4540
        %4986 = vmatprep.subr.bf16.mxu0 %v4551
        %4987 = vmatpush1.bf16.msra.mxu0 %v4550
        %4988 = vmatprep.subr.bf16.mxu0 %v4561
        %4989 = vmatpush1.bf16.msra.mxu0 %v4560
        %4990 = vmatprep.subr.bf16.mxu0 %v4571
        %4991 = vmatpush1.bf16.msra.mxu0 %v4570
        %4992 = vmatprep.subr.bf16.mxu0 %v4581
        %4993 = vmatpush1.bf16.msra.mxu0 %v4580
        %4994 = vmatprep.subr.bf16.mxu0 %v4591
        %4995 = vmatpush1.bf16.msra.mxu0 %v4590
        %4996 = vmatprep.subr.bf16.mxu0 %v4601
        %4997 = vmatpush1.bf16.msra.mxu0 %v4600
        %4998 = vmatprep.subr.bf16.mxu0 %v4611
        %4999 = vmatpush1.bf16.msra.mxu0 %v4610
        %5000 = vmatprep.subr.bf16.mxu0 %v4621
        %5001 = vmatpush1.bf16.msra.mxu0 %v4620
        %5002 = vmatprep.subr.bf16.mxu0 %v4631
        %5003 = vmatpush1.bf16.msra.mxu0 %v4630
        %5004 = vmatprep.subr.bf16.mxu0 %v4641
        %5005 = vmatpush1.bf16.msra.mxu0 %v4640
        %5006 = vmatprep.mubr.bf16.mxu0 %v3999
        %5007 = vmatmul.mubr.bf16.gmra.mrb[0].mxu0 %v3998
        %v5008 = vpop.f32.mrb[0].mxu0
        %v5009 = vadd.f32 0.0, %v5008
        %v5010 = vpop.f32.mrb[0].mxu0
        %v5011 = vadd.f32 0.0, %v5010
        %v5012 = vpop.f32.mrb[0].mxu0
        %v5013 = vadd.f32 0.0, %v5012
        %v5014 = vpop.f32.mrb[0].mxu0
        %v5015 = vadd.f32 0.0, %v5014
        %5016 = vdwg.mxu0
        %v5017 = vadd.f32 %v3791, %v4837
        %v5018 = vadd.f32 %v3792, %v4839
        %v5019 = vadd.f32 %v3793, %v4880
        %v5020 = vadd.f32 %v3794, %v4882
        %v5021 = vadd.f32 %v3795, %v4923
        %v5022 = vadd.f32 %v3796, %v4925
        %v5023 = vadd.f32 %v3797, %v4966
        %v5024 = vadd.f32 %v3798, %v4968
        %v5025 = vadd.f32 %v3799, %v5009
        %v5026 = vadd.f32 %v3800, %v5011
        %v5027 = vadd.f32 %v3801, %v4841
        %v5028 = vadd.f32 %v3802, %v4843
        %v5029 = vadd.f32 %v3803, %v4884
        %v5030 = vadd.f32 %v3804, %v4886
        %v5031 = vadd.f32 %v3805, %v4927
        %v5032 = vadd.f32 %v3806, %v4929
        %v5033 = vadd.f32 %v3807, %v4970
        %v5034 = vadd.f32 %v3808, %v4972
        %v5035 = vadd.f32 %v3809, %v5013
        %v5036 = vadd.f32 %v3810, %v5015
        %v5037 = vmul.f32 %v5017, %v5017
        %v5038 = vmul.f32 %v5018, %v5018
        %v5039 = vmul.f32 %v5019, %v5019
        %v5040 = vmul.f32 %v5020, %v5020
        %v5041 = vmul.f32 %v5021, %v5021
        %v5042 = vmul.f32 %v5027, %v5027
        %v5043 = vmul.f32 %v5028, %v5028
        %v5044 = vmul.f32 %v5029, %v5029
        %v5045 = vmul.f32 %v5030, %v5030
        %v5046 = vmul.f32 %v5031, %v5031
        %v5047 = vmul.f32 %v5022, %v5022
        %v5048 = vmul.f32 %v5023, %v5023
        %v5049 = vmul.f32 %v5024, %v5024
        %v5050 = vmul.f32 %v5025, %v5025
        %v5051 = vmul.f32 %v5026, %v5026
        %v5052 = vmul.f32 %v5032, %v5032
        %v5053 = vmul.f32 %v5033, %v5033
        %v5054 = vmul.f32 %v5034, %v5034
        %v5055 = vmul.f32 %v5035, %v5035
        %v5056 = vmul.f32 %v5036, %v5036
        %v5057 = vadd.f32 %v5037, %v5047
        %v5058 = vadd.f32 %v5038, %v5048
        %v5059 = vadd.f32 %v5039, %v5049
        %v5060 = vadd.f32 %v5040, %v5050
        %v5061 = vadd.f32 %v5041, %v5051
        %v5062 = vadd.f32 %v5042, %v5052
        %v5063 = vadd.f32 %v5043, %v5053
        %v5064 = vadd.f32 %v5044, %v5054
        %v5065 = vadd.f32 %v5045, %v5055
        %v5066 = vadd.f32 %v5046, %v5056
        %v5067 = vadd.f32 %v5057, 1e-09
        %v5068 = vadd.f32 %v5058, 1e-09
        %v5069 = vadd.f32 %v5059, 1e-09
        %v5070 = vadd.f32 %v5060, 1e-09
        %v5071 = vadd.f32 %v5061, 1e-09
        %v5072 = vadd.f32 %v5062, 1e-09
        %v5073 = vadd.f32 %v5063, 1e-09
        %v5074 = vadd.f32 %v5064, 1e-09
        %v5075 = vadd.f32 %v5065, 1e-09
        %v5076 = vadd.f32 %v5066, 1e-09
        %v5077 = vrsqrt.pop %v5067
        %v5078 = vmul.f32 %v5067, %v5077
        %vm5079 = vcmp.eq.f32.partialorder %v5067, inf
        %v5080 = vsel %vm5079, %v5067, %v5078
        %vm5081 = vcmp.eq.f32.partialorder %v5067, 0.0
        %v5082 = vand.u32 %v5067, 2147483648
        %v5083 = vsel %vm5081, %v5082, %v5080
        %v5084 = vrsqrt.pop %v5068
        %v5085 = vmul.f32 %v5068, %v5084
        %vm5086 = vcmp.eq.f32.partialorder %v5068, inf
        %v5087 = vsel %vm5086, %v5068, %v5085
        %vm5088 = vcmp.eq.f32.partialorder %v5068, 0.0
        %v5089 = vand.u32 %v5068, 2147483648
        %v5090 = vsel %vm5088, %v5089, %v5087
        %v5091 = vrsqrt.pop %v5069
        %v5092 = vmul.f32 %v5069, %v5091
        %vm5093 = vcmp.eq.f32.partialorder %v5069, inf
        %v5094 = vsel %vm5093, %v5069, %v5092
        %vm5095 = vcmp.eq.f32.partialorder %v5069, 0.0
        %v5096 = vand.u32 %v5069, 2147483648
        %v5097 = vsel %vm5095, %v5096, %v5094
        %v5098 = vrsqrt.pop %v5070
        %v5099 = vmul.f32 %v5070, %v5098
        %vm5100 = vcmp.eq.f32.partialorder %v5070, inf
        %v5101 = vsel %vm5100, %v5070, %v5099
        %vm5102 = vcmp.eq.f32.partialorder %v5070, 0.0
        %v5103 = vand.u32 %v5070, 2147483648
        %v5104 = vsel %vm5102, %v5103, %v5101
        %v5105 = vrsqrt.pop %v5071
        %v5106 = vmul.f32 %v5071, %v5105
        %vm5107 = vcmp.eq.f32.partialorder %v5071, inf
        %v5108 = vsel %vm5107, %v5071, %v5106
        %vm5109 = vcmp.eq.f32.partialorder %v5071, 0.0
        %v5110 = vand.u32 %v5071, 2147483648
        %v5111 = vsel %vm5109, %v5110, %v5108
        %v5112 = vrsqrt.pop %v5072
        %v5113 = vmul.f32 %v5072, %v5112
        %vm5114 = vcmp.eq.f32.partialorder %v5072, inf
        %v5115 = vsel %vm5114, %v5072, %v5113
        %vm5116 = vcmp.eq.f32.partialorder %v5072, 0.0
        %v5117 = vand.u32 %v5072, 2147483648
        %v5118 = vsel %vm5116, %v5117, %v5115
        %v5119 = vrsqrt.pop %v5073
        %v5120 = vmul.f32 %v5073, %v5119
        %vm5121 = vcmp.eq.f32.partialorder %v5073, inf
        %v5122 = vsel %vm5121, %v5073, %v5120
        %vm5123 = vcmp.eq.f32.partialorder %v5073, 0.0
        %v5124 = vand.u32 %v5073, 2147483648
        %v5125 = vsel %vm5123, %v5124, %v5122
        %v5126 = vrsqrt.pop %v5074
        %v5127 = vmul.f32 %v5074, %v5126
        %vm5128 = vcmp.eq.f32.partialorder %v5074, inf
        %v5129 = vsel %vm5128, %v5074, %v5127
        %vm5130 = vcmp.eq.f32.partialorder %v5074, 0.0
        %v5131 = vand.u32 %v5074, 2147483648
        %v5132 = vsel %vm5130, %v5131, %v5129
        %v5133 = vrsqrt.pop %v5075
        %v5134 = vmul.f32 %v5075, %v5133
        %vm5135 = vcmp.eq.f32.partialorder %v5075, inf
        %v5136 = vsel %vm5135, %v5075, %v5134
        %vm5137 = vcmp.eq.f32.partialorder %v5075, 0.0
        %v5138 = vand.u32 %v5075, 2147483648
        %v5139 = vsel %vm5137, %v5138, %v5136
        %v5140 = vrsqrt.pop %v5076
        %v5141 = vmul.f32 %v5076, %v5140
        %vm5142 = vcmp.eq.f32.partialorder %v5076, inf
        %v5143 = vsel %vm5142, %v5076, %v5141
        %vm5144 = vcmp.eq.f32.partialorder %v5076, 0.0
        %v5145 = vand.u32 %v5076, 2147483648
        %v5146 = vsel %vm5144, %v5145, %v5143
        %v5147 = vpack.c.bf16 %v5118, %v5083
        %v5148 = vpack.c.bf16 %v5125, %v5090
        %v5149 = vpack.c.bf16 %v5132, %v5097
        %v5150 = vpack.c.bf16 %v5139, %v5104
        %v5151 = vpack.c.bf16 %v5146, %v5111
        %v5152 = vld [vmem:[%s2] sm:$0xf]
        %v5153 = vld [vmem:[%s2 + $0x4] sm:$0xf]
        %v5154 = vld [vmem:[%s2 + $0x8] sm:$0xf]
        %v5155 = vld [vmem:[%s2 + $0xc] sm:$0xf]
        %v5156 = vld [vmem:[%s2 + $0x10] sm:$0xf]
        %v5157 = vld [vmem:[%s2 + $0x14] sm:$0xf]
        %v5158 = vld [vmem:[%s2 + $0x18] sm:$0xf]
        %v5159 = vld [vmem:[%s2 + $0x1c] sm:$0xf]
        %v5160 = vld [vmem:[%s2 + $0x20] sm:$0xf]
        %v5161 = vld [vmem:[%s2 + $0x24] sm:$0xf]
        %v5162 = vld [vmem:[%s2 + $0x28] sm:$0xf]
        %v5163 = vld [vmem:[%s2 + $0x2c] sm:$0xf]
        %v5164 = vld [vmem:[%s2 + $0x30] sm:$0xf]
        %v5165 = vld [vmem:[%s2 + $0x34] sm:$0xf]
        %v5166 = vld [vmem:[%s2 + $0x38] sm:$0xf]
        %v5167 = vld [vmem:[%s2 + $0x3c] sm:$0xf]
        %v5168 = vld [vmem:[%s2 + $0x40] sm:$0xf]
        %v5169 = vld [vmem:[%s2 + $0x44] sm:$0xf]
        %v5170 = vld [vmem:[%s2 + $0x48] sm:$0xf]
        %v5171 = vld [vmem:[%s2 + $0x4c] sm:$0xf]
        %v5172 = vld [vmem:[%s2 + $0x50] sm:$0xf]
        %v5173 = vld [vmem:[%s2 + $0x54] sm:$0xf]
        %v5174 = vld [vmem:[%s2 + $0x58] sm:$0xf]
        %v5175 = vld [vmem:[%s2 + $0x5c] sm:$0xf]
        %v5176 = vld [vmem:[%s2 + $0x60] sm:$0xf]
        %v5177 = vld [vmem:[%s2 + $0x64] sm:$0xf]
        %v5178 = vld [vmem:[%s2 + $0x68] sm:$0xf]
        %v5179 = vld [vmem:[%s2 + $0x6c] sm:$0xf]
        %v5180 = vld [vmem:[%s2 + $0x70] sm:$0xf]
        %v5181 = vld [vmem:[%s2 + $0x74] sm:$0xf]
        %v5182 = vld [vmem:[%s2 + $0x78] sm:$0xf]
        %v5183 = vld [vmem:[%s2 + $0x7c] sm:$0xf]
        %v5184 = vld [vmem:[%s2 + $0x80] sm:$0xf]
        %v5185 = vld [vmem:[%s2 + $0x84] sm:$0xf]
        %v5186 = vld [vmem:[%s2 + $0x88] sm:$0xf]
        %v5187 = vld [vmem:[%s2 + $0x8c] sm:$0xf]
        %v5188 = vld [vmem:[%s2 + $0x90] sm:$0xf]
        %v5189 = vld [vmem:[%s2 + $0x94] sm:$0xf]
        %v5190 = vld [vmem:[%s2 + $0x98] sm:$0xf]
        %v5191 = vld [vmem:[%s2 + $0x9c] sm:$0xf]
        %v5192 = vld [vmem:[%s2 + $0xa0] sm:$0xf]
        %v5193 = vld [vmem:[%s2 + $0xa4] sm:$0xf]
        %v5194 = vld [vmem:[%s2 + $0xa8] sm:$0xf]
        %v5195 = vld [vmem:[%s2 + $0xac] sm:$0xf]
        %v5196 = vld [vmem:[%s2 + $0xb0] sm:$0xf]
        %v5197 = vld [vmem:[%s2 + $0xb4] sm:$0xf]
        %v5198 = vld [vmem:[%s2 + $0xb8] sm:$0xf]
        %v5199 = vld [vmem:[%s2 + $0xbc] sm:$0xf]
        %v5200 = vld [vmem:[%s2 + $0xc0] sm:$0xf]
        %v5201 = vld [vmem:[%s2 + $0xc4] sm:$0xf]
        %v5202 = vld [vmem:[%s2 + $0xc8] sm:$0xf]
        %v5203 = vld [vmem:[%s2 + $0xcc] sm:$0xf]
        %v5204 = vld [vmem:[%s2 + $0xd0] sm:$0xf]
        %v5205 = vld [vmem:[%s2 + $0xd4] sm:$0xf]
        %v5206 = vld [vmem:[%s2 + $0xd8] sm:$0xf]
        %v5207 = vld [vmem:[%s2 + $0xdc] sm:$0xf]
        %v5208 = vld [vmem:[%s2 + $0xe0] sm:$0xf]
        %v5209 = vld [vmem:[%s2 + $0xe4] sm:$0xf]
        %v5210 = vld [vmem:[%s2 + $0xe8] sm:$0xf]
        %v5211 = vld [vmem:[%s2 + $0xec] sm:$0xf]
        %v5212 = vld [vmem:[%s2 + $0xf0] sm:$0xf]
        %v5213 = vld [vmem:[%s2 + $0xf4] sm:$0xf]
        %v5214 = vld [vmem:[%s2 + $0xf8] sm:$0xf]
        %v5215 = vld [vmem:[%s2 + $0xfc] sm:$0xf]
        %v5216 = vld [vmem:[%s2 + $0x100] sm:$0xf]
        %v5217 = vld [vmem:[%s2 + $0x104] sm:$0xf]
        %v5218 = vld [vmem:[%s2 + $0x108] sm:$0xf]
        %v5219 = vld [vmem:[%s2 + $0x10c] sm:$0xf]
        %v5220 = vld [vmem:[%s2 + $0x110] sm:$0xf]
        %v5221 = vld [vmem:[%s2 + $0x114] sm:$0xf]
        %v5222 = vld [vmem:[%s2 + $0x118] sm:$0xf]
        %v5223 = vld [vmem:[%s2 + $0x11c] sm:$0xf]
        %v5224 = vld [vmem:[%s2 + $0x120] sm:$0xf]
        %v5225 = vld [vmem:[%s2 + $0x124] sm:$0xf]
        %v5226 = vld [vmem:[%s2 + $0x128] sm:$0xf]
        %v5227 = vld [vmem:[%s2 + $0x12c] sm:$0xf]
        %v5228 = vld [vmem:[%s2 + $0x130] sm:$0xf]
        %v5229 = vld [vmem:[%s2 + $0x134] sm:$0xf]
        %v5230 = vld [vmem:[%s2 + $0x138] sm:$0xf]
        %v5231 = vld [vmem:[%s2 + $0x13c] sm:$0xf]
        %v5312 = vunpack.c.l.b16 %v5152
        %v5313 = vunpack.c.l.b16 %v5153
        %v5314 = vunpack.c.l.b16 %v5154
        %v5315 = vunpack.c.l.b16 %v5155
        %v5316 = vunpack.c.l.b16 %v5156
        %v5317 = vunpack.c.l.b16 %v5157
        %v5318 = vunpack.c.l.b16 %v5158
        %v5319 = vunpack.c.l.b16 %v5159
        %v5320 = vunpack.c.l.b16 %v5160
        %v5321 = vunpack.c.l.b16 %v5161
        %v5322 = vunpack.c.l.b16 %v5162
        %v5323 = vunpack.c.l.b16 %v5163
        %v5324 = vunpack.c.l.b16 %v5164
        %v5325 = vunpack.c.l.b16 %v5165
        %v5326 = vunpack.c.l.b16 %v5166
        %v5327 = vunpack.c.l.b16 %v5167
        %v5328 = vunpack.c.l.b16 %v5168
        %v5329 = vunpack.c.l.b16 %v5169
        %v5330 = vunpack.c.l.b16 %v5170
        %v5331 = vunpack.c.l.b16 %v5171
        %v5332 = vunpack.c.l.b16 %v5172
        %v5333 = vunpack.c.l.b16 %v5173
        %v5334 = vunpack.c.l.b16 %v5174
        %v5335 = vunpack.c.l.b16 %v5175
        %v5336 = vunpack.c.l.b16 %v5176
        %v5337 = vunpack.c.l.b16 %v5177
        %v5338 = vunpack.c.l.b16 %v5178
        %v5339 = vunpack.c.l.b16 %v5179
        %v5340 = vunpack.c.l.b16 %v5180
        %v5341 = vunpack.c.l.b16 %v5181
        %v5342 = vunpack.c.l.b16 %v5182
        %v5343 = vunpack.c.l.b16 %v5183
        %v5344 = vunpack.c.l.b16 %v5184
        %v5345 = vunpack.c.l.b16 %v5185
        %v5346 = vunpack.c.l.b16 %v5186
        %v5347 = vunpack.c.l.b16 %v5187
        %v5348 = vunpack.c.l.b16 %v5188
        %v5349 = vunpack.c.l.b16 %v5189
        %v5350 = vunpack.c.l.b16 %v5190
        %v5351 = vunpack.c.l.b16 %v5191
        %v5352 = vunpack.c.l.b16 %v5192
        %v5353 = vunpack.c.l.b16 %v5193
        %v5354 = vunpack.c.l.b16 %v5194
        %v5355 = vunpack.c.l.b16 %v5195
        %v5356 = vunpack.c.l.b16 %v5196
        %v5357 = vunpack.c.l.b16 %v5197
        %v5358 = vunpack.c.l.b16 %v5198
        %v5359 = vunpack.c.l.b16 %v5199
        %v5360 = vunpack.c.l.b16 %v5200
        %v5361 = vunpack.c.l.b16 %v5201
        %v5362 = vunpack.c.l.b16 %v5202
        %v5363 = vunpack.c.l.b16 %v5203
        %v5364 = vunpack.c.l.b16 %v5204
        %v5365 = vunpack.c.l.b16 %v5205
        %v5366 = vunpack.c.l.b16 %v5206
        %v5367 = vunpack.c.l.b16 %v5207
        %v5368 = vunpack.c.l.b16 %v5208
        %v5369 = vunpack.c.l.b16 %v5209
        %v5370 = vunpack.c.l.b16 %v5210
        %v5371 = vunpack.c.l.b16 %v5211
        %v5372 = vunpack.c.l.b16 %v5212
        %v5373 = vunpack.c.l.b16 %v5213
        %v5374 = vunpack.c.l.b16 %v5214
        %v5375 = vunpack.c.l.b16 %v5215
        %v5376 = vunpack.c.l.b16 %v5216
        %v5377 = vunpack.c.l.b16 %v5217
        %v5378 = vunpack.c.l.b16 %v5218
        %v5379 = vunpack.c.l.b16 %v5219
        %v5380 = vunpack.c.l.b16 %v5220
        %v5381 = vunpack.c.l.b16 %v5221
        %v5382 = vunpack.c.l.b16 %v5222
        %v5383 = vunpack.c.l.b16 %v5223
        %v5384 = vunpack.c.l.b16 %v5224
        %v5385 = vunpack.c.l.b16 %v5225
        %v5386 = vunpack.c.l.b16 %v5226
        %v5387 = vunpack.c.l.b16 %v5227
        %v5388 = vunpack.c.l.b16 %v5228
        %v5389 = vunpack.c.l.b16 %v5229
        %v5390 = vunpack.c.l.b16 %v5230
        %v5391 = vunpack.c.l.b16 %v5231
        %v5392 = vpack.c.b16 %v5313, %v5312
        %v5393 = vpack.c.b16 %v5315, %v5314
        %v5394 = vpack.c.b16 %v5317, %v5316
        %v5395 = vpack.c.b16 %v5319, %v5318
        %v5396 = vpack.c.b16 %v5321, %v5320
        %v5397 = vpack.c.b16 %v5323, %v5322
        %v5398 = vpack.c.b16 %v5325, %v5324
        %v5399 = vpack.c.b16 %v5327, %v5326
        %v5400 = vpack.c.b16 %v5329, %v5328
        %v5401 = vpack.c.b16 %v5331, %v5330
        %v5402 = vpack.c.b16 %v5333, %v5332
        %v5403 = vpack.c.b16 %v5335, %v5334
        %v5404 = vpack.c.b16 %v5337, %v5336
        %v5405 = vpack.c.b16 %v5339, %v5338
        %v5406 = vpack.c.b16 %v5341, %v5340
        %v5407 = vpack.c.b16 %v5343, %v5342
        %v5408 = vpack.c.b16 %v5345, %v5344
        %v5409 = vpack.c.b16 %v5347, %v5346
        %v5410 = vpack.c.b16 %v5349, %v5348
        %v5411 = vpack.c.b16 %v5351, %v5350
        %v5412 = vpack.c.b16 %v5353, %v5352
        %v5413 = vpack.c.b16 %v5355, %v5354
        %v5414 = vpack.c.b16 %v5357, %v5356
        %v5415 = vpack.c.b16 %v5359, %v5358
        %v5416 = vpack.c.b16 %v5361, %v5360
        %v5417 = vpack.c.b16 %v5363, %v5362
        %v5418 = vpack.c.b16 %v5365, %v5364
        %v5419 = vpack.c.b16 %v5367, %v5366
        %v5420 = vpack.c.b16 %v5369, %v5368
        %v5421 = vpack.c.b16 %v5371, %v5370
        %v5422 = vpack.c.b16 %v5373, %v5372
        %v5423 = vpack.c.b16 %v5375, %v5374
        %v5424 = vpack.c.b16 %v5377, %v5376
        %v5425 = vpack.c.b16 %v5379, %v5378
        %v5426 = vpack.c.b16 %v5381, %v5380
        %v5427 = vpack.c.b16 %v5383, %v5382
        %v5428 = vpack.c.b16 %v5385, %v5384
        %v5429 = vpack.c.b16 %v5387, %v5386
        %v5430 = vpack.c.b16 %v5389, %v5388
        %v5431 = vpack.c.b16 %v5391, %v5390
        %5472 = vmatprep.subr.bf16.mxu0 0
        %5473 = vmatpush1.bf16.msra.mxu0 %v5392
        %5474 = vmatprep.subr.bf16.mxu0 0
        %5475 = vmatpush1.bf16.msra.mxu0 %v5393
        %5476 = vmatprep.subr.bf16.mxu0 0
        %5477 = vmatpush1.bf16.msra.mxu0 %v5394
        %5478 = vmatprep.subr.bf16.mxu0 0
        %5479 = vmatpush1.bf16.msra.mxu0 %v5395
        %5480 = vmatprep.subr.bf16.mxu0 0
        %5481 = vmatpush1.bf16.msra.mxu0 %v5396
        %5482 = vmatprep.subr.bf16.mxu0 0
        %5483 = vmatpush1.bf16.msra.mxu0 %v5397
        %5484 = vmatprep.subr.bf16.mxu0 0
        %5485 = vmatpush1.bf16.msra.mxu0 %v5398
        %5486 = vmatprep.subr.bf16.mxu0 0
        %5487 = vmatpush1.bf16.msra.mxu0 %v5399
        %5488 = vmatprep.subr.bf16.mxu0 0
        %5489 = vmatpush1.bf16.msra.mxu0 %v5400
        %5490 = vmatprep.subr.bf16.mxu0 0
        %5491 = vmatpush1.bf16.msra.mxu0 %v5401
        %5492 = vmatprep.subr.bf16.mxu0 0
        %5493 = vmatpush1.bf16.msra.mxu0 %v5402
        %5494 = vmatprep.subr.bf16.mxu0 0
        %5495 = vmatpush1.bf16.msra.mxu0 %v5403
        %5496 = vmatprep.subr.bf16.mxu0 0
        %5497 = vmatpush1.bf16.msra.mxu0 %v5404
        %5498 = vmatprep.subr.bf16.mxu0 0
        %5499 = vmatpush1.bf16.msra.mxu0 %v5405
        %5500 = vmatprep.subr.bf16.mxu0 0
        %5501 = vmatpush1.bf16.msra.mxu0 %v5406
        %5502 = vmatprep.subr.bf16.mxu0 0
        %5503 = vmatpush1.bf16.msra.mxu0 %v5407
        %5504 = vmatprep.mubr.bf16.mxu0 %v5148
        %5505 = vmatmul.mubr.bf16.gmra.mrb[0].mxu0 %v5147
        %v5506 = vpop.f32.mrb[0].mxu0
        %v5507 = vadd.f32 0.0, %v5506
        %v5508 = vpop.f32.mrb[0].mxu0
        %v5509 = vpop.f32.mrb[0].mxu0
        %v5510 = vadd.f32 0.0, %v5509
        %v5511 = vpop.f32.mrb[0].mxu0
        %5512 = vdwg.mxu0
        %5513 = vmatprep.subr.bf16.mxu0 0
        %5514 = vmatpush1.bf16.msra.mxu0 %v5408
        %5515 = vmatprep.subr.bf16.mxu0 0
        %5516 = vmatpush1.bf16.msra.mxu0 %v5409
        %5517 = vmatprep.subr.bf16.mxu0 0
        %5518 = vmatpush1.bf16.msra.mxu0 %v5410
        %5519 = vmatprep.subr.bf16.mxu0 0
        %5520 = vmatpush1.bf16.msra.mxu0 %v5411
        %5521 = vmatprep.subr.bf16.mxu0 0
        %5522 = vmatpush1.bf16.msra.mxu0 %v5412
        %5523 = vmatprep.subr.bf16.mxu0 0
        %5524 = vmatpush1.bf16.msra.mxu0 %v5413
        %5525 = vmatprep.subr.bf16.mxu0 0
        %5526 = vmatpush1.bf16.msra.mxu0 %v5414
        %5527 = vmatprep.subr.bf16.mxu0 0
        %5528 = vmatpush1.bf16.msra.mxu0 %v5415
        %5529 = vmatprep.subr.bf16.mxu0 0
        %5530 = vmatpush1.bf16.msra.mxu0 %v5416
        %5531 = vmatprep.subr.bf16.mxu0 0
        %5532 = vmatpush1.bf16.msra.mxu0 %v5417
        %5533 = vmatprep.subr.bf16.mxu0 0
        %5534 = vmatpush1.bf16.msra.mxu0 %v5418
        %5535 = vmatprep.subr.bf16.mxu0 0
        %5536 = vmatpush1.bf16.msra.mxu0 %v5419
        %5537 = vmatprep.subr.bf16.mxu0 0
        %5538 = vmatpush1.bf16.msra.mxu0 %v5420
        %5539 = vmatprep.subr.bf16.mxu0 0
        %5540 = vmatpush1.bf16.msra.mxu0 %v5421
        %5541 = vmatprep.subr.bf16.mxu0 0
        %5542 = vmatpush1.bf16.msra.mxu0 %v5422
        %5543 = vmatprep.subr.bf16.mxu0 0
        %5544 = vmatpush1.bf16.msra.mxu0 %v5423
        %5545 = vmatprep.mubr.bf16.mxu0 %v5150
        %5546 = vmatmul.mubr.bf16.gmra.mrb[0].mxu0 %v5149
        %v5547 = vpop.f32.mrb[0].mxu0
        %v5548 = vadd.f32 %v5507, %v5547
        %v5549 = vpop.f32.mrb[0].mxu0
        %v5550 = vpop.f32.mrb[0].mxu0
        %v5551 = vadd.f32 %v5510, %v5550
        %v5552 = vpop.f32.mrb[0].mxu0
        %5553 = vdwg.mxu0
        %5554 = vmatprep.subr.bf16.mxu0 0
        %5555 = vmatpush1.bf16.msra.mxu0 %v5424
        %5556 = vmatprep.subr.bf16.mxu0 0
        %5557 = vmatpush1.bf16.msra.mxu0 %v5425
        %5558 = vmatprep.subr.bf16.mxu0 0
        %5559 = vmatpush1.bf16.msra.mxu0 %v5426
        %5560 = vmatprep.subr.bf16.mxu0 0
        %5561 = vmatpush1.bf16.msra.mxu0 %v5427
        %5562 = vmatprep.subr.bf16.mxu0 0
        %5563 = vmatpush1.bf16.msra.mxu0 %v5428
        %5564 = vmatprep.subr.bf16.mxu0 0
        %5565 = vmatpush1.bf16.msra.mxu0 %v5429
        %5566 = vmatprep.subr.bf16.mxu0 0
        %5567 = vmatpush1.bf16.msra.mxu0 %v5430
        %5568 = vmatprep.subr.bf16.mxu0 0
        %5569 = vmatpush1.bf16.msra.mxu0 %v5431
        %5570 = vmatprep.subr.bf16.mxu0 0
        %5571 = vmatpush1.bf16.msra.mxu0 0
        %5572 = vmatprep.subr.bf16.mxu0 0
        %5573 = vmatpush1.bf16.msra.mxu0 0
        %5574 = vmatprep.subr.bf16.mxu0 0
        %5575 = vmatpush1.bf16.msra.mxu0 0
        %5576 = vmatprep.subr.bf16.mxu0 0
        %5577 = vmatpush1.bf16.msra.mxu0 0
        %5578 = vmatprep.subr.bf16.mxu0 0
        %5579 = vmatpush1.bf16.msra.mxu0 0
        %5580 = vmatprep.subr.bf16.mxu0 0
        %5581 = vmatpush1.bf16.msra.mxu0 0
        %5582 = vmatprep.subr.bf16.mxu0 0
        %5583 = vmatpush1.bf16.msra.mxu0 0
        %5584 = vmatprep.subr.bf16.mxu0 0
        %5585 = vmatpush1.bf16.msra.mxu0 0
        %5586 = vmatprep.mubr.bf16.mxu0 0
        %5587 = vmatmul.mubr.bf16.gmra.mrb[0].mxu0 %v5151
        %v5588 = vpop.f32.mrb[0].mxu0
        %v5589 = vadd.f32 %v5548, %v5588
        %v5590 = vpop.f32.mrb[0].mxu0
        %v5591 = vpop.f32.mrb[0].mxu0
        %v5592 = vadd.f32 %v5551, %v5591
        %v5593 = vpop.f32.mrb[0].mxu0
        %5594 = vdwg.mxu0
        %v5595 = vmax.f32 %v5589, 1e-05
        %v5596 = vmax.f32 %v5592, 1e-05
        %v5597 = vlog2.pop %v5595
        %v5598 = vmul.f32 %v5597, 0.6931472
        %v5599 = vlog2.pop %v5596
        %v5600 = vmul.f32 %v5599, 0.6931472
        %5601 = vst [vmem:[%s166] sm:$0xff] %v5598
        %5602 = vst [vmem:[%s166 + $0x8] sm:$0xff] %v5600
        %s5603 = sand.u32 %s93, 1
        %s5604 = scalar_lea.sflag [#allocation3], %s5603
        %s5605 = sand.u32 %s93, 1
        %s5606 = smul.addr %s5605, 16
        %s5607 = scalar_lea.vmem [#allocation2], %s5606
        // Predicated region
        $region33: #{_lambda_.5} parent=31 // pred_check
          %p5608 = pneg %p103
        $region34: #{_lambda_.5} parent=31 // pred_check_branch
          %5610 = sbr.rel (%p5608) target = $region36
        $region35: #{_lambda_.5} parent=31 // pred_region
          %s5611 = smul.u32 2, %s17
          %s5613 = ssub.s32 256, 256
          %5614 = vsyncadd %s5604, %s5613
          %s5615 = smul.addr %s5611, 128
          %s5616 = scalar_lea.hbm %s3, %s5615
          %s5617 = sshll.u32 %s5607, 4
          %s5618 = int_to_ptr.vmem [resolvable:$true] %s5617
          %5623 = dma.vmem_to_hbm [thread:$0]  %s5618, 256, %s5616, %s5604, 128, 128, 8
        $region36: #{_lambda_.5} parent=31 // pred_fallthru
          _
      $region32: #{_lambda_.5} parent=5 // pred_fallthru
        _
      %p5624 = scmp.le.s32.totalorder 2, %s12
      // Predicated region
      $region37: #{_lambda_.5} parent=5 // pred_check
        %p5625 = pneg %p5624
      $region38: #{_lambda_.5} parent=5 // pred_check_branch
        %5627 = sbr.rel (%p5625) target = $region40
      $region39: #{_lambda_.5} parent=5 // pred_region
        %s5628 = ssub.s32 %s12, 2
        // Predicated region
        $region41: #{_lambda_.5} parent=39 // pred_check
          %p5629 = pneg %p109
        $region42: #{_lambda_.5} parent=39 // pred_check_branch
          %5631 = sbr.rel (%p5629) target = $region44
        $region43: #{_lambda_.5} parent=39 // pred_region
          %s5632 = sand.u32 %s94, 1
          %s5633 = scalar_lea.sflag [#allocation3], %s5632
          %s5634 = sand.u32 %s94, 1
          %s5635 = smul.addr %s5634, 16
          %s5636 = scalar_lea.vmem [#allocation2], %s5635
          %5637 = dma.done %s5633, 256
        $region44: #{_lambda_.5} parent=39 // pred_fallthru
          _
      $region40: #{_lambda_.5} parent=5 // pred_fallthru
        _
    $region6: #{_lambda_.5} parent=1 // loop_footer
      %s16 = sadd.s32 1, %s12
    $region7: #{_lambda_.5} parent=1 // loop_footer_branch
      %11 = sbr.rel target = $region3
    $region8: #{_lambda_.5} parent=1 // loop_exit
      _
    %5638 = vsyncpa [#allocation3], 1
    %s5639 = scalar_lea.sflag [#allocation3], 1
    %5640 = vsyncpa %s5639, 1

</llo_original>
